<compile_context>
chip_gen: v7x
topology: tpu7x:2x2x1
jax: 0.10.0
libtpu: 0.0.40
codegen_flags: <defaults>
</compile_context>

<pallas_src>
import functools
from typing import NamedTuple

import numpy as np
import jax
import jax.numpy as jnp
from jax.experimental import pallas as pl
from jax.experimental.pallas import tpu as pltpu

BN_EPS = 1e-5
LEAKY = 0.1
CMAX = 256          # max channel count in the network
FC_IN = 256
FC_OUT = 1000
FC_OUT_PAD = 1024   # lane-dense fc output (sliced back to 1000 in the wrapper)

# (kind, cin, cout, stride)
STAGE1 = [("conv_bn", 3, 8, 2), ("dw", 8, 16, 1), ("dw", 16, 32, 2),
          ("dw", 32, 32, 1), ("dw", 32, 64, 2), ("dw", 64, 64, 1)]
STAGE2 = [("dw", 64, 128, 2)] + [("dw", 128, 128, 1)] * 5
STAGE3 = [("dw", 128, 256, 2), ("dw", 256, 256, 1)]
LAYERS = STAGE1 + STAGE2 + STAGE3


class _DwCfg(NamedTuple):
    cin: int
    cout: int
    stride: int
    H: int      # input spatial height
    W: int      # input spatial width
    ho: int     # output spatial height
    wo: int     # output spatial width
    Lf: int     # flat full-res tap-slab length: (H-1)*(W+2) + W


# ---------------------------------------------------------------------------
# Kernel helpers (trace-time Python, all ops are plain jnp / ref slicing)
# ---------------------------------------------------------------------------
def _leaky(v):
    return jnp.where(v >= 0.0, v, LEAKY * v)


def _store_rows(buf_ref, y, ho, wo, row_stride, wpad):
    """Write the valid rows of `y` into the interior of a zero-padded flat buffer."""
    buf_ref[...] = jnp.zeros(buf_ref.shape, buf_ref.dtype)
    for h in range(ho):
        row = y[h * row_stride:h * row_stride + wo, :]
        dst = (h + 1) * wpad + 1
        buf_ref[dst:dst + wo, :] = row


def _mobilenet_kernel(*refs, plan, n_in):
    in_refs = refs[:n_in]
    out_ref = refs[n_in]
    bufs = refs[n_in + 1:]          # one flat padded VMEM buffer per dw layer (its input)

    n_s = sum(1 for c in plan if c.stride == 2)
    x0_ref, w0_ref, b0_ref = in_refs[0], in_refs[1], in_refs[2]
    dww_ref, dwb_ref = in_refs[3], in_refs[4]
    pww_ref, pwb_ref = in_refs[5], in_refs[6]
    s_refs = in_refs[7:7 + n_s]
    fcw_ref, fcb_ref = in_refs[7 + n_s], in_refs[8 + n_s]

    # --- layer 0: dense 3x3 conv (wrapper-provided im2col) + folded BN + LeakyReLU (MXU)
    y = jnp.dot(x0_ref[0], w0_ref[...], preferred_element_type=jnp.float32)
    y = _leaky(y + b0_ref[...])                             # (ho0*wo0, 8) f32

    first = plan[0]
    _store_rows(bufs[0], y, first.H, first.W, first.W, first.W + 2)

    # --- 13 fused depthwise(3x3)+BN+act -> pointwise(1x1)+BN+act blocks, all in VMEM
    final_y = None
    final_cfg = None
    final_row_stride = None
    s_idx = 0
    for li, cfg in enumerate(plan):
        buf = bufs[li]
        wp = cfg.W + 2
        wdw = dww_ref[li, :, :cfg.cin]                      # (9, cin)  f32 (BN scale folded)
        bdw = dwb_ref[li, :, :cfg.cin]                      # (1, cin)  f32
        wpw = pww_ref[li, :cfg.cin, :cfg.cout]              # (cin, cout) bf16 (BN scale folded)
        bpw = pwb_ref[li, :, :cfg.cout]                     # (1, cout) f32

        # depthwise 3x3: nine contiguous tap slabs of the flat padded buffer (VPU, f32)
        acc = None
        k = 0
        for dh in range(3):
            for dwc in range(3):
                off = dh * wp + dwc
                tap = buf[off:off + cfg.Lf, :]              # (Lf, cin)
                term = tap * wdw[k:k + 1, :]
                acc = term if acc is None else acc + term
                k += 1
        z = _leaky(acc + bdw)                               # (Lf, cin) f32
        zb = z.astype(jnp.bfloat16)

        if cfg.stride == 2:
            # subsample to the stride-2 output grid via a constant 0/1 selection matmul
            sel = s_refs[s_idx][...]                        # (ho*wo, Lf) bf16
            s_idx += 1
            zb = jnp.dot(sel, zb,
                         preferred_element_type=jnp.float32).astype(jnp.bfloat16)
            row_stride = cfg.wo                             # compact (ho*wo, cin) layout
        else:
            row_stride = wp                                 # full-res layout, junk cols skipped

        # pointwise 1x1 conv + folded BN + LeakyReLU (MXU, bf16 in / f32 accumulate)
        yv = jnp.dot(zb, wpw, preferred_element_type=jnp.float32)
        yv = _leaky(yv + bpw)                               # (rows, cout) f32

        if li + 1 < len(plan):
            _store_rows(bufs[li + 1], yv, cfg.ho, cfg.wo, row_stride, cfg.wo + 2)
        else:
            final_y = yv
            final_cfg = cfg
            final_row_stride = row_stride

    # --- AdaptiveAvgPool2d((1,1)) + Linear(256 -> 1000, padded to 1024 lanes)
    pooled = None
    for h in range(final_cfg.ho):
        seg = final_y[h * final_row_stride:h * final_row_stride + final_cfg.wo, :]
        s = jnp.sum(seg, axis=0, keepdims=True)
        pooled = s if pooled is None else pooled + s
    pooled = pooled * (1.0 / float(final_cfg.ho * final_cfg.wo))   # (1, 256) f32

    logits = jnp.dot(pooled.astype(jnp.bfloat16), fcw_ref[...],
                     preferred_element_type=jnp.float32) + fcb_ref[...]
    out_ref[0] = logits                                     # (1, FC_OUT_PAD)


# ---------------------------------------------------------------------------
# Wrapper: BN folding, weight packing, first-layer im2col, pallas_call
# ---------------------------------------------------------------------------
def _fold_bn(bn):
    # TODO(synk): eval-mode BatchNorm (running stats); PyTorch train-mode batch stats not reproduced.
    scale = bn["gamma"] / jnp.sqrt(bn["var"] + BN_EPS)
    bias = bn["beta"] - bn["mean"] * scale
    return scale, bias


def _make_select(ho, wo, w_in, lf):
    """0/1 matrix picking the stride-2 output positions out of the flat full-res layout."""
    s = np.zeros((ho * wo, lf), np.float32)
    for i in range(ho):
        for j in range(wo):
            s[i * wo + j, 2 * i * (w_in + 2) + 2 * j] = 1.0
    return jnp.asarray(s, dtype=jnp.bfloat16)


def _const_index_map(rank):
    def im(b):
        return (0,) * rank
    return im


def mobilenet_v1_forward(params, x_nchw):
    # NOTE: in a serving setting the BN-folded / packed weights below would be precomputed
    # once; they are recomputed here so the function keeps the original (params, x) signature.
    n = x_nchw.shape[0]
    x = jnp.transpose(x_nchw, (0, 2, 3, 1)).astype(jnp.float32)    # NCHW -> NHWC
    h0, w0 = x.shape[1], x.shape[2]

    # ---- layer 0: im2col of the (tiny, read-once) network input, done once in the wrapper
    _, cin0, cout0, s0 = LAYERS[0]
    ho0 = (h0 + 2 - 3) // s0 + 1
    wo0 = (w0 + 2 - 3) // s0 + 1
    xp = jnp.pad(x, ((0, 0), (1, 1), (1, 1), (0, 0)))
    taps = [xp[:, dh:dh + s0 * (ho0 - 1) + 1:s0, dw:dw + s0 * (wo0 - 1) + 1:s0, :]
            for dh in range(3) for dw in range(3)]
    k0 = 9 * cin0
    k0p = ((k0 + 7) // 8) * 8                                       # 27 -> 32
    im2col = jnp.stack(taps, axis=3).reshape(n, ho0 * wo0, k0)
    im2col = jnp.pad(im2col, ((0, 0), (0, 0), (0, k0p - k0))).astype(jnp.bfloat16)

    p0 = params["layers"][0]
    sc0, bi0 = _fold_bn(p0["bn"])
    w0m = p0["w"].reshape(k0, cout0) * sc0[None, :]
    w0m = jnp.pad(w0m, ((0, k0p - k0), (0, 0))).astype(jnp.bfloat16)

    # ---- pack the 13 depthwise-block parameter sets into a handful of operands
    num_dw = len(LAYERS) - 1
    dw_w_all = jnp.zeros((num_dw, 9, CMAX), jnp.float32)
    dw_b_all = jnp.zeros((num_dw, 1, CMAX), jnp.float32)
    pw_w_all = jnp.zeros((num_dw, CMAX, CMAX), jnp.bfloat16)
    pw_b_all = jnp.zeros((num_dw, 1, CMAX), jnp.float32)
    s_mats = []
    plan = []
    hh, ww = ho0, wo0
    for li, ((kind, cin, cout, stride), p) in enumerate(zip(LAYERS[1:], params["layers"][1:])):
        ho = (hh + 2 - 3) // stride + 1
        wo = (ww + 2 - 3) // stride + 1
        lf = (hh - 1) * (ww + 2) + ww
        sdw, bdw = _fold_bn(p["bn_dw"])
        spw, bpw = _fold_bn(p["bn_pw"])
        dw_w_all = dw_w_all.at[li, :, :cin].set(p["w_dw"].reshape(9, cin) * sdw[None, :])
        dw_b_all = dw_b_all.at[li, 0, :cin].set(bdw)
        pw_w_all = pw_w_all.at[li, :cin, :cout].set((p["w_pw"] * spw[None, :]).astype(jnp.bfloat16))
        pw_b_all = pw_b_all.at[li, 0, :cout].set(bpw)
        if stride == 2:
            s_mats.append(_make_select(ho, wo, ww, lf))
        plan.append(_DwCfg(cin=cin, cout=cout, stride=stride,
                           H=hh, W=ww, ho=ho, wo=wo, Lf=lf))
        hh, ww = ho, wo

    fc_w = jnp.pad(params["fc_w"], ((0, 0), (0, FC_OUT_PAD - FC_OUT))).astype(jnp.bfloat16)
    fc_b = jnp.pad(params["fc_b"], (0, FC_OUT_PAD - FC_OUT)).reshape(1, FC_OUT_PAD)

    operands = [im2col, w0m, bi0.reshape(1, cout0),
                dw_w_all, dw_b_all, pw_w_all, pw_b_all] + s_mats + [fc_w, fc_b]
    n_in = len(operands)

    in_specs = [pl.BlockSpec((1,) + tuple(operands[0].shape[1:]), lambda b: (b, 0, 0))]
    for op in operands[1:]:
        in_specs.append(pl.BlockSpec(tuple(op.shape), _const_index_map(op.ndim)))

    scratch_shapes = [pltpu.VMEM(((cfg.H + 2) * (cfg.W + 2), cfg.cin), jnp.float32)
                      for cfg in plan]

    kernel = functools.partial(_mobilenet_kernel, plan=tuple(plan), n_in=n_in)

    out = pl.pallas_call(
        kernel,
        out_shape=jax.ShapeDtypeStruct((n, 1, FC_OUT_PAD), jnp.float32),
        grid=(n,),
        in_specs=in_specs,
        out_specs=pl.BlockSpec((1, 1, FC_OUT_PAD), lambda b: (b, 0, 0)),
        scratch_shapes=scratch_shapes,
        compiler_params=pltpu.CompilerParams(dimension_semantics=("parallel",)),
    )(*operands)
    # TODO(synk): the reference's print(x.shape) debug statements are host-side only; omitted.
    return out[:, 0, :FC_OUT]


# ---------------------------------------------------------------------------
# Deterministic parameter init (same layout as the previous version)
# ---------------------------------------------------------------------------
def _init_bn(key, c):
    k1, k2, k3, k4 = jax.random.split(key, 4)
    return dict(
        gamma=jax.random.uniform(k1, (c,), jnp.float32, 0.5, 1.5),
        beta=jax.random.normal(k2, (c,), jnp.float32) * 0.1,
        mean=jax.random.normal(k3, (c,), jnp.float32) * 0.1,
        var=jax.random.uniform(k4, (c,), jnp.float32, 0.5, 1.5),
    )


def init_params(key):
    layers = []
    for kind, cin, cout, _stride in LAYERS:
        key, k1, k2, k3, k4 = jax.random.split(key, 5)
        if kind == "conv_bn":
            w = jax.random.normal(k1, (3, 3, cin, cout), jnp.float32) * (2.0 / (9 * cin)) ** 0.5
            layers.append(dict(w=w, bn=_init_bn(k2, cout)))
        else:
            w_dw = jax.random.normal(k1, (3, 3, cin), jnp.float32) * (2.0 / 9.0) ** 0.5
            w_pw = jax.random.normal(k3, (cin, cout), jnp.float32) * (2.0 / cin) ** 0.5
            layers.append(dict(w_dw=w_dw, bn_dw=_init_bn(k2, cin),
                               w_pw=w_pw, bn_pw=_init_bn(k4, cout)))
    key, kf1, kf2 = jax.random.split(key, 3)
    fc_w = jax.random.normal(kf1, (FC_IN, FC_OUT), jnp.float32) * (1.0 / FC_IN) ** 0.5
    fc_b = jax.random.normal(kf2, (FC_OUT,), jnp.float32) * 0.01
    return dict(layers=layers, fc_w=fc_w, fc_b=fc_b)


if __name__ == "__main__":
    key = jax.random.PRNGKey(0)
    kp, kx = jax.random.split(key)
    params = init_params(kp)
    # 5 stride-2 layers reduce 32 -> 1 spatially, matching fc input of 256 features
    x = jax.random.normal(kx, (2, 3, 32, 32), jnp.float32)  # NCHW, like the PyTorch module
    fwd = jax.jit(mobilenet_v1_forward)
    out = jax.block_until_ready(fwd(params, x))
    assert out.shape == (2, 1000) and out.dtype == jnp.float32
    print("KERNEL_OK")
</pallas_src>

<mosaic_0001>
module attributes {stable_mosaic.version = 11 : i64} {
  func.func @_mobilenet_kernel(%arg0: i32, %arg1: memref<1x256x32xbf16, #tpu.memory_space<vmem>>, %arg2: memref<32x8xbf16, #tpu.memory_space<vmem>>, %arg3: memref<1x8xf32, #tpu.memory_space<vmem>>, %arg4: memref<13x9x256xf32, #tpu.memory_space<vmem>>, %arg5: memref<13x1x256xf32, #tpu.memory_space<vmem>>, %arg6: memref<13x256x256xbf16, #tpu.memory_space<vmem>>, %arg7: memref<13x1x256xf32, #tpu.memory_space<vmem>>, %arg8: memref<64x286xbf16, #tpu.memory_space<vmem>>, %arg9: memref<16x78xbf16, #tpu.memory_space<vmem>>, %arg10: memref<4x22xbf16, #tpu.memory_space<vmem>>, %arg11: memref<1x6xbf16, #tpu.memory_space<vmem>>, %arg12: memref<256x1024xbf16, #tpu.memory_space<vmem>>, %arg13: memref<1x1024xf32, #tpu.memory_space<vmem>>, %arg14: memref<1x1x1024xf32, #tpu.memory_space<vmem>>, %arg15: memref<324x8xf32, #tpu.memory_space<vmem>>, %arg16: memref<324x16xf32, #tpu.memory_space<vmem>>, %arg17: memref<100x32xf32, #tpu.memory_space<vmem>>, %arg18: memref<100x32xf32, #tpu.memory_space<vmem>>, %arg19: memref<36x64xf32, #tpu.memory_space<vmem>>, %arg20: memref<36x64xf32, #tpu.memory_space<vmem>>, %arg21: memref<16x128xf32, #tpu.memory_space<vmem>>, %arg22: memref<16x128xf32, #tpu.memory_space<vmem>>, %arg23: memref<16x128xf32, #tpu.memory_space<vmem>>, %arg24: memref<16x128xf32, #tpu.memory_space<vmem>>, %arg25: memref<16x128xf32, #tpu.memory_space<vmem>>, %arg26: memref<16x128xf32, #tpu.memory_space<vmem>>, %arg27: memref<9x256xf32, #tpu.memory_space<vmem>>) attributes {dimension_semantics = [#tpu.dimension_semantics<parallel>], iteration_bounds = array<i64: 2>, scalar_prefetch = 0 : i64, scratch_operands = 13 : i64, tpu.core_type = #tpu.core_type<tc>, window_params = [{transform_indices = @transform_0, window_bounds = array<i64: 1, 256, 32>}, {pipeline_mode = #tpu.pipeline_mode<synchronous>, transform_indices = @transform_1, window_bounds = array<i64: 32, 8>}, {pipeline_mode = #tpu.pipeline_mode<synchronous>, transform_indices = @transform_2, window_bounds = array<i64: 1, 8>}, {pipeline_mode = #tpu.pipeline_mode<synchronous>, transform_indices = @transform_3, window_bounds = array<i64: 13, 9, 256>}, {pipeline_mode = #tpu.pipeline_mode<synchronous>, transform_indices = @transform_4, window_bounds = array<i64: 13, 1, 256>}, {pipeline_mode = #tpu.pipeline_mode<synchronous>, transform_indices = @transform_5, window_bounds = array<i64: 13, 256, 256>}, {pipeline_mode = #tpu.pipeline_mode<synchronous>, transform_indices = @transform_6, window_bounds = array<i64: 13, 1, 256>}, {pipeline_mode = #tpu.pipeline_mode<synchronous>, transform_indices = @transform_7, window_bounds = array<i64: 64, 286>}, {pipeline_mode = #tpu.pipeline_mode<synchronous>, transform_indices = @transform_8, window_bounds = array<i64: 16, 78>}, {pipeline_mode = #tpu.pipeline_mode<synchronous>, transform_indices = @transform_9, window_bounds = array<i64: 4, 22>}, {pipeline_mode = #tpu.pipeline_mode<synchronous>, transform_indices = @transform_10, window_bounds = array<i64: 1, 6>}, {pipeline_mode = #tpu.pipeline_mode<synchronous>, transform_indices = @transform_11, window_bounds = array<i64: 256, 1024>}, {pipeline_mode = #tpu.pipeline_mode<synchronous>, transform_indices = @transform_12, window_bounds = array<i64: 1, 1024>}, {transform_indices = @transform_13, window_bounds = array<i64: 1, 1, 1024>}]} {
    %c0 = arith.constant 0 : index
    %c0_0 = arith.constant 0 : index
    %c0_1 = arith.constant 0 : index
    %0 = vector.load %arg1[%c0, %c0_0, %c0_1] : memref<1x256x32xbf16, #tpu.memory_space<vmem>>, vector<1x256x32xbf16>
    %1 = vector.shape_cast %0 : vector<1x256x32xbf16> to vector<256x32xbf16>
    %c0_2 = arith.constant 0 : index
    %c0_3 = arith.constant 0 : index
    %2 = vector.load %arg2[%c0_2, %c0_3] : memref<32x8xbf16, #tpu.memory_space<vmem>>, vector<32x8xbf16>
    %cst = arith.constant dense<0.000000e+00> : vector<256x8xf32>
    %3 = tpu.matmul %1, %2, %cst {dimension_numbers = #tpu.dot_dimension_numbers<[1], [0], [0], [1], [0, 0, 1, 1], [], []>} : vector<256x32xbf16>, vector<32x8xbf16>, vector<256x8xf32> -> vector<256x8xf32>
    %c0_4 = arith.constant 0 : index
    %c0_5 = arith.constant 0 : index
    %4 = vector.load %arg3[%c0_4, %c0_5] : memref<1x8xf32, #tpu.memory_space<vmem>>, vector<1x8xf32>
    %5 = vector.broadcast %4 : vector<1x8xf32> to vector<256x8xf32>
    %6 = arith.addf %3, %5 : vector<256x8xf32>
    %cst_6 = arith.constant 0.000000e+00 : f32
    %7 = vector.broadcast %cst_6 : f32 to vector<256x8xf32>
    %8 = arith.cmpf oge, %6, %7 : vector<256x8xf32>
    %cst_7 = arith.constant 1.000000e-01 : f32
    %9 = vector.broadcast %cst_7 : f32 to vector<256x8xf32>
    %10 = arith.mulf %9, %6 : vector<256x8xf32>
    %11 = arith.select %8, %6, %10 : vector<256x8xi1>, vector<256x8xf32>
    %cst_8 = arith.constant 0.000000e+00 : f32
    %12 = vector.broadcast %cst_8 : f32 to vector<324x8xf32>
    %c0_9 = arith.constant 0 : index
    %c0_10 = arith.constant 0 : index
    %13 = vector.load %arg15[%c0_9, %c0_10] : memref<324x8xf32, #tpu.memory_space<vmem>>, vector<324x8xf32>
    tpu.vector_store %arg15[%c0_9, %c0_10], %12 {strides = array<i32>} : memref<324x8xf32, #tpu.memory_space<vmem>>, vector<324x8xf32>,
    %14 = vector.extract_strided_slice %11 {offsets = [0, 0], sizes = [16, 8], strides = [1, 1]} : vector<256x8xf32> to vector<16x8xf32>
    %c19 = arith.constant 19 : index
    %c0_11 = arith.constant 0 : index
    %15 = vector.load %arg15[%c19, %c0_11] : memref<324x8xf32, #tpu.memory_space<vmem>>, vector<16x8xf32>
    tpu.vector_store %arg15[%c19, %c0_11], %14 {strides = array<i32>} : memref<324x8xf32, #tpu.memory_space<vmem>>, vector<16x8xf32>,
    %16 = vector.extract_strided_slice %11 {offsets = [16, 0], sizes = [16, 8], strides = [1, 1]} : vector<256x8xf32> to vector<16x8xf32>
    %c37 = arith.constant 37 : index
    %c0_12 = arith.constant 0 : index
    %17 = vector.load %arg15[%c37, %c0_12] : memref<324x8xf32, #tpu.memory_space<vmem>>, vector<16x8xf32>
    tpu.vector_store %arg15[%c37, %c0_12], %16 {strides = array<i32>} : memref<324x8xf32, #tpu.memory_space<vmem>>, vector<16x8xf32>,
    %18 = vector.extract_strided_slice %11 {offsets = [32, 0], sizes = [16, 8], strides = [1, 1]} : vector<256x8xf32> to vector<16x8xf32>
    %c55 = arith.constant 55 : index
    %c0_13 = arith.constant 0 : index
    %19 = vector.load %arg15[%c55, %c0_13] : memref<324x8xf32, #tpu.memory_space<vmem>>, vector<16x8xf32>
    tpu.vector_store %arg15[%c55, %c0_13], %18 {strides = array<i32>} : memref<324x8xf32, #tpu.memory_space<vmem>>, vector<16x8xf32>,
    %20 = vector.extract_strided_slice %11 {offsets = [48, 0], sizes = [16, 8], strides = [1, 1]} : vector<256x8xf32> to vector<16x8xf32>
    %c73 = arith.constant 73 : index
    %c0_14 = arith.constant 0 : index
    %21 = vector.load %arg15[%c73, %c0_14] : memref<324x8xf32, #tpu.memory_space<vmem>>, vector<16x8xf32>
    tpu.vector_store %arg15[%c73, %c0_14], %20 {strides = array<i32>} : memref<324x8xf32, #tpu.memory_space<vmem>>, vector<16x8xf32>,
    %22 = vector.extract_strided_slice %11 {offsets = [64, 0], sizes = [16, 8], strides = [1, 1]} : vector<256x8xf32> to vector<16x8xf32>
    %c91 = arith.constant 91 : index
    %c0_15 = arith.constant 0 : index
    %23 = vector.load %arg15[%c91, %c0_15] : memref<324x8xf32, #tpu.memory_space<vmem>>, vector<16x8xf32>
    tpu.vector_store %arg15[%c91, %c0_15], %22 {strides = array<i32>} : memref<324x8xf32, #tpu.memory_space<vmem>>, vector<16x8xf32>,
    %24 = vector.extract_strided_slice %11 {offsets = [80, 0], sizes = [16, 8], strides = [1, 1]} : vector<256x8xf32> to vector<16x8xf32>
    %c109 = arith.constant 109 : index
    %c0_16 = arith.constant 0 : index
    %25 = vector.load %arg15[%c109, %c0_16] : memref<324x8xf32, #tpu.memory_space<vmem>>, vector<16x8xf32>
    tpu.vector_store %arg15[%c109, %c0_16], %24 {strides = array<i32>} : memref<324x8xf32, #tpu.memory_space<vmem>>, vector<16x8xf32>,
    %26 = vector.extract_strided_slice %11 {offsets = [96, 0], sizes = [16, 8], strides = [1, 1]} : vector<256x8xf32> to vector<16x8xf32>
    %c127 = arith.constant 127 : index
    %c0_17 = arith.constant 0 : index
    %27 = vector.load %arg15[%c127, %c0_17] : memref<324x8xf32, #tpu.memory_space<vmem>>, vector<16x8xf32>
    tpu.vector_store %arg15[%c127, %c0_17], %26 {strides = array<i32>} : memref<324x8xf32, #tpu.memory_space<vmem>>, vector<16x8xf32>,
    %28 = vector.extract_strided_slice %11 {offsets = [112, 0], sizes = [16, 8], strides = [1, 1]} : vector<256x8xf32> to vector<16x8xf32>
    %c145 = arith.constant 145 : index
    %c0_18 = arith.constant 0 : index
    %29 = vector.load %arg15[%c145, %c0_18] : memref<324x8xf32, #tpu.memory_space<vmem>>, vector<16x8xf32>
    tpu.vector_store %arg15[%c145, %c0_18], %28 {strides = array<i32>} : memref<324x8xf32, #tpu.memory_space<vmem>>, vector<16x8xf32>,
    %30 = vector.extract_strided_slice %11 {offsets = [128, 0], sizes = [16, 8], strides = [1, 1]} : vector<256x8xf32> to vector<16x8xf32>
    %c163 = arith.constant 163 : index
    %c0_19 = arith.constant 0 : index
    %31 = vector.load %arg15[%c163, %c0_19] : memref<324x8xf32, #tpu.memory_space<vmem>>, vector<16x8xf32>
    tpu.vector_store %arg15[%c163, %c0_19], %30 {strides = array<i32>} : memref<324x8xf32, #tpu.memory_space<vmem>>, vector<16x8xf32>,
    %32 = vector.extract_strided_slice %11 {offsets = [144, 0], sizes = [16, 8], strides = [1, 1]} : vector<256x8xf32> to vector<16x8xf32>
    %c181 = arith.constant 181 : index
    %c0_20 = arith.constant 0 : index
    %33 = vector.load %arg15[%c181, %c0_20] : memref<324x8xf32, #tpu.memory_space<vmem>>, vector<16x8xf32>
    tpu.vector_store %arg15[%c181, %c0_20], %32 {strides = array<i32>} : memref<324x8xf32, #tpu.memory_space<vmem>>, vector<16x8xf32>,
    %34 = vector.extract_strided_slice %11 {offsets = [160, 0], sizes = [16, 8], strides = [1, 1]} : vector<256x8xf32> to vector<16x8xf32>
    %c199 = arith.constant 199 : index
    %c0_21 = arith.constant 0 : index
    %35 = vector.load %arg15[%c199, %c0_21] : memref<324x8xf32, #tpu.memory_space<vmem>>, vector<16x8xf32>
    tpu.vector_store %arg15[%c199, %c0_21], %34 {strides = array<i32>} : memref<324x8xf32, #tpu.memory_space<vmem>>, vector<16x8xf32>,
    %36 = vector.extract_strided_slice %11 {offsets = [176, 0], sizes = [16, 8], strides = [1, 1]} : vector<256x8xf32> to vector<16x8xf32>
    %c217 = arith.constant 217 : index
    %c0_22 = arith.constant 0 : index
    %37 = vector.load %arg15[%c217, %c0_22] : memref<324x8xf32, #tpu.memory_space<vmem>>, vector<16x8xf32>
    tpu.vector_store %arg15[%c217, %c0_22], %36 {strides = array<i32>} : memref<324x8xf32, #tpu.memory_space<vmem>>, vector<16x8xf32>,
    %38 = vector.extract_strided_slice %11 {offsets = [192, 0], sizes = [16, 8], strides = [1, 1]} : vector<256x8xf32> to vector<16x8xf32>
    %c235 = arith.constant 235 : index
    %c0_23 = arith.constant 0 : index
    %39 = vector.load %arg15[%c235, %c0_23] : memref<324x8xf32, #tpu.memory_space<vmem>>, vector<16x8xf32>
    tpu.vector_store %arg15[%c235, %c0_23], %38 {strides = array<i32>} : memref<324x8xf32, #tpu.memory_space<vmem>>, vector<16x8xf32>,
    %40 = vector.extract_strided_slice %11 {offsets = [208, 0], sizes = [16, 8], strides = [1, 1]} : vector<256x8xf32> to vector<16x8xf32>
    %c253 = arith.constant 253 : index
    %c0_24 = arith.constant 0 : index
    %41 = vector.load %arg15[%c253, %c0_24] : memref<324x8xf32, #tpu.memory_space<vmem>>, vector<16x8xf32>
    tpu.vector_store %arg15[%c253, %c0_24], %40 {strides = array<i32>} : memref<324x8xf32, #tpu.memory_space<vmem>>, vector<16x8xf32>,
    %42 = vector.extract_strided_slice %11 {offsets = [224, 0], sizes = [16, 8], strides = [1, 1]} : vector<256x8xf32> to vector<16x8xf32>
    %c271 = arith.constant 271 : index
    %c0_25 = arith.constant 0 : index
    %43 = vector.load %arg15[%c271, %c0_25] : memref<324x8xf32, #tpu.memory_space<vmem>>, vector<16x8xf32>
    tpu.vector_store %arg15[%c271, %c0_25], %42 {strides = array<i32>} : memref<324x8xf32, #tpu.memory_space<vmem>>, vector<16x8xf32>,
    %44 = vector.extract_strided_slice %11 {offsets = [240, 0], sizes = [16, 8], strides = [1, 1]} : vector<256x8xf32> to vector<16x8xf32>
    %c289 = arith.constant 289 : index
    %c0_26 = arith.constant 0 : index
    %45 = vector.load %arg15[%c289, %c0_26] : memref<324x8xf32, #tpu.memory_space<vmem>>, vector<16x8xf32>
    tpu.vector_store %arg15[%c289, %c0_26], %44 {strides = array<i32>} : memref<324x8xf32, #tpu.memory_space<vmem>>, vector<16x8xf32>,
    %c0_27 = arith.constant 0 : index
    %c0_28 = arith.constant 0 : index
    %c0_29 = arith.constant 0 : index
    %46 = vector.load %arg4[%c0_27, %c0_28, %c0_29] : memref<13x9x256xf32, #tpu.memory_space<vmem>>, vector<1x9x8xf32>
    %47 = vector.shape_cast %46 : vector<1x9x8xf32> to vector<9x8xf32>
    %c0_30 = arith.constant 0 : index
    %c0_31 = arith.constant 0 : index
    %c0_32 = arith.constant 0 : index
    %48 = vector.load %arg5[%c0_30, %c0_31, %c0_32] : memref<13x1x256xf32, #tpu.memory_space<vmem>>, vector<1x1x8xf32>
    %49 = vector.shape_cast %48 : vector<1x1x8xf32> to vector<1x8xf32>
    %c0_33 = arith.constant 0 : index
    %c0_34 = arith.constant 0 : index
    %c0_35 = arith.constant 0 : index
    %50 = vector.load %arg6[%c0_33, %c0_34, %c0_35] : memref<13x256x256xbf16, #tpu.memory_space<vmem>>, vector<1x8x16xbf16>
    %51 = vector.shape_cast %50 : vector<1x8x16xbf16> to vector<8x16xbf16>
    %c0_36 = arith.constant 0 : index
    %c0_37 = arith.constant 0 : index
    %c0_38 = arith.constant 0 : index
    %52 = vector.load %arg7[%c0_36, %c0_37, %c0_38] : memref<13x1x256xf32, #tpu.memory_space<vmem>>, vector<1x1x16xf32>
    %53 = vector.shape_cast %52 : vector<1x1x16xf32> to vector<1x16xf32>
    %c0_39 = arith.constant 0 : index
    %c0_40 = arith.constant 0 : index
    %54 = vector.load %arg15[%c0_39, %c0_40] : memref<324x8xf32, #tpu.memory_space<vmem>>, vector<286x8xf32>
    %55 = vector.extract_strided_slice %47 {offsets = [0, 0], sizes = [1, 8], strides = [1, 1]} : vector<9x8xf32> to vector<1x8xf32>
    %56 = vector.broadcast %55 : vector<1x8xf32> to vector<286x8xf32>
    %57 = arith.mulf %54, %56 : vector<286x8xf32>
    %c1 = arith.constant 1 : index
    %c0_41 = arith.constant 0 : index
    %58 = vector.load %arg15[%c1, %c0_41] : memref<324x8xf32, #tpu.memory_space<vmem>>, vector<286x8xf32>
    %59 = vector.extract_strided_slice %47 {offsets = [1, 0], sizes = [1, 8], strides = [1, 1]} : vector<9x8xf32> to vector<1x8xf32>
    %60 = vector.broadcast %59 : vector<1x8xf32> to vector<286x8xf32>
    %61 = arith.mulf %58, %60 : vector<286x8xf32>
    %62 = arith.addf %57, %61 : vector<286x8xf32>
    %c2 = arith.constant 2 : index
    %c0_42 = arith.constant 0 : index
    %63 = vector.load %arg15[%c2, %c0_42] : memref<324x8xf32, #tpu.memory_space<vmem>>, vector<286x8xf32>
    %64 = vector.extract_strided_slice %47 {offsets = [2, 0], sizes = [1, 8], strides = [1, 1]} : vector<9x8xf32> to vector<1x8xf32>
    %65 = vector.broadcast %64 : vector<1x8xf32> to vector<286x8xf32>
    %66 = arith.mulf %63, %65 : vector<286x8xf32>
    %67 = arith.addf %62, %66 : vector<286x8xf32>
    %c18 = arith.constant 18 : index
    %c0_43 = arith.constant 0 : index
    %68 = vector.load %arg15[%c18, %c0_43] : memref<324x8xf32, #tpu.memory_space<vmem>>, vector<286x8xf32>
    %69 = vector.extract_strided_slice %47 {offsets = [3, 0], sizes = [1, 8], strides = [1, 1]} : vector<9x8xf32> to vector<1x8xf32>
    %70 = vector.broadcast %69 : vector<1x8xf32> to vector<286x8xf32>
    %71 = arith.mulf %68, %70 : vector<286x8xf32>
    %72 = arith.addf %67, %71 : vector<286x8xf32>
    %c19_44 = arith.constant 19 : index
    %c0_45 = arith.constant 0 : index
    %73 = vector.load %arg15[%c19_44, %c0_45] : memref<324x8xf32, #tpu.memory_space<vmem>>, vector<286x8xf32>
    %74 = vector.extract_strided_slice %47 {offsets = [4, 0], sizes = [1, 8], strides = [1, 1]} : vector<9x8xf32> to vector<1x8xf32>
    %75 = vector.broadcast %74 : vector<1x8xf32> to vector<286x8xf32>
    %76 = arith.mulf %73, %75 : vector<286x8xf32>
    %77 = arith.addf %72, %76 : vector<286x8xf32>
    %c20 = arith.constant 20 : index
    %c0_46 = arith.constant 0 : index
    %78 = vector.load %arg15[%c20, %c0_46] : memref<324x8xf32, #tpu.memory_space<vmem>>, vector<286x8xf32>
    %79 = vector.extract_strided_slice %47 {offsets = [5, 0], sizes = [1, 8], strides = [1, 1]} : vector<9x8xf32> to vector<1x8xf32>
    %80 = vector.broadcast %79 : vector<1x8xf32> to vector<286x8xf32>
    %81 = arith.mulf %78, %80 : vector<286x8xf32>
    %82 = arith.addf %77, %81 : vector<286x8xf32>
    %c36 = arith.constant 36 : index
    %c0_47 = arith.constant 0 : index
    %83 = vector.load %arg15[%c36, %c0_47] : memref<324x8xf32, #tpu.memory_space<vmem>>, vector<286x8xf32>
    %84 = vector.extract_strided_slice %47 {offsets = [6, 0], sizes = [1, 8], strides = [1, 1]} : vector<9x8xf32> to vector<1x8xf32>
    %85 = vector.broadcast %84 : vector<1x8xf32> to vector<286x8xf32>
    %86 = arith.mulf %83, %85 : vector<286x8xf32>
    %87 = arith.addf %82, %86 : vector<286x8xf32>
    %c37_48 = arith.constant 37 : index
    %c0_49 = arith.constant 0 : index
    %88 = vector.load %arg15[%c37_48, %c0_49] : memref<324x8xf32, #tpu.memory_space<vmem>>, vector<286x8xf32>
    %89 = vector.extract_strided_slice %47 {offsets = [7, 0], sizes = [1, 8], strides = [1, 1]} : vector<9x8xf32> to vector<1x8xf32>
    %90 = vector.broadcast %89 : vector<1x8xf32> to vector<286x8xf32>
    %91 = arith.mulf %88, %90 : vector<286x8xf32>
    %92 = arith.addf %87, %91 : vector<286x8xf32>
    %c38 = arith.constant 38 : index
    %c0_50 = arith.constant 0 : index
    %93 = vector.load %arg15[%c38, %c0_50] : memref<324x8xf32, #tpu.memory_space<vmem>>, vector<286x8xf32>
    %94 = vector.extract_strided_slice %47 {offsets = [8, 0], sizes = [1, 8], strides = [1, 1]} : vector<9x8xf32> to vector<1x8xf32>
    %95 = vector.broadcast %94 : vector<1x8xf32> to vector<286x8xf32>
    %96 = arith.mulf %93, %95 : vector<286x8xf32>
    %97 = arith.addf %92, %96 : vector<286x8xf32>
    %98 = vector.broadcast %49 : vector<1x8xf32> to vector<286x8xf32>
    %99 = arith.addf %97, %98 : vector<286x8xf32>
    %cst_51 = arith.constant 0.000000e+00 : f32
    %100 = vector.broadcast %cst_51 : f32 to vector<286x8xf32>
    %101 = arith.cmpf oge, %99, %100 : vector<286x8xf32>
    %cst_52 = arith.constant 1.000000e-01 : f32
    %102 = vector.broadcast %cst_52 : f32 to vector<286x8xf32>
    %103 = arith.mulf %102, %99 : vector<286x8xf32>
    %104 = arith.select %101, %99, %103 : vector<286x8xi1>, vector<286x8xf32>
    %105 = arith.truncf %104 : vector<286x8xf32> to vector<286x8xbf16>
    %cst_53 = arith.constant dense<0.000000e+00> : vector<286x16xf32>
    %106 = tpu.matmul %105, %51, %cst_53 {dimension_numbers = #tpu.dot_dimension_numbers<[1], [0], [0], [1], [0, 0, 1, 1], [], []>} : vector<286x8xbf16>, vector<8x16xbf16>, vector<286x16xf32> -> vector<286x16xf32>
    %107 = vector.broadcast %53 : vector<1x16xf32> to vector<286x16xf32>
    %108 = arith.addf %106, %107 : vector<286x16xf32>
    %cst_54 = arith.constant 0.000000e+00 : f32
    %109 = vector.broadcast %cst_54 : f32 to vector<286x16xf32>
    %110 = arith.cmpf oge, %108, %109 : vector<286x16xf32>
    %cst_55 = arith.constant 1.000000e-01 : f32
    %111 = vector.broadcast %cst_55 : f32 to vector<286x16xf32>
    %112 = arith.mulf %111, %108 : vector<286x16xf32>
    %113 = arith.select %110, %108, %112 : vector<286x16xi1>, vector<286x16xf32>
    %cst_56 = arith.constant 0.000000e+00 : f32
    %114 = vector.broadcast %cst_56 : f32 to vector<324x16xf32>
    %c0_57 = arith.constant 0 : index
    %c0_58 = arith.constant 0 : index
    %115 = vector.load %arg16[%c0_57, %c0_58] : memref<324x16xf32, #tpu.memory_space<vmem>>, vector<324x16xf32>
    tpu.vector_store %arg16[%c0_57, %c0_58], %114 {strides = array<i32>} : memref<324x16xf32, #tpu.memory_space<vmem>>, vector<324x16xf32>,
    %116 = vector.extract_strided_slice %113 {offsets = [0, 0], sizes = [16, 16], strides = [1, 1]} : vector<286x16xf32> to vector<16x16xf32>
    %c19_59 = arith.constant 19 : index
    %c0_60 = arith.constant 0 : index
    %117 = vector.load %arg16[%c19_59, %c0_60] : memref<324x16xf32, #tpu.memory_space<vmem>>, vector<16x16xf32>
    tpu.vector_store %arg16[%c19_59, %c0_60], %116 {strides = array<i32>} : memref<324x16xf32, #tpu.memory_space<vmem>>, vector<16x16xf32>,
    %118 = vector.extract_strided_slice %113 {offsets = [18, 0], sizes = [16, 16], strides = [1, 1]} : vector<286x16xf32> to vector<16x16xf32>
    %c37_61 = arith.constant 37 : index
    %c0_62 = arith.constant 0 : index
    %119 = vector.load %arg16[%c37_61, %c0_62] : memref<324x16xf32, #tpu.memory_space<vmem>>, vector<16x16xf32>
    tpu.vector_store %arg16[%c37_61, %c0_62], %118 {strides = array<i32>} : memref<324x16xf32, #tpu.memory_space<vmem>>, vector<16x16xf32>,
    %120 = vector.extract_strided_slice %113 {offsets = [36, 0], sizes = [16, 16], strides = [1, 1]} : vector<286x16xf32> to vector<16x16xf32>
    %c55_63 = arith.constant 55 : index
    %c0_64 = arith.constant 0 : index
    %121 = vector.load %arg16[%c55_63, %c0_64] : memref<324x16xf32, #tpu.memory_space<vmem>>, vector<16x16xf32>
    tpu.vector_store %arg16[%c55_63, %c0_64], %120 {strides = array<i32>} : memref<324x16xf32, #tpu.memory_space<vmem>>, vector<16x16xf32>,
    %122 = vector.extract_strided_slice %113 {offsets = [54, 0], sizes = [16, 16], strides = [1, 1]} : vector<286x16xf32> to vector<16x16xf32>
    %c73_65 = arith.constant 73 : index
    %c0_66 = arith.constant 0 : index
    %123 = vector.load %arg16[%c73_65, %c0_66] : memref<324x16xf32, #tpu.memory_space<vmem>>, vector<16x16xf32>
    tpu.vector_store %arg16[%c73_65, %c0_66], %122 {strides = array<i32>} : memref<324x16xf32, #tpu.memory_space<vmem>>, vector<16x16xf32>,
    %124 = vector.extract_strided_slice %113 {offsets = [72, 0], sizes = [16, 16], strides = [1, 1]} : vector<286x16xf32> to vector<16x16xf32>
    %c91_67 = arith.constant 91 : index
    %c0_68 = arith.constant 0 : index
    %125 = vector.load %arg16[%c91_67, %c0_68] : memref<324x16xf32, #tpu.memory_space<vmem>>, vector<16x16xf32>
    tpu.vector_store %arg16[%c91_67, %c0_68], %124 {strides = array<i32>} : memref<324x16xf32, #tpu.memory_space<vmem>>, vector<16x16xf32>,
    %126 = vector.extract_strided_slice %113 {offsets = [90, 0], sizes = [16, 16], strides = [1, 1]} : vector<286x16xf32> to vector<16x16xf32>
    %c109_69 = arith.constant 109 : index
    %c0_70 = arith.constant 0 : index
    %127 = vector.load %arg16[%c109_69, %c0_70] : memref<324x16xf32, #tpu.memory_space<vmem>>, vector<16x16xf32>
    tpu.vector_store %arg16[%c109_69, %c0_70], %126 {strides = array<i32>} : memref<324x16xf32, #tpu.memory_space<vmem>>, vector<16x16xf32>,
    %128 = vector.extract_strided_slice %113 {offsets = [108, 0], sizes = [16, 16], strides = [1, 1]} : vector<286x16xf32> to vector<16x16xf32>
    %c127_71 = arith.constant 127 : index
    %c0_72 = arith.constant 0 : index
    %129 = vector.load %arg16[%c127_71, %c0_72] : memref<324x16xf32, #tpu.memory_space<vmem>>, vector<16x16xf32>
    tpu.vector_store %arg16[%c127_71, %c0_72], %128 {strides = array<i32>} : memref<324x16xf32, #tpu.memory_space<vmem>>, vector<16x16xf32>,
    %130 = vector.extract_strided_slice %113 {offsets = [126, 0], sizes = [16, 16], strides = [1, 1]} : vector<286x16xf32> to vector<16x16xf32>
    %c145_73 = arith.constant 145 : index
    %c0_74 = arith.constant 0 : index
    %131 = vector.load %arg16[%c145_73, %c0_74] : memref<324x16xf32, #tpu.memory_space<vmem>>, vector<16x16xf32>
    tpu.vector_store %arg16[%c145_73, %c0_74], %130 {strides = array<i32>} : memref<324x16xf32, #tpu.memory_space<vmem>>, vector<16x16xf32>,
    %132 = vector.extract_strided_slice %113 {offsets = [144, 0], sizes = [16, 16], strides = [1, 1]} : vector<286x16xf32> to vector<16x16xf32>
    %c163_75 = arith.constant 163 : index
    %c0_76 = arith.constant 0 : index
    %133 = vector.load %arg16[%c163_75, %c0_76] : memref<324x16xf32, #tpu.memory_space<vmem>>, vector<16x16xf32>
    tpu.vector_store %arg16[%c163_75, %c0_76], %132 {strides = array<i32>} : memref<324x16xf32, #tpu.memory_space<vmem>>, vector<16x16xf32>,
    %134 = vector.extract_strided_slice %113 {offsets = [162, 0], sizes = [16, 16], strides = [1, 1]} : vector<286x16xf32> to vector<16x16xf32>
    %c181_77 = arith.constant 181 : index
    %c0_78 = arith.constant 0 : index
    %135 = vector.load %arg16[%c181_77, %c0_78] : memref<324x16xf32, #tpu.memory_space<vmem>>, vector<16x16xf32>
    tpu.vector_store %arg16[%c181_77, %c0_78], %134 {strides = array<i32>} : memref<324x16xf32, #tpu.memory_space<vmem>>, vector<16x16xf32>,
    %136 = vector.extract_strided_slice %113 {offsets = [180, 0], sizes = [16, 16], strides = [1, 1]} : vector<286x16xf32> to vector<16x16xf32>
    %c199_79 = arith.constant 199 : index
    %c0_80 = arith.constant 0 : index
    %137 = vector.load %arg16[%c199_79, %c0_80] : memref<324x16xf32, #tpu.memory_space<vmem>>, vector<16x16xf32>
    tpu.vector_store %arg16[%c199_79, %c0_80], %136 {strides = array<i32>} : memref<324x16xf32, #tpu.memory_space<vmem>>, vector<16x16xf32>,
    %138 = vector.extract_strided_slice %113 {offsets = [198, 0], sizes = [16, 16], strides = [1, 1]} : vector<286x16xf32> to vector<16x16xf32>
    %c217_81 = arith.constant 217 : index
    %c0_82 = arith.constant 0 : index
    %139 = vector.load %arg16[%c217_81, %c0_82] : memref<324x16xf32, #tpu.memory_space<vmem>>, vector<16x16xf32>
    tpu.vector_store %arg16[%c217_81, %c0_82], %138 {strides = array<i32>} : memref<324x16xf32, #tpu.memory_space<vmem>>, vector<16x16xf32>,
    %140 = vector.extract_strided_slice %113 {offsets = [216, 0], sizes = [16, 16], strides = [1, 1]} : vector<286x16xf32> to vector<16x16xf32>
    %c235_83 = arith.constant 235 : index
    %c0_84 = arith.constant 0 : index
    %141 = vector.load %arg16[%c235_83, %c0_84] : memref<324x16xf32, #tpu.memory_space<vmem>>, vector<16x16xf32>
    tpu.vector_store %arg16[%c235_83, %c0_84], %140 {strides = array<i32>} : memref<324x16xf32, #tpu.memory_space<vmem>>, vector<16x16xf32>,
    %142 = vector.extract_strided_slice %113 {offsets = [234, 0], sizes = [16, 16], strides = [1, 1]} : vector<286x16xf32> to vector<16x16xf32>
    %c253_85 = arith.constant 253 : index
    %c0_86 = arith.constant 0 : index
    %143 = vector.load %arg16[%c253_85, %c0_86] : memref<324x16xf32, #tpu.memory_space<vmem>>, vector<16x16xf32>
    tpu.vector_store %arg16[%c253_85, %c0_86], %142 {strides = array<i32>} : memref<324x16xf32, #tpu.memory_space<vmem>>, vector<16x16xf32>,
    %144 = vector.extract_strided_slice %113 {offsets = [252, 0], sizes = [16, 16], strides = [1, 1]} : vector<286x16xf32> to vector<16x16xf32>
    %c271_87 = arith.constant 271 : index
    %c0_88 = arith.constant 0 : index
    %145 = vector.load %arg16[%c271_87, %c0_88] : memref<324x16xf32, #tpu.memory_space<vmem>>, vector<16x16xf32>
    tpu.vector_store %arg16[%c271_87, %c0_88], %144 {strides = array<i32>} : memref<324x16xf32, #tpu.memory_space<vmem>>, vector<16x16xf32>,
    %146 = vector.extract_strided_slice %113 {offsets = [270, 0], sizes = [16, 16], strides = [1, 1]} : vector<286x16xf32> to vector<16x16xf32>
    %c289_89 = arith.constant 289 : index
    %c0_90 = arith.constant 0 : index
    %147 = vector.load %arg16[%c289_89, %c0_90] : memref<324x16xf32, #tpu.memory_space<vmem>>, vector<16x16xf32>
    tpu.vector_store %arg16[%c289_89, %c0_90], %146 {strides = array<i32>} : memref<324x16xf32, #tpu.memory_space<vmem>>, vector<16x16xf32>,
    %c1_91 = arith.constant 1 : index
    %c0_92 = arith.constant 0 : index
    %c0_93 = arith.constant 0 : index
    %148 = vector.load %arg4[%c1_91, %c0_92, %c0_93] : memref<13x9x256xf32, #tpu.memory_space<vmem>>, vector<1x9x16xf32>
    %149 = vector.shape_cast %148 : vector<1x9x16xf32> to vector<9x16xf32>
    %c1_94 = arith.constant 1 : index
    %c0_95 = arith.constant 0 : index
    %c0_96 = arith.constant 0 : index
    %150 = vector.load %arg5[%c1_94, %c0_95, %c0_96] : memref<13x1x256xf32, #tpu.memory_space<vmem>>, vector<1x1x16xf32>
    %151 = vector.shape_cast %150 : vector<1x1x16xf32> to vector<1x16xf32>
    %c1_97 = arith.constant 1 : index
    %c0_98 = arith.constant 0 : index
    %c0_99 = arith.constant 0 : index
    %152 = vector.load %arg6[%c1_97, %c0_98, %c0_99] : memref<13x256x256xbf16, #tpu.memory_space<vmem>>, vector<1x16x32xbf16>
    %153 = vector.shape_cast %152 : vector<1x16x32xbf16> to vector<16x32xbf16>
    %c1_100 = arith.constant 1 : index
    %c0_101 = arith.constant 0 : index
    %c0_102 = arith.constant 0 : index
    %154 = vector.load %arg7[%c1_100, %c0_101, %c0_102] : memref<13x1x256xf32, #tpu.memory_space<vmem>>, vector<1x1x32xf32>
    %155 = vector.shape_cast %154 : vector<1x1x32xf32> to vector<1x32xf32>
    %c0_103 = arith.constant 0 : index
    %c0_104 = arith.constant 0 : index
    %156 = vector.load %arg16[%c0_103, %c0_104] : memref<324x16xf32, #tpu.memory_space<vmem>>, vector<286x16xf32>
    %157 = vector.extract_strided_slice %149 {offsets = [0, 0], sizes = [1, 16], strides = [1, 1]} : vector<9x16xf32> to vector<1x16xf32>
    %158 = vector.broadcast %157 : vector<1x16xf32> to vector<286x16xf32>
    %159 = arith.mulf %156, %158 : vector<286x16xf32>
    %c1_105 = arith.constant 1 : index
    %c0_106 = arith.constant 0 : index
    %160 = vector.load %arg16[%c1_105, %c0_106] : memref<324x16xf32, #tpu.memory_space<vmem>>, vector<286x16xf32>
    %161 = vector.extract_strided_slice %149 {offsets = [1, 0], sizes = [1, 16], strides = [1, 1]} : vector<9x16xf32> to vector<1x16xf32>
    %162 = vector.broadcast %161 : vector<1x16xf32> to vector<286x16xf32>
    %163 = arith.mulf %160, %162 : vector<286x16xf32>
    %164 = arith.addf %159, %163 : vector<286x16xf32>
    %c2_107 = arith.constant 2 : index
    %c0_108 = arith.constant 0 : index
    %165 = vector.load %arg16[%c2_107, %c0_108] : memref<324x16xf32, #tpu.memory_space<vmem>>, vector<286x16xf32>
    %166 = vector.extract_strided_slice %149 {offsets = [2, 0], sizes = [1, 16], strides = [1, 1]} : vector<9x16xf32> to vector<1x16xf32>
    %167 = vector.broadcast %166 : vector<1x16xf32> to vector<286x16xf32>
    %168 = arith.mulf %165, %167 : vector<286x16xf32>
    %169 = arith.addf %164, %168 : vector<286x16xf32>
    %c18_109 = arith.constant 18 : index
    %c0_110 = arith.constant 0 : index
    %170 = vector.load %arg16[%c18_109, %c0_110] : memref<324x16xf32, #tpu.memory_space<vmem>>, vector<286x16xf32>
    %171 = vector.extract_strided_slice %149 {offsets = [3, 0], sizes = [1, 16], strides = [1, 1]} : vector<9x16xf32> to vector<1x16xf32>
    %172 = vector.broadcast %171 : vector<1x16xf32> to vector<286x16xf32>
    %173 = arith.mulf %170, %172 : vector<286x16xf32>
    %174 = arith.addf %169, %173 : vector<286x16xf32>
    %c19_111 = arith.constant 19 : index
    %c0_112 = arith.constant 0 : index
    %175 = vector.load %arg16[%c19_111, %c0_112] : memref<324x16xf32, #tpu.memory_space<vmem>>, vector<286x16xf32>
    %176 = vector.extract_strided_slice %149 {offsets = [4, 0], sizes = [1, 16], strides = [1, 1]} : vector<9x16xf32> to vector<1x16xf32>
    %177 = vector.broadcast %176 : vector<1x16xf32> to vector<286x16xf32>
    %178 = arith.mulf %175, %177 : vector<286x16xf32>
    %179 = arith.addf %174, %178 : vector<286x16xf32>
    %c20_113 = arith.constant 20 : index
    %c0_114 = arith.constant 0 : index
    %180 = vector.load %arg16[%c20_113, %c0_114] : memref<324x16xf32, #tpu.memory_space<vmem>>, vector<286x16xf32>
    %181 = vector.extract_strided_slice %149 {offsets = [5, 0], sizes = [1, 16], strides = [1, 1]} : vector<9x16xf32> to vector<1x16xf32>
    %182 = vector.broadcast %181 : vector<1x16xf32> to vector<286x16xf32>
    %183 = arith.mulf %180, %182 : vector<286x16xf32>
    %184 = arith.addf %179, %183 : vector<286x16xf32>
    %c36_115 = arith.constant 36 : index
    %c0_116 = arith.constant 0 : index
    %185 = vector.load %arg16[%c36_115, %c0_116] : memref<324x16xf32, #tpu.memory_space<vmem>>, vector<286x16xf32>
    %186 = vector.extract_strided_slice %149 {offsets = [6, 0], sizes = [1, 16], strides = [1, 1]} : vector<9x16xf32> to vector<1x16xf32>
    %187 = vector.broadcast %186 : vector<1x16xf32> to vector<286x16xf32>
    %188 = arith.mulf %185, %187 : vector<286x16xf32>
    %189 = arith.addf %184, %188 : vector<286x16xf32>
    %c37_117 = arith.constant 37 : index
    %c0_118 = arith.constant 0 : index
    %190 = vector.load %arg16[%c37_117, %c0_118] : memref<324x16xf32, #tpu.memory_space<vmem>>, vector<286x16xf32>
    %191 = vector.extract_strided_slice %149 {offsets = [7, 0], sizes = [1, 16], strides = [1, 1]} : vector<9x16xf32> to vector<1x16xf32>
    %192 = vector.broadcast %191 : vector<1x16xf32> to vector<286x16xf32>
    %193 = arith.mulf %190, %192 : vector<286x16xf32>
    %194 = arith.addf %189, %193 : vector<286x16xf32>
    %c38_119 = arith.constant 38 : index
    %c0_120 = arith.constant 0 : index
    %195 = vector.load %arg16[%c38_119, %c0_120] : memref<324x16xf32, #tpu.memory_space<vmem>>, vector<286x16xf32>
    %196 = vector.extract_strided_slice %149 {offsets = [8, 0], sizes = [1, 16], strides = [1, 1]} : vector<9x16xf32> to vector<1x16xf32>
    %197 = vector.broadcast %196 : vector<1x16xf32> to vector<286x16xf32>
    %198 = arith.mulf %195, %197 : vector<286x16xf32>
    %199 = arith.addf %194, %198 : vector<286x16xf32>
    %200 = vector.broadcast %151 : vector<1x16xf32> to vector<286x16xf32>
    %201 = arith.addf %199, %200 : vector<286x16xf32>
    %cst_121 = arith.constant 0.000000e+00 : f32
    %202 = vector.broadcast %cst_121 : f32 to vector<286x16xf32>
    %203 = arith.cmpf oge, %201, %202 : vector<286x16xf32>
    %cst_122 = arith.constant 1.000000e-01 : f32
    %204 = vector.broadcast %cst_122 : f32 to vector<286x16xf32>
    %205 = arith.mulf %204, %201 : vector<286x16xf32>
    %206 = arith.select %203, %201, %205 : vector<286x16xi1>, vector<286x16xf32>
    %207 = arith.truncf %206 : vector<286x16xf32> to vector<286x16xbf16>
    %c0_123 = arith.constant 0 : index
    %c0_124 = arith.constant 0 : index
    %208 = vector.load %arg8[%c0_123, %c0_124] : memref<64x286xbf16, #tpu.memory_space<vmem>>, vector<64x286xbf16>
    %cst_125 = arith.constant dense<0.000000e+00> : vector<64x16xf32>
    %209 = tpu.matmul %208, %207, %cst_125 {dimension_numbers = #tpu.dot_dimension_numbers<[1], [0], [0], [1], [0, 0, 1, 1], [], []>} : vector<64x286xbf16>, vector<286x16xbf16>, vector<64x16xf32> -> vector<64x16xf32>
    %210 = arith.truncf %209 : vector<64x16xf32> to vector<64x16xbf16>
    %cst_126 = arith.constant dense<0.000000e+00> : vector<64x32xf32>
    %211 = tpu.matmul %210, %153, %cst_126 {dimension_numbers = #tpu.dot_dimension_numbers<[1], [0], [0], [1], [0, 0, 1, 1], [], []>} : vector<64x16xbf16>, vector<16x32xbf16>, vector<64x32xf32> -> vector<64x32xf32>
    %212 = vector.broadcast %155 : vector<1x32xf32> to vector<64x32xf32>
    %213 = arith.addf %211, %212 : vector<64x32xf32>
    %cst_127 = arith.constant 0.000000e+00 : f32
    %214 = vector.broadcast %cst_127 : f32 to vector<64x32xf32>
    %215 = arith.cmpf oge, %213, %214 : vector<64x32xf32>
    %cst_128 = arith.constant 1.000000e-01 : f32
    %216 = vector.broadcast %cst_128 : f32 to vector<64x32xf32>
    %217 = arith.mulf %216, %213 : vector<64x32xf32>
    %218 = arith.select %215, %213, %217 : vector<64x32xi1>, vector<64x32xf32>
    %cst_129 = arith.constant 0.000000e+00 : f32
    %219 = vector.broadcast %cst_129 : f32 to vector<100x32xf32>
    %c0_130 = arith.constant 0 : index
    %c0_131 = arith.constant 0 : index
    %220 = vector.load %arg17[%c0_130, %c0_131] : memref<100x32xf32, #tpu.memory_space<vmem>>, vector<100x32xf32>
    tpu.vector_store %arg17[%c0_130, %c0_131], %219 {strides = array<i32>} : memref<100x32xf32, #tpu.memory_space<vmem>>, vector<100x32xf32>,
    %221 = vector.extract_strided_slice %218 {offsets = [0, 0], sizes = [8, 32], strides = [1, 1]} : vector<64x32xf32> to vector<8x32xf32>
    %c11 = arith.constant 11 : index
    %c0_132 = arith.constant 0 : index
    %222 = vector.load %arg17[%c11, %c0_132] : memref<100x32xf32, #tpu.memory_space<vmem>>, vector<8x32xf32>
    tpu.vector_store %arg17[%c11, %c0_132], %221 {strides = array<i32>} : memref<100x32xf32, #tpu.memory_space<vmem>>, vector<8x32xf32>,
    %223 = vector.extract_strided_slice %218 {offsets = [8, 0], sizes = [8, 32], strides = [1, 1]} : vector<64x32xf32> to vector<8x32xf32>
    %c21 = arith.constant 21 : index
    %c0_133 = arith.constant 0 : index
    %224 = vector.load %arg17[%c21, %c0_133] : memref<100x32xf32, #tpu.memory_space<vmem>>, vector<8x32xf32>
    tpu.vector_store %arg17[%c21, %c0_133], %223 {strides = array<i32>} : memref<100x32xf32, #tpu.memory_space<vmem>>, vector<8x32xf32>,
    %225 = vector.extract_strided_slice %218 {offsets = [16, 0], sizes = [8, 32], strides = [1, 1]} : vector<64x32xf32> to vector<8x32xf32>
    %c31 = arith.constant 31 : index
    %c0_134 = arith.constant 0 : index
    %226 = vector.load %arg17[%c31, %c0_134] : memref<100x32xf32, #tpu.memory_space<vmem>>, vector<8x32xf32>
    tpu.vector_store %arg17[%c31, %c0_134], %225 {strides = array<i32>} : memref<100x32xf32, #tpu.memory_space<vmem>>, vector<8x32xf32>,
    %227 = vector.extract_strided_slice %218 {offsets = [24, 0], sizes = [8, 32], strides = [1, 1]} : vector<64x32xf32> to vector<8x32xf32>
    %c41 = arith.constant 41 : index
    %c0_135 = arith.constant 0 : index
    %228 = vector.load %arg17[%c41, %c0_135] : memref<100x32xf32, #tpu.memory_space<vmem>>, vector<8x32xf32>
    tpu.vector_store %arg17[%c41, %c0_135], %227 {strides = array<i32>} : memref<100x32xf32, #tpu.memory_space<vmem>>, vector<8x32xf32>,
    %229 = vector.extract_strided_slice %218 {offsets = [32, 0], sizes = [8, 32], strides = [1, 1]} : vector<64x32xf32> to vector<8x32xf32>
    %c51 = arith.constant 51 : index
    %c0_136 = arith.constant 0 : index
    %230 = vector.load %arg17[%c51, %c0_136] : memref<100x32xf32, #tpu.memory_space<vmem>>, vector<8x32xf32>
    tpu.vector_store %arg17[%c51, %c0_136], %229 {strides = array<i32>} : memref<100x32xf32, #tpu.memory_space<vmem>>, vector<8x32xf32>,
    %231 = vector.extract_strided_slice %218 {offsets = [40, 0], sizes = [8, 32], strides = [1, 1]} : vector<64x32xf32> to vector<8x32xf32>
    %c61 = arith.constant 61 : index
    %c0_137 = arith.constant 0 : index
    %232 = vector.load %arg17[%c61, %c0_137] : memref<100x32xf32, #tpu.memory_space<vmem>>, vector<8x32xf32>
    tpu.vector_store %arg17[%c61, %c0_137], %231 {strides = array<i32>} : memref<100x32xf32, #tpu.memory_space<vmem>>, vector<8x32xf32>,
    %233 = vector.extract_strided_slice %218 {offsets = [48, 0], sizes = [8, 32], strides = [1, 1]} : vector<64x32xf32> to vector<8x32xf32>
    %c71 = arith.constant 71 : index
    %c0_138 = arith.constant 0 : index
    %234 = vector.load %arg17[%c71, %c0_138] : memref<100x32xf32, #tpu.memory_space<vmem>>, vector<8x32xf32>
    tpu.vector_store %arg17[%c71, %c0_138], %233 {strides = array<i32>} : memref<100x32xf32, #tpu.memory_space<vmem>>, vector<8x32xf32>,
    %235 = vector.extract_strided_slice %218 {offsets = [56, 0], sizes = [8, 32], strides = [1, 1]} : vector<64x32xf32> to vector<8x32xf32>
    %c81 = arith.constant 81 : index
    %c0_139 = arith.constant 0 : index
    %236 = vector.load %arg17[%c81, %c0_139] : memref<100x32xf32, #tpu.memory_space<vmem>>, vector<8x32xf32>
    tpu.vector_store %arg17[%c81, %c0_139], %235 {strides = array<i32>} : memref<100x32xf32, #tpu.memory_space<vmem>>, vector<8x32xf32>,
    %c2_140 = arith.constant 2 : index
    %c0_141 = arith.constant 0 : index
    %c0_142 = arith.constant 0 : index
    %237 = vector.load %arg4[%c2_140, %c0_141, %c0_142] : memref<13x9x256xf32, #tpu.memory_space<vmem>>, vector<1x9x32xf32>
    %238 = vector.shape_cast %237 : vector<1x9x32xf32> to vector<9x32xf32>
    %c2_143 = arith.constant 2 : index
    %c0_144 = arith.constant 0 : index
    %c0_145 = arith.constant 0 : index
    %239 = vector.load %arg5[%c2_143, %c0_144, %c0_145] : memref<13x1x256xf32, #tpu.memory_space<vmem>>, vector<1x1x32xf32>
    %240 = vector.shape_cast %239 : vector<1x1x32xf32> to vector<1x32xf32>
    %c2_146 = arith.constant 2 : index
    %c0_147 = arith.constant 0 : index
    %c0_148 = arith.constant 0 : index
    %241 = vector.load %arg6[%c2_146, %c0_147, %c0_148] : memref<13x256x256xbf16, #tpu.memory_space<vmem>>, vector<1x32x32xbf16>
    %242 = vector.shape_cast %241 : vector<1x32x32xbf16> to vector<32x32xbf16>
    %c2_149 = arith.constant 2 : index
    %c0_150 = arith.constant 0 : index
    %c0_151 = arith.constant 0 : index
    %243 = vector.load %arg7[%c2_149, %c0_150, %c0_151] : memref<13x1x256xf32, #tpu.memory_space<vmem>>, vector<1x1x32xf32>
    %244 = vector.shape_cast %243 : vector<1x1x32xf32> to vector<1x32xf32>
    %c0_152 = arith.constant 0 : index
    %c0_153 = arith.constant 0 : index
    %245 = vector.load %arg17[%c0_152, %c0_153] : memref<100x32xf32, #tpu.memory_space<vmem>>, vector<78x32xf32>
    %246 = vector.extract_strided_slice %238 {offsets = [0, 0], sizes = [1, 32], strides = [1, 1]} : vector<9x32xf32> to vector<1x32xf32>
    %247 = vector.broadcast %246 : vector<1x32xf32> to vector<78x32xf32>
    %248 = arith.mulf %245, %247 : vector<78x32xf32>
    %c1_154 = arith.constant 1 : index
    %c0_155 = arith.constant 0 : index
    %249 = vector.load %arg17[%c1_154, %c0_155] : memref<100x32xf32, #tpu.memory_space<vmem>>, vector<78x32xf32>
    %250 = vector.extract_strided_slice %238 {offsets = [1, 0], sizes = [1, 32], strides = [1, 1]} : vector<9x32xf32> to vector<1x32xf32>
    %251 = vector.broadcast %250 : vector<1x32xf32> to vector<78x32xf32>
    %252 = arith.mulf %249, %251 : vector<78x32xf32>
    %253 = arith.addf %248, %252 : vector<78x32xf32>
    %c2_156 = arith.constant 2 : index
    %c0_157 = arith.constant 0 : index
    %254 = vector.load %arg17[%c2_156, %c0_157] : memref<100x32xf32, #tpu.memory_space<vmem>>, vector<78x32xf32>
    %255 = vector.extract_strided_slice %238 {offsets = [2, 0], sizes = [1, 32], strides = [1, 1]} : vector<9x32xf32> to vector<1x32xf32>
    %256 = vector.broadcast %255 : vector<1x32xf32> to vector<78x32xf32>
    %257 = arith.mulf %254, %256 : vector<78x32xf32>
    %258 = arith.addf %253, %257 : vector<78x32xf32>
    %c10 = arith.constant 10 : index
    %c0_158 = arith.constant 0 : index
    %259 = vector.load %arg17[%c10, %c0_158] : memref<100x32xf32, #tpu.memory_space<vmem>>, vector<78x32xf32>
    %260 = vector.extract_strided_slice %238 {offsets = [3, 0], sizes = [1, 32], strides = [1, 1]} : vector<9x32xf32> to vector<1x32xf32>
    %261 = vector.broadcast %260 : vector<1x32xf32> to vector<78x32xf32>
    %262 = arith.mulf %259, %261 : vector<78x32xf32>
    %263 = arith.addf %258, %262 : vector<78x32xf32>
    %c11_159 = arith.constant 11 : index
    %c0_160 = arith.constant 0 : index
    %264 = vector.load %arg17[%c11_159, %c0_160] : memref<100x32xf32, #tpu.memory_space<vmem>>, vector<78x32xf32>
    %265 = vector.extract_strided_slice %238 {offsets = [4, 0], sizes = [1, 32], strides = [1, 1]} : vector<9x32xf32> to vector<1x32xf32>
    %266 = vector.broadcast %265 : vector<1x32xf32> to vector<78x32xf32>
    %267 = arith.mulf %264, %266 : vector<78x32xf32>
    %268 = arith.addf %263, %267 : vector<78x32xf32>
    %c12 = arith.constant 12 : index
    %c0_161 = arith.constant 0 : index
    %269 = vector.load %arg17[%c12, %c0_161] : memref<100x32xf32, #tpu.memory_space<vmem>>, vector<78x32xf32>
    %270 = vector.extract_strided_slice %238 {offsets = [5, 0], sizes = [1, 32], strides = [1, 1]} : vector<9x32xf32> to vector<1x32xf32>
    %271 = vector.broadcast %270 : vector<1x32xf32> to vector<78x32xf32>
    %272 = arith.mulf %269, %271 : vector<78x32xf32>
    %273 = arith.addf %268, %272 : vector<78x32xf32>
    %c20_162 = arith.constant 20 : index
    %c0_163 = arith.constant 0 : index
    %274 = vector.load %arg17[%c20_162, %c0_163] : memref<100x32xf32, #tpu.memory_space<vmem>>, vector<78x32xf32>
    %275 = vector.extract_strided_slice %238 {offsets = [6, 0], sizes = [1, 32], strides = [1, 1]} : vector<9x32xf32> to vector<1x32xf32>
    %276 = vector.broadcast %275 : vector<1x32xf32> to vector<78x32xf32>
    %277 = arith.mulf %274, %276 : vector<78x32xf32>
    %278 = arith.addf %273, %277 : vector<78x32xf32>
    %c21_164 = arith.constant 21 : index
    %c0_165 = arith.constant 0 : index
    %279 = vector.load %arg17[%c21_164, %c0_165] : memref<100x32xf32, #tpu.memory_space<vmem>>, vector<78x32xf32>
    %280 = vector.extract_strided_slice %238 {offsets = [7, 0], sizes = [1, 32], strides = [1, 1]} : vector<9x32xf32> to vector<1x32xf32>
    %281 = vector.broadcast %280 : vector<1x32xf32> to vector<78x32xf32>
    %282 = arith.mulf %279, %281 : vector<78x32xf32>
    %283 = arith.addf %278, %282 : vector<78x32xf32>
    %c22 = arith.constant 22 : index
    %c0_166 = arith.constant 0 : index
    %284 = vector.load %arg17[%c22, %c0_166] : memref<100x32xf32, #tpu.memory_space<vmem>>, vector<78x32xf32>
    %285 = vector.extract_strided_slice %238 {offsets = [8, 0], sizes = [1, 32], strides = [1, 1]} : vector<9x32xf32> to vector<1x32xf32>
    %286 = vector.broadcast %285 : vector<1x32xf32> to vector<78x32xf32>
    %287 = arith.mulf %284, %286 : vector<78x32xf32>
    %288 = arith.addf %283, %287 : vector<78x32xf32>
    %289 = vector.broadcast %240 : vector<1x32xf32> to vector<78x32xf32>
    %290 = arith.addf %288, %289 : vector<78x32xf32>
    %cst_167 = arith.constant 0.000000e+00 : f32
    %291 = vector.broadcast %cst_167 : f32 to vector<78x32xf32>
    %292 = arith.cmpf oge, %290, %291 : vector<78x32xf32>
    %cst_168 = arith.constant 1.000000e-01 : f32
    %293 = vector.broadcast %cst_168 : f32 to vector<78x32xf32>
    %294 = arith.mulf %293, %290 : vector<78x32xf32>
    %295 = arith.select %292, %290, %294 : vector<78x32xi1>, vector<78x32xf32>
    %296 = arith.truncf %295 : vector<78x32xf32> to vector<78x32xbf16>
    %cst_169 = arith.constant dense<0.000000e+00> : vector<78x32xf32>
    %297 = tpu.matmul %296, %242, %cst_169 {dimension_numbers = #tpu.dot_dimension_numbers<[1], [0], [0], [1], [0, 0, 1, 1], [], []>} : vector<78x32xbf16>, vector<32x32xbf16>, vector<78x32xf32> -> vector<78x32xf32>
    %298 = vector.broadcast %244 : vector<1x32xf32> to vector<78x32xf32>
    %299 = arith.addf %297, %298 : vector<78x32xf32>
    %cst_170 = arith.constant 0.000000e+00 : f32
    %300 = vector.broadcast %cst_170 : f32 to vector<78x32xf32>
    %301 = arith.cmpf oge, %299, %300 : vector<78x32xf32>
    %cst_171 = arith.constant 1.000000e-01 : f32
    %302 = vector.broadcast %cst_171 : f32 to vector<78x32xf32>
    %303 = arith.mulf %302, %299 : vector<78x32xf32>
    %304 = arith.select %301, %299, %303 : vector<78x32xi1>, vector<78x32xf32>
    %cst_172 = arith.constant 0.000000e+00 : f32
    %305 = vector.broadcast %cst_172 : f32 to vector<100x32xf32>
    %c0_173 = arith.constant 0 : index
    %c0_174 = arith.constant 0 : index
    %306 = vector.load %arg18[%c0_173, %c0_174] : memref<100x32xf32, #tpu.memory_space<vmem>>, vector<100x32xf32>
    tpu.vector_store %arg18[%c0_173, %c0_174], %305 {strides = array<i32>} : memref<100x32xf32, #tpu.memory_space<vmem>>, vector<100x32xf32>,
    %307 = vector.extract_strided_slice %304 {offsets = [0, 0], sizes = [8, 32], strides = [1, 1]} : vector<78x32xf32> to vector<8x32xf32>
    %c11_175 = arith.constant 11 : index
    %c0_176 = arith.constant 0 : index
    %308 = vector.load %arg18[%c11_175, %c0_176] : memref<100x32xf32, #tpu.memory_space<vmem>>, vector<8x32xf32>
    tpu.vector_store %arg18[%c11_175, %c0_176], %307 {strides = array<i32>} : memref<100x32xf32, #tpu.memory_space<vmem>>, vector<8x32xf32>,
    %309 = vector.extract_strided_slice %304 {offsets = [10, 0], sizes = [8, 32], strides = [1, 1]} : vector<78x32xf32> to vector<8x32xf32>
    %c21_177 = arith.constant 21 : index
    %c0_178 = arith.constant 0 : index
    %310 = vector.load %arg18[%c21_177, %c0_178] : memref<100x32xf32, #tpu.memory_space<vmem>>, vector<8x32xf32>
    tpu.vector_store %arg18[%c21_177, %c0_178], %309 {strides = array<i32>} : memref<100x32xf32, #tpu.memory_space<vmem>>, vector<8x32xf32>,
    %311 = vector.extract_strided_slice %304 {offsets = [20, 0], sizes = [8, 32], strides = [1, 1]} : vector<78x32xf32> to vector<8x32xf32>
    %c31_179 = arith.constant 31 : index
    %c0_180 = arith.constant 0 : index
    %312 = vector.load %arg18[%c31_179, %c0_180] : memref<100x32xf32, #tpu.memory_space<vmem>>, vector<8x32xf32>
    tpu.vector_store %arg18[%c31_179, %c0_180], %311 {strides = array<i32>} : memref<100x32xf32, #tpu.memory_space<vmem>>, vector<8x32xf32>,
    %313 = vector.extract_strided_slice %304 {offsets = [30, 0], sizes = [8, 32], strides = [1, 1]} : vector<78x32xf32> to vector<8x32xf32>
    %c41_181 = arith.constant 41 : index
    %c0_182 = arith.constant 0 : index
    %314 = vector.load %arg18[%c41_181, %c0_182] : memref<100x32xf32, #tpu.memory_space<vmem>>, vector<8x32xf32>
    tpu.vector_store %arg18[%c41_181, %c0_182], %313 {strides = array<i32>} : memref<100x32xf32, #tpu.memory_space<vmem>>, vector<8x32xf32>,
    %315 = vector.extract_strided_slice %304 {offsets = [40, 0], sizes = [8, 32], strides = [1, 1]} : vector<78x32xf32> to vector<8x32xf32>
    %c51_183 = arith.constant 51 : index
    %c0_184 = arith.constant 0 : index
    %316 = vector.load %arg18[%c51_183, %c0_184] : memref<100x32xf32, #tpu.memory_space<vmem>>, vector<8x32xf32>
    tpu.vector_store %arg18[%c51_183, %c0_184], %315 {strides = array<i32>} : memref<100x32xf32, #tpu.memory_space<vmem>>, vector<8x32xf32>,
    %317 = vector.extract_strided_slice %304 {offsets = [50, 0], sizes = [8, 32], strides = [1, 1]} : vector<78x32xf32> to vector<8x32xf32>
    %c61_185 = arith.constant 61 : index
    %c0_186 = arith.constant 0 : index
    %318 = vector.load %arg18[%c61_185, %c0_186] : memref<100x32xf32, #tpu.memory_space<vmem>>, vector<8x32xf32>
    tpu.vector_store %arg18[%c61_185, %c0_186], %317 {strides = array<i32>} : memref<100x32xf32, #tpu.memory_space<vmem>>, vector<8x32xf32>,
    %319 = vector.extract_strided_slice %304 {offsets = [60, 0], sizes = [8, 32], strides = [1, 1]} : vector<78x32xf32> to vector<8x32xf32>
    %c71_187 = arith.constant 71 : index
    %c0_188 = arith.constant 0 : index
    %320 = vector.load %arg18[%c71_187, %c0_188] : memref<100x32xf32, #tpu.memory_space<vmem>>, vector<8x32xf32>
    tpu.vector_store %arg18[%c71_187, %c0_188], %319 {strides = array<i32>} : memref<100x32xf32, #tpu.memory_space<vmem>>, vector<8x32xf32>,
    %321 = vector.extract_strided_slice %304 {offsets = [70, 0], sizes = [8, 32], strides = [1, 1]} : vector<78x32xf32> to vector<8x32xf32>
    %c81_189 = arith.constant 81 : index
    %c0_190 = arith.constant 0 : index
    %322 = vector.load %arg18[%c81_189, %c0_190] : memref<100x32xf32, #tpu.memory_space<vmem>>, vector<8x32xf32>
    tpu.vector_store %arg18[%c81_189, %c0_190], %321 {strides = array<i32>} : memref<100x32xf32, #tpu.memory_space<vmem>>, vector<8x32xf32>,
    %c3 = arith.constant 3 : index
    %c0_191 = arith.constant 0 : index
    %c0_192 = arith.constant 0 : index
    %323 = vector.load %arg4[%c3, %c0_191, %c0_192] : memref<13x9x256xf32, #tpu.memory_space<vmem>>, vector<1x9x32xf32>
    %324 = vector.shape_cast %323 : vector<1x9x32xf32> to vector<9x32xf32>
    %c3_193 = arith.constant 3 : index
    %c0_194 = arith.constant 0 : index
    %c0_195 = arith.constant 0 : index
    %325 = vector.load %arg5[%c3_193, %c0_194, %c0_195] : memref<13x1x256xf32, #tpu.memory_space<vmem>>, vector<1x1x32xf32>
    %326 = vector.shape_cast %325 : vector<1x1x32xf32> to vector<1x32xf32>
    %c3_196 = arith.constant 3 : index
    %c0_197 = arith.constant 0 : index
    %c0_198 = arith.constant 0 : index
    %327 = vector.load %arg6[%c3_196, %c0_197, %c0_198] : memref<13x256x256xbf16, #tpu.memory_space<vmem>>, vector<1x32x64xbf16>
    %328 = vector.shape_cast %327 : vector<1x32x64xbf16> to vector<32x64xbf16>
    %c3_199 = arith.constant 3 : index
    %c0_200 = arith.constant 0 : index
    %c0_201 = arith.constant 0 : index
    %329 = vector.load %arg7[%c3_199, %c0_200, %c0_201] : memref<13x1x256xf32, #tpu.memory_space<vmem>>, vector<1x1x64xf32>
    %330 = vector.shape_cast %329 : vector<1x1x64xf32> to vector<1x64xf32>
    %c0_202 = arith.constant 0 : index
    %c0_203 = arith.constant 0 : index
    %331 = vector.load %arg18[%c0_202, %c0_203] : memref<100x32xf32, #tpu.memory_space<vmem>>, vector<78x32xf32>
    %332 = vector.extract_strided_slice %324 {offsets = [0, 0], sizes = [1, 32], strides = [1, 1]} : vector<9x32xf32> to vector<1x32xf32>
    %333 = vector.broadcast %332 : vector<1x32xf32> to vector<78x32xf32>
    %334 = arith.mulf %331, %333 : vector<78x32xf32>
    %c1_204 = arith.constant 1 : index
    %c0_205 = arith.constant 0 : index
    %335 = vector.load %arg18[%c1_204, %c0_205] : memref<100x32xf32, #tpu.memory_space<vmem>>, vector<78x32xf32>
    %336 = vector.extract_strided_slice %324 {offsets = [1, 0], sizes = [1, 32], strides = [1, 1]} : vector<9x32xf32> to vector<1x32xf32>
    %337 = vector.broadcast %336 : vector<1x32xf32> to vector<78x32xf32>
    %338 = arith.mulf %335, %337 : vector<78x32xf32>
    %339 = arith.addf %334, %338 : vector<78x32xf32>
    %c2_206 = arith.constant 2 : index
    %c0_207 = arith.constant 0 : index
    %340 = vector.load %arg18[%c2_206, %c0_207] : memref<100x32xf32, #tpu.memory_space<vmem>>, vector<78x32xf32>
    %341 = vector.extract_strided_slice %324 {offsets = [2, 0], sizes = [1, 32], strides = [1, 1]} : vector<9x32xf32> to vector<1x32xf32>
    %342 = vector.broadcast %341 : vector<1x32xf32> to vector<78x32xf32>
    %343 = arith.mulf %340, %342 : vector<78x32xf32>
    %344 = arith.addf %339, %343 : vector<78x32xf32>
    %c10_208 = arith.constant 10 : index
    %c0_209 = arith.constant 0 : index
    %345 = vector.load %arg18[%c10_208, %c0_209] : memref<100x32xf32, #tpu.memory_space<vmem>>, vector<78x32xf32>
    %346 = vector.extract_strided_slice %324 {offsets = [3, 0], sizes = [1, 32], strides = [1, 1]} : vector<9x32xf32> to vector<1x32xf32>
    %347 = vector.broadcast %346 : vector<1x32xf32> to vector<78x32xf32>
    %348 = arith.mulf %345, %347 : vector<78x32xf32>
    %349 = arith.addf %344, %348 : vector<78x32xf32>
    %c11_210 = arith.constant 11 : index
    %c0_211 = arith.constant 0 : index
    %350 = vector.load %arg18[%c11_210, %c0_211] : memref<100x32xf32, #tpu.memory_space<vmem>>, vector<78x32xf32>
    %351 = vector.extract_strided_slice %324 {offsets = [4, 0], sizes = [1, 32], strides = [1, 1]} : vector<9x32xf32> to vector<1x32xf32>
    %352 = vector.broadcast %351 : vector<1x32xf32> to vector<78x32xf32>
    %353 = arith.mulf %350, %352 : vector<78x32xf32>
    %354 = arith.addf %349, %353 : vector<78x32xf32>
    %c12_212 = arith.constant 12 : index
    %c0_213 = arith.constant 0 : index
    %355 = vector.load %arg18[%c12_212, %c0_213] : memref<100x32xf32, #tpu.memory_space<vmem>>, vector<78x32xf32>
    %356 = vector.extract_strided_slice %324 {offsets = [5, 0], sizes = [1, 32], strides = [1, 1]} : vector<9x32xf32> to vector<1x32xf32>
    %357 = vector.broadcast %356 : vector<1x32xf32> to vector<78x32xf32>
    %358 = arith.mulf %355, %357 : vector<78x32xf32>
    %359 = arith.addf %354, %358 : vector<78x32xf32>
    %c20_214 = arith.constant 20 : index
    %c0_215 = arith.constant 0 : index
    %360 = vector.load %arg18[%c20_214, %c0_215] : memref<100x32xf32, #tpu.memory_space<vmem>>, vector<78x32xf32>
    %361 = vector.extract_strided_slice %324 {offsets = [6, 0], sizes = [1, 32], strides = [1, 1]} : vector<9x32xf32> to vector<1x32xf32>
    %362 = vector.broadcast %361 : vector<1x32xf32> to vector<78x32xf32>
    %363 = arith.mulf %360, %362 : vector<78x32xf32>
    %364 = arith.addf %359, %363 : vector<78x32xf32>
    %c21_216 = arith.constant 21 : index
    %c0_217 = arith.constant 0 : index
    %365 = vector.load %arg18[%c21_216, %c0_217] : memref<100x32xf32, #tpu.memory_space<vmem>>, vector<78x32xf32>
    %366 = vector.extract_strided_slice %324 {offsets = [7, 0], sizes = [1, 32], strides = [1, 1]} : vector<9x32xf32> to vector<1x32xf32>
    %367 = vector.broadcast %366 : vector<1x32xf32> to vector<78x32xf32>
    %368 = arith.mulf %365, %367 : vector<78x32xf32>
    %369 = arith.addf %364, %368 : vector<78x32xf32>
    %c22_218 = arith.constant 22 : index
    %c0_219 = arith.constant 0 : index
    %370 = vector.load %arg18[%c22_218, %c0_219] : memref<100x32xf32, #tpu.memory_space<vmem>>, vector<78x32xf32>
    %371 = vector.extract_strided_slice %324 {offsets = [8, 0], sizes = [1, 32], strides = [1, 1]} : vector<9x32xf32> to vector<1x32xf32>
    %372 = vector.broadcast %371 : vector<1x32xf32> to vector<78x32xf32>
    %373 = arith.mulf %370, %372 : vector<78x32xf32>
    %374 = arith.addf %369, %373 : vector<78x32xf32>
    %375 = vector.broadcast %326 : vector<1x32xf32> to vector<78x32xf32>
    %376 = arith.addf %374, %375 : vector<78x32xf32>
    %cst_220 = arith.constant 0.000000e+00 : f32
    %377 = vector.broadcast %cst_220 : f32 to vector<78x32xf32>
    %378 = arith.cmpf oge, %376, %377 : vector<78x32xf32>
    %cst_221 = arith.constant 1.000000e-01 : f32
    %379 = vector.broadcast %cst_221 : f32 to vector<78x32xf32>
    %380 = arith.mulf %379, %376 : vector<78x32xf32>
    %381 = arith.select %378, %376, %380 : vector<78x32xi1>, vector<78x32xf32>
    %382 = arith.truncf %381 : vector<78x32xf32> to vector<78x32xbf16>
    %c0_222 = arith.constant 0 : index
    %c0_223 = arith.constant 0 : index
    %383 = vector.load %arg9[%c0_222, %c0_223] : memref<16x78xbf16, #tpu.memory_space<vmem>>, vector<16x78xbf16>
    %cst_224 = arith.constant dense<0.000000e+00> : vector<16x32xf32>
    %384 = tpu.matmul %383, %382, %cst_224 {dimension_numbers = #tpu.dot_dimension_numbers<[1], [0], [0], [1], [0, 0, 1, 1], [], []>} : vector<16x78xbf16>, vector<78x32xbf16>, vector<16x32xf32> -> vector<16x32xf32>
    %385 = arith.truncf %384 : vector<16x32xf32> to vector<16x32xbf16>
    %cst_225 = arith.constant dense<0.000000e+00> : vector<16x64xf32>
    %386 = tpu.matmul %385, %328, %cst_225 {dimension_numbers = #tpu.dot_dimension_numbers<[1], [0], [0], [1], [0, 0, 1, 1], [], []>} : vector<16x32xbf16>, vector<32x64xbf16>, vector<16x64xf32> -> vector<16x64xf32>
    %387 = vector.broadcast %330 : vector<1x64xf32> to vector<16x64xf32>
    %388 = arith.addf %386, %387 : vector<16x64xf32>
    %cst_226 = arith.constant 0.000000e+00 : f32
    %389 = vector.broadcast %cst_226 : f32 to vector<16x64xf32>
    %390 = arith.cmpf oge, %388, %389 : vector<16x64xf32>
    %cst_227 = arith.constant 1.000000e-01 : f32
    %391 = vector.broadcast %cst_227 : f32 to vector<16x64xf32>
    %392 = arith.mulf %391, %388 : vector<16x64xf32>
    %393 = arith.select %390, %388, %392 : vector<16x64xi1>, vector<16x64xf32>
    %cst_228 = arith.constant 0.000000e+00 : f32
    %394 = vector.broadcast %cst_228 : f32 to vector<36x64xf32>
    %c0_229 = arith.constant 0 : index
    %c0_230 = arith.constant 0 : index
    %395 = vector.load %arg19[%c0_229, %c0_230] : memref<36x64xf32, #tpu.memory_space<vmem>>, vector<36x64xf32>
    tpu.vector_store %arg19[%c0_229, %c0_230], %394 {strides = array<i32>} : memref<36x64xf32, #tpu.memory_space<vmem>>, vector<36x64xf32>,
    %396 = vector.extract_strided_slice %393 {offsets = [0, 0], sizes = [4, 64], strides = [1, 1]} : vector<16x64xf32> to vector<4x64xf32>
    %c7 = arith.constant 7 : index
    %c0_231 = arith.constant 0 : index
    %397 = vector.load %arg19[%c7, %c0_231] : memref<36x64xf32, #tpu.memory_space<vmem>>, vector<4x64xf32>
    tpu.vector_store %arg19[%c7, %c0_231], %396 {strides = array<i32>} : memref<36x64xf32, #tpu.memory_space<vmem>>, vector<4x64xf32>,
    %398 = vector.extract_strided_slice %393 {offsets = [4, 0], sizes = [4, 64], strides = [1, 1]} : vector<16x64xf32> to vector<4x64xf32>
    %c13 = arith.constant 13 : index
    %c0_232 = arith.constant 0 : index
    %399 = vector.load %arg19[%c13, %c0_232] : memref<36x64xf32, #tpu.memory_space<vmem>>, vector<4x64xf32>
    tpu.vector_store %arg19[%c13, %c0_232], %398 {strides = array<i32>} : memref<36x64xf32, #tpu.memory_space<vmem>>, vector<4x64xf32>,
    %400 = vector.extract_strided_slice %393 {offsets = [8, 0], sizes = [4, 64], strides = [1, 1]} : vector<16x64xf32> to vector<4x64xf32>
    %c19_233 = arith.constant 19 : index
    %c0_234 = arith.constant 0 : index
    %401 = vector.load %arg19[%c19_233, %c0_234] : memref<36x64xf32, #tpu.memory_space<vmem>>, vector<4x64xf32>
    tpu.vector_store %arg19[%c19_233, %c0_234], %400 {strides = array<i32>} : memref<36x64xf32, #tpu.memory_space<vmem>>, vector<4x64xf32>,
    %402 = vector.extract_strided_slice %393 {offsets = [12, 0], sizes = [4, 64], strides = [1, 1]} : vector<16x64xf32> to vector<4x64xf32>
    %c25 = arith.constant 25 : index
    %c0_235 = arith.constant 0 : index
    %403 = vector.load %arg19[%c25, %c0_235] : memref<36x64xf32, #tpu.memory_space<vmem>>, vector<4x64xf32>
    tpu.vector_store %arg19[%c25, %c0_235], %402 {strides = array<i32>} : memref<36x64xf32, #tpu.memory_space<vmem>>, vector<4x64xf32>,
    %c4 = arith.constant 4 : index
    %c0_236 = arith.constant 0 : index
    %c0_237 = arith.constant 0 : index
    %404 = vector.load %arg4[%c4, %c0_236, %c0_237] : memref<13x9x256xf32, #tpu.memory_space<vmem>>, vector<1x9x64xf32>
    %405 = vector.shape_cast %404 : vector<1x9x64xf32> to vector<9x64xf32>
    %c4_238 = arith.constant 4 : index
    %c0_239 = arith.constant 0 : index
    %c0_240 = arith.constant 0 : index
    %406 = vector.load %arg5[%c4_238, %c0_239, %c0_240] : memref<13x1x256xf32, #tpu.memory_space<vmem>>, vector<1x1x64xf32>
    %407 = vector.shape_cast %406 : vector<1x1x64xf32> to vector<1x64xf32>
    %c4_241 = arith.constant 4 : index
    %c0_242 = arith.constant 0 : index
    %c0_243 = arith.constant 0 : index
    %408 = vector.load %arg6[%c4_241, %c0_242, %c0_243] : memref<13x256x256xbf16, #tpu.memory_space<vmem>>, vector<1x64x64xbf16>
    %409 = vector.shape_cast %408 : vector<1x64x64xbf16> to vector<64x64xbf16>
    %c4_244 = arith.constant 4 : index
    %c0_245 = arith.constant 0 : index
    %c0_246 = arith.constant 0 : index
    %410 = vector.load %arg7[%c4_244, %c0_245, %c0_246] : memref<13x1x256xf32, #tpu.memory_space<vmem>>, vector<1x1x64xf32>
    %411 = vector.shape_cast %410 : vector<1x1x64xf32> to vector<1x64xf32>
    %c0_247 = arith.constant 0 : index
    %c0_248 = arith.constant 0 : index
    %412 = vector.load %arg19[%c0_247, %c0_248] : memref<36x64xf32, #tpu.memory_space<vmem>>, vector<22x64xf32>
    %413 = vector.extract_strided_slice %405 {offsets = [0, 0], sizes = [1, 64], strides = [1, 1]} : vector<9x64xf32> to vector<1x64xf32>
    %414 = vector.broadcast %413 : vector<1x64xf32> to vector<22x64xf32>
    %415 = arith.mulf %412, %414 : vector<22x64xf32>
    %c1_249 = arith.constant 1 : index
    %c0_250 = arith.constant 0 : index
    %416 = vector.load %arg19[%c1_249, %c0_250] : memref<36x64xf32, #tpu.memory_space<vmem>>, vector<22x64xf32>
    %417 = vector.extract_strided_slice %405 {offsets = [1, 0], sizes = [1, 64], strides = [1, 1]} : vector<9x64xf32> to vector<1x64xf32>
    %418 = vector.broadcast %417 : vector<1x64xf32> to vector<22x64xf32>
    %419 = arith.mulf %416, %418 : vector<22x64xf32>
    %420 = arith.addf %415, %419 : vector<22x64xf32>
    %c2_251 = arith.constant 2 : index
    %c0_252 = arith.constant 0 : index
    %421 = vector.load %arg19[%c2_251, %c0_252] : memref<36x64xf32, #tpu.memory_space<vmem>>, vector<22x64xf32>
    %422 = vector.extract_strided_slice %405 {offsets = [2, 0], sizes = [1, 64], strides = [1, 1]} : vector<9x64xf32> to vector<1x64xf32>
    %423 = vector.broadcast %422 : vector<1x64xf32> to vector<22x64xf32>
    %424 = arith.mulf %421, %423 : vector<22x64xf32>
    %425 = arith.addf %420, %424 : vector<22x64xf32>
    %c6 = arith.constant 6 : index
    %c0_253 = arith.constant 0 : index
    %426 = vector.load %arg19[%c6, %c0_253] : memref<36x64xf32, #tpu.memory_space<vmem>>, vector<22x64xf32>
    %427 = vector.extract_strided_slice %405 {offsets = [3, 0], sizes = [1, 64], strides = [1, 1]} : vector<9x64xf32> to vector<1x64xf32>
    %428 = vector.broadcast %427 : vector<1x64xf32> to vector<22x64xf32>
    %429 = arith.mulf %426, %428 : vector<22x64xf32>
    %430 = arith.addf %425, %429 : vector<22x64xf32>
    %c7_254 = arith.constant 7 : index
    %c0_255 = arith.constant 0 : index
    %431 = vector.load %arg19[%c7_254, %c0_255] : memref<36x64xf32, #tpu.memory_space<vmem>>, vector<22x64xf32>
    %432 = vector.extract_strided_slice %405 {offsets = [4, 0], sizes = [1, 64], strides = [1, 1]} : vector<9x64xf32> to vector<1x64xf32>
    %433 = vector.broadcast %432 : vector<1x64xf32> to vector<22x64xf32>
    %434 = arith.mulf %431, %433 : vector<22x64xf32>
    %435 = arith.addf %430, %434 : vector<22x64xf32>
    %c8 = arith.constant 8 : index
    %c0_256 = arith.constant 0 : index
    %436 = vector.load %arg19[%c8, %c0_256] : memref<36x64xf32, #tpu.memory_space<vmem>>, vector<22x64xf32>
    %437 = vector.extract_strided_slice %405 {offsets = [5, 0], sizes = [1, 64], strides = [1, 1]} : vector<9x64xf32> to vector<1x64xf32>
    %438 = vector.broadcast %437 : vector<1x64xf32> to vector<22x64xf32>
    %439 = arith.mulf %436, %438 : vector<22x64xf32>
    %440 = arith.addf %435, %439 : vector<22x64xf32>
    %c12_257 = arith.constant 12 : index
    %c0_258 = arith.constant 0 : index
    %441 = vector.load %arg19[%c12_257, %c0_258] : memref<36x64xf32, #tpu.memory_space<vmem>>, vector<22x64xf32>
    %442 = vector.extract_strided_slice %405 {offsets = [6, 0], sizes = [1, 64], strides = [1, 1]} : vector<9x64xf32> to vector<1x64xf32>
    %443 = vector.broadcast %442 : vector<1x64xf32> to vector<22x64xf32>
    %444 = arith.mulf %441, %443 : vector<22x64xf32>
    %445 = arith.addf %440, %444 : vector<22x64xf32>
    %c13_259 = arith.constant 13 : index
    %c0_260 = arith.constant 0 : index
    %446 = vector.load %arg19[%c13_259, %c0_260] : memref<36x64xf32, #tpu.memory_space<vmem>>, vector<22x64xf32>
    %447 = vector.extract_strided_slice %405 {offsets = [7, 0], sizes = [1, 64], strides = [1, 1]} : vector<9x64xf32> to vector<1x64xf32>
    %448 = vector.broadcast %447 : vector<1x64xf32> to vector<22x64xf32>
    %449 = arith.mulf %446, %448 : vector<22x64xf32>
    %450 = arith.addf %445, %449 : vector<22x64xf32>
    %c14 = arith.constant 14 : index
    %c0_261 = arith.constant 0 : index
    %451 = vector.load %arg19[%c14, %c0_261] : memref<36x64xf32, #tpu.memory_space<vmem>>, vector<22x64xf32>
    %452 = vector.extract_strided_slice %405 {offsets = [8, 0], sizes = [1, 64], strides = [1, 1]} : vector<9x64xf32> to vector<1x64xf32>
    %453 = vector.broadcast %452 : vector<1x64xf32> to vector<22x64xf32>
    %454 = arith.mulf %451, %453 : vector<22x64xf32>
    %455 = arith.addf %450, %454 : vector<22x64xf32>
    %456 = vector.broadcast %407 : vector<1x64xf32> to vector<22x64xf32>
    %457 = arith.addf %455, %456 : vector<22x64xf32>
    %cst_262 = arith.constant 0.000000e+00 : f32
    %458 = vector.broadcast %cst_262 : f32 to vector<22x64xf32>
    %459 = arith.cmpf oge, %457, %458 : vector<22x64xf32>
    %cst_263 = arith.constant 1.000000e-01 : f32
    %460 = vector.broadcast %cst_263 : f32 to vector<22x64xf32>
    %461 = arith.mulf %460, %457 : vector<22x64xf32>
    %462 = arith.select %459, %457, %461 : vector<22x64xi1>, vector<22x64xf32>
    %463 = arith.truncf %462 : vector<22x64xf32> to vector<22x64xbf16>
    %cst_264 = arith.constant dense<0.000000e+00> : vector<22x64xf32>
    %464 = tpu.matmul %463, %409, %cst_264 {dimension_numbers = #tpu.dot_dimension_numbers<[1], [0], [0], [1], [0, 0, 1, 1], [], []>} : vector<22x64xbf16>, vector<64x64xbf16>, vector<22x64xf32> -> vector<22x64xf32>
    %465 = vector.broadcast %411 : vector<1x64xf32> to vector<22x64xf32>
    %466 = arith.addf %464, %465 : vector<22x64xf32>
    %cst_265 = arith.constant 0.000000e+00 : f32
    %467 = vector.broadcast %cst_265 : f32 to vector<22x64xf32>
    %468 = arith.cmpf oge, %466, %467 : vector<22x64xf32>
    %cst_266 = arith.constant 1.000000e-01 : f32
    %469 = vector.broadcast %cst_266 : f32 to vector<22x64xf32>
    %470 = arith.mulf %469, %466 : vector<22x64xf32>
    %471 = arith.select %468, %466, %470 : vector<22x64xi1>, vector<22x64xf32>
    %cst_267 = arith.constant 0.000000e+00 : f32
    %472 = vector.broadcast %cst_267 : f32 to vector<36x64xf32>
    %c0_268 = arith.constant 0 : index
    %c0_269 = arith.constant 0 : index
    %473 = vector.load %arg20[%c0_268, %c0_269] : memref<36x64xf32, #tpu.memory_space<vmem>>, vector<36x64xf32>
    tpu.vector_store %arg20[%c0_268, %c0_269], %472 {strides = array<i32>} : memref<36x64xf32, #tpu.memory_space<vmem>>, vector<36x64xf32>,
    %474 = vector.extract_strided_slice %471 {offsets = [0, 0], sizes = [4, 64], strides = [1, 1]} : vector<22x64xf32> to vector<4x64xf32>
    %c7_270 = arith.constant 7 : index
    %c0_271 = arith.constant 0 : index
    %475 = vector.load %arg20[%c7_270, %c0_271] : memref<36x64xf32, #tpu.memory_space<vmem>>, vector<4x64xf32>
    tpu.vector_store %arg20[%c7_270, %c0_271], %474 {strides = array<i32>} : memref<36x64xf32, #tpu.memory_space<vmem>>, vector<4x64xf32>,
    %476 = vector.extract_strided_slice %471 {offsets = [6, 0], sizes = [4, 64], strides = [1, 1]} : vector<22x64xf32> to vector<4x64xf32>
    %c13_272 = arith.constant 13 : index
    %c0_273 = arith.constant 0 : index
    %477 = vector.load %arg20[%c13_272, %c0_273] : memref<36x64xf32, #tpu.memory_space<vmem>>, vector<4x64xf32>
    tpu.vector_store %arg20[%c13_272, %c0_273], %476 {strides = array<i32>} : memref<36x64xf32, #tpu.memory_space<vmem>>, vector<4x64xf32>,
    %478 = vector.extract_strided_slice %471 {offsets = [12, 0], sizes = [4, 64], strides = [1, 1]} : vector<22x64xf32> to vector<4x64xf32>
    %c19_274 = arith.constant 19 : index
    %c0_275 = arith.constant 0 : index
    %479 = vector.load %arg20[%c19_274, %c0_275] : memref<36x64xf32, #tpu.memory_space<vmem>>, vector<4x64xf32>
    tpu.vector_store %arg20[%c19_274, %c0_275], %478 {strides = array<i32>} : memref<36x64xf32, #tpu.memory_space<vmem>>, vector<4x64xf32>,
    %480 = vector.extract_strided_slice %471 {offsets = [18, 0], sizes = [4, 64], strides = [1, 1]} : vector<22x64xf32> to vector<4x64xf32>
    %c25_276 = arith.constant 25 : index
    %c0_277 = arith.constant 0 : index
    %481 = vector.load %arg20[%c25_276, %c0_277] : memref<36x64xf32, #tpu.memory_space<vmem>>, vector<4x64xf32>
    tpu.vector_store %arg20[%c25_276, %c0_277], %480 {strides = array<i32>} : memref<36x64xf32, #tpu.memory_space<vmem>>, vector<4x64xf32>,
    %c5 = arith.constant 5 : index
    %c0_278 = arith.constant 0 : index
    %c0_279 = arith.constant 0 : index
    %482 = vector.load %arg4[%c5, %c0_278, %c0_279] : memref<13x9x256xf32, #tpu.memory_space<vmem>>, vector<1x9x64xf32>
    %483 = vector.shape_cast %482 : vector<1x9x64xf32> to vector<9x64xf32>
    %c5_280 = arith.constant 5 : index
    %c0_281 = arith.constant 0 : index
    %c0_282 = arith.constant 0 : index
    %484 = vector.load %arg5[%c5_280, %c0_281, %c0_282] : memref<13x1x256xf32, #tpu.memory_space<vmem>>, vector<1x1x64xf32>
    %485 = vector.shape_cast %484 : vector<1x1x64xf32> to vector<1x64xf32>
    %c5_283 = arith.constant 5 : index
    %c0_284 = arith.constant 0 : index
    %c0_285 = arith.constant 0 : index
    %486 = vector.load %arg6[%c5_283, %c0_284, %c0_285] : memref<13x256x256xbf16, #tpu.memory_space<vmem>>, vector<1x64x128xbf16>
    %487 = vector.shape_cast %486 : vector<1x64x128xbf16> to vector<64x128xbf16>
    %c5_286 = arith.constant 5 : index
    %c0_287 = arith.constant 0 : index
    %c0_288 = arith.constant 0 : index
    %488 = vector.load %arg7[%c5_286, %c0_287, %c0_288] : memref<13x1x256xf32, #tpu.memory_space<vmem>>, vector<1x1x128xf32>
    %489 = vector.shape_cast %488 : vector<1x1x128xf32> to vector<1x128xf32>
    %c0_289 = arith.constant 0 : index
    %c0_290 = arith.constant 0 : index
    %490 = vector.load %arg20[%c0_289, %c0_290] : memref<36x64xf32, #tpu.memory_space<vmem>>, vector<22x64xf32>
    %491 = vector.extract_strided_slice %483 {offsets = [0, 0], sizes = [1, 64], strides = [1, 1]} : vector<9x64xf32> to vector<1x64xf32>
    %492 = vector.broadcast %491 : vector<1x64xf32> to vector<22x64xf32>
    %493 = arith.mulf %490, %492 : vector<22x64xf32>
    %c1_291 = arith.constant 1 : index
    %c0_292 = arith.constant 0 : index
    %494 = vector.load %arg20[%c1_291, %c0_292] : memref<36x64xf32, #tpu.memory_space<vmem>>, vector<22x64xf32>
    %495 = vector.extract_strided_slice %483 {offsets = [1, 0], sizes = [1, 64], strides = [1, 1]} : vector<9x64xf32> to vector<1x64xf32>
    %496 = vector.broadcast %495 : vector<1x64xf32> to vector<22x64xf32>
    %497 = arith.mulf %494, %496 : vector<22x64xf32>
    %498 = arith.addf %493, %497 : vector<22x64xf32>
    %c2_293 = arith.constant 2 : index
    %c0_294 = arith.constant 0 : index
    %499 = vector.load %arg20[%c2_293, %c0_294] : memref<36x64xf32, #tpu.memory_space<vmem>>, vector<22x64xf32>
    %500 = vector.extract_strided_slice %483 {offsets = [2, 0], sizes = [1, 64], strides = [1, 1]} : vector<9x64xf32> to vector<1x64xf32>
    %501 = vector.broadcast %500 : vector<1x64xf32> to vector<22x64xf32>
    %502 = arith.mulf %499, %501 : vector<22x64xf32>
    %503 = arith.addf %498, %502 : vector<22x64xf32>
    %c6_295 = arith.constant 6 : index
    %c0_296 = arith.constant 0 : index
    %504 = vector.load %arg20[%c6_295, %c0_296] : memref<36x64xf32, #tpu.memory_space<vmem>>, vector<22x64xf32>
    %505 = vector.extract_strided_slice %483 {offsets = [3, 0], sizes = [1, 64], strides = [1, 1]} : vector<9x64xf32> to vector<1x64xf32>
    %506 = vector.broadcast %505 : vector<1x64xf32> to vector<22x64xf32>
    %507 = arith.mulf %504, %506 : vector<22x64xf32>
    %508 = arith.addf %503, %507 : vector<22x64xf32>
    %c7_297 = arith.constant 7 : index
    %c0_298 = arith.constant 0 : index
    %509 = vector.load %arg20[%c7_297, %c0_298] : memref<36x64xf32, #tpu.memory_space<vmem>>, vector<22x64xf32>
    %510 = vector.extract_strided_slice %483 {offsets = [4, 0], sizes = [1, 64], strides = [1, 1]} : vector<9x64xf32> to vector<1x64xf32>
    %511 = vector.broadcast %510 : vector<1x64xf32> to vector<22x64xf32>
    %512 = arith.mulf %509, %511 : vector<22x64xf32>
    %513 = arith.addf %508, %512 : vector<22x64xf32>
    %c8_299 = arith.constant 8 : index
    %c0_300 = arith.constant 0 : index
    %514 = vector.load %arg20[%c8_299, %c0_300] : memref<36x64xf32, #tpu.memory_space<vmem>>, vector<22x64xf32>
    %515 = vector.extract_strided_slice %483 {offsets = [5, 0], sizes = [1, 64], strides = [1, 1]} : vector<9x64xf32> to vector<1x64xf32>
    %516 = vector.broadcast %515 : vector<1x64xf32> to vector<22x64xf32>
    %517 = arith.mulf %514, %516 : vector<22x64xf32>
    %518 = arith.addf %513, %517 : vector<22x64xf32>
    %c12_301 = arith.constant 12 : index
    %c0_302 = arith.constant 0 : index
    %519 = vector.load %arg20[%c12_301, %c0_302] : memref<36x64xf32, #tpu.memory_space<vmem>>, vector<22x64xf32>
    %520 = vector.extract_strided_slice %483 {offsets = [6, 0], sizes = [1, 64], strides = [1, 1]} : vector<9x64xf32> to vector<1x64xf32>
    %521 = vector.broadcast %520 : vector<1x64xf32> to vector<22x64xf32>
    %522 = arith.mulf %519, %521 : vector<22x64xf32>
    %523 = arith.addf %518, %522 : vector<22x64xf32>
    %c13_303 = arith.constant 13 : index
    %c0_304 = arith.constant 0 : index
    %524 = vector.load %arg20[%c13_303, %c0_304] : memref<36x64xf32, #tpu.memory_space<vmem>>, vector<22x64xf32>
    %525 = vector.extract_strided_slice %483 {offsets = [7, 0], sizes = [1, 64], strides = [1, 1]} : vector<9x64xf32> to vector<1x64xf32>
    %526 = vector.broadcast %525 : vector<1x64xf32> to vector<22x64xf32>
    %527 = arith.mulf %524, %526 : vector<22x64xf32>
    %528 = arith.addf %523, %527 : vector<22x64xf32>
    %c14_305 = arith.constant 14 : index
    %c0_306 = arith.constant 0 : index
    %529 = vector.load %arg20[%c14_305, %c0_306] : memref<36x64xf32, #tpu.memory_space<vmem>>, vector<22x64xf32>
    %530 = vector.extract_strided_slice %483 {offsets = [8, 0], sizes = [1, 64], strides = [1, 1]} : vector<9x64xf32> to vector<1x64xf32>
    %531 = vector.broadcast %530 : vector<1x64xf32> to vector<22x64xf32>
    %532 = arith.mulf %529, %531 : vector<22x64xf32>
    %533 = arith.addf %528, %532 : vector<22x64xf32>
    %534 = vector.broadcast %485 : vector<1x64xf32> to vector<22x64xf32>
    %535 = arith.addf %533, %534 : vector<22x64xf32>
    %cst_307 = arith.constant 0.000000e+00 : f32
    %536 = vector.broadcast %cst_307 : f32 to vector<22x64xf32>
    %537 = arith.cmpf oge, %535, %536 : vector<22x64xf32>
    %cst_308 = arith.constant 1.000000e-01 : f32
    %538 = vector.broadcast %cst_308 : f32 to vector<22x64xf32>
    %539 = arith.mulf %538, %535 : vector<22x64xf32>
    %540 = arith.select %537, %535, %539 : vector<22x64xi1>, vector<22x64xf32>
    %541 = arith.truncf %540 : vector<22x64xf32> to vector<22x64xbf16>
    %c0_309 = arith.constant 0 : index
    %c0_310 = arith.constant 0 : index
    %542 = vector.load %arg10[%c0_309, %c0_310] : memref<4x22xbf16, #tpu.memory_space<vmem>>, vector<4x22xbf16>
    %cst_311 = arith.constant dense<0.000000e+00> : vector<4x64xf32>
    %543 = tpu.matmul %542, %541, %cst_311 {dimension_numbers = #tpu.dot_dimension_numbers<[1], [0], [0], [1], [0, 0, 1, 1], [], []>} : vector<4x22xbf16>, vector<22x64xbf16>, vector<4x64xf32> -> vector<4x64xf32>
    %544 = arith.truncf %543 : vector<4x64xf32> to vector<4x64xbf16>
    %cst_312 = arith.constant dense<0.000000e+00> : vector<4x128xf32>
    %545 = tpu.matmul %544, %487, %cst_312 {dimension_numbers = #tpu.dot_dimension_numbers<[1], [0], [0], [1], [0, 0, 1, 1], [], []>} : vector<4x64xbf16>, vector<64x128xbf16>, vector<4x128xf32> -> vector<4x128xf32>
    %546 = vector.broadcast %489 : vector<1x128xf32> to vector<4x128xf32>
    %547 = arith.addf %545, %546 : vector<4x128xf32>
    %cst_313 = arith.constant 0.000000e+00 : f32
    %548 = vector.broadcast %cst_313 : f32 to vector<4x128xf32>
    %549 = arith.cmpf oge, %547, %548 : vector<4x128xf32>
    %cst_314 = arith.constant 1.000000e-01 : f32
    %550 = vector.broadcast %cst_314 : f32 to vector<4x128xf32>
    %551 = arith.mulf %550, %547 : vector<4x128xf32>
    %552 = arith.select %549, %547, %551 : vector<4x128xi1>, vector<4x128xf32>
    %cst_315 = arith.constant 0.000000e+00 : f32
    %553 = vector.broadcast %cst_315 : f32 to vector<16x128xf32>
    %c0_316 = arith.constant 0 : index
    %c0_317 = arith.constant 0 : index
    %554 = vector.load %arg21[%c0_316, %c0_317] : memref<16x128xf32, #tpu.memory_space<vmem>>, vector<16x128xf32>
    tpu.vector_store %arg21[%c0_316, %c0_317], %553 {strides = array<i32>} : memref<16x128xf32, #tpu.memory_space<vmem>>, vector<16x128xf32>,
    %555 = vector.extract_strided_slice %552 {offsets = [0, 0], sizes = [2, 128], strides = [1, 1]} : vector<4x128xf32> to vector<2x128xf32>
    %c5_318 = arith.constant 5 : index
    %c0_319 = arith.constant 0 : index
    %556 = vector.load %arg21[%c5_318, %c0_319] : memref<16x128xf32, #tpu.memory_space<vmem>>, vector<2x128xf32>
    tpu.vector_store %arg21[%c5_318, %c0_319], %555 {strides = array<i32>} : memref<16x128xf32, #tpu.memory_space<vmem>>, vector<2x128xf32>,
    %557 = vector.extract_strided_slice %552 {offsets = [2, 0], sizes = [2, 128], strides = [1, 1]} : vector<4x128xf32> to vector<2x128xf32>
    %c9 = arith.constant 9 : index
    %c0_320 = arith.constant 0 : index
    %558 = vector.load %arg21[%c9, %c0_320] : memref<16x128xf32, #tpu.memory_space<vmem>>, vector<2x128xf32>
    tpu.vector_store %arg21[%c9, %c0_320], %557 {strides = array<i32>} : memref<16x128xf32, #tpu.memory_space<vmem>>, vector<2x128xf32>,
    %c6_321 = arith.constant 6 : index
    %c0_322 = arith.constant 0 : index
    %c0_323 = arith.constant 0 : index
    %559 = vector.load %arg4[%c6_321, %c0_322, %c0_323] : memref<13x9x256xf32, #tpu.memory_space<vmem>>, vector<1x9x128xf32>
    %560 = vector.shape_cast %559 : vector<1x9x128xf32> to vector<9x128xf32>
    %c6_324 = arith.constant 6 : index
    %c0_325 = arith.constant 0 : index
    %c0_326 = arith.constant 0 : index
    %561 = vector.load %arg5[%c6_324, %c0_325, %c0_326] : memref<13x1x256xf32, #tpu.memory_space<vmem>>, vector<1x1x128xf32>
    %562 = vector.shape_cast %561 : vector<1x1x128xf32> to vector<1x128xf32>
    %c6_327 = arith.constant 6 : index
    %c0_328 = arith.constant 0 : index
    %c0_329 = arith.constant 0 : index
    %563 = vector.load %arg6[%c6_327, %c0_328, %c0_329] : memref<13x256x256xbf16, #tpu.memory_space<vmem>>, vector<1x128x128xbf16>
    %564 = vector.shape_cast %563 : vector<1x128x128xbf16> to vector<128x128xbf16>
    %c6_330 = arith.constant 6 : index
    %c0_331 = arith.constant 0 : index
    %c0_332 = arith.constant 0 : index
    %565 = vector.load %arg7[%c6_330, %c0_331, %c0_332] : memref<13x1x256xf32, #tpu.memory_space<vmem>>, vector<1x1x128xf32>
    %566 = vector.shape_cast %565 : vector<1x1x128xf32> to vector<1x128xf32>
    %c0_333 = arith.constant 0 : index
    %c0_334 = arith.constant 0 : index
    %567 = vector.load %arg21[%c0_333, %c0_334] : memref<16x128xf32, #tpu.memory_space<vmem>>, vector<6x128xf32>
    %568 = vector.extract_strided_slice %560 {offsets = [0, 0], sizes = [1, 128], strides = [1, 1]} : vector<9x128xf32> to vector<1x128xf32>
    %569 = vector.broadcast %568 : vector<1x128xf32> to vector<6x128xf32>
    %570 = arith.mulf %567, %569 : vector<6x128xf32>
    %c1_335 = arith.constant 1 : index
    %c0_336 = arith.constant 0 : index
    %571 = vector.load %arg21[%c1_335, %c0_336] : memref<16x128xf32, #tpu.memory_space<vmem>>, vector<6x128xf32>
    %572 = vector.extract_strided_slice %560 {offsets = [1, 0], sizes = [1, 128], strides = [1, 1]} : vector<9x128xf32> to vector<1x128xf32>
    %573 = vector.broadcast %572 : vector<1x128xf32> to vector<6x128xf32>
    %574 = arith.mulf %571, %573 : vector<6x128xf32>
    %575 = arith.addf %570, %574 : vector<6x128xf32>
    %c2_337 = arith.constant 2 : index
    %c0_338 = arith.constant 0 : index
    %576 = vector.load %arg21[%c2_337, %c0_338] : memref<16x128xf32, #tpu.memory_space<vmem>>, vector<6x128xf32>
    %577 = vector.extract_strided_slice %560 {offsets = [2, 0], sizes = [1, 128], strides = [1, 1]} : vector<9x128xf32> to vector<1x128xf32>
    %578 = vector.broadcast %577 : vector<1x128xf32> to vector<6x128xf32>
    %579 = arith.mulf %576, %578 : vector<6x128xf32>
    %580 = arith.addf %575, %579 : vector<6x128xf32>
    %c4_339 = arith.constant 4 : index
    %c0_340 = arith.constant 0 : index
    %581 = vector.load %arg21[%c4_339, %c0_340] : memref<16x128xf32, #tpu.memory_space<vmem>>, vector<6x128xf32>
    %582 = vector.extract_strided_slice %560 {offsets = [3, 0], sizes = [1, 128], strides = [1, 1]} : vector<9x128xf32> to vector<1x128xf32>
    %583 = vector.broadcast %582 : vector<1x128xf32> to vector<6x128xf32>
    %584 = arith.mulf %581, %583 : vector<6x128xf32>
    %585 = arith.addf %580, %584 : vector<6x128xf32>
    %c5_341 = arith.constant 5 : index
    %c0_342 = arith.constant 0 : index
    %586 = vector.load %arg21[%c5_341, %c0_342] : memref<16x128xf32, #tpu.memory_space<vmem>>, vector<6x128xf32>
    %587 = vector.extract_strided_slice %560 {offsets = [4, 0], sizes = [1, 128], strides = [1, 1]} : vector<9x128xf32> to vector<1x128xf32>
    %588 = vector.broadcast %587 : vector<1x128xf32> to vector<6x128xf32>
    %589 = arith.mulf %586, %588 : vector<6x128xf32>
    %590 = arith.addf %585, %589 : vector<6x128xf32>
    %c6_343 = arith.constant 6 : index
    %c0_344 = arith.constant 0 : index
    %591 = vector.load %arg21[%c6_343, %c0_344] : memref<16x128xf32, #tpu.memory_space<vmem>>, vector<6x128xf32>
    %592 = vector.extract_strided_slice %560 {offsets = [5, 0], sizes = [1, 128], strides = [1, 1]} : vector<9x128xf32> to vector<1x128xf32>
    %593 = vector.broadcast %592 : vector<1x128xf32> to vector<6x128xf32>
    %594 = arith.mulf %591, %593 : vector<6x128xf32>
    %595 = arith.addf %590, %594 : vector<6x128xf32>
    %c8_345 = arith.constant 8 : index
    %c0_346 = arith.constant 0 : index
    %596 = vector.load %arg21[%c8_345, %c0_346] : memref<16x128xf32, #tpu.memory_space<vmem>>, vector<6x128xf32>
    %597 = vector.extract_strided_slice %560 {offsets = [6, 0], sizes = [1, 128], strides = [1, 1]} : vector<9x128xf32> to vector<1x128xf32>
    %598 = vector.broadcast %597 : vector<1x128xf32> to vector<6x128xf32>
    %599 = arith.mulf %596, %598 : vector<6x128xf32>
    %600 = arith.addf %595, %599 : vector<6x128xf32>
    %c9_347 = arith.constant 9 : index
    %c0_348 = arith.constant 0 : index
    %601 = vector.load %arg21[%c9_347, %c0_348] : memref<16x128xf32, #tpu.memory_space<vmem>>, vector<6x128xf32>
    %602 = vector.extract_strided_slice %560 {offsets = [7, 0], sizes = [1, 128], strides = [1, 1]} : vector<9x128xf32> to vector<1x128xf32>
    %603 = vector.broadcast %602 : vector<1x128xf32> to vector<6x128xf32>
    %604 = arith.mulf %601, %603 : vector<6x128xf32>
    %605 = arith.addf %600, %604 : vector<6x128xf32>
    %c10_349 = arith.constant 10 : index
    %c0_350 = arith.constant 0 : index
    %606 = vector.load %arg21[%c10_349, %c0_350] : memref<16x128xf32, #tpu.memory_space<vmem>>, vector<6x128xf32>
    %607 = vector.extract_strided_slice %560 {offsets = [8, 0], sizes = [1, 128], strides = [1, 1]} : vector<9x128xf32> to vector<1x128xf32>
    %608 = vector.broadcast %607 : vector<1x128xf32> to vector<6x128xf32>
    %609 = arith.mulf %606, %608 : vector<6x128xf32>
    %610 = arith.addf %605, %609 : vector<6x128xf32>
    %611 = vector.broadcast %562 : vector<1x128xf32> to vector<6x128xf32>
    %612 = arith.addf %610, %611 : vector<6x128xf32>
    %cst_351 = arith.constant 0.000000e+00 : f32
    %613 = vector.broadcast %cst_351 : f32 to vector<6x128xf32>
    %614 = arith.cmpf oge, %612, %613 : vector<6x128xf32>
    %cst_352 = arith.constant 1.000000e-01 : f32
    %615 = vector.broadcast %cst_352 : f32 to vector<6x128xf32>
    %616 = arith.mulf %615, %612 : vector<6x128xf32>
    %617 = arith.select %614, %612, %616 : vector<6x128xi1>, vector<6x128xf32>
    %618 = arith.truncf %617 : vector<6x128xf32> to vector<6x128xbf16>
    %cst_353 = arith.constant dense<0.000000e+00> : vector<6x128xf32>
    %619 = tpu.matmul %618, %564, %cst_353 {dimension_numbers = #tpu.dot_dimension_numbers<[1], [0], [0], [1], [0, 0, 1, 1], [], []>} : vector<6x128xbf16>, vector<128x128xbf16>, vector<6x128xf32> -> vector<6x128xf32>
    %620 = vector.broadcast %566 : vector<1x128xf32> to vector<6x128xf32>
    %621 = arith.addf %619, %620 : vector<6x128xf32>
    %cst_354 = arith.constant 0.000000e+00 : f32
    %622 = vector.broadcast %cst_354 : f32 to vector<6x128xf32>
    %623 = arith.cmpf oge, %621, %622 : vector<6x128xf32>
    %cst_355 = arith.constant 1.000000e-01 : f32
    %624 = vector.broadcast %cst_355 : f32 to vector<6x128xf32>
    %625 = arith.mulf %624, %621 : vector<6x128xf32>
    %626 = arith.select %623, %621, %625 : vector<6x128xi1>, vector<6x128xf32>
    %cst_356 = arith.constant 0.000000e+00 : f32
    %627 = vector.broadcast %cst_356 : f32 to vector<16x128xf32>
    %c0_357 = arith.constant 0 : index
    %c0_358 = arith.constant 0 : index
    %628 = vector.load %arg22[%c0_357, %c0_358] : memref<16x128xf32, #tpu.memory_space<vmem>>, vector<16x128xf32>
    tpu.vector_store %arg22[%c0_357, %c0_358], %627 {strides = array<i32>} : memref<16x128xf32, #tpu.memory_space<vmem>>, vector<16x128xf32>,
    %629 = vector.extract_strided_slice %626 {offsets = [0, 0], sizes = [2, 128], strides = [1, 1]} : vector<6x128xf32> to vector<2x128xf32>
    %c5_359 = arith.constant 5 : index
    %c0_360 = arith.constant 0 : index
    %630 = vector.load %arg22[%c5_359, %c0_360] : memref<16x128xf32, #tpu.memory_space<vmem>>, vector<2x128xf32>
    tpu.vector_store %arg22[%c5_359, %c0_360], %629 {strides = array<i32>} : memref<16x128xf32, #tpu.memory_space<vmem>>, vector<2x128xf32>,
    %631 = vector.extract_strided_slice %626 {offsets = [4, 0], sizes = [2, 128], strides = [1, 1]} : vector<6x128xf32> to vector<2x128xf32>
    %c9_361 = arith.constant 9 : index
    %c0_362 = arith.constant 0 : index
    %632 = vector.load %arg22[%c9_361, %c0_362] : memref<16x128xf32, #tpu.memory_space<vmem>>, vector<2x128xf32>
    tpu.vector_store %arg22[%c9_361, %c0_362], %631 {strides = array<i32>} : memref<16x128xf32, #tpu.memory_space<vmem>>, vector<2x128xf32>,
    %c7_363 = arith.constant 7 : index
    %c0_364 = arith.constant 0 : index
    %c0_365 = arith.constant 0 : index
    %633 = vector.load %arg4[%c7_363, %c0_364, %c0_365] : memref<13x9x256xf32, #tpu.memory_space<vmem>>, vector<1x9x128xf32>
    %634 = vector.shape_cast %633 : vector<1x9x128xf32> to vector<9x128xf32>
    %c7_366 = arith.constant 7 : index
    %c0_367 = arith.constant 0 : index
    %c0_368 = arith.constant 0 : index
    %635 = vector.load %arg5[%c7_366, %c0_367, %c0_368] : memref<13x1x256xf32, #tpu.memory_space<vmem>>, vector<1x1x128xf32>
    %636 = vector.shape_cast %635 : vector<1x1x128xf32> to vector<1x128xf32>
    %c7_369 = arith.constant 7 : index
    %c0_370 = arith.constant 0 : index
    %c0_371 = arith.constant 0 : index
    %637 = vector.load %arg6[%c7_369, %c0_370, %c0_371] : memref<13x256x256xbf16, #tpu.memory_space<vmem>>, vector<1x128x128xbf16>
    %638 = vector.shape_cast %637 : vector<1x128x128xbf16> to vector<128x128xbf16>
    %c7_372 = arith.constant 7 : index
    %c0_373 = arith.constant 0 : index
    %c0_374 = arith.constant 0 : index
    %639 = vector.load %arg7[%c7_372, %c0_373, %c0_374] : memref<13x1x256xf32, #tpu.memory_space<vmem>>, vector<1x1x128xf32>
    %640 = vector.shape_cast %639 : vector<1x1x128xf32> to vector<1x128xf32>
    %c0_375 = arith.constant 0 : index
    %c0_376 = arith.constant 0 : index
    %641 = vector.load %arg22[%c0_375, %c0_376] : memref<16x128xf32, #tpu.memory_space<vmem>>, vector<6x128xf32>
    %642 = vector.extract_strided_slice %634 {offsets = [0, 0], sizes = [1, 128], strides = [1, 1]} : vector<9x128xf32> to vector<1x128xf32>
    %643 = vector.broadcast %642 : vector<1x128xf32> to vector<6x128xf32>
    %644 = arith.mulf %641, %643 : vector<6x128xf32>
    %c1_377 = arith.constant 1 : index
    %c0_378 = arith.constant 0 : index
    %645 = vector.load %arg22[%c1_377, %c0_378] : memref<16x128xf32, #tpu.memory_space<vmem>>, vector<6x128xf32>
    %646 = vector.extract_strided_slice %634 {offsets = [1, 0], sizes = [1, 128], strides = [1, 1]} : vector<9x128xf32> to vector<1x128xf32>
    %647 = vector.broadcast %646 : vector<1x128xf32> to vector<6x128xf32>
    %648 = arith.mulf %645, %647 : vector<6x128xf32>
    %649 = arith.addf %644, %648 : vector<6x128xf32>
    %c2_379 = arith.constant 2 : index
    %c0_380 = arith.constant 0 : index
    %650 = vector.load %arg22[%c2_379, %c0_380] : memref<16x128xf32, #tpu.memory_space<vmem>>, vector<6x128xf32>
    %651 = vector.extract_strided_slice %634 {offsets = [2, 0], sizes = [1, 128], strides = [1, 1]} : vector<9x128xf32> to vector<1x128xf32>
    %652 = vector.broadcast %651 : vector<1x128xf32> to vector<6x128xf32>
    %653 = arith.mulf %650, %652 : vector<6x128xf32>
    %654 = arith.addf %649, %653 : vector<6x128xf32>
    %c4_381 = arith.constant 4 : index
    %c0_382 = arith.constant 0 : index
    %655 = vector.load %arg22[%c4_381, %c0_382] : memref<16x128xf32, #tpu.memory_space<vmem>>, vector<6x128xf32>
    %656 = vector.extract_strided_slice %634 {offsets = [3, 0], sizes = [1, 128], strides = [1, 1]} : vector<9x128xf32> to vector<1x128xf32>
    %657 = vector.broadcast %656 : vector<1x128xf32> to vector<6x128xf32>
    %658 = arith.mulf %655, %657 : vector<6x128xf32>
    %659 = arith.addf %654, %658 : vector<6x128xf32>
    %c5_383 = arith.constant 5 : index
    %c0_384 = arith.constant 0 : index
    %660 = vector.load %arg22[%c5_383, %c0_384] : memref<16x128xf32, #tpu.memory_space<vmem>>, vector<6x128xf32>
    %661 = vector.extract_strided_slice %634 {offsets = [4, 0], sizes = [1, 128], strides = [1, 1]} : vector<9x128xf32> to vector<1x128xf32>
    %662 = vector.broadcast %661 : vector<1x128xf32> to vector<6x128xf32>
    %663 = arith.mulf %660, %662 : vector<6x128xf32>
    %664 = arith.addf %659, %663 : vector<6x128xf32>
    %c6_385 = arith.constant 6 : index
    %c0_386 = arith.constant 0 : index
    %665 = vector.load %arg22[%c6_385, %c0_386] : memref<16x128xf32, #tpu.memory_space<vmem>>, vector<6x128xf32>
    %666 = vector.extract_strided_slice %634 {offsets = [5, 0], sizes = [1, 128], strides = [1, 1]} : vector<9x128xf32> to vector<1x128xf32>
    %667 = vector.broadcast %666 : vector<1x128xf32> to vector<6x128xf32>
    %668 = arith.mulf %665, %667 : vector<6x128xf32>
    %669 = arith.addf %664, %668 : vector<6x128xf32>
    %c8_387 = arith.constant 8 : index
    %c0_388 = arith.constant 0 : index
    %670 = vector.load %arg22[%c8_387, %c0_388] : memref<16x128xf32, #tpu.memory_space<vmem>>, vector<6x128xf32>
    %671 = vector.extract_strided_slice %634 {offsets = [6, 0], sizes = [1, 128], strides = [1, 1]} : vector<9x128xf32> to vector<1x128xf32>
    %672 = vector.broadcast %671 : vector<1x128xf32> to vector<6x128xf32>
    %673 = arith.mulf %670, %672 : vector<6x128xf32>
    %674 = arith.addf %669, %673 : vector<6x128xf32>
    %c9_389 = arith.constant 9 : index
    %c0_390 = arith.constant 0 : index
    %675 = vector.load %arg22[%c9_389, %c0_390] : memref<16x128xf32, #tpu.memory_space<vmem>>, vector<6x128xf32>
    %676 = vector.extract_strided_slice %634 {offsets = [7, 0], sizes = [1, 128], strides = [1, 1]} : vector<9x128xf32> to vector<1x128xf32>
    %677 = vector.broadcast %676 : vector<1x128xf32> to vector<6x128xf32>
    %678 = arith.mulf %675, %677 : vector<6x128xf32>
    %679 = arith.addf %674, %678 : vector<6x128xf32>
    %c10_391 = arith.constant 10 : index
    %c0_392 = arith.constant 0 : index
    %680 = vector.load %arg22[%c10_391, %c0_392] : memref<16x128xf32, #tpu.memory_space<vmem>>, vector<6x128xf32>
    %681 = vector.extract_strided_slice %634 {offsets = [8, 0], sizes = [1, 128], strides = [1, 1]} : vector<9x128xf32> to vector<1x128xf32>
    %682 = vector.broadcast %681 : vector<1x128xf32> to vector<6x128xf32>
    %683 = arith.mulf %680, %682 : vector<6x128xf32>
    %684 = arith.addf %679, %683 : vector<6x128xf32>
    %685 = vector.broadcast %636 : vector<1x128xf32> to vector<6x128xf32>
    %686 = arith.addf %684, %685 : vector<6x128xf32>
    %cst_393 = arith.constant 0.000000e+00 : f32
    %687 = vector.broadcast %cst_393 : f32 to vector<6x128xf32>
    %688 = arith.cmpf oge, %686, %687 : vector<6x128xf32>
    %cst_394 = arith.constant 1.000000e-01 : f32
    %689 = vector.broadcast %cst_394 : f32 to vector<6x128xf32>
    %690 = arith.mulf %689, %686 : vector<6x128xf32>
    %691 = arith.select %688, %686, %690 : vector<6x128xi1>, vector<6x128xf32>
    %692 = arith.truncf %691 : vector<6x128xf32> to vector<6x128xbf16>
    %cst_395 = arith.constant dense<0.000000e+00> : vector<6x128xf32>
    %693 = tpu.matmul %692, %638, %cst_395 {dimension_numbers = #tpu.dot_dimension_numbers<[1], [0], [0], [1], [0, 0, 1, 1], [], []>} : vector<6x128xbf16>, vector<128x128xbf16>, vector<6x128xf32> -> vector<6x128xf32>
    %694 = vector.broadcast %640 : vector<1x128xf32> to vector<6x128xf32>
    %695 = arith.addf %693, %694 : vector<6x128xf32>
    %cst_396 = arith.constant 0.000000e+00 : f32
    %696 = vector.broadcast %cst_396 : f32 to vector<6x128xf32>
    %697 = arith.cmpf oge, %695, %696 : vector<6x128xf32>
    %cst_397 = arith.constant 1.000000e-01 : f32
    %698 = vector.broadcast %cst_397 : f32 to vector<6x128xf32>
    %699 = arith.mulf %698, %695 : vector<6x128xf32>
    %700 = arith.select %697, %695, %699 : vector<6x128xi1>, vector<6x128xf32>
    %cst_398 = arith.constant 0.000000e+00 : f32
    %701 = vector.broadcast %cst_398 : f32 to vector<16x128xf32>
    %c0_399 = arith.constant 0 : index
    %c0_400 = arith.constant 0 : index
    %702 = vector.load %arg23[%c0_399, %c0_400] : memref<16x128xf32, #tpu.memory_space<vmem>>, vector<16x128xf32>
    tpu.vector_store %arg23[%c0_399, %c0_400], %701 {strides = array<i32>} : memref<16x128xf32, #tpu.memory_space<vmem>>, vector<16x128xf32>,
    %703 = vector.extract_strided_slice %700 {offsets = [0, 0], sizes = [2, 128], strides = [1, 1]} : vector<6x128xf32> to vector<2x128xf32>
    %c5_401 = arith.constant 5 : index
    %c0_402 = arith.constant 0 : index
    %704 = vector.load %arg23[%c5_401, %c0_402] : memref<16x128xf32, #tpu.memory_space<vmem>>, vector<2x128xf32>
    tpu.vector_store %arg23[%c5_401, %c0_402], %703 {strides = array<i32>} : memref<16x128xf32, #tpu.memory_space<vmem>>, vector<2x128xf32>,
    %705 = vector.extract_strided_slice %700 {offsets = [4, 0], sizes = [2, 128], strides = [1, 1]} : vector<6x128xf32> to vector<2x128xf32>
    %c9_403 = arith.constant 9 : index
    %c0_404 = arith.constant 0 : index
    %706 = vector.load %arg23[%c9_403, %c0_404] : memref<16x128xf32, #tpu.memory_space<vmem>>, vector<2x128xf32>
    tpu.vector_store %arg23[%c9_403, %c0_404], %705 {strides = array<i32>} : memref<16x128xf32, #tpu.memory_space<vmem>>, vector<2x128xf32>,
    %c8_405 = arith.constant 8 : index
    %c0_406 = arith.constant 0 : index
    %c0_407 = arith.constant 0 : index
    %707 = vector.load %arg4[%c8_405, %c0_406, %c0_407] : memref<13x9x256xf32, #tpu.memory_space<vmem>>, vector<1x9x128xf32>
    %708 = vector.shape_cast %707 : vector<1x9x128xf32> to vector<9x128xf32>
    %c8_408 = arith.constant 8 : index
    %c0_409 = arith.constant 0 : index
    %c0_410 = arith.constant 0 : index
    %709 = vector.load %arg5[%c8_408, %c0_409, %c0_410] : memref<13x1x256xf32, #tpu.memory_space<vmem>>, vector<1x1x128xf32>
    %710 = vector.shape_cast %709 : vector<1x1x128xf32> to vector<1x128xf32>
    %c8_411 = arith.constant 8 : index
    %c0_412 = arith.constant 0 : index
    %c0_413 = arith.constant 0 : index
    %711 = vector.load %arg6[%c8_411, %c0_412, %c0_413] : memref<13x256x256xbf16, #tpu.memory_space<vmem>>, vector<1x128x128xbf16>
    %712 = vector.shape_cast %711 : vector<1x128x128xbf16> to vector<128x128xbf16>
    %c8_414 = arith.constant 8 : index
    %c0_415 = arith.constant 0 : index
    %c0_416 = arith.constant 0 : index
    %713 = vector.load %arg7[%c8_414, %c0_415, %c0_416] : memref<13x1x256xf32, #tpu.memory_space<vmem>>, vector<1x1x128xf32>
    %714 = vector.shape_cast %713 : vector<1x1x128xf32> to vector<1x128xf32>
    %c0_417 = arith.constant 0 : index
    %c0_418 = arith.constant 0 : index
    %715 = vector.load %arg23[%c0_417, %c0_418] : memref<16x128xf32, #tpu.memory_space<vmem>>, vector<6x128xf32>
    %716 = vector.extract_strided_slice %708 {offsets = [0, 0], sizes = [1, 128], strides = [1, 1]} : vector<9x128xf32> to vector<1x128xf32>
    %717 = vector.broadcast %716 : vector<1x128xf32> to vector<6x128xf32>
    %718 = arith.mulf %715, %717 : vector<6x128xf32>
    %c1_419 = arith.constant 1 : index
    %c0_420 = arith.constant 0 : index
    %719 = vector.load %arg23[%c1_419, %c0_420] : memref<16x128xf32, #tpu.memory_space<vmem>>, vector<6x128xf32>
    %720 = vector.extract_strided_slice %708 {offsets = [1, 0], sizes = [1, 128], strides = [1, 1]} : vector<9x128xf32> to vector<1x128xf32>
    %721 = vector.broadcast %720 : vector<1x128xf32> to vector<6x128xf32>
    %722 = arith.mulf %719, %721 : vector<6x128xf32>
    %723 = arith.addf %718, %722 : vector<6x128xf32>
    %c2_421 = arith.constant 2 : index
    %c0_422 = arith.constant 0 : index
    %724 = vector.load %arg23[%c2_421, %c0_422] : memref<16x128xf32, #tpu.memory_space<vmem>>, vector<6x128xf32>
    %725 = vector.extract_strided_slice %708 {offsets = [2, 0], sizes = [1, 128], strides = [1, 1]} : vector<9x128xf32> to vector<1x128xf32>
    %726 = vector.broadcast %725 : vector<1x128xf32> to vector<6x128xf32>
    %727 = arith.mulf %724, %726 : vector<6x128xf32>
    %728 = arith.addf %723, %727 : vector<6x128xf32>
    %c4_423 = arith.constant 4 : index
    %c0_424 = arith.constant 0 : index
    %729 = vector.load %arg23[%c4_423, %c0_424] : memref<16x128xf32, #tpu.memory_space<vmem>>, vector<6x128xf32>
    %730 = vector.extract_strided_slice %708 {offsets = [3, 0], sizes = [1, 128], strides = [1, 1]} : vector<9x128xf32> to vector<1x128xf32>
    %731 = vector.broadcast %730 : vector<1x128xf32> to vector<6x128xf32>
    %732 = arith.mulf %729, %731 : vector<6x128xf32>
    %733 = arith.addf %728, %732 : vector<6x128xf32>
    %c5_425 = arith.constant 5 : index
    %c0_426 = arith.constant 0 : index
    %734 = vector.load %arg23[%c5_425, %c0_426] : memref<16x128xf32, #tpu.memory_space<vmem>>, vector<6x128xf32>
    %735 = vector.extract_strided_slice %708 {offsets = [4, 0], sizes = [1, 128], strides = [1, 1]} : vector<9x128xf32> to vector<1x128xf32>
    %736 = vector.broadcast %735 : vector<1x128xf32> to vector<6x128xf32>
    %737 = arith.mulf %734, %736 : vector<6x128xf32>
    %738 = arith.addf %733, %737 : vector<6x128xf32>
    %c6_427 = arith.constant 6 : index
    %c0_428 = arith.constant 0 : index
    %739 = vector.load %arg23[%c6_427, %c0_428] : memref<16x128xf32, #tpu.memory_space<vmem>>, vector<6x128xf32>
    %740 = vector.extract_strided_slice %708 {offsets = [5, 0], sizes = [1, 128], strides = [1, 1]} : vector<9x128xf32> to vector<1x128xf32>
    %741 = vector.broadcast %740 : vector<1x128xf32> to vector<6x128xf32>
    %742 = arith.mulf %739, %741 : vector<6x128xf32>
    %743 = arith.addf %738, %742 : vector<6x128xf32>
    %c8_429 = arith.constant 8 : index
    %c0_430 = arith.constant 0 : index
    %744 = vector.load %arg23[%c8_429, %c0_430] : memref<16x128xf32, #tpu.memory_space<vmem>>, vector<6x128xf32>
    %745 = vector.extract_strided_slice %708 {offsets = [6, 0], sizes = [1, 128], strides = [1, 1]} : vector<9x128xf32> to vector<1x128xf32>
    %746 = vector.broadcast %745 : vector<1x128xf32> to vector<6x128xf32>
    %747 = arith.mulf %744, %746 : vector<6x128xf32>
    %748 = arith.addf %743, %747 : vector<6x128xf32>
    %c9_431 = arith.constant 9 : index
    %c0_432 = arith.constant 0 : index
    %749 = vector.load %arg23[%c9_431, %c0_432] : memref<16x128xf32, #tpu.memory_space<vmem>>, vector<6x128xf32>
    %750 = vector.extract_strided_slice %708 {offsets = [7, 0], sizes = [1, 128], strides = [1, 1]} : vector<9x128xf32> to vector<1x128xf32>
    %751 = vector.broadcast %750 : vector<1x128xf32> to vector<6x128xf32>
    %752 = arith.mulf %749, %751 : vector<6x128xf32>
    %753 = arith.addf %748, %752 : vector<6x128xf32>
    %c10_433 = arith.constant 10 : index
    %c0_434 = arith.constant 0 : index
    %754 = vector.load %arg23[%c10_433, %c0_434] : memref<16x128xf32, #tpu.memory_space<vmem>>, vector<6x128xf32>
    %755 = vector.extract_strided_slice %708 {offsets = [8, 0], sizes = [1, 128], strides = [1, 1]} : vector<9x128xf32> to vector<1x128xf32>
    %756 = vector.broadcast %755 : vector<1x128xf32> to vector<6x128xf32>
    %757 = arith.mulf %754, %756 : vector<6x128xf32>
    %758 = arith.addf %753, %757 : vector<6x128xf32>
    %759 = vector.broadcast %710 : vector<1x128xf32> to vector<6x128xf32>
    %760 = arith.addf %758, %759 : vector<6x128xf32>
    %cst_435 = arith.constant 0.000000e+00 : f32
    %761 = vector.broadcast %cst_435 : f32 to vector<6x128xf32>
    %762 = arith.cmpf oge, %760, %761 : vector<6x128xf32>
    %cst_436 = arith.constant 1.000000e-01 : f32
    %763 = vector.broadcast %cst_436 : f32 to vector<6x128xf32>
    %764 = arith.mulf %763, %760 : vector<6x128xf32>
    %765 = arith.select %762, %760, %764 : vector<6x128xi1>, vector<6x128xf32>
    %766 = arith.truncf %765 : vector<6x128xf32> to vector<6x128xbf16>
    %cst_437 = arith.constant dense<0.000000e+00> : vector<6x128xf32>
    %767 = tpu.matmul %766, %712, %cst_437 {dimension_numbers = #tpu.dot_dimension_numbers<[1], [0], [0], [1], [0, 0, 1, 1], [], []>} : vector<6x128xbf16>, vector<128x128xbf16>, vector<6x128xf32> -> vector<6x128xf32>
    %768 = vector.broadcast %714 : vector<1x128xf32> to vector<6x128xf32>
    %769 = arith.addf %767, %768 : vector<6x128xf32>
    %cst_438 = arith.constant 0.000000e+00 : f32
    %770 = vector.broadcast %cst_438 : f32 to vector<6x128xf32>
    %771 = arith.cmpf oge, %769, %770 : vector<6x128xf32>
    %cst_439 = arith.constant 1.000000e-01 : f32
    %772 = vector.broadcast %cst_439 : f32 to vector<6x128xf32>
    %773 = arith.mulf %772, %769 : vector<6x128xf32>
    %774 = arith.select %771, %769, %773 : vector<6x128xi1>, vector<6x128xf32>
    %cst_440 = arith.constant 0.000000e+00 : f32
    %775 = vector.broadcast %cst_440 : f32 to vector<16x128xf32>
    %c0_441 = arith.constant 0 : index
    %c0_442 = arith.constant 0 : index
    %776 = vector.load %arg24[%c0_441, %c0_442] : memref<16x128xf32, #tpu.memory_space<vmem>>, vector<16x128xf32>
    tpu.vector_store %arg24[%c0_441, %c0_442], %775 {strides = array<i32>} : memref<16x128xf32, #tpu.memory_space<vmem>>, vector<16x128xf32>,
    %777 = vector.extract_strided_slice %774 {offsets = [0, 0], sizes = [2, 128], strides = [1, 1]} : vector<6x128xf32> to vector<2x128xf32>
    %c5_443 = arith.constant 5 : index
    %c0_444 = arith.constant 0 : index
    %778 = vector.load %arg24[%c5_443, %c0_444] : memref<16x128xf32, #tpu.memory_space<vmem>>, vector<2x128xf32>
    tpu.vector_store %arg24[%c5_443, %c0_444], %777 {strides = array<i32>} : memref<16x128xf32, #tpu.memory_space<vmem>>, vector<2x128xf32>,
    %779 = vector.extract_strided_slice %774 {offsets = [4, 0], sizes = [2, 128], strides = [1, 1]} : vector<6x128xf32> to vector<2x128xf32>
    %c9_445 = arith.constant 9 : index
    %c0_446 = arith.constant 0 : index
    %780 = vector.load %arg24[%c9_445, %c0_446] : memref<16x128xf32, #tpu.memory_space<vmem>>, vector<2x128xf32>
    tpu.vector_store %arg24[%c9_445, %c0_446], %779 {strides = array<i32>} : memref<16x128xf32, #tpu.memory_space<vmem>>, vector<2x128xf32>,
    %c9_447 = arith.constant 9 : index
    %c0_448 = arith.constant 0 : index
    %c0_449 = arith.constant 0 : index
    %781 = vector.load %arg4[%c9_447, %c0_448, %c0_449] : memref<13x9x256xf32, #tpu.memory_space<vmem>>, vector<1x9x128xf32>
    %782 = vector.shape_cast %781 : vector<1x9x128xf32> to vector<9x128xf32>
    %c9_450 = arith.constant 9 : index
    %c0_451 = arith.constant 0 : index
    %c0_452 = arith.constant 0 : index
    %783 = vector.load %arg5[%c9_450, %c0_451, %c0_452] : memref<13x1x256xf32, #tpu.memory_space<vmem>>, vector<1x1x128xf32>
    %784 = vector.shape_cast %783 : vector<1x1x128xf32> to vector<1x128xf32>
    %c9_453 = arith.constant 9 : index
    %c0_454 = arith.constant 0 : index
    %c0_455 = arith.constant 0 : index
    %785 = vector.load %arg6[%c9_453, %c0_454, %c0_455] : memref<13x256x256xbf16, #tpu.memory_space<vmem>>, vector<1x128x128xbf16>
    %786 = vector.shape_cast %785 : vector<1x128x128xbf16> to vector<128x128xbf16>
    %c9_456 = arith.constant 9 : index
    %c0_457 = arith.constant 0 : index
    %c0_458 = arith.constant 0 : index
    %787 = vector.load %arg7[%c9_456, %c0_457, %c0_458] : memref<13x1x256xf32, #tpu.memory_space<vmem>>, vector<1x1x128xf32>
    %788 = vector.shape_cast %787 : vector<1x1x128xf32> to vector<1x128xf32>
    %c0_459 = arith.constant 0 : index
    %c0_460 = arith.constant 0 : index
    %789 = vector.load %arg24[%c0_459, %c0_460] : memref<16x128xf32, #tpu.memory_space<vmem>>, vector<6x128xf32>
    %790 = vector.extract_strided_slice %782 {offsets = [0, 0], sizes = [1, 128], strides = [1, 1]} : vector<9x128xf32> to vector<1x128xf32>
    %791 = vector.broadcast %790 : vector<1x128xf32> to vector<6x128xf32>
    %792 = arith.mulf %789, %791 : vector<6x128xf32>
    %c1_461 = arith.constant 1 : index
    %c0_462 = arith.constant 0 : index
    %793 = vector.load %arg24[%c1_461, %c0_462] : memref<16x128xf32, #tpu.memory_space<vmem>>, vector<6x128xf32>
    %794 = vector.extract_strided_slice %782 {offsets = [1, 0], sizes = [1, 128], strides = [1, 1]} : vector<9x128xf32> to vector<1x128xf32>
    %795 = vector.broadcast %794 : vector<1x128xf32> to vector<6x128xf32>
    %796 = arith.mulf %793, %795 : vector<6x128xf32>
    %797 = arith.addf %792, %796 : vector<6x128xf32>
    %c2_463 = arith.constant 2 : index
    %c0_464 = arith.constant 0 : index
    %798 = vector.load %arg24[%c2_463, %c0_464] : memref<16x128xf32, #tpu.memory_space<vmem>>, vector<6x128xf32>
    %799 = vector.extract_strided_slice %782 {offsets = [2, 0], sizes = [1, 128], strides = [1, 1]} : vector<9x128xf32> to vector<1x128xf32>
    %800 = vector.broadcast %799 : vector<1x128xf32> to vector<6x128xf32>
    %801 = arith.mulf %798, %800 : vector<6x128xf32>
    %802 = arith.addf %797, %801 : vector<6x128xf32>
    %c4_465 = arith.constant 4 : index
    %c0_466 = arith.constant 0 : index
    %803 = vector.load %arg24[%c4_465, %c0_466] : memref<16x128xf32, #tpu.memory_space<vmem>>, vector<6x128xf32>
    %804 = vector.extract_strided_slice %782 {offsets = [3, 0], sizes = [1, 128], strides = [1, 1]} : vector<9x128xf32> to vector<1x128xf32>
    %805 = vector.broadcast %804 : vector<1x128xf32> to vector<6x128xf32>
    %806 = arith.mulf %803, %805 : vector<6x128xf32>
    %807 = arith.addf %802, %806 : vector<6x128xf32>
    %c5_467 = arith.constant 5 : index
    %c0_468 = arith.constant 0 : index
    %808 = vector.load %arg24[%c5_467, %c0_468] : memref<16x128xf32, #tpu.memory_space<vmem>>, vector<6x128xf32>
    %809 = vector.extract_strided_slice %782 {offsets = [4, 0], sizes = [1, 128], strides = [1, 1]} : vector<9x128xf32> to vector<1x128xf32>
    %810 = vector.broadcast %809 : vector<1x128xf32> to vector<6x128xf32>
    %811 = arith.mulf %808, %810 : vector<6x128xf32>
    %812 = arith.addf %807, %811 : vector<6x128xf32>
    %c6_469 = arith.constant 6 : index
    %c0_470 = arith.constant 0 : index
    %813 = vector.load %arg24[%c6_469, %c0_470] : memref<16x128xf32, #tpu.memory_space<vmem>>, vector<6x128xf32>
    %814 = vector.extract_strided_slice %782 {offsets = [5, 0], sizes = [1, 128], strides = [1, 1]} : vector<9x128xf32> to vector<1x128xf32>
    %815 = vector.broadcast %814 : vector<1x128xf32> to vector<6x128xf32>
    %816 = arith.mulf %813, %815 : vector<6x128xf32>
    %817 = arith.addf %812, %816 : vector<6x128xf32>
    %c8_471 = arith.constant 8 : index
    %c0_472 = arith.constant 0 : index
    %818 = vector.load %arg24[%c8_471, %c0_472] : memref<16x128xf32, #tpu.memory_space<vmem>>, vector<6x128xf32>
    %819 = vector.extract_strided_slice %782 {offsets = [6, 0], sizes = [1, 128], strides = [1, 1]} : vector<9x128xf32> to vector<1x128xf32>
    %820 = vector.broadcast %819 : vector<1x128xf32> to vector<6x128xf32>
    %821 = arith.mulf %818, %820 : vector<6x128xf32>
    %822 = arith.addf %817, %821 : vector<6x128xf32>
    %c9_473 = arith.constant 9 : index
    %c0_474 = arith.constant 0 : index
    %823 = vector.load %arg24[%c9_473, %c0_474] : memref<16x128xf32, #tpu.memory_space<vmem>>, vector<6x128xf32>
    %824 = vector.extract_strided_slice %782 {offsets = [7, 0], sizes = [1, 128], strides = [1, 1]} : vector<9x128xf32> to vector<1x128xf32>
    %825 = vector.broadcast %824 : vector<1x128xf32> to vector<6x128xf32>
    %826 = arith.mulf %823, %825 : vector<6x128xf32>
    %827 = arith.addf %822, %826 : vector<6x128xf32>
    %c10_475 = arith.constant 10 : index
    %c0_476 = arith.constant 0 : index
    %828 = vector.load %arg24[%c10_475, %c0_476] : memref<16x128xf32, #tpu.memory_space<vmem>>, vector<6x128xf32>
    %829 = vector.extract_strided_slice %782 {offsets = [8, 0], sizes = [1, 128], strides = [1, 1]} : vector<9x128xf32> to vector<1x128xf32>
    %830 = vector.broadcast %829 : vector<1x128xf32> to vector<6x128xf32>
    %831 = arith.mulf %828, %830 : vector<6x128xf32>
    %832 = arith.addf %827, %831 : vector<6x128xf32>
    %833 = vector.broadcast %784 : vector<1x128xf32> to vector<6x128xf32>
    %834 = arith.addf %832, %833 : vector<6x128xf32>
    %cst_477 = arith.constant 0.000000e+00 : f32
    %835 = vector.broadcast %cst_477 : f32 to vector<6x128xf32>
    %836 = arith.cmpf oge, %834, %835 : vector<6x128xf32>
    %cst_478 = arith.constant 1.000000e-01 : f32
    %837 = vector.broadcast %cst_478 : f32 to vector<6x128xf32>
    %838 = arith.mulf %837, %834 : vector<6x128xf32>
    %839 = arith.select %836, %834, %838 : vector<6x128xi1>, vector<6x128xf32>
    %840 = arith.truncf %839 : vector<6x128xf32> to vector<6x128xbf16>
    %cst_479 = arith.constant dense<0.000000e+00> : vector<6x128xf32>
    %841 = tpu.matmul %840, %786, %cst_479 {dimension_numbers = #tpu.dot_dimension_numbers<[1], [0], [0], [1], [0, 0, 1, 1], [], []>} : vector<6x128xbf16>, vector<128x128xbf16>, vector<6x128xf32> -> vector<6x128xf32>
    %842 = vector.broadcast %788 : vector<1x128xf32> to vector<6x128xf32>
    %843 = arith.addf %841, %842 : vector<6x128xf32>
    %cst_480 = arith.constant 0.000000e+00 : f32
    %844 = vector.broadcast %cst_480 : f32 to vector<6x128xf32>
    %845 = arith.cmpf oge, %843, %844 : vector<6x128xf32>
    %cst_481 = arith.constant 1.000000e-01 : f32
    %846 = vector.broadcast %cst_481 : f32 to vector<6x128xf32>
    %847 = arith.mulf %846, %843 : vector<6x128xf32>
    %848 = arith.select %845, %843, %847 : vector<6x128xi1>, vector<6x128xf32>
    %cst_482 = arith.constant 0.000000e+00 : f32
    %849 = vector.broadcast %cst_482 : f32 to vector<16x128xf32>
    %c0_483 = arith.constant 0 : index
    %c0_484 = arith.constant 0 : index
    %850 = vector.load %arg25[%c0_483, %c0_484] : memref<16x128xf32, #tpu.memory_space<vmem>>, vector<16x128xf32>
    tpu.vector_store %arg25[%c0_483, %c0_484], %849 {strides = array<i32>} : memref<16x128xf32, #tpu.memory_space<vmem>>, vector<16x128xf32>,
    %851 = vector.extract_strided_slice %848 {offsets = [0, 0], sizes = [2, 128], strides = [1, 1]} : vector<6x128xf32> to vector<2x128xf32>
    %c5_485 = arith.constant 5 : index
    %c0_486 = arith.constant 0 : index
    %852 = vector.load %arg25[%c5_485, %c0_486] : memref<16x128xf32, #tpu.memory_space<vmem>>, vector<2x128xf32>
    tpu.vector_store %arg25[%c5_485, %c0_486], %851 {strides = array<i32>} : memref<16x128xf32, #tpu.memory_space<vmem>>, vector<2x128xf32>,
    %853 = vector.extract_strided_slice %848 {offsets = [4, 0], sizes = [2, 128], strides = [1, 1]} : vector<6x128xf32> to vector<2x128xf32>
    %c9_487 = arith.constant 9 : index
    %c0_488 = arith.constant 0 : index
    %854 = vector.load %arg25[%c9_487, %c0_488] : memref<16x128xf32, #tpu.memory_space<vmem>>, vector<2x128xf32>
    tpu.vector_store %arg25[%c9_487, %c0_488], %853 {strides = array<i32>} : memref<16x128xf32, #tpu.memory_space<vmem>>, vector<2x128xf32>,
    %c10_489 = arith.constant 10 : index
    %c0_490 = arith.constant 0 : index
    %c0_491 = arith.constant 0 : index
    %855 = vector.load %arg4[%c10_489, %c0_490, %c0_491] : memref<13x9x256xf32, #tpu.memory_space<vmem>>, vector<1x9x128xf32>
    %856 = vector.shape_cast %855 : vector<1x9x128xf32> to vector<9x128xf32>
    %c10_492 = arith.constant 10 : index
    %c0_493 = arith.constant 0 : index
    %c0_494 = arith.constant 0 : index
    %857 = vector.load %arg5[%c10_492, %c0_493, %c0_494] : memref<13x1x256xf32, #tpu.memory_space<vmem>>, vector<1x1x128xf32>
    %858 = vector.shape_cast %857 : vector<1x1x128xf32> to vector<1x128xf32>
    %c10_495 = arith.constant 10 : index
    %c0_496 = arith.constant 0 : index
    %c0_497 = arith.constant 0 : index
    %859 = vector.load %arg6[%c10_495, %c0_496, %c0_497] : memref<13x256x256xbf16, #tpu.memory_space<vmem>>, vector<1x128x128xbf16>
    %860 = vector.shape_cast %859 : vector<1x128x128xbf16> to vector<128x128xbf16>
    %c10_498 = arith.constant 10 : index
    %c0_499 = arith.constant 0 : index
    %c0_500 = arith.constant 0 : index
    %861 = vector.load %arg7[%c10_498, %c0_499, %c0_500] : memref<13x1x256xf32, #tpu.memory_space<vmem>>, vector<1x1x128xf32>
    %862 = vector.shape_cast %861 : vector<1x1x128xf32> to vector<1x128xf32>
    %c0_501 = arith.constant 0 : index
    %c0_502 = arith.constant 0 : index
    %863 = vector.load %arg25[%c0_501, %c0_502] : memref<16x128xf32, #tpu.memory_space<vmem>>, vector<6x128xf32>
    %864 = vector.extract_strided_slice %856 {offsets = [0, 0], sizes = [1, 128], strides = [1, 1]} : vector<9x128xf32> to vector<1x128xf32>
    %865 = vector.broadcast %864 : vector<1x128xf32> to vector<6x128xf32>
    %866 = arith.mulf %863, %865 : vector<6x128xf32>
    %c1_503 = arith.constant 1 : index
    %c0_504 = arith.constant 0 : index
    %867 = vector.load %arg25[%c1_503, %c0_504] : memref<16x128xf32, #tpu.memory_space<vmem>>, vector<6x128xf32>
    %868 = vector.extract_strided_slice %856 {offsets = [1, 0], sizes = [1, 128], strides = [1, 1]} : vector<9x128xf32> to vector<1x128xf32>
    %869 = vector.broadcast %868 : vector<1x128xf32> to vector<6x128xf32>
    %870 = arith.mulf %867, %869 : vector<6x128xf32>
    %871 = arith.addf %866, %870 : vector<6x128xf32>
    %c2_505 = arith.constant 2 : index
    %c0_506 = arith.constant 0 : index
    %872 = vector.load %arg25[%c2_505, %c0_506] : memref<16x128xf32, #tpu.memory_space<vmem>>, vector<6x128xf32>
    %873 = vector.extract_strided_slice %856 {offsets = [2, 0], sizes = [1, 128], strides = [1, 1]} : vector<9x128xf32> to vector<1x128xf32>
    %874 = vector.broadcast %873 : vector<1x128xf32> to vector<6x128xf32>
    %875 = arith.mulf %872, %874 : vector<6x128xf32>
    %876 = arith.addf %871, %875 : vector<6x128xf32>
    %c4_507 = arith.constant 4 : index
    %c0_508 = arith.constant 0 : index
    %877 = vector.load %arg25[%c4_507, %c0_508] : memref<16x128xf32, #tpu.memory_space<vmem>>, vector<6x128xf32>
    %878 = vector.extract_strided_slice %856 {offsets = [3, 0], sizes = [1, 128], strides = [1, 1]} : vector<9x128xf32> to vector<1x128xf32>
    %879 = vector.broadcast %878 : vector<1x128xf32> to vector<6x128xf32>
    %880 = arith.mulf %877, %879 : vector<6x128xf32>
    %881 = arith.addf %876, %880 : vector<6x128xf32>
    %c5_509 = arith.constant 5 : index
    %c0_510 = arith.constant 0 : index
    %882 = vector.load %arg25[%c5_509, %c0_510] : memref<16x128xf32, #tpu.memory_space<vmem>>, vector<6x128xf32>
    %883 = vector.extract_strided_slice %856 {offsets = [4, 0], sizes = [1, 128], strides = [1, 1]} : vector<9x128xf32> to vector<1x128xf32>
    %884 = vector.broadcast %883 : vector<1x128xf32> to vector<6x128xf32>
    %885 = arith.mulf %882, %884 : vector<6x128xf32>
    %886 = arith.addf %881, %885 : vector<6x128xf32>
    %c6_511 = arith.constant 6 : index
    %c0_512 = arith.constant 0 : index
    %887 = vector.load %arg25[%c6_511, %c0_512] : memref<16x128xf32, #tpu.memory_space<vmem>>, vector<6x128xf32>
    %888 = vector.extract_strided_slice %856 {offsets = [5, 0], sizes = [1, 128], strides = [1, 1]} : vector<9x128xf32> to vector<1x128xf32>
    %889 = vector.broadcast %888 : vector<1x128xf32> to vector<6x128xf32>
    %890 = arith.mulf %887, %889 : vector<6x128xf32>
    %891 = arith.addf %886, %890 : vector<6x128xf32>
    %c8_513 = arith.constant 8 : index
    %c0_514 = arith.constant 0 : index
    %892 = vector.load %arg25[%c8_513, %c0_514] : memref<16x128xf32, #tpu.memory_space<vmem>>, vector<6x128xf32>
    %893 = vector.extract_strided_slice %856 {offsets = [6, 0], sizes = [1, 128], strides = [1, 1]} : vector<9x128xf32> to vector<1x128xf32>
    %894 = vector.broadcast %893 : vector<1x128xf32> to vector<6x128xf32>
    %895 = arith.mulf %892, %894 : vector<6x128xf32>
    %896 = arith.addf %891, %895 : vector<6x128xf32>
    %c9_515 = arith.constant 9 : index
    %c0_516 = arith.constant 0 : index
    %897 = vector.load %arg25[%c9_515, %c0_516] : memref<16x128xf32, #tpu.memory_space<vmem>>, vector<6x128xf32>
    %898 = vector.extract_strided_slice %856 {offsets = [7, 0], sizes = [1, 128], strides = [1, 1]} : vector<9x128xf32> to vector<1x128xf32>
    %899 = vector.broadcast %898 : vector<1x128xf32> to vector<6x128xf32>
    %900 = arith.mulf %897, %899 : vector<6x128xf32>
    %901 = arith.addf %896, %900 : vector<6x128xf32>
    %c10_517 = arith.constant 10 : index
    %c0_518 = arith.constant 0 : index
    %902 = vector.load %arg25[%c10_517, %c0_518] : memref<16x128xf32, #tpu.memory_space<vmem>>, vector<6x128xf32>
    %903 = vector.extract_strided_slice %856 {offsets = [8, 0], sizes = [1, 128], strides = [1, 1]} : vector<9x128xf32> to vector<1x128xf32>
    %904 = vector.broadcast %903 : vector<1x128xf32> to vector<6x128xf32>
    %905 = arith.mulf %902, %904 : vector<6x128xf32>
    %906 = arith.addf %901, %905 : vector<6x128xf32>
    %907 = vector.broadcast %858 : vector<1x128xf32> to vector<6x128xf32>
    %908 = arith.addf %906, %907 : vector<6x128xf32>
    %cst_519 = arith.constant 0.000000e+00 : f32
    %909 = vector.broadcast %cst_519 : f32 to vector<6x128xf32>
    %910 = arith.cmpf oge, %908, %909 : vector<6x128xf32>
    %cst_520 = arith.constant 1.000000e-01 : f32
    %911 = vector.broadcast %cst_520 : f32 to vector<6x128xf32>
    %912 = arith.mulf %911, %908 : vector<6x128xf32>
    %913 = arith.select %910, %908, %912 : vector<6x128xi1>, vector<6x128xf32>
    %914 = arith.truncf %913 : vector<6x128xf32> to vector<6x128xbf16>
    %cst_521 = arith.constant dense<0.000000e+00> : vector<6x128xf32>
    %915 = tpu.matmul %914, %860, %cst_521 {dimension_numbers = #tpu.dot_dimension_numbers<[1], [0], [0], [1], [0, 0, 1, 1], [], []>} : vector<6x128xbf16>, vector<128x128xbf16>, vector<6x128xf32> -> vector<6x128xf32>
    %916 = vector.broadcast %862 : vector<1x128xf32> to vector<6x128xf32>
    %917 = arith.addf %915, %916 : vector<6x128xf32>
    %cst_522 = arith.constant 0.000000e+00 : f32
    %918 = vector.broadcast %cst_522 : f32 to vector<6x128xf32>
    %919 = arith.cmpf oge, %917, %918 : vector<6x128xf32>
    %cst_523 = arith.constant 1.000000e-01 : f32
    %920 = vector.broadcast %cst_523 : f32 to vector<6x128xf32>
    %921 = arith.mulf %920, %917 : vector<6x128xf32>
    %922 = arith.select %919, %917, %921 : vector<6x128xi1>, vector<6x128xf32>
    %cst_524 = arith.constant 0.000000e+00 : f32
    %923 = vector.broadcast %cst_524 : f32 to vector<16x128xf32>
    %c0_525 = arith.constant 0 : index
    %c0_526 = arith.constant 0 : index
    %924 = vector.load %arg26[%c0_525, %c0_526] : memref<16x128xf32, #tpu.memory_space<vmem>>, vector<16x128xf32>
    tpu.vector_store %arg26[%c0_525, %c0_526], %923 {strides = array<i32>} : memref<16x128xf32, #tpu.memory_space<vmem>>, vector<16x128xf32>,
    %925 = vector.extract_strided_slice %922 {offsets = [0, 0], sizes = [2, 128], strides = [1, 1]} : vector<6x128xf32> to vector<2x128xf32>
    %c5_527 = arith.constant 5 : index
    %c0_528 = arith.constant 0 : index
    %926 = vector.load %arg26[%c5_527, %c0_528] : memref<16x128xf32, #tpu.memory_space<vmem>>, vector<2x128xf32>
    tpu.vector_store %arg26[%c5_527, %c0_528], %925 {strides = array<i32>} : memref<16x128xf32, #tpu.memory_space<vmem>>, vector<2x128xf32>,
    %927 = vector.extract_strided_slice %922 {offsets = [4, 0], sizes = [2, 128], strides = [1, 1]} : vector<6x128xf32> to vector<2x128xf32>
    %c9_529 = arith.constant 9 : index
    %c0_530 = arith.constant 0 : index
    %928 = vector.load %arg26[%c9_529, %c0_530] : memref<16x128xf32, #tpu.memory_space<vmem>>, vector<2x128xf32>
    tpu.vector_store %arg26[%c9_529, %c0_530], %927 {strides = array<i32>} : memref<16x128xf32, #tpu.memory_space<vmem>>, vector<2x128xf32>,
    %c11_531 = arith.constant 11 : index
    %c0_532 = arith.constant 0 : index
    %c0_533 = arith.constant 0 : index
    %929 = vector.load %arg4[%c11_531, %c0_532, %c0_533] : memref<13x9x256xf32, #tpu.memory_space<vmem>>, vector<1x9x128xf32>
    %930 = vector.shape_cast %929 : vector<1x9x128xf32> to vector<9x128xf32>
    %c11_534 = arith.constant 11 : index
    %c0_535 = arith.constant 0 : index
    %c0_536 = arith.constant 0 : index
    %931 = vector.load %arg5[%c11_534, %c0_535, %c0_536] : memref<13x1x256xf32, #tpu.memory_space<vmem>>, vector<1x1x128xf32>
    %932 = vector.shape_cast %931 : vector<1x1x128xf32> to vector<1x128xf32>
    %c11_537 = arith.constant 11 : index
    %c0_538 = arith.constant 0 : index
    %c0_539 = arith.constant 0 : index
    %933 = vector.load %arg6[%c11_537, %c0_538, %c0_539] : memref<13x256x256xbf16, #tpu.memory_space<vmem>>, vector<1x128x256xbf16>
    %934 = vector.shape_cast %933 : vector<1x128x256xbf16> to vector<128x256xbf16>
    %c11_540 = arith.constant 11 : index
    %c0_541 = arith.constant 0 : index
    %c0_542 = arith.constant 0 : index
    %935 = vector.load %arg7[%c11_540, %c0_541, %c0_542] : memref<13x1x256xf32, #tpu.memory_space<vmem>>, vector<1x1x256xf32>
    %936 = vector.shape_cast %935 : vector<1x1x256xf32> to vector<1x256xf32>
    %c0_543 = arith.constant 0 : index
    %c0_544 = arith.constant 0 : index
    %937 = vector.load %arg26[%c0_543, %c0_544] : memref<16x128xf32, #tpu.memory_space<vmem>>, vector<6x128xf32>
    %938 = vector.extract_strided_slice %930 {offsets = [0, 0], sizes = [1, 128], strides = [1, 1]} : vector<9x128xf32> to vector<1x128xf32>
    %939 = vector.broadcast %938 : vector<1x128xf32> to vector<6x128xf32>
    %940 = arith.mulf %937, %939 : vector<6x128xf32>
    %c1_545 = arith.constant 1 : index
    %c0_546 = arith.constant 0 : index
    %941 = vector.load %arg26[%c1_545, %c0_546] : memref<16x128xf32, #tpu.memory_space<vmem>>, vector<6x128xf32>
    %942 = vector.extract_strided_slice %930 {offsets = [1, 0], sizes = [1, 128], strides = [1, 1]} : vector<9x128xf32> to vector<1x128xf32>
    %943 = vector.broadcast %942 : vector<1x128xf32> to vector<6x128xf32>
    %944 = arith.mulf %941, %943 : vector<6x128xf32>
    %945 = arith.addf %940, %944 : vector<6x128xf32>
    %c2_547 = arith.constant 2 : index
    %c0_548 = arith.constant 0 : index
    %946 = vector.load %arg26[%c2_547, %c0_548] : memref<16x128xf32, #tpu.memory_space<vmem>>, vector<6x128xf32>
    %947 = vector.extract_strided_slice %930 {offsets = [2, 0], sizes = [1, 128], strides = [1, 1]} : vector<9x128xf32> to vector<1x128xf32>
    %948 = vector.broadcast %947 : vector<1x128xf32> to vector<6x128xf32>
    %949 = arith.mulf %946, %948 : vector<6x128xf32>
    %950 = arith.addf %945, %949 : vector<6x128xf32>
    %c4_549 = arith.constant 4 : index
    %c0_550 = arith.constant 0 : index
    %951 = vector.load %arg26[%c4_549, %c0_550] : memref<16x128xf32, #tpu.memory_space<vmem>>, vector<6x128xf32>
    %952 = vector.extract_strided_slice %930 {offsets = [3, 0], sizes = [1, 128], strides = [1, 1]} : vector<9x128xf32> to vector<1x128xf32>
    %953 = vector.broadcast %952 : vector<1x128xf32> to vector<6x128xf32>
    %954 = arith.mulf %951, %953 : vector<6x128xf32>
    %955 = arith.addf %950, %954 : vector<6x128xf32>
    %c5_551 = arith.constant 5 : index
    %c0_552 = arith.constant 0 : index
    %956 = vector.load %arg26[%c5_551, %c0_552] : memref<16x128xf32, #tpu.memory_space<vmem>>, vector<6x128xf32>
    %957 = vector.extract_strided_slice %930 {offsets = [4, 0], sizes = [1, 128], strides = [1, 1]} : vector<9x128xf32> to vector<1x128xf32>
    %958 = vector.broadcast %957 : vector<1x128xf32> to vector<6x128xf32>
    %959 = arith.mulf %956, %958 : vector<6x128xf32>
    %960 = arith.addf %955, %959 : vector<6x128xf32>
    %c6_553 = arith.constant 6 : index
    %c0_554 = arith.constant 0 : index
    %961 = vector.load %arg26[%c6_553, %c0_554] : memref<16x128xf32, #tpu.memory_space<vmem>>, vector<6x128xf32>
    %962 = vector.extract_strided_slice %930 {offsets = [5, 0], sizes = [1, 128], strides = [1, 1]} : vector<9x128xf32> to vector<1x128xf32>
    %963 = vector.broadcast %962 : vector<1x128xf32> to vector<6x128xf32>
    %964 = arith.mulf %961, %963 : vector<6x128xf32>
    %965 = arith.addf %960, %964 : vector<6x128xf32>
    %c8_555 = arith.constant 8 : index
    %c0_556 = arith.constant 0 : index
    %966 = vector.load %arg26[%c8_555, %c0_556] : memref<16x128xf32, #tpu.memory_space<vmem>>, vector<6x128xf32>
    %967 = vector.extract_strided_slice %930 {offsets = [6, 0], sizes = [1, 128], strides = [1, 1]} : vector<9x128xf32> to vector<1x128xf32>
    %968 = vector.broadcast %967 : vector<1x128xf32> to vector<6x128xf32>
    %969 = arith.mulf %966, %968 : vector<6x128xf32>
    %970 = arith.addf %965, %969 : vector<6x128xf32>
    %c9_557 = arith.constant 9 : index
    %c0_558 = arith.constant 0 : index
    %971 = vector.load %arg26[%c9_557, %c0_558] : memref<16x128xf32, #tpu.memory_space<vmem>>, vector<6x128xf32>
    %972 = vector.extract_strided_slice %930 {offsets = [7, 0], sizes = [1, 128], strides = [1, 1]} : vector<9x128xf32> to vector<1x128xf32>
    %973 = vector.broadcast %972 : vector<1x128xf32> to vector<6x128xf32>
    %974 = arith.mulf %971, %973 : vector<6x128xf32>
    %975 = arith.addf %970, %974 : vector<6x128xf32>
    %c10_559 = arith.constant 10 : index
    %c0_560 = arith.constant 0 : index
    %976 = vector.load %arg26[%c10_559, %c0_560] : memref<16x128xf32, #tpu.memory_space<vmem>>, vector<6x128xf32>
    %977 = vector.extract_strided_slice %930 {offsets = [8, 0], sizes = [1, 128], strides = [1, 1]} : vector<9x128xf32> to vector<1x128xf32>
    %978 = vector.broadcast %977 : vector<1x128xf32> to vector<6x128xf32>
    %979 = arith.mulf %976, %978 : vector<6x128xf32>
    %980 = arith.addf %975, %979 : vector<6x128xf32>
    %981 = vector.broadcast %932 : vector<1x128xf32> to vector<6x128xf32>
    %982 = arith.addf %980, %981 : vector<6x128xf32>
    %cst_561 = arith.constant 0.000000e+00 : f32
    %983 = vector.broadcast %cst_561 : f32 to vector<6x128xf32>
    %984 = arith.cmpf oge, %982, %983 : vector<6x128xf32>
    %cst_562 = arith.constant 1.000000e-01 : f32
    %985 = vector.broadcast %cst_562 : f32 to vector<6x128xf32>
    %986 = arith.mulf %985, %982 : vector<6x128xf32>
    %987 = arith.select %984, %982, %986 : vector<6x128xi1>, vector<6x128xf32>
    %988 = arith.truncf %987 : vector<6x128xf32> to vector<6x128xbf16>
    %c0_563 = arith.constant 0 : index
    %c0_564 = arith.constant 0 : index
    %989 = vector.load %arg11[%c0_563, %c0_564] : memref<1x6xbf16, #tpu.memory_space<vmem>>, vector<1x6xbf16>
    %cst_565 = arith.constant dense<0.000000e+00> : vector<1x128xf32>
    %990 = tpu.matmul %989, %988, %cst_565 {dimension_numbers = #tpu.dot_dimension_numbers<[1], [0], [0], [1], [0, 0, 1, 1], [], []>} : vector<1x6xbf16>, vector<6x128xbf16>, vector<1x128xf32> -> vector<1x128xf32>
    %991 = arith.truncf %990 : vector<1x128xf32> to vector<1x128xbf16>
    %cst_566 = arith.constant dense<0.000000e+00> : vector<1x256xf32>
    %992 = tpu.matmul %991, %934, %cst_566 {dimension_numbers = #tpu.dot_dimension_numbers<[1], [0], [0], [1], [0, 0, 1, 1], [], []>} : vector<1x128xbf16>, vector<128x256xbf16>, vector<1x256xf32> -> vector<1x256xf32>
    %993 = arith.addf %992, %936 : vector<1x256xf32>
    %cst_567 = arith.constant 0.000000e+00 : f32
    %994 = vector.broadcast %cst_567 : f32 to vector<1x256xf32>
    %995 = arith.cmpf oge, %993, %994 : vector<1x256xf32>
    %cst_568 = arith.constant 1.000000e-01 : f32
    %996 = vector.broadcast %cst_568 : f32 to vector<1x256xf32>
    %997 = arith.mulf %996, %993 : vector<1x256xf32>
    %998 = arith.select %995, %993, %997 : vector<1x256xi1>, vector<1x256xf32>
    %cst_569 = arith.constant 0.000000e+00 : f32
    %999 = vector.broadcast %cst_569 : f32 to vector<9x256xf32>
    %c0_570 = arith.constant 0 : index
    %c0_571 = arith.constant 0 : index
    %1000 = vector.load %arg27[%c0_570, %c0_571] : memref<9x256xf32, #tpu.memory_space<vmem>>, vector<9x256xf32>
    tpu.vector_store %arg27[%c0_570, %c0_571], %999 {strides = array<i32>} : memref<9x256xf32, #tpu.memory_space<vmem>>, vector<9x256xf32>,
    %c4_572 = arith.constant 4 : index
    %c0_573 = arith.constant 0 : index
    %1001 = vector.load %arg27[%c4_572, %c0_573] : memref<9x256xf32, #tpu.memory_space<vmem>>, vector<1x256xf32>
    tpu.vector_store %arg27[%c4_572, %c0_573], %998 {strides = array<i32>} : memref<9x256xf32, #tpu.memory_space<vmem>>, vector<1x256xf32>,
    %c12_574 = arith.constant 12 : index
    %c0_575 = arith.constant 0 : index
    %c0_576 = arith.constant 0 : index
    %1002 = vector.load %arg4[%c12_574, %c0_575, %c0_576] : memref<13x9x256xf32, #tpu.memory_space<vmem>>, vector<1x9x256xf32>
    %1003 = vector.shape_cast %1002 : vector<1x9x256xf32> to vector<9x256xf32>
    %c12_577 = arith.constant 12 : index
    %c0_578 = arith.constant 0 : index
    %c0_579 = arith.constant 0 : index
    %1004 = vector.load %arg5[%c12_577, %c0_578, %c0_579] : memref<13x1x256xf32, #tpu.memory_space<vmem>>, vector<1x1x256xf32>
    %1005 = vector.shape_cast %1004 : vector<1x1x256xf32> to vector<1x256xf32>
    %c12_580 = arith.constant 12 : index
    %c0_581 = arith.constant 0 : index
    %c0_582 = arith.constant 0 : index
    %1006 = vector.load %arg6[%c12_580, %c0_581, %c0_582] : memref<13x256x256xbf16, #tpu.memory_space<vmem>>, vector<1x256x256xbf16>
    %1007 = vector.shape_cast %1006 : vector<1x256x256xbf16> to vector<256x256xbf16>
    %c12_583 = arith.constant 12 : index
    %c0_584 = arith.constant 0 : index
    %c0_585 = arith.constant 0 : index
    %1008 = vector.load %arg7[%c12_583, %c0_584, %c0_585] : memref<13x1x256xf32, #tpu.memory_space<vmem>>, vector<1x1x256xf32>
    %1009 = vector.shape_cast %1008 : vector<1x1x256xf32> to vector<1x256xf32>
    %c0_586 = arith.constant 0 : index
    %c0_587 = arith.constant 0 : index
    %1010 = vector.load %arg27[%c0_586, %c0_587] : memref<9x256xf32, #tpu.memory_space<vmem>>, vector<1x256xf32>
    %1011 = vector.extract_strided_slice %1003 {offsets = [0, 0], sizes = [1, 256], strides = [1, 1]} : vector<9x256xf32> to vector<1x256xf32>
    %1012 = arith.mulf %1010, %1011 : vector<1x256xf32>
    %c1_588 = arith.constant 1 : index
    %c0_589 = arith.constant 0 : index
    %1013 = vector.load %arg27[%c1_588, %c0_589] : memref<9x256xf32, #tpu.memory_space<vmem>>, vector<1x256xf32>
    %1014 = vector.extract_strided_slice %1003 {offsets = [1, 0], sizes = [1, 256], strides = [1, 1]} : vector<9x256xf32> to vector<1x256xf32>
    %1015 = arith.mulf %1013, %1014 : vector<1x256xf32>
    %1016 = arith.addf %1012, %1015 : vector<1x256xf32>
    %c2_590 = arith.constant 2 : index
    %c0_591 = arith.constant 0 : index
    %1017 = vector.load %arg27[%c2_590, %c0_591] : memref<9x256xf32, #tpu.memory_space<vmem>>, vector<1x256xf32>
    %1018 = vector.extract_strided_slice %1003 {offsets = [2, 0], sizes = [1, 256], strides = [1, 1]} : vector<9x256xf32> to vector<1x256xf32>
    %1019 = arith.mulf %1017, %1018 : vector<1x256xf32>
    %1020 = arith.addf %1016, %1019 : vector<1x256xf32>
    %c3_592 = arith.constant 3 : index
    %c0_593 = arith.constant 0 : index
    %1021 = vector.load %arg27[%c3_592, %c0_593] : memref<9x256xf32, #tpu.memory_space<vmem>>, vector<1x256xf32>
    %1022 = vector.extract_strided_slice %1003 {offsets = [3, 0], sizes = [1, 256], strides = [1, 1]} : vector<9x256xf32> to vector<1x256xf32>
    %1023 = arith.mulf %1021, %1022 : vector<1x256xf32>
    %1024 = arith.addf %1020, %1023 : vector<1x256xf32>
    %c4_594 = arith.constant 4 : index
    %c0_595 = arith.constant 0 : index
    %1025 = vector.load %arg27[%c4_594, %c0_595] : memref<9x256xf32, #tpu.memory_space<vmem>>, vector<1x256xf32>
    %1026 = vector.extract_strided_slice %1003 {offsets = [4, 0], sizes = [1, 256], strides = [1, 1]} : vector<9x256xf32> to vector<1x256xf32>
    %1027 = arith.mulf %1025, %1026 : vector<1x256xf32>
    %1028 = arith.addf %1024, %1027 : vector<1x256xf32>
    %c5_596 = arith.constant 5 : index
    %c0_597 = arith.constant 0 : index
    %1029 = vector.load %arg27[%c5_596, %c0_597] : memref<9x256xf32, #tpu.memory_space<vmem>>, vector<1x256xf32>
    %1030 = vector.extract_strided_slice %1003 {offsets = [5, 0], sizes = [1, 256], strides = [1, 1]} : vector<9x256xf32> to vector<1x256xf32>
    %1031 = arith.mulf %1029, %1030 : vector<1x256xf32>
    %1032 = arith.addf %1028, %1031 : vector<1x256xf32>
    %c6_598 = arith.constant 6 : index
    %c0_599 = arith.constant 0 : index
    %1033 = vector.load %arg27[%c6_598, %c0_599] : memref<9x256xf32, #tpu.memory_space<vmem>>, vector<1x256xf32>
    %1034 = vector.extract_strided_slice %1003 {offsets = [6, 0], sizes = [1, 256], strides = [1, 1]} : vector<9x256xf32> to vector<1x256xf32>
    %1035 = arith.mulf %1033, %1034 : vector<1x256xf32>
    %1036 = arith.addf %1032, %1035 : vector<1x256xf32>
    %c7_600 = arith.constant 7 : index
    %c0_601 = arith.constant 0 : index
    %1037 = vector.load %arg27[%c7_600, %c0_601] : memref<9x256xf32, #tpu.memory_space<vmem>>, vector<1x256xf32>
    %1038 = vector.extract_strided_slice %1003 {offsets = [7, 0], sizes = [1, 256], strides = [1, 1]} : vector<9x256xf32> to vector<1x256xf32>
    %1039 = arith.mulf %1037, %1038 : vector<1x256xf32>
    %1040 = arith.addf %1036, %1039 : vector<1x256xf32>
    %c8_602 = arith.constant 8 : index
    %c0_603 = arith.constant 0 : index
    %1041 = vector.load %arg27[%c8_602, %c0_603] : memref<9x256xf32, #tpu.memory_space<vmem>>, vector<1x256xf32>
    %1042 = vector.extract_strided_slice %1003 {offsets = [8, 0], sizes = [1, 256], strides = [1, 1]} : vector<9x256xf32> to vector<1x256xf32>
    %1043 = arith.mulf %1041, %1042 : vector<1x256xf32>
    %1044 = arith.addf %1040, %1043 : vector<1x256xf32>
    %1045 = arith.addf %1044, %1005 : vector<1x256xf32>
    %cst_604 = arith.constant 0.000000e+00 : f32
    %1046 = vector.broadcast %cst_604 : f32 to vector<1x256xf32>
    %1047 = arith.cmpf oge, %1045, %1046 : vector<1x256xf32>
    %cst_605 = arith.constant 1.000000e-01 : f32
    %1048 = vector.broadcast %cst_605 : f32 to vector<1x256xf32>
    %1049 = arith.mulf %1048, %1045 : vector<1x256xf32>
    %1050 = arith.select %1047, %1045, %1049 : vector<1x256xi1>, vector<1x256xf32>
    %1051 = arith.truncf %1050 : vector<1x256xf32> to vector<1x256xbf16>
    %cst_606 = arith.constant dense<0.000000e+00> : vector<1x256xf32>
    %1052 = tpu.matmul %1051, %1007, %cst_606 {dimension_numbers = #tpu.dot_dimension_numbers<[1], [0], [0], [1], [0, 0, 1, 1], [], []>} : vector<1x256xbf16>, vector<256x256xbf16>, vector<1x256xf32> -> vector<1x256xf32>
    %1053 = arith.addf %1052, %1009 : vector<1x256xf32>
    %cst_607 = arith.constant 0.000000e+00 : f32
    %1054 = vector.broadcast %cst_607 : f32 to vector<1x256xf32>
    %1055 = arith.cmpf oge, %1053, %1054 : vector<1x256xf32>
    %cst_608 = arith.constant 1.000000e-01 : f32
    %1056 = vector.broadcast %cst_608 : f32 to vector<1x256xf32>
    %1057 = arith.mulf %1056, %1053 : vector<1x256xf32>
    %1058 = arith.select %1055, %1053, %1057 : vector<1x256xi1>, vector<1x256xf32>
    %cst_609 = arith.constant dense<0.000000e+00> : vector<256xf32>
    %1059 = vector.multi_reduction <add>, %1058, %cst_609 [0] : vector<1x256xf32> to vector<256xf32>
    %1060 = vector.shape_cast %1059 : vector<256xf32> to vector<1x256xf32>
    %cst_610 = arith.constant 1.000000e+00 : f32
    %1061 = vector.broadcast %cst_610 : f32 to vector<1x256xf32>
    %1062 = arith.mulf %1060, %1061 : vector<1x256xf32>
    %1063 = arith.truncf %1062 : vector<1x256xf32> to vector<1x256xbf16>
    %c0_611 = arith.constant 0 : index
    %c0_612 = arith.constant 0 : index
    %1064 = vector.load %arg12[%c0_611, %c0_612] : memref<256x1024xbf16, #tpu.memory_space<vmem>>, vector<256x1024xbf16>
    %cst_613 = arith.constant dense<0.000000e+00> : vector<1x1024xf32>
    %1065 = tpu.matmul %1063, %1064, %cst_613 {dimension_numbers = #tpu.dot_dimension_numbers<[1], [0], [0], [1], [0, 0, 1, 1], [], []>} : vector<1x256xbf16>, vector<256x1024xbf16>, vector<1x1024xf32> -> vector<1x1024xf32>
    %c0_614 = arith.constant 0 : index
    %c0_615 = arith.constant 0 : index
    %1066 = vector.load %arg13[%c0_614, %c0_615] : memref<1x1024xf32, #tpu.memory_space<vmem>>, vector<1x1024xf32>
    %1067 = arith.addf %1065, %1066 : vector<1x1024xf32>
    %c0_616 = arith.constant 0 : index
    %c0_617 = arith.constant 0 : index
    %c0_618 = arith.constant 0 : index
    %1068 = vector.load %arg14[%c0_616, %c0_617, %c0_618] : memref<1x1x1024xf32, #tpu.memory_space<vmem>>, vector<1x1x1024xf32>
    %1069 = vector.shape_cast %1068 : vector<1x1x1024xf32> to vector<1x1024xf32>
    %1070 = vector.shape_cast %1067 : vector<1x1024xf32> to vector<1x1x1024xf32>
    tpu.vector_store %arg14[%c0_616, %c0_617, %c0_618], %1070 {strides = array<i32>} : memref<1x1x1024xf32, #tpu.memory_space<vmem>>, vector<1x1x1024xf32>,
    return
  }
  func.func @transform_0(%arg0: i32) -> (i32, i32, i32) {
    %c0_i32 = arith.constant 0 : i32
    %c0_i32_0 = arith.constant 0 : i32
    %c0_i32_1 = arith.constant 0 : i32
    return %arg0, %c0_i32, %c0_i32_0 : i32, i32, i32
  }
  func.func @transform_1(%arg0: i32) -> (i32, i32) {
    %c0_i32 = arith.constant 0 : i32
    %c0_i32_0 = arith.constant 0 : i32
    %c0_i32_1 = arith.constant 0 : i32
    return %c0_i32, %c0_i32_0 : i32, i32
  }
  func.func @transform_2(%arg0: i32) -> (i32, i32) {
    %c0_i32 = arith.constant 0 : i32
    %c0_i32_0 = arith.constant 0 : i32
    %c0_i32_1 = arith.constant 0 : i32
    return %c0_i32, %c0_i32_0 : i32, i32
  }
  func.func @transform_3(%arg0: i32) -> (i32, i32, i32) {
    %c0_i32 = arith.constant 0 : i32
    %c0_i32_0 = arith.constant 0 : i32
    %c0_i32_1 = arith.constant 0 : i32
    %c0_i32_2 = arith.constant 0 : i32
    return %c0_i32, %c0_i32_0, %c0_i32_1 : i32, i32, i32
  }
  func.func @transform_4(%arg0: i32) -> (i32, i32, i32) {
    %c0_i32 = arith.constant 0 : i32
    %c0_i32_0 = arith.constant 0 : i32
    %c0_i32_1 = arith.constant 0 : i32
    %c0_i32_2 = arith.constant 0 : i32
    return %c0_i32, %c0_i32_0, %c0_i32_1 : i32, i32, i32
  }
  func.func @transform_5(%arg0: i32) -> (i32, i32, i32) {
    %c0_i32 = arith.constant 0 : i32
    %c0_i32_0 = arith.constant 0 : i32
    %c0_i32_1 = arith.constant 0 : i32
    %c0_i32_2 = arith.constant 0 : i32
    return %c0_i32, %c0_i32_0, %c0_i32_1 : i32, i32, i32
  }
  func.func @transform_6(%arg0: i32) -> (i32, i32, i32) {
    %c0_i32 = arith.constant 0 : i32
    %c0_i32_0 = arith.constant 0 : i32
    %c0_i32_1 = arith.constant 0 : i32
    %c0_i32_2 = arith.constant 0 : i32
    return %c0_i32, %c0_i32_0, %c0_i32_1 : i32, i32, i32
  }
  func.func @transform_7(%arg0: i32) -> (i32, i32) {
    %c0_i32 = arith.constant 0 : i32
    %c0_i32_0 = arith.constant 0 : i32
    %c0_i32_1 = arith.constant 0 : i32
    return %c0_i32, %c0_i32_0 : i32, i32
  }
  func.func @transform_8(%arg0: i32) -> (i32, i32) {
    %c0_i32 = arith.constant 0 : i32
    %c0_i32_0 = arith.constant 0 : i32
    %c0_i32_1 = arith.constant 0 : i32
    return %c0_i32, %c0_i32_0 : i32, i32
  }
  func.func @transform_9(%arg0: i32) -> (i32, i32) {
    %c0_i32 = arith.constant 0 : i32
    %c0_i32_0 = arith.constant 0 : i32
    %c0_i32_1 = arith.constant 0 : i32
    return %c0_i32, %c0_i32_0 : i32, i32
  }
  func.func @transform_10(%arg0: i32) -> (i32, i32) {
    %c0_i32 = arith.constant 0 : i32
    %c0_i32_0 = arith.constant 0 : i32
    %c0_i32_1 = arith.constant 0 : i32
    return %c0_i32, %c0_i32_0 : i32, i32
  }
  func.func @transform_11(%arg0: i32) -> (i32, i32) {
    %c0_i32 = arith.constant 0 : i32
    %c0_i32_0 = arith.constant 0 : i32
    %c0_i32_1 = arith.constant 0 : i32
    return %c0_i32, %c0_i32_0 : i32, i32
  }
  func.func @transform_12(%arg0: i32) -> (i32, i32) {
    %c0_i32 = arith.constant 0 : i32
    %c0_i32_0 = arith.constant 0 : i32
    %c0_i32_1 = arith.constant 0 : i32
    return %c0_i32, %c0_i32_0 : i32, i32
  }
  func.func @transform_13(%arg0: i32) -> (i32, i32, i32) {
    %c0_i32 = arith.constant 0 : i32
    %c0_i32_0 = arith.constant 0 : i32
    %c0_i32_1 = arith.constant 0 : i32
    return %arg0, %c0_i32, %c0_i32_0 : i32, i32, i32
  }
}

</mosaic_0001>

<llo_original>
// kernel: mobilenet_v1_forward.1
$region0: #{mobilenet_v1_forward.1}
  #allocation0 [shape = 'u32[]', space=smem, size = 0x4, offset = 0x4, fixed_abs, tag = 'smem constant byte address 0x4 - core index']
  #allocation1 [shape = 'u32[144,128]{1,0:T(1,128)}', space=vmem, size = 0x12000, scoped, tag = 'internal scratch']
  #allocation2 [shape = 'f32[324,8]{1,0:T(8,128)}', space=vmem, size = 0x29000, scoped, tag = 'scratch operand']
  #allocation3 [shape = 'f32[324,16]{1,0:T(8,128)}', space=vmem, size = 0x29000, scoped, tag = 'scratch operand']
  #allocation4 [shape = 'f32[100,32]{1,0:T(8,128)}', space=vmem, size = 0xd000, scoped, tag = 'scratch operand']
  #allocation5 [shape = 'f32[100,32]{1,0:T(8,128)}', space=vmem, size = 0xd000, scoped, tag = 'scratch operand']
  #allocation6 [shape = 'f32[36,64]{1,0:T(8,128)}', space=vmem, size = 0x5000, scoped, tag = 'scratch operand']
  #allocation7 [shape = 'f32[36,64]{1,0:T(8,128)}', space=vmem, size = 0x5000, scoped, tag = 'scratch operand']
  #allocation8 [shape = 'f32[16,128]{1,0:T(8,128)}', space=vmem, size = 0x2000, scoped, tag = 'scratch operand']
  #allocation9 [shape = 'f32[16,128]{1,0:T(8,128)}', space=vmem, size = 0x2000, scoped, tag = 'scratch operand']
  #allocation10 [shape = 'f32[16,128]{1,0:T(8,128)}', space=vmem, size = 0x2000, scoped, tag = 'scratch operand']
  #allocation11 [shape = 'f32[16,128]{1,0:T(8,128)}', space=vmem, size = 0x2000, scoped, tag = 'scratch operand']
  #allocation12 [shape = 'f32[16,128]{1,0:T(8,128)}', space=vmem, size = 0x2000, scoped, tag = 'scratch operand']
  #allocation13 [shape = 'f32[16,128]{1,0:T(8,128)}', space=vmem, size = 0x2000, scoped, tag = 'scratch operand']
  #allocation14 [shape = 'f32[9,256]{1,0:T(8,128)}', space=vmem, size = 0x4000, scoped, tag = 'scratch operand']
  %s0 = inlined_call_operand.vmem [shape: bf16[2,256,32], index: 0, kind: input, shape index: {}]
  %s1 = inlined_call_operand.vmem [shape: bf16[32,8], index: 1, kind: input, shape index: {}]
  %s2 = inlined_call_operand.vmem [shape: f32[1,8], index: 2, kind: input, shape index: {}]
  %s3 = inlined_call_operand.vmem [shape: f32[13,9,256], index: 3, kind: input, shape index: {}]
  %s4 = inlined_call_operand.vmem [shape: f32[13,1,256], index: 4, kind: input, shape index: {}]
  %s5 = inlined_call_operand.vmem [shape: bf16[13,256,256], index: 5, kind: input, shape index: {}]
  %s6 = inlined_call_operand.vmem [shape: f32[13,1,256], index: 6, kind: input, shape index: {}]
  %s7 = inlined_call_operand.vmem [shape: bf16[64,286], index: 7, kind: input, shape index: {}]
  %s8 = inlined_call_operand.vmem [shape: bf16[16,78], index: 8, kind: input, shape index: {}]
  %s9 = inlined_call_operand.vmem [shape: bf16[4,22], index: 9, kind: input, shape index: {}]
  %s10 = inlined_call_operand.vmem [shape: bf16[1,6], index: 10, kind: input, shape index: {}]
  %s11 = inlined_call_operand.vmem [shape: bf16[256,1024], index: 11, kind: input, shape index: {}]
  %s12 = inlined_call_operand.vmem [shape: f32[1,1024], index: 12, kind: input, shape index: {}]
  %s13 = inlined_call_operand.vmem [shape: f32[2,1,1024], index: 13, kind: output, shape index: {}]
  %s14 = sld [smem:[#allocation0]]
  $region85: #{mobilenet_v1_forward.1} parent=0
    _
  %s16 = ssub.s32 1, %s14
  %s17 = scalar_select 0, %s16, %s14
  loop: start=0, step=1, limit=4
  $region2: #{mobilenet_v1_forward.1} parent=0 // loop_pre_header
    _
  $region3: #{mobilenet_v1_forward.1} parent=0 // loop_header
    %s19 = sphi 0, %s23
    %p20 = scmp.ge.s32.totalorder %s19, 4
    %s29 = sphi 0, %s31
    %s32 = sphi 0, %s29
    %s33 = sphi 0, %s32
    %s49 = sphi 0, %s33
    %s53 = sphi 0, %s53
    %s55 = sphi 0, %s53
    %s56 = sphi 0, %s55
    %s70 = sphi 0, %s56
    %s74 = sphi 0, %s74
    %s76 = sphi 0, %s74
    %s77 = sphi 0, %s76
    %s91 = sphi 0, %s77
    %s95 = sphi 0, %s95
    %s97 = sphi 0, %s95
    %s98 = sphi 0, %s97
    %s112 = sphi 0, %s98
    %s116 = sphi 0, %s116
    %s118 = sphi 0, %s116
    %s119 = sphi 0, %s118
    %s133 = sphi 0, %s119
    %s137 = sphi 0, %s137
    %s139 = sphi 0, %s137
    %s140 = sphi 0, %s139
    %s154 = sphi 0, %s140
    %s158 = sphi 0, %s158
    %s160 = sphi 0, %s158
    %s161 = sphi 0, %s160
    %s175 = sphi 0, %s161
    %s179 = sphi 0, %s179
    %s181 = sphi 0, %s179
    %s182 = sphi 0, %s181
    %s196 = sphi 0, %s182
    %s200 = sphi 0, %s200
    %s202 = sphi 0, %s200
    %s203 = sphi 0, %s202
    %s217 = sphi 0, %s203
    %s221 = sphi 0, %s221
    %s223 = sphi 0, %s221
    %s224 = sphi 0, %s223
    %s238 = sphi 0, %s224
    %s242 = sphi 0, %s242
    %s244 = sphi 0, %s242
    %s245 = sphi 0, %s244
    %s259 = sphi 0, %s245
    %s263 = sphi 0, %s263
    %s265 = sphi 0, %s263
    %s266 = sphi 0, %s265
    %s280 = sphi 0, %s266
    %s284 = sphi 0, %s284
    %s286 = sphi 0, %s284
    %s287 = sphi 0, %s286
    %s301 = sphi 0, %s287
    %s307 = sphi 0, %s309
    %s310 = sphi 0, %s307
    %s311 = sphi 0, %s310
    %s327 = sphi 0, %s311
  $region4: #{mobilenet_v1_forward.1} parent=0 // loop_header_branch
    %22 = sbr.rel (%p20) target = $region8
  $region5: #{mobilenet_v1_forward.1} parent=0 // loop_body
    %s24 = ssub.s32 %s19, 1
    %s25 = ssub.s32 %s19, 2
    %s26 = sadd.s32 %s19, 1
    %s27 = ssub.s32 %s19, %s26
    %p28 = scmp.eq.s32.totalorder %s27, 0
    %s30 = sadd.s32 %s29, 1
    %s31 = scalar_select %p28, %s29, %s30
    %p34 = pneg %p28
    %p35 = scmp.eq.s32.totalorder %s19, 1
    %p36 = por %p34, %p35
    %p37 = scmp.ne.s32.totalorder %s29, %s32
    %p38 = scmp.eq.s32.totalorder %s19, 0
    %p39 = por %p37, %p38
    %p40 = scmp.ne.s32.totalorder %s29, %s32
    %p41 = scmp.eq.s32.totalorder %s24, 1
    %p42 = por %p40, %p41
    %p43 = scmp.ne.s32.totalorder %s32, %s33
    %p44 = scmp.eq.s32.totalorder %s24, 0
    %p45 = por %p43, %p44
    %p46 = scmp.ne.s32.totalorder %s32, %s33
    %p47 = scmp.eq.s32.totalorder %s25, 1
    %p48 = por %p46, %p47
    %p50 = scmp.ne.s32.totalorder %s33, %s49
    %p51 = scmp.eq.s32.totalorder %s25, 0
    %p52 = por %p50, %p51
    %s54 = sadd.s32 %s53, 1
    %p57 = scmp.eq.s32.totalorder %s19, 1
    %p58 = scmp.ne.s32.totalorder %s53, %s55
    %p59 = scmp.eq.s32.totalorder %s19, 0
    %p60 = por %p58, %p59
    %p61 = scmp.ne.s32.totalorder %s53, %s55
    %p62 = scmp.eq.s32.totalorder %s24, 1
    %p63 = por %p61, %p62
    %p64 = scmp.ne.s32.totalorder %s55, %s56
    %p65 = scmp.eq.s32.totalorder %s24, 0
    %p66 = por %p64, %p65
    %p67 = scmp.ne.s32.totalorder %s55, %s56
    %p68 = scmp.eq.s32.totalorder %s25, 1
    %p69 = por %p67, %p68
    %p71 = scmp.ne.s32.totalorder %s56, %s70
    %p72 = scmp.eq.s32.totalorder %s25, 0
    %p73 = por %p71, %p72
    %s75 = sadd.s32 %s74, 1
    %p78 = scmp.eq.s32.totalorder %s19, 1
    %p79 = scmp.ne.s32.totalorder %s74, %s76
    %p80 = scmp.eq.s32.totalorder %s19, 0
    %p81 = por %p79, %p80
    %p82 = scmp.ne.s32.totalorder %s74, %s76
    %p83 = scmp.eq.s32.totalorder %s24, 1
    %p84 = por %p82, %p83
    %p85 = scmp.ne.s32.totalorder %s76, %s77
    %p86 = scmp.eq.s32.totalorder %s24, 0
    %p87 = por %p85, %p86
    %p88 = scmp.ne.s32.totalorder %s76, %s77
    %p89 = scmp.eq.s32.totalorder %s25, 1
    %p90 = por %p88, %p89
    %p92 = scmp.ne.s32.totalorder %s77, %s91
    %p93 = scmp.eq.s32.totalorder %s25, 0
    %p94 = por %p92, %p93
    %s96 = sadd.s32 %s95, 1
    %p99 = scmp.eq.s32.totalorder %s19, 1
    %p100 = scmp.ne.s32.totalorder %s95, %s97
    %p101 = scmp.eq.s32.totalorder %s19, 0
    %p102 = por %p100, %p101
    %p103 = scmp.ne.s32.totalorder %s95, %s97
    %p104 = scmp.eq.s32.totalorder %s24, 1
    %p105 = por %p103, %p104
    %p106 = scmp.ne.s32.totalorder %s97, %s98
    %p107 = scmp.eq.s32.totalorder %s24, 0
    %p108 = por %p106, %p107
    %p109 = scmp.ne.s32.totalorder %s97, %s98
    %p110 = scmp.eq.s32.totalorder %s25, 1
    %p111 = por %p109, %p110
    %p113 = scmp.ne.s32.totalorder %s98, %s112
    %p114 = scmp.eq.s32.totalorder %s25, 0
    %p115 = por %p113, %p114
    %s117 = sadd.s32 %s116, 1
    %p120 = scmp.eq.s32.totalorder %s19, 1
    %p121 = scmp.ne.s32.totalorder %s116, %s118
    %p122 = scmp.eq.s32.totalorder %s19, 0
    %p123 = por %p121, %p122
    %p124 = scmp.ne.s32.totalorder %s116, %s118
    %p125 = scmp.eq.s32.totalorder %s24, 1
    %p126 = por %p124, %p125
    %p127 = scmp.ne.s32.totalorder %s118, %s119
    %p128 = scmp.eq.s32.totalorder %s24, 0
    %p129 = por %p127, %p128
    %p130 = scmp.ne.s32.totalorder %s118, %s119
    %p131 = scmp.eq.s32.totalorder %s25, 1
    %p132 = por %p130, %p131
    %p134 = scmp.ne.s32.totalorder %s119, %s133
    %p135 = scmp.eq.s32.totalorder %s25, 0
    %p136 = por %p134, %p135
    %s138 = sadd.s32 %s137, 1
    %p141 = scmp.eq.s32.totalorder %s19, 1
    %p142 = scmp.ne.s32.totalorder %s137, %s139
    %p143 = scmp.eq.s32.totalorder %s19, 0
    %p144 = por %p142, %p143
    %p145 = scmp.ne.s32.totalorder %s137, %s139
    %p146 = scmp.eq.s32.totalorder %s24, 1
    %p147 = por %p145, %p146
    %p148 = scmp.ne.s32.totalorder %s139, %s140
    %p149 = scmp.eq.s32.totalorder %s24, 0
    %p150 = por %p148, %p149
    %p151 = scmp.ne.s32.totalorder %s139, %s140
    %p152 = scmp.eq.s32.totalorder %s25, 1
    %p153 = por %p151, %p152
    %p155 = scmp.ne.s32.totalorder %s140, %s154
    %p156 = scmp.eq.s32.totalorder %s25, 0
    %p157 = por %p155, %p156
    %s159 = sadd.s32 %s158, 1
    %p162 = scmp.eq.s32.totalorder %s19, 1
    %p163 = scmp.ne.s32.totalorder %s158, %s160
    %p164 = scmp.eq.s32.totalorder %s19, 0
    %p165 = por %p163, %p164
    %p166 = scmp.ne.s32.totalorder %s158, %s160
    %p167 = scmp.eq.s32.totalorder %s24, 1
    %p168 = por %p166, %p167
    %p169 = scmp.ne.s32.totalorder %s160, %s161
    %p170 = scmp.eq.s32.totalorder %s24, 0
    %p171 = por %p169, %p170
    %p172 = scmp.ne.s32.totalorder %s160, %s161
    %p173 = scmp.eq.s32.totalorder %s25, 1
    %p174 = por %p172, %p173
    %p176 = scmp.ne.s32.totalorder %s161, %s175
    %p177 = scmp.eq.s32.totalorder %s25, 0
    %p178 = por %p176, %p177
    %s180 = sadd.s32 %s179, 1
    %p183 = scmp.eq.s32.totalorder %s19, 1
    %p184 = scmp.ne.s32.totalorder %s179, %s181
    %p185 = scmp.eq.s32.totalorder %s19, 0
    %p186 = por %p184, %p185
    %p187 = scmp.ne.s32.totalorder %s179, %s181
    %p188 = scmp.eq.s32.totalorder %s24, 1
    %p189 = por %p187, %p188
    %p190 = scmp.ne.s32.totalorder %s181, %s182
    %p191 = scmp.eq.s32.totalorder %s24, 0
    %p192 = por %p190, %p191
    %p193 = scmp.ne.s32.totalorder %s181, %s182
    %p194 = scmp.eq.s32.totalorder %s25, 1
    %p195 = por %p193, %p194
    %p197 = scmp.ne.s32.totalorder %s182, %s196
    %p198 = scmp.eq.s32.totalorder %s25, 0
    %p199 = por %p197, %p198
    %s201 = sadd.s32 %s200, 1
    %p204 = scmp.eq.s32.totalorder %s19, 1
    %p205 = scmp.ne.s32.totalorder %s200, %s202
    %p206 = scmp.eq.s32.totalorder %s19, 0
    %p207 = por %p205, %p206
    %p208 = scmp.ne.s32.totalorder %s200, %s202
    %p209 = scmp.eq.s32.totalorder %s24, 1
    %p210 = por %p208, %p209
    %p211 = scmp.ne.s32.totalorder %s202, %s203
    %p212 = scmp.eq.s32.totalorder %s24, 0
    %p213 = por %p211, %p212
    %p214 = scmp.ne.s32.totalorder %s202, %s203
    %p215 = scmp.eq.s32.totalorder %s25, 1
    %p216 = por %p214, %p215
    %p218 = scmp.ne.s32.totalorder %s203, %s217
    %p219 = scmp.eq.s32.totalorder %s25, 0
    %p220 = por %p218, %p219
    %s222 = sadd.s32 %s221, 1
    %p225 = scmp.eq.s32.totalorder %s19, 1
    %p226 = scmp.ne.s32.totalorder %s221, %s223
    %p227 = scmp.eq.s32.totalorder %s19, 0
    %p228 = por %p226, %p227
    %p229 = scmp.ne.s32.totalorder %s221, %s223
    %p230 = scmp.eq.s32.totalorder %s24, 1
    %p231 = por %p229, %p230
    %p232 = scmp.ne.s32.totalorder %s223, %s224
    %p233 = scmp.eq.s32.totalorder %s24, 0
    %p234 = por %p232, %p233
    %p235 = scmp.ne.s32.totalorder %s223, %s224
    %p236 = scmp.eq.s32.totalorder %s25, 1
    %p237 = por %p235, %p236
    %p239 = scmp.ne.s32.totalorder %s224, %s238
    %p240 = scmp.eq.s32.totalorder %s25, 0
    %p241 = por %p239, %p240
    %s243 = sadd.s32 %s242, 1
    %p246 = scmp.eq.s32.totalorder %s19, 1
    %p247 = scmp.ne.s32.totalorder %s242, %s244
    %p248 = scmp.eq.s32.totalorder %s19, 0
    %p249 = por %p247, %p248
    %p250 = scmp.ne.s32.totalorder %s242, %s244
    %p251 = scmp.eq.s32.totalorder %s24, 1
    %p252 = por %p250, %p251
    %p253 = scmp.ne.s32.totalorder %s244, %s245
    %p254 = scmp.eq.s32.totalorder %s24, 0
    %p255 = por %p253, %p254
    %p256 = scmp.ne.s32.totalorder %s244, %s245
    %p257 = scmp.eq.s32.totalorder %s25, 1
    %p258 = por %p256, %p257
    %p260 = scmp.ne.s32.totalorder %s245, %s259
    %p261 = scmp.eq.s32.totalorder %s25, 0
    %p262 = por %p260, %p261
    %s264 = sadd.s32 %s263, 1
    %p267 = scmp.eq.s32.totalorder %s19, 1
    %p268 = scmp.ne.s32.totalorder %s263, %s265
    %p269 = scmp.eq.s32.totalorder %s19, 0
    %p270 = por %p268, %p269
    %p271 = scmp.ne.s32.totalorder %s263, %s265
    %p272 = scmp.eq.s32.totalorder %s24, 1
    %p273 = por %p271, %p272
    %p274 = scmp.ne.s32.totalorder %s265, %s266
    %p275 = scmp.eq.s32.totalorder %s24, 0
    %p276 = por %p274, %p275
    %p277 = scmp.ne.s32.totalorder %s265, %s266
    %p278 = scmp.eq.s32.totalorder %s25, 1
    %p279 = por %p277, %p278
    %p281 = scmp.ne.s32.totalorder %s266, %s280
    %p282 = scmp.eq.s32.totalorder %s25, 0
    %p283 = por %p281, %p282
    %s285 = sadd.s32 %s284, 1
    %p288 = scmp.eq.s32.totalorder %s19, 1
    %p289 = scmp.ne.s32.totalorder %s284, %s286
    %p290 = scmp.eq.s32.totalorder %s19, 0
    %p291 = por %p289, %p290
    %p292 = scmp.ne.s32.totalorder %s284, %s286
    %p293 = scmp.eq.s32.totalorder %s24, 1
    %p294 = por %p292, %p293
    %p295 = scmp.ne.s32.totalorder %s286, %s287
    %p296 = scmp.eq.s32.totalorder %s24, 0
    %p297 = por %p295, %p296
    %p298 = scmp.ne.s32.totalorder %s286, %s287
    %p299 = scmp.eq.s32.totalorder %s25, 1
    %p300 = por %p298, %p299
    %p302 = scmp.ne.s32.totalorder %s287, %s301
    %p303 = scmp.eq.s32.totalorder %s25, 0
    %p304 = por %p302, %p303
    %s305 = ssub.s32 %s19, %s26
    %p306 = scmp.eq.s32.totalorder %s305, 0
    %s308 = sadd.s32 %s307, 1
    %s309 = scalar_select %p306, %s307, %s308
    %p312 = pneg %p306
    %p313 = scmp.eq.s32.totalorder %s19, 1
    %p314 = por %p312, %p313
    %p315 = scmp.ne.s32.totalorder %s307, %s310
    %p316 = scmp.eq.s32.totalorder %s19, 0
    %p317 = por %p315, %p316
    %p318 = scmp.ne.s32.totalorder %s307, %s310
    %p319 = scmp.eq.s32.totalorder %s24, 1
    %p320 = por %p318, %p319
    %p321 = scmp.ne.s32.totalorder %s310, %s311
    %p322 = scmp.eq.s32.totalorder %s24, 0
    %p323 = por %p321, %p322
    %p324 = scmp.ne.s32.totalorder %s310, %s311
    %p325 = scmp.eq.s32.totalorder %s25, 1
    %p326 = por %p324, %p325
    %p328 = scmp.ne.s32.totalorder %s311, %s327
    %p329 = scmp.eq.s32.totalorder %s25, 0
    %p330 = por %p328, %p329
    %p331 = scmp.le.s32.totalorder 1, %s19
    %p332 = scmp.lt.s32.totalorder %s19, 3
    %p333 = pnand %p331, %p332
    %p334 = pneg %p333
    // Predicated region
    $region9: #{mobilenet_v1_forward.1} parent=5 // pred_check
      _
    $region10: #{mobilenet_v1_forward.1} parent=5 // pred_check_branch
      %336 = sbr.rel (%p333) target = $region12
    $region11: #{mobilenet_v1_forward.1} parent=5 // pred_region
      %s337 = ssub.s32 %s19, 1
      // Predicated region
      $region13: #{mobilenet_v1_forward.1} parent=11 // pred_check
        %p338 = pneg %p66
      $region14: #{mobilenet_v1_forward.1} parent=11 // pred_check_branch
        %340 = sbr.rel (%p338) target = $region16
      $region15: #{mobilenet_v1_forward.1} parent=11 // pred_region
        _
      $region16: #{mobilenet_v1_forward.1} parent=11 // pred_fallthru
        _
      // Predicated region
      $region17: #{mobilenet_v1_forward.1} parent=11 // pred_check
        %p341 = pneg %p87
      $region18: #{mobilenet_v1_forward.1} parent=11 // pred_check_branch
        %343 = sbr.rel (%p341) target = $region20
      $region19: #{mobilenet_v1_forward.1} parent=11 // pred_region
        _
      $region20: #{mobilenet_v1_forward.1} parent=11 // pred_fallthru
        _
      // Predicated region
      $region21: #{mobilenet_v1_forward.1} parent=11 // pred_check
        %p344 = pneg %p108
      $region22: #{mobilenet_v1_forward.1} parent=11 // pred_check_branch
        %346 = sbr.rel (%p344) target = $region24
      $region23: #{mobilenet_v1_forward.1} parent=11 // pred_region
        _
      $region24: #{mobilenet_v1_forward.1} parent=11 // pred_fallthru
        _
      // Predicated region
      $region25: #{mobilenet_v1_forward.1} parent=11 // pred_check
        %p347 = pneg %p129
      $region26: #{mobilenet_v1_forward.1} parent=11 // pred_check_branch
        %349 = sbr.rel (%p347) target = $region28
      $region27: #{mobilenet_v1_forward.1} parent=11 // pred_region
        _
      $region28: #{mobilenet_v1_forward.1} parent=11 // pred_fallthru
        _
      // Predicated region
      $region29: #{mobilenet_v1_forward.1} parent=11 // pred_check
        %p350 = pneg %p150
      $region30: #{mobilenet_v1_forward.1} parent=11 // pred_check_branch
        %352 = sbr.rel (%p350) target = $region32
      $region31: #{mobilenet_v1_forward.1} parent=11 // pred_region
        _
      $region32: #{mobilenet_v1_forward.1} parent=11 // pred_fallthru
        _
      // Predicated region
      $region33: #{mobilenet_v1_forward.1} parent=11 // pred_check
        %p353 = pneg %p171
      $region34: #{mobilenet_v1_forward.1} parent=11 // pred_check_branch
        %355 = sbr.rel (%p353) target = $region36
      $region35: #{mobilenet_v1_forward.1} parent=11 // pred_region
        _
      $region36: #{mobilenet_v1_forward.1} parent=11 // pred_fallthru
        _
      // Predicated region
      $region37: #{mobilenet_v1_forward.1} parent=11 // pred_check
        %p356 = pneg %p192
      $region38: #{mobilenet_v1_forward.1} parent=11 // pred_check_branch
        %358 = sbr.rel (%p356) target = $region40
      $region39: #{mobilenet_v1_forward.1} parent=11 // pred_region
        _
      $region40: #{mobilenet_v1_forward.1} parent=11 // pred_fallthru
        _
      // Predicated region
      $region41: #{mobilenet_v1_forward.1} parent=11 // pred_check
        %p359 = pneg %p213
      $region42: #{mobilenet_v1_forward.1} parent=11 // pred_check_branch
        %361 = sbr.rel (%p359) target = $region44
      $region43: #{mobilenet_v1_forward.1} parent=11 // pred_region
        _
      $region44: #{mobilenet_v1_forward.1} parent=11 // pred_fallthru
        _
      // Predicated region
      $region45: #{mobilenet_v1_forward.1} parent=11 // pred_check
        %p362 = pneg %p234
      $region46: #{mobilenet_v1_forward.1} parent=11 // pred_check_branch
        %364 = sbr.rel (%p362) target = $region48
      $region47: #{mobilenet_v1_forward.1} parent=11 // pred_region
        _
      $region48: #{mobilenet_v1_forward.1} parent=11 // pred_fallthru
        _
      // Predicated region
      $region49: #{mobilenet_v1_forward.1} parent=11 // pred_check
        %p365 = pneg %p255
      $region50: #{mobilenet_v1_forward.1} parent=11 // pred_check_branch
        %367 = sbr.rel (%p365) target = $region52
      $region51: #{mobilenet_v1_forward.1} parent=11 // pred_region
        _
      $region52: #{mobilenet_v1_forward.1} parent=11 // pred_fallthru
        _
      // Predicated region
      $region53: #{mobilenet_v1_forward.1} parent=11 // pred_check
        %p368 = pneg %p276
      $region54: #{mobilenet_v1_forward.1} parent=11 // pred_check_branch
        %370 = sbr.rel (%p368) target = $region56
      $region55: #{mobilenet_v1_forward.1} parent=11 // pred_region
        _
      $region56: #{mobilenet_v1_forward.1} parent=11 // pred_fallthru
        _
      // Predicated region
      $region57: #{mobilenet_v1_forward.1} parent=11 // pred_check
        %p371 = pneg %p297
      $region58: #{mobilenet_v1_forward.1} parent=11 // pred_check_branch
        %373 = sbr.rel (%p371) target = $region60
      $region59: #{mobilenet_v1_forward.1} parent=11 // pred_region
        _
      $region60: #{mobilenet_v1_forward.1} parent=11 // pred_fallthru
        _
    $region12: #{mobilenet_v1_forward.1} parent=5 // pred_fallthru
      _
    %p374 = scmp.lt.s32.totalorder %s19, 2
    // Predicated region
    $region61: #{mobilenet_v1_forward.1} parent=5 // pred_check
      %p375 = pneg %p374
    $region62: #{mobilenet_v1_forward.1} parent=5 // pred_check_branch
      %377 = sbr.rel (%p375) target = $region64
    $region63: #{mobilenet_v1_forward.1} parent=5 // pred_region
      // Predicated region
      $region65: #{mobilenet_v1_forward.1} parent=63 // pred_check
        %p378 = pneg %p39
      $region66: #{mobilenet_v1_forward.1} parent=63 // pred_check_branch
        %380 = sbr.rel (%p378) target = $region68
      $region67: #{mobilenet_v1_forward.1} parent=63 // pred_region
        %p381 = scmp.lt.s32.totalorder %s19, 1
        %s382 = scalar_select %p381, %s19, 1
        %s383 = smul.addr %s382, 32
        %s384 = smul.addr %s383, 4
        %s385 = scalar_lea.vmem %s0, %s384
      $region68: #{mobilenet_v1_forward.1} parent=63 // pred_fallthru
        _
    $region64: #{mobilenet_v1_forward.1} parent=5 // pred_fallthru
      _
    %p386 = scmp.le.s32.totalorder 1, %s19
    %p387 = scmp.lt.s32.totalorder %s19, 3
    %p388 = pnand %p386, %p387
    %p389 = pneg %p388
    // Predicated region
    $region69: #{mobilenet_v1_forward.1} parent=5 // pred_check
      _
    $region70: #{mobilenet_v1_forward.1} parent=5 // pred_check_branch
      %391 = sbr.rel (%p388) target = $region72
    $region71: #{mobilenet_v1_forward.1} parent=5 // pred_region
      %s392 = ssub.s32 %s19, 1
      %p393 = scmp.lt.s32.totalorder %s24, 1
      %s394 = scalar_select %p393, %s24, 1
      %s395 = smul.addr %s394, 32
      %s396 = smul.addr %s395, 4
      %s397 = scalar_lea.vmem %s0, %s396
      %p398 = pneg %p45
      %p399 = pneg %p42
      %p400 = pneg %p66
      %p401 = pneg %p63
      %p402 = pneg %p87
      %p403 = pneg %p84
      %p404 = pneg %p108
      %p405 = pneg %p105
      %p406 = pneg %p129
      %p407 = pneg %p126
      %p408 = pneg %p150
      %p409 = pneg %p147
      %p410 = pneg %p171
      %p411 = pneg %p168
      %p412 = pneg %p192
      %p413 = pneg %p189
      %p414 = pneg %p213
      %p415 = pneg %p210
      %p416 = pneg %p234
      %p417 = pneg %p231
      %p418 = pneg %p255
      %p419 = pneg %p252
      %p420 = pneg %p276
      %p421 = pneg %p273
      %p422 = pneg %p297
      %p423 = pneg %p294
      %p424 = pneg %p323
      %p425 = pneg %p320
      %p426 = scmp.lt.s32.totalorder %s24, 1
      %s427 = scalar_select %p426, %s24, 1
      %s428 = smul.addr %s427, 8
      %s429 = scalar_lea.vmem %s13, %s428
      %p430 = scmp.lt.s32.totalorder %s24, 1
      %s431 = scalar_select %p430, %s24, 1
      %s432 = smul.addr %s431, 32
      %s433 = smul.addr %s432, 4
      %s434 = scalar_lea.vmem %s0, %s433
      %p435 = scmp.lt.s32.totalorder %s24, 1
      %s436 = scalar_select %p435, %s24, 1
      %s437 = smul.addr %s436, 8
      %s438 = scalar_lea.vmem %s13, %s437
      %v440 = vld [vmem:[%s434] sm:$0xf]
      %v441 = vld [vmem:[%s434 + $0x4] sm:$0xf]
      %v442 = vld [vmem:[%s434 + $0x8] sm:$0xf]
      %v443 = vld [vmem:[%s434 + $0xc] sm:$0xf]
      %v444 = vld [vmem:[%s434 + $0x10] sm:$0xf]
      %v445 = vld [vmem:[%s434 + $0x14] sm:$0xf]
      %v446 = vld [vmem:[%s434 + $0x18] sm:$0xf]
      %v447 = vld [vmem:[%s434 + $0x1c] sm:$0xf]
      %v448 = vld [vmem:[%s434 + $0x20] sm:$0xf]
      %v449 = vld [vmem:[%s434 + $0x24] sm:$0xf]
      %v450 = vld [vmem:[%s434 + $0x28] sm:$0xf]
      %v451 = vld [vmem:[%s434 + $0x2c] sm:$0xf]
      %v452 = vld [vmem:[%s434 + $0x30] sm:$0xf]
      %v453 = vld [vmem:[%s434 + $0x34] sm:$0xf]
      %v454 = vld [vmem:[%s434 + $0x38] sm:$0xf]
      %v455 = vld [vmem:[%s434 + $0x3c] sm:$0xf]
      %v456 = vld [vmem:[%s434 + $0x40] sm:$0xf]
      %v457 = vld [vmem:[%s434 + $0x44] sm:$0xf]
      %v458 = vld [vmem:[%s434 + $0x48] sm:$0xf]
      %v459 = vld [vmem:[%s434 + $0x4c] sm:$0xf]
      %v460 = vld [vmem:[%s434 + $0x50] sm:$0xf]
      %v461 = vld [vmem:[%s434 + $0x54] sm:$0xf]
      %v462 = vld [vmem:[%s434 + $0x58] sm:$0xf]
      %v463 = vld [vmem:[%s434 + $0x5c] sm:$0xf]
      %v464 = vld [vmem:[%s434 + $0x60] sm:$0xf]
      %v465 = vld [vmem:[%s434 + $0x64] sm:$0xf]
      %v466 = vld [vmem:[%s434 + $0x68] sm:$0xf]
      %v467 = vld [vmem:[%s434 + $0x6c] sm:$0xf]
      %v468 = vld [vmem:[%s434 + $0x70] sm:$0xf]
      %v469 = vld [vmem:[%s434 + $0x74] sm:$0xf]
      %v470 = vld [vmem:[%s434 + $0x78] sm:$0xf]
      %v471 = vld [vmem:[%s434 + $0x7c] sm:$0xf]
      %v472 = vld [vmem:[%s1] sm:$0xf]
      %v473 = vld [vmem:[%s1 + $0x4] sm:$0xf]
      %v474 = vld [vmem:[%s1 + $0x8] sm:$0xf]
      %v475 = vld [vmem:[%s1 + $0xc] sm:$0xf]
      %v476 = vld [vmem:[%s2] sm:$0x1]
      %v478 = vlaneseq
      %v479 = vshrl.u32 %v478, 7
      %v480 = vsub.s32 0, %v479
      %v481 = vrot.slane %v476, %v480
      %v515 = vunpack.c.l.b16 %v440
      %v516 = vunpack.c.l.b16 %v441
      %v517 = vunpack.c.l.b16 %v442
      %v518 = vunpack.c.l.b16 %v443
      %v519 = vunpack.c.l.b16 %v444
      %v520 = vunpack.c.l.b16 %v445
      %v521 = vunpack.c.l.b16 %v446
      %v522 = vunpack.c.l.b16 %v447
      %v523 = vunpack.c.l.b16 %v448
      %v524 = vunpack.c.l.b16 %v449
      %v525 = vunpack.c.l.b16 %v450
      %v526 = vunpack.c.l.b16 %v451
      %v527 = vunpack.c.l.b16 %v452
      %v528 = vunpack.c.l.b16 %v453
      %v529 = vunpack.c.l.b16 %v454
      %v530 = vunpack.c.l.b16 %v455
      %v531 = vunpack.c.l.b16 %v456
      %v532 = vunpack.c.l.b16 %v457
      %v533 = vunpack.c.l.b16 %v458
      %v534 = vunpack.c.l.b16 %v459
      %v535 = vunpack.c.l.b16 %v460
      %v536 = vunpack.c.l.b16 %v461
      %v537 = vunpack.c.l.b16 %v462
      %v538 = vunpack.c.l.b16 %v463
      %v539 = vunpack.c.l.b16 %v464
      %v540 = vunpack.c.l.b16 %v465
      %v541 = vunpack.c.l.b16 %v466
      %v542 = vunpack.c.l.b16 %v467
      %v543 = vunpack.c.l.b16 %v468
      %v544 = vunpack.c.l.b16 %v469
      %v545 = vunpack.c.l.b16 %v470
      %v546 = vunpack.c.l.b16 %v471
      %v547 = vpack.c.b16 %v516, %v515
      %v548 = vpack.c.b16 %v518, %v517
      %v549 = vpack.c.b16 %v520, %v519
      %v550 = vpack.c.b16 %v522, %v521
      %v551 = vpack.c.b16 %v524, %v523
      %v552 = vpack.c.b16 %v526, %v525
      %v553 = vpack.c.b16 %v528, %v527
      %v554 = vpack.c.b16 %v530, %v529
      %v555 = vpack.c.b16 %v532, %v531
      %v556 = vpack.c.b16 %v534, %v533
      %v557 = vpack.c.b16 %v536, %v535
      %v558 = vpack.c.b16 %v538, %v537
      %v559 = vpack.c.b16 %v540, %v539
      %v560 = vpack.c.b16 %v542, %v541
      %v561 = vpack.c.b16 %v544, %v543
      %v562 = vpack.c.b16 %v546, %v545
      %v567 = vunpack.c.l.b16 %v472
      %v568 = vunpack.c.l.b16 %v473
      %v569 = vunpack.c.l.b16 %v474
      %v570 = vunpack.c.l.b16 %v475
      %v571 = vpack.c.b16 %v568, %v567
      %v572 = vpack.c.b16 %v570, %v569
      %vm575 = vcmask 261120
      %v577 = vsel %vm575, %v547, 0
      %v580 = vsel %vm575, %v548, 0
      %v583 = vsel %vm575, %v549, 0
      %v586 = vsel %vm575, %v550, 0
      %v589 = vsel %vm575, %v551, 0
      %v592 = vsel %vm575, %v552, 0
      %v595 = vsel %vm575, %v553, 0
      %v598 = vsel %vm575, %v554, 0
      %v601 = vsel %vm575, %v555, 0
      %v604 = vsel %vm575, %v556, 0
      %v607 = vsel %vm575, %v557, 0
      %v610 = vsel %vm575, %v558, 0
      %v613 = vsel %vm575, %v559, 0
      %v616 = vsel %vm575, %v560, 0
      %v619 = vsel %vm575, %v561, 0
      %v622 = vsel %vm575, %v562, 0
      %624 = vmatprep.subr.bf16.mxu0 0
      %625 = vmatpush1.bf16.msra.mxu0 %v571
      %626 = vmatprep.subr.bf16.mxu0 0
      %627 = vmatpush1.bf16.msra.mxu0 %v572
      %628 = vmatprep.subr.bf16.mxu0 0
      %629 = vmatpush1.bf16.msra.mxu0 0
      %630 = vmatprep.subr.bf16.mxu0 0
      %631 = vmatpush1.bf16.msra.mxu0 0
      %632 = vmatprep.subr.bf16.mxu0 0
      %633 = vmatpush1.bf16.msra.mxu0 0
      %634 = vmatprep.subr.bf16.mxu0 0
      %635 = vmatpush1.bf16.msra.mxu0 0
      %636 = vmatprep.subr.bf16.mxu0 0
      %637 = vmatpush1.bf16.msra.mxu0 0
      %638 = vmatprep.subr.bf16.mxu0 0
      %639 = vmatpush1.bf16.msra.mxu0 0
      %640 = vmatprep.subr.bf16.mxu0 0
      %641 = vmatpush1.bf16.msra.mxu0 0
      %642 = vmatprep.subr.bf16.mxu0 0
      %643 = vmatpush1.bf16.msra.mxu0 0
      %644 = vmatprep.subr.bf16.mxu0 0
      %645 = vmatpush1.bf16.msra.mxu0 0
      %646 = vmatprep.subr.bf16.mxu0 0
      %647 = vmatpush1.bf16.msra.mxu0 0
      %648 = vmatprep.subr.bf16.mxu0 0
      %649 = vmatpush1.bf16.msra.mxu0 0
      %650 = vmatprep.subr.bf16.mxu0 0
      %651 = vmatpush1.bf16.msra.mxu0 0
      %652 = vmatprep.subr.bf16.mxu0 0
      %653 = vmatpush1.bf16.msra.mxu0 0
      %654 = vmatprep.subr.bf16.mxu0 0
      %655 = vmatpush1.bf16.msra.mxu0 0
      %656 = vmatprep.mubr.bf16.mxu0 0
      %657 = vmatmul.mubr.bf16.gmra.mrb[0].mxu0 %v577
      %v658 = vpop.f32.mrb[0].mxu0
      %v659 = vadd.f32 %v481, %v658
      %v660 = vpop.f32.mrb[0].mxu0
      %v661 = vpop.f32.mrb[0].mxu0
      %v662 = vadd.f32 %v481, %v661
      %v663 = vpop.f32.mrb[0].mxu0
      %664 = vmatprep.mubr.bf16.mxu0 0
      %665 = vmatmul.mubr.bf16.gmra.mrb[0].mxu0 %v580
      %v666 = vpop.f32.mrb[0].mxu0
      %v667 = vadd.f32 %v481, %v666
      %v668 = vpop.f32.mrb[0].mxu0
      %v669 = vpop.f32.mrb[0].mxu0
      %v670 = vadd.f32 %v481, %v669
      %v671 = vpop.f32.mrb[0].mxu0
      %672 = vmatprep.mubr.bf16.mxu0 0
      %673 = vmatmul.mubr.bf16.gmra.mrb[0].mxu0 %v583
      %v674 = vpop.f32.mrb[0].mxu0
      %v675 = vadd.f32 %v481, %v674
      %v676 = vpop.f32.mrb[0].mxu0
      %v677 = vpop.f32.mrb[0].mxu0
      %v678 = vadd.f32 %v481, %v677
      %v679 = vpop.f32.mrb[0].mxu0
      %680 = vmatprep.mubr.bf16.mxu0 0
      %681 = vmatmul.mubr.bf16.gmra.mrb[0].mxu0 %v586
      %v682 = vpop.f32.mrb[0].mxu0
      %v683 = vadd.f32 %v481, %v682
      %v684 = vpop.f32.mrb[0].mxu0
      %v685 = vpop.f32.mrb[0].mxu0
      %v686 = vadd.f32 %v481, %v685
      %v687 = vpop.f32.mrb[0].mxu0
      %688 = vmatprep.mubr.bf16.mxu0 0
      %689 = vmatmul.mubr.bf16.gmra.mrb[0].mxu0 %v589
      %v690 = vpop.f32.mrb[0].mxu0
      %v691 = vadd.f32 %v481, %v690
      %v692 = vpop.f32.mrb[0].mxu0
      %v693 = vpop.f32.mrb[0].mxu0
      %v694 = vadd.f32 %v481, %v693
      %v695 = vpop.f32.mrb[0].mxu0
      %696 = vmatprep.mubr.bf16.mxu0 0
      %697 = vmatmul.mubr.bf16.gmra.mrb[0].mxu0 %v592
      %v698 = vpop.f32.mrb[0].mxu0
      %v699 = vadd.f32 %v481, %v698
      %v700 = vpop.f32.mrb[0].mxu0
      %v701 = vpop.f32.mrb[0].mxu0
      %v702 = vadd.f32 %v481, %v701
      %v703 = vpop.f32.mrb[0].mxu0
      %704 = vmatprep.mubr.bf16.mxu0 0
      %705 = vmatmul.mubr.bf16.gmra.mrb[0].mxu0 %v595
      %v706 = vpop.f32.mrb[0].mxu0
      %v707 = vadd.f32 %v481, %v706
      %v708 = vpop.f32.mrb[0].mxu0
      %v709 = vpop.f32.mrb[0].mxu0
      %v710 = vadd.f32 %v481, %v709
      %v711 = vpop.f32.mrb[0].mxu0
      %712 = vmatprep.mubr.bf16.mxu0 0
      %713 = vmatmul.mubr.bf16.gmra.mrb[0].mxu0 %v598
      %v714 = vpop.f32.mrb[0].mxu0
      %v715 = vadd.f32 %v481, %v714
      %v716 = vpop.f32.mrb[0].mxu0
      %v717 = vpop.f32.mrb[0].mxu0
      %v718 = vadd.f32 %v481, %v717
      %v719 = vpop.f32.mrb[0].mxu0
      %720 = vmatprep.mubr.bf16.mxu0 0
      %721 = vmatmul.mubr.bf16.gmra.mrb[0].mxu0 %v601
      %v722 = vpop.f32.mrb[0].mxu0
      %v723 = vadd.f32 %v481, %v722
      %v724 = vpop.f32.mrb[0].mxu0
      %v725 = vpop.f32.mrb[0].mxu0
      %v726 = vadd.f32 %v481, %v725
      %v727 = vpop.f32.mrb[0].mxu0
      %728 = vmatprep.mubr.bf16.mxu0 0
      %729 = vmatmul.mubr.bf16.gmra.mrb[0].mxu0 %v604
      %v730 = vpop.f32.mrb[0].mxu0
      %v731 = vadd.f32 %v481, %v730
      %v732 = vpop.f32.mrb[0].mxu0
      %v733 = vpop.f32.mrb[0].mxu0
      %v734 = vadd.f32 %v481, %v733
      %v735 = vpop.f32.mrb[0].mxu0
      %736 = vmatprep.mubr.bf16.mxu0 0
      %737 = vmatmul.mubr.bf16.gmra.mrb[0].mxu0 %v607
      %v738 = vpop.f32.mrb[0].mxu0
      %v739 = vadd.f32 %v481, %v738
      %v740 = vpop.f32.mrb[0].mxu0
      %v741 = vpop.f32.mrb[0].mxu0
      %v742 = vadd.f32 %v481, %v741
      %v743 = vpop.f32.mrb[0].mxu0
      %744 = vmatprep.mubr.bf16.mxu0 0
      %745 = vmatmul.mubr.bf16.gmra.mrb[0].mxu0 %v610
      %v746 = vpop.f32.mrb[0].mxu0
      %v747 = vadd.f32 %v481, %v746
      %v748 = vpop.f32.mrb[0].mxu0
      %v749 = vpop.f32.mrb[0].mxu0
      %v750 = vadd.f32 %v481, %v749
      %v751 = vpop.f32.mrb[0].mxu0
      %752 = vmatprep.mubr.bf16.mxu0 0
      %753 = vmatmul.mubr.bf16.gmra.mrb[0].mxu0 %v613
      %v754 = vpop.f32.mrb[0].mxu0
      %v755 = vadd.f32 %v481, %v754
      %v756 = vpop.f32.mrb[0].mxu0
      %v757 = vpop.f32.mrb[0].mxu0
      %v758 = vadd.f32 %v481, %v757
      %v759 = vpop.f32.mrb[0].mxu0
      %760 = vmatprep.mubr.bf16.mxu0 0
      %761 = vmatmul.mubr.bf16.gmra.mrb[0].mxu0 %v616
      %v762 = vpop.f32.mrb[0].mxu0
      %v763 = vadd.f32 %v481, %v762
      %v764 = vpop.f32.mrb[0].mxu0
      %v765 = vpop.f32.mrb[0].mxu0
      %v766 = vadd.f32 %v481, %v765
      %v767 = vpop.f32.mrb[0].mxu0
      %768 = vmatprep.mubr.bf16.mxu0 0
      %769 = vmatmul.mubr.bf16.gmra.mrb[0].mxu0 %v619
      %v770 = vpop.f32.mrb[0].mxu0
      %v771 = vadd.f32 %v481, %v770
      %v772 = vpop.f32.mrb[0].mxu0
      %v773 = vpop.f32.mrb[0].mxu0
      %v774 = vadd.f32 %v481, %v773
      %v775 = vpop.f32.mrb[0].mxu0
      %776 = vmatprep.mubr.bf16.mxu0 0
      %777 = vmatmul.mubr.bf16.gmra.mrb[0].mxu0 %v622
      %v778 = vpop.f32.mrb[0].mxu0
      %v779 = vadd.f32 %v481, %v778
      %v780 = vpop.f32.mrb[0].mxu0
      %v781 = vpop.f32.mrb[0].mxu0
      %v782 = vadd.f32 %v481, %v781
      %v783 = vpop.f32.mrb[0].mxu0
      %784 = vdwg.mxu0
      %vm785 = vcmp.ge.f32.partialorder %v659, 0.0
      %vm786 = vcmp.ge.f32.partialorder %v662, 0.0
      %vm787 = vcmp.ge.f32.partialorder %v667, 0.0
      %vm788 = vcmp.ge.f32.partialorder %v670, 0.0
      %vm789 = vcmp.ge.f32.partialorder %v675, 0.0
      %vm790 = vcmp.ge.f32.partialorder %v678, 0.0
      %vm791 = vcmp.ge.f32.partialorder %v683, 0.0
      %vm792 = vcmp.ge.f32.partialorder %v686, 0.0
      %vm793 = vcmp.ge.f32.partialorder %v691, 0.0
      %vm794 = vcmp.ge.f32.partialorder %v694, 0.0
      %vm795 = vcmp.ge.f32.partialorder %v699, 0.0
      %vm796 = vcmp.ge.f32.partialorder %v702, 0.0
      %vm797 = vcmp.ge.f32.partialorder %v707, 0.0
      %vm798 = vcmp.ge.f32.partialorder %v710, 0.0
      %vm799 = vcmp.ge.f32.partialorder %v715, 0.0
      %vm800 = vcmp.ge.f32.partialorder %v718, 0.0
      %vm801 = vcmp.ge.f32.partialorder %v723, 0.0
      %vm802 = vcmp.ge.f32.partialorder %v726, 0.0
      %vm803 = vcmp.ge.f32.partialorder %v731, 0.0
      %vm804 = vcmp.ge.f32.partialorder %v734, 0.0
      %vm805 = vcmp.ge.f32.partialorder %v739, 0.0
      %vm806 = vcmp.ge.f32.partialorder %v742, 0.0
      %vm807 = vcmp.ge.f32.partialorder %v747, 0.0
      %vm808 = vcmp.ge.f32.partialorder %v750, 0.0
      %vm809 = vcmp.ge.f32.partialorder %v755, 0.0
      %vm810 = vcmp.ge.f32.partialorder %v758, 0.0
      %vm811 = vcmp.ge.f32.partialorder %v763, 0.0
      %vm812 = vcmp.ge.f32.partialorder %v766, 0.0
      %vm813 = vcmp.ge.f32.partialorder %v771, 0.0
      %vm814 = vcmp.ge.f32.partialorder %v774, 0.0
      %vm815 = vcmp.ge.f32.partialorder %v779, 0.0
      %vm816 = vcmp.ge.f32.partialorder %v782, 0.0
      %v817 = vmul.f32 %v659, 0.1
      %v818 = vmul.f32 %v662, 0.1
      %v819 = vmul.f32 %v667, 0.1
      %v820 = vmul.f32 %v670, 0.1
      %v821 = vmul.f32 %v675, 0.1
      %v822 = vmul.f32 %v678, 0.1
      %v823 = vmul.f32 %v683, 0.1
      %v824 = vmul.f32 %v686, 0.1
      %v825 = vmul.f32 %v691, 0.1
      %v826 = vmul.f32 %v694, 0.1
      %v827 = vmul.f32 %v699, 0.1
      %v828 = vmul.f32 %v702, 0.1
      %v829 = vmul.f32 %v707, 0.1
      %v830 = vmul.f32 %v710, 0.1
      %v831 = vmul.f32 %v715, 0.1
      %v832 = vmul.f32 %v718, 0.1
      %v833 = vmul.f32 %v723, 0.1
      %v834 = vmul.f32 %v726, 0.1
      %v835 = vmul.f32 %v731, 0.1
      %v836 = vmul.f32 %v734, 0.1
      %v837 = vmul.f32 %v739, 0.1
      %v838 = vmul.f32 %v742, 0.1
      %v839 = vmul.f32 %v747, 0.1
      %v840 = vmul.f32 %v750, 0.1
      %v841 = vmul.f32 %v755, 0.1
      %v842 = vmul.f32 %v758, 0.1
      %v843 = vmul.f32 %v763, 0.1
      %v844 = vmul.f32 %v766, 0.1
      %v845 = vmul.f32 %v771, 0.1
      %v846 = vmul.f32 %v774, 0.1
      %v847 = vmul.f32 %v779, 0.1
      %v848 = vmul.f32 %v782, 0.1
      %v849 = vsel %vm785, %v659, %v817
      %v850 = vsel %vm786, %v662, %v818
      %v851 = vsel %vm787, %v667, %v819
      %v852 = vsel %vm788, %v670, %v820
      %v853 = vsel %vm789, %v675, %v821
      %v854 = vsel %vm790, %v678, %v822
      %v855 = vsel %vm791, %v683, %v823
      %v856 = vsel %vm792, %v686, %v824
      %v857 = vsel %vm793, %v691, %v825
      %v858 = vsel %vm794, %v694, %v826
      %v859 = vsel %vm795, %v699, %v827
      %v860 = vsel %vm796, %v702, %v828
      %v861 = vsel %vm797, %v707, %v829
      %v862 = vsel %vm798, %v710, %v830
      %v863 = vsel %vm799, %v715, %v831
      %v864 = vsel %vm800, %v718, %v832
      %v865 = vsel %vm801, %v723, %v833
      %v866 = vsel %vm802, %v726, %v834
      %v867 = vsel %vm803, %v731, %v835
      %v868 = vsel %vm804, %v734, %v836
      %v869 = vsel %vm805, %v739, %v837
      %v870 = vsel %vm806, %v742, %v838
      %v871 = vsel %vm807, %v747, %v839
      %v872 = vsel %vm808, %v750, %v840
      %v873 = vsel %vm809, %v755, %v841
      %v874 = vsel %vm810, %v758, %v842
      %v875 = vsel %vm811, %v763, %v843
      %v876 = vsel %vm812, %v766, %v844
      %v877 = vsel %vm813, %v771, %v845
      %v878 = vsel %vm814, %v774, %v846
      %v879 = vsel %vm815, %v779, %v847
      %v880 = vsel %vm816, %v782, %v848
      %vm881 = vcmask 64512
      %882 = vst.msk [vmem:[#allocation2] sm:$0xff] %vm881, 0.0
      %883 = vst.msk [vmem:[#allocation2 + $0x8] sm:$0xff] %vm881, 0.0
      %884 = vst.msk [vmem:[#allocation2 + $0x10] sm:$0xff] %vm881, 0.0
      %885 = vst.msk [vmem:[#allocation2 + $0x18] sm:$0xff] %vm881, 0.0
      %886 = vst.msk [vmem:[#allocation2 + $0x20] sm:$0xff] %vm881, 0.0
      %887 = vst.msk [vmem:[#allocation2 + $0x28] sm:$0xff] %vm881, 0.0
      %888 = vst.msk [vmem:[#allocation2 + $0x30] sm:$0xff] %vm881, 0.0
      %889 = vst.msk [vmem:[#allocation2 + $0x38] sm:$0xff] %vm881, 0.0
      %890 = vst.msk [vmem:[#allocation2 + $0x40] sm:$0xff] %vm881, 0.0
      %891 = vst.msk [vmem:[#allocation2 + $0x48] sm:$0xff] %vm881, 0.0
      %892 = vst.msk [vmem:[#allocation2 + $0x50] sm:$0xff] %vm881, 0.0
      %893 = vst.msk [vmem:[#allocation2 + $0x58] sm:$0xff] %vm881, 0.0
      %894 = vst.msk [vmem:[#allocation2 + $0x60] sm:$0xff] %vm881, 0.0
      %895 = vst.msk [vmem:[#allocation2 + $0x68] sm:$0xff] %vm881, 0.0
      %896 = vst.msk [vmem:[#allocation2 + $0x70] sm:$0xff] %vm881, 0.0
      %897 = vst.msk [vmem:[#allocation2 + $0x78] sm:$0xff] %vm881, 0.0
      %898 = vst.msk [vmem:[#allocation2 + $0x80] sm:$0xff] %vm881, 0.0
      %899 = vst.msk [vmem:[#allocation2 + $0x88] sm:$0xff] %vm881, 0.0
      %900 = vst.msk [vmem:[#allocation2 + $0x90] sm:$0xff] %vm881, 0.0
      %901 = vst.msk [vmem:[#allocation2 + $0x98] sm:$0xff] %vm881, 0.0
      %902 = vst.msk [vmem:[#allocation2 + $0xa0] sm:$0xff] %vm881, 0.0
      %903 = vst.msk [vmem:[#allocation2 + $0xa8] sm:$0xff] %vm881, 0.0
      %904 = vst.msk [vmem:[#allocation2 + $0xb0] sm:$0xff] %vm881, 0.0
      %905 = vst.msk [vmem:[#allocation2 + $0xb8] sm:$0xff] %vm881, 0.0
      %906 = vst.msk [vmem:[#allocation2 + $0xc0] sm:$0xff] %vm881, 0.0
      %907 = vst.msk [vmem:[#allocation2 + $0xc8] sm:$0xff] %vm881, 0.0
      %908 = vst.msk [vmem:[#allocation2 + $0xd0] sm:$0xff] %vm881, 0.0
      %909 = vst.msk [vmem:[#allocation2 + $0xd8] sm:$0xff] %vm881, 0.0
      %910 = vst.msk [vmem:[#allocation2 + $0xe0] sm:$0xff] %vm881, 0.0
      %911 = vst.msk [vmem:[#allocation2 + $0xe8] sm:$0xff] %vm881, 0.0
      %912 = vst.msk [vmem:[#allocation2 + $0xf0] sm:$0xff] %vm881, 0.0
      %913 = vst.msk [vmem:[#allocation2 + $0xf8] sm:$0xff] %vm881, 0.0
      %914 = vst.msk [vmem:[#allocation2 + $0x100] sm:$0xff] %vm881, 0.0
      %915 = vst.msk [vmem:[#allocation2 + $0x108] sm:$0xff] %vm881, 0.0
      %916 = vst.msk [vmem:[#allocation2 + $0x110] sm:$0xff] %vm881, 0.0
      %917 = vst.msk [vmem:[#allocation2 + $0x118] sm:$0xff] %vm881, 0.0
      %918 = vst.msk [vmem:[#allocation2 + $0x120] sm:$0xff] %vm881, 0.0
      %919 = vst.msk [vmem:[#allocation2 + $0x128] sm:$0xff] %vm881, 0.0
      %920 = vst.msk [vmem:[#allocation2 + $0x130] sm:$0xff] %vm881, 0.0
      %921 = vst.msk [vmem:[#allocation2 + $0x138] sm:$0xff] %vm881, 0.0
      %vm922 = vcmask 60416
      %923 = vst.msk [vmem:[#allocation2 + $0x140] sm:$0xf] %vm922, 0.0
      %924 = vst.msk [vmem:[#allocation2 + $0x13] sm:$0xff] %vm881, %v849
      %925 = vst.msk [vmem:[#allocation2 + $0x1b] sm:$0xff] %vm881, %v850
      %926 = vst.msk [vmem:[#allocation2 + $0x25] sm:$0xff] %vm881, %v851
      %927 = vst.msk [vmem:[#allocation2 + $0x2d] sm:$0xff] %vm881, %v852
      %928 = vst.msk [vmem:[#allocation2 + $0x37] sm:$0xff] %vm881, %v853
      %929 = vst.msk [vmem:[#allocation2 + $0x3f] sm:$0xff] %vm881, %v854
      %930 = vst.msk [vmem:[#allocation2 + $0x49] sm:$0xff] %vm881, %v855
      %931 = vst.msk [vmem:[#allocation2 + $0x51] sm:$0xff] %vm881, %v856
      %932 = vst.msk [vmem:[#allocation2 + $0x5b] sm:$0xff] %vm881, %v857
      %933 = vst.msk [vmem:[#allocation2 + $0x63] sm:$0xff] %vm881, %v858
      %934 = vst.msk [vmem:[#allocation2 + $0x6d] sm:$0xff] %vm881, %v859
      %935 = vst.msk [vmem:[#allocation2 + $0x75] sm:$0xff] %vm881, %v860
      %936 = vst.msk [vmem:[#allocation2 + $0x7f] sm:$0xff] %vm881, %v861
      %937 = vst.msk [vmem:[#allocation2 + $0x87] sm:$0xff] %vm881, %v862
      %938 = vst.msk [vmem:[#allocation2 + $0x91] sm:$0xff] %vm881, %v863
      %939 = vst.msk [vmem:[#allocation2 + $0x99] sm:$0xff] %vm881, %v864
      %940 = vst.msk [vmem:[#allocation2 + $0xa3] sm:$0xff] %vm881, %v865
      %941 = vst.msk [vmem:[#allocation2 + $0xab] sm:$0xff] %vm881, %v866
      %942 = vst.msk [vmem:[#allocation2 + $0xb5] sm:$0xff] %vm881, %v867
      %943 = vst.msk [vmem:[#allocation2 + $0xbd] sm:$0xff] %vm881, %v868
      %944 = vst.msk [vmem:[#allocation2 + $0xc7] sm:$0xff] %vm881, %v869
      %945 = vst.msk [vmem:[#allocation2 + $0xcf] sm:$0xff] %vm881, %v870
      %946 = vst.msk [vmem:[#allocation2 + $0xd9] sm:$0xff] %vm881, %v871
      %947 = vst.msk [vmem:[#allocation2 + $0xe1] sm:$0xff] %vm881, %v872
      %948 = vst.msk [vmem:[#allocation2 + $0xeb] sm:$0xff] %vm881, %v873
      %949 = vst.msk [vmem:[#allocation2 + $0xf3] sm:$0xff] %vm881, %v874
      %950 = vst.msk [vmem:[#allocation2 + $0xfd] sm:$0xff] %vm881, %v875
      %951 = vst.msk [vmem:[#allocation2 + $0x105] sm:$0xff] %vm881, %v876
      %952 = vst.msk [vmem:[#allocation2 + $0x10f] sm:$0xff] %vm881, %v877
      %953 = vst.msk [vmem:[#allocation2 + $0x117] sm:$0xff] %vm881, %v878
      %954 = vst.msk [vmem:[#allocation2 + $0x121] sm:$0xff] %vm881, %v879
      %955 = vst.msk [vmem:[#allocation2 + $0x129] sm:$0xff] %vm881, %v880
      %v956 = vld [vmem:[%s3] sm:$0xff]
      %v957 = vld [vmem:[%s3 + $0x10] sm:$0x1]
      %v958 = vld [vmem:[%s4] sm:$0x1]
      %v959 = vld [vmem:[%s5] sm:$0xf]
      %v960 = vld [vmem:[%s6] sm:$0x1]
      %v961 = vld [vmem:[#allocation2] sm:$0xff]
      %v962 = vld [vmem:[#allocation2 + $0x8] sm:$0xff]
      %v963 = vld [vmem:[#allocation2 + $0x10] sm:$0xff]
      %v964 = vld [vmem:[#allocation2 + $0x18] sm:$0xff]
      %v965 = vld [vmem:[#allocation2 + $0x20] sm:$0xff]
      %v966 = vld [vmem:[#allocation2 + $0x28] sm:$0xff]
      %v967 = vld [vmem:[#allocation2 + $0x30] sm:$0xff]
      %v968 = vld [vmem:[#allocation2 + $0x38] sm:$0xff]
      %v969 = vld [vmem:[#allocation2 + $0x40] sm:$0xff]
      %v970 = vld [vmem:[#allocation2 + $0x48] sm:$0xff]
      %v971 = vld [vmem:[#allocation2 + $0x50] sm:$0xff]
      %v972 = vld [vmem:[#allocation2 + $0x58] sm:$0xff]
      %v973 = vld [vmem:[#allocation2 + $0x60] sm:$0xff]
      %v974 = vld [vmem:[#allocation2 + $0x68] sm:$0xff]
      %v975 = vld [vmem:[#allocation2 + $0x70] sm:$0xff]
      %v976 = vld [vmem:[#allocation2 + $0x78] sm:$0xff]
      %v977 = vld [vmem:[#allocation2 + $0x80] sm:$0xff]
      %v978 = vld [vmem:[#allocation2 + $0x88] sm:$0xff]
      %v979 = vld [vmem:[#allocation2 + $0x90] sm:$0xff]
      %v980 = vld [vmem:[#allocation2 + $0x98] sm:$0xff]
      %v981 = vld [vmem:[#allocation2 + $0xa0] sm:$0xff]
      %v982 = vld [vmem:[#allocation2 + $0xa8] sm:$0xff]
      %v983 = vld [vmem:[#allocation2 + $0xb0] sm:$0xff]
      %v984 = vld [vmem:[#allocation2 + $0xb8] sm:$0xff]
      %v985 = vld [vmem:[#allocation2 + $0xc0] sm:$0xff]
      %v986 = vld [vmem:[#allocation2 + $0xc8] sm:$0xff]
      %v987 = vld [vmem:[#allocation2 + $0xd0] sm:$0xff]
      %v988 = vld [vmem:[#allocation2 + $0xd8] sm:$0xff]
      %v989 = vld [vmem:[#allocation2 + $0xe0] sm:$0xff]
      %v990 = vld [vmem:[#allocation2 + $0xe8] sm:$0xff]
      %v991 = vld [vmem:[#allocation2 + $0xf0] sm:$0xff]
      %v992 = vld [vmem:[#allocation2 + $0xf8] sm:$0xff]
      %v993 = vld [vmem:[#allocation2 + $0x100] sm:$0xff]
      %v994 = vld [vmem:[#allocation2 + $0x108] sm:$0xff]
      %v995 = vld [vmem:[#allocation2 + $0x110] sm:$0xff]
      %v996 = vld [vmem:[#allocation2 + $0x118] sm:$0x3f]
      %v997 = vlaneseq
      %v998 = vshrl.u32 %v997, 7
      %v999 = vsub.s32 0, %v998
      %v1000 = vrot.slane %v956, %v999
      %v1001 = vmul.f32 %v961, %v1000
      %v1002 = vmul.f32 %v962, %v1000
      %v1003 = vmul.f32 %v963, %v1000
      %v1004 = vmul.f32 %v964, %v1000
      %v1005 = vmul.f32 %v965, %v1000
      %v1006 = vmul.f32 %v966, %v1000
      %v1007 = vmul.f32 %v967, %v1000
      %v1008 = vmul.f32 %v968, %v1000
      %v1009 = vmul.f32 %v969, %v1000
      %v1010 = vmul.f32 %v970, %v1000
      %v1011 = vmul.f32 %v971, %v1000
      %v1012 = vmul.f32 %v972, %v1000
      %v1013 = vmul.f32 %v973, %v1000
      %v1014 = vmul.f32 %v974, %v1000
      %v1015 = vmul.f32 %v975, %v1000
      %v1016 = vmul.f32 %v976, %v1000
      %v1017 = vmul.f32 %v977, %v1000
      %v1018 = vmul.f32 %v978, %v1000
      %v1019 = vmul.f32 %v979, %v1000
      %v1020 = vmul.f32 %v980, %v1000
      %v1021 = vmul.f32 %v981, %v1000
      %v1022 = vmul.f32 %v982, %v1000
      %v1023 = vmul.f32 %v983, %v1000
      %v1024 = vmul.f32 %v984, %v1000
      %v1025 = vmul.f32 %v985, %v1000
      %v1026 = vmul.f32 %v986, %v1000
      %v1027 = vmul.f32 %v987, %v1000
      %v1028 = vmul.f32 %v988, %v1000
      %v1029 = vmul.f32 %v989, %v1000
      %v1030 = vmul.f32 %v990, %v1000
      %v1031 = vmul.f32 %v991, %v1000
      %v1032 = vmul.f32 %v992, %v1000
      %v1033 = vmul.f32 %v993, %v1000
      %v1034 = vmul.f32 %v994, %v1000
      %v1035 = vmul.f32 %v995, %v1000
      %v1036 = vmul.f32 %v996, %v1000
      %v1037 = vld [vmem:[#allocation2 + $0x1] sm:$0xff]
      %v1038 = vld [vmem:[#allocation2 + $0x9] sm:$0xff]
      %v1039 = vld [vmem:[#allocation2 + $0x11] sm:$0xff]
      %v1040 = vld [vmem:[#allocation2 + $0x19] sm:$0xff]
      %v1041 = vld [vmem:[#allocation2 + $0x21] sm:$0xff]
      %v1042 = vld [vmem:[#allocation2 + $0x29] sm:$0xff]
      %v1043 = vld [vmem:[#allocation2 + $0x31] sm:$0xff]
      %v1044 = vld [vmem:[#allocation2 + $0x39] sm:$0xff]
      %v1045 = vld [vmem:[#allocation2 + $0x41] sm:$0xff]
      %v1046 = vld [vmem:[#allocation2 + $0x49] sm:$0xff]
      %v1047 = vld [vmem:[#allocation2 + $0x51] sm:$0xff]
      %v1048 = vld [vmem:[#allocation2 + $0x59] sm:$0xff]
      %v1049 = vld [vmem:[#allocation2 + $0x61] sm:$0xff]
      %v1050 = vld [vmem:[#allocation2 + $0x69] sm:$0xff]
      %v1051 = vld [vmem:[#allocation2 + $0x71] sm:$0xff]
      %v1052 = vld [vmem:[#allocation2 + $0x79] sm:$0xff]
      %v1053 = vld [vmem:[#allocation2 + $0x81] sm:$0xff]
      %v1054 = vld [vmem:[#allocation2 + $0x89] sm:$0xff]
      %v1055 = vld [vmem:[#allocation2 + $0x91] sm:$0xff]
      %v1056 = vld [vmem:[#allocation2 + $0x99] sm:$0xff]
      %v1057 = vld [vmem:[#allocation2 + $0xa1] sm:$0xff]
      %v1058 = vld [vmem:[#allocation2 + $0xa9] sm:$0xff]
      %v1059 = vld [vmem:[#allocation2 + $0xb1] sm:$0xff]
      %v1060 = vld [vmem:[#allocation2 + $0xb9] sm:$0xff]
      %v1061 = vld [vmem:[#allocation2 + $0xc1] sm:$0xff]
      %v1062 = vld [vmem:[#allocation2 + $0xc9] sm:$0xff]
      %v1063 = vld [vmem:[#allocation2 + $0xd1] sm:$0xff]
      %v1064 = vld [vmem:[#allocation2 + $0xd9] sm:$0xff]
      %v1065 = vld [vmem:[#allocation2 + $0xe1] sm:$0xff]
      %v1066 = vld [vmem:[#allocation2 + $0xe9] sm:$0xff]
      %v1067 = vld [vmem:[#allocation2 + $0xf1] sm:$0xff]
      %v1068 = vld [vmem:[#allocation2 + $0xf9] sm:$0xff]
      %v1069 = vld [vmem:[#allocation2 + $0x101] sm:$0xff]
      %v1070 = vld [vmem:[#allocation2 + $0x109] sm:$0xff]
      %v1071 = vld [vmem:[#allocation2 + $0x111] sm:$0xff]
      %v1072 = vld [vmem:[#allocation2 + $0x119] sm:$0x3f]
      %v1073 = vlaneseq
      %v1074 = vshrl.u32 %v1073, 7
      %v1075 = vsub.s32 1, %v1074
      %v1076 = vrot.slane %v956, %v1075
      %v1077 = vmul.f32 %v1037, %v1076
      %v1078 = vmul.f32 %v1038, %v1076
      %v1079 = vmul.f32 %v1039, %v1076
      %v1080 = vmul.f32 %v1040, %v1076
      %v1081 = vmul.f32 %v1041, %v1076
      %v1082 = vmul.f32 %v1042, %v1076
      %v1083 = vmul.f32 %v1043, %v1076
      %v1084 = vmul.f32 %v1044, %v1076
      %v1085 = vmul.f32 %v1045, %v1076
      %v1086 = vmul.f32 %v1046, %v1076
      %v1087 = vmul.f32 %v1047, %v1076
      %v1088 = vmul.f32 %v1048, %v1076
      %v1089 = vmul.f32 %v1049, %v1076
      %v1090 = vmul.f32 %v1050, %v1076
      %v1091 = vmul.f32 %v1051, %v1076
      %v1092 = vmul.f32 %v1052, %v1076
      %v1093 = vmul.f32 %v1053, %v1076
      %v1094 = vmul.f32 %v1054, %v1076
      %v1095 = vmul.f32 %v1055, %v1076
      %v1096 = vmul.f32 %v1056, %v1076
      %v1097 = vmul.f32 %v1057, %v1076
      %v1098 = vmul.f32 %v1058, %v1076
      %v1099 = vmul.f32 %v1059, %v1076
      %v1100 = vmul.f32 %v1060, %v1076
      %v1101 = vmul.f32 %v1061, %v1076
      %v1102 = vmul.f32 %v1062, %v1076
      %v1103 = vmul.f32 %v1063, %v1076
      %v1104 = vmul.f32 %v1064, %v1076
      %v1105 = vmul.f32 %v1065, %v1076
      %v1106 = vmul.f32 %v1066, %v1076
      %v1107 = vmul.f32 %v1067, %v1076
      %v1108 = vmul.f32 %v1068, %v1076
      %v1109 = vmul.f32 %v1069, %v1076
      %v1110 = vmul.f32 %v1070, %v1076
      %v1111 = vmul.f32 %v1071, %v1076
      %v1112 = vmul.f32 %v1072, %v1076
      %v1113 = vadd.f32 %v1001, %v1077
      %v1114 = vadd.f32 %v1002, %v1078
      %v1115 = vadd.f32 %v1003, %v1079
      %v1116 = vadd.f32 %v1004, %v1080
      %v1117 = vadd.f32 %v1005, %v1081
      %v1118 = vadd.f32 %v1006, %v1082
      %v1119 = vadd.f32 %v1007, %v1083
      %v1120 = vadd.f32 %v1008, %v1084
      %v1121 = vadd.f32 %v1009, %v1085
      %v1122 = vadd.f32 %v1010, %v1086
      %v1123 = vadd.f32 %v1011, %v1087
      %v1124 = vadd.f32 %v1012, %v1088
      %v1125 = vadd.f32 %v1013, %v1089
      %v1126 = vadd.f32 %v1014, %v1090
      %v1127 = vadd.f32 %v1015, %v1091
      %v1128 = vadd.f32 %v1016, %v1092
      %v1129 = vadd.f32 %v1017, %v1093
      %v1130 = vadd.f32 %v1018, %v1094
      %v1131 = vadd.f32 %v1019, %v1095
      %v1132 = vadd.f32 %v1020, %v1096
      %v1133 = vadd.f32 %v1021, %v1097
      %v1134 = vadd.f32 %v1022, %v1098
      %v1135 = vadd.f32 %v1023, %v1099
      %v1136 = vadd.f32 %v1024, %v1100
      %v1137 = vadd.f32 %v1025, %v1101
      %v1138 = vadd.f32 %v1026, %v1102
      %v1139 = vadd.f32 %v1027, %v1103
      %v1140 = vadd.f32 %v1028, %v1104
      %v1141 = vadd.f32 %v1029, %v1105
      %v1142 = vadd.f32 %v1030, %v1106
      %v1143 = vadd.f32 %v1031, %v1107
      %v1144 = vadd.f32 %v1032, %v1108
      %v1145 = vadd.f32 %v1033, %v1109
      %v1146 = vadd.f32 %v1034, %v1110
      %v1147 = vadd.f32 %v1035, %v1111
      %v1148 = vadd.f32 %v1036, %v1112
      %v1149 = vld [vmem:[#allocation2 + $0x2] sm:$0xff]
      %v1150 = vld [vmem:[#allocation2 + $0xa] sm:$0xff]
      %v1151 = vld [vmem:[#allocation2 + $0x12] sm:$0xff]
      %v1152 = vld [vmem:[#allocation2 + $0x1a] sm:$0xff]
      %v1153 = vld [vmem:[#allocation2 + $0x22] sm:$0xff]
      %v1154 = vld [vmem:[#allocation2 + $0x2a] sm:$0xff]
      %v1155 = vld [vmem:[#allocation2 + $0x32] sm:$0xff]
      %v1156 = vld [vmem:[#allocation2 + $0x3a] sm:$0xff]
      %v1157 = vld [vmem:[#allocation2 + $0x42] sm:$0xff]
      %v1158 = vld [vmem:[#allocation2 + $0x4a] sm:$0xff]
      %v1159 = vld [vmem:[#allocation2 + $0x52] sm:$0xff]
      %v1160 = vld [vmem:[#allocation2 + $0x5a] sm:$0xff]
      %v1161 = vld [vmem:[#allocation2 + $0x62] sm:$0xff]
      %v1162 = vld [vmem:[#allocation2 + $0x6a] sm:$0xff]
      %v1163 = vld [vmem:[#allocation2 + $0x72] sm:$0xff]
      %v1164 = vld [vmem:[#allocation2 + $0x7a] sm:$0xff]
      %v1165 = vld [vmem:[#allocation2 + $0x82] sm:$0xff]
      %v1166 = vld [vmem:[#allocation2 + $0x8a] sm:$0xff]
      %v1167 = vld [vmem:[#allocation2 + $0x92] sm:$0xff]
      %v1168 = vld [vmem:[#allocation2 + $0x9a] sm:$0xff]
      %v1169 = vld [vmem:[#allocation2 + $0xa2] sm:$0xff]
      %v1170 = vld [vmem:[#allocation2 + $0xaa] sm:$0xff]
      %v1171 = vld [vmem:[#allocation2 + $0xb2] sm:$0xff]
      %v1172 = vld [vmem:[#allocation2 + $0xba] sm:$0xff]
      %v1173 = vld [vmem:[#allocation2 + $0xc2] sm:$0xff]
      %v1174 = vld [vmem:[#allocation2 + $0xca] sm:$0xff]
      %v1175 = vld [vmem:[#allocation2 + $0xd2] sm:$0xff]
      %v1176 = vld [vmem:[#allocation2 + $0xda] sm:$0xff]
      %v1177 = vld [vmem:[#allocation2 + $0xe2] sm:$0xff]
      %v1178 = vld [vmem:[#allocation2 + $0xea] sm:$0xff]
      %v1179 = vld [vmem:[#allocation2 + $0xf2] sm:$0xff]
      %v1180 = vld [vmem:[#allocation2 + $0xfa] sm:$0xff]
      %v1181 = vld [vmem:[#allocation2 + $0x102] sm:$0xff]
      %v1182 = vld [vmem:[#allocation2 + $0x10a] sm:$0xff]
      %v1183 = vld [vmem:[#allocation2 + $0x112] sm:$0xff]
      %v1184 = vld [vmem:[#allocation2 + $0x11a] sm:$0x3f]
      %v1185 = vlaneseq
      %v1186 = vshrl.u32 %v1185, 7
      %v1187 = vsub.s32 2, %v1186
      %v1188 = vrot.slane %v956, %v1187
      %v1189 = vmul.f32 %v1149, %v1188
      %v1190 = vmul.f32 %v1150, %v1188
      %v1191 = vmul.f32 %v1151, %v1188
      %v1192 = vmul.f32 %v1152, %v1188
      %v1193 = vmul.f32 %v1153, %v1188
      %v1194 = vmul.f32 %v1154, %v1188
      %v1195 = vmul.f32 %v1155, %v1188
      %v1196 = vmul.f32 %v1156, %v1188
      %v1197 = vmul.f32 %v1157, %v1188
      %v1198 = vmul.f32 %v1158, %v1188
      %v1199 = vmul.f32 %v1159, %v1188
      %v1200 = vmul.f32 %v1160, %v1188
      %v1201 = vmul.f32 %v1161, %v1188
      %v1202 = vmul.f32 %v1162, %v1188
      %v1203 = vmul.f32 %v1163, %v1188
      %v1204 = vmul.f32 %v1164, %v1188
      %v1205 = vmul.f32 %v1165, %v1188
      %v1206 = vmul.f32 %v1166, %v1188
      %v1207 = vmul.f32 %v1167, %v1188
      %v1208 = vmul.f32 %v1168, %v1188
      %v1209 = vmul.f32 %v1169, %v1188
      %v1210 = vmul.f32 %v1170, %v1188
      %v1211 = vmul.f32 %v1171, %v1188
      %v1212 = vmul.f32 %v1172, %v1188
      %v1213 = vmul.f32 %v1173, %v1188
      %v1214 = vmul.f32 %v1174, %v1188
      %v1215 = vmul.f32 %v1175, %v1188
      %v1216 = vmul.f32 %v1176, %v1188
      %v1217 = vmul.f32 %v1177, %v1188
      %v1218 = vmul.f32 %v1178, %v1188
      %v1219 = vmul.f32 %v1179, %v1188
      %v1220 = vmul.f32 %v1180, %v1188
      %v1221 = vmul.f32 %v1181, %v1188
      %v1222 = vmul.f32 %v1182, %v1188
      %v1223 = vmul.f32 %v1183, %v1188
      %v1224 = vmul.f32 %v1184, %v1188
      %v1225 = vadd.f32 %v1113, %v1189
      %v1226 = vadd.f32 %v1114, %v1190
      %v1227 = vadd.f32 %v1115, %v1191
      %v1228 = vadd.f32 %v1116, %v1192
      %v1229 = vadd.f32 %v1117, %v1193
      %v1230 = vadd.f32 %v1118, %v1194
      %v1231 = vadd.f32 %v1119, %v1195
      %v1232 = vadd.f32 %v1120, %v1196
      %v1233 = vadd.f32 %v1121, %v1197
      %v1234 = vadd.f32 %v1122, %v1198
      %v1235 = vadd.f32 %v1123, %v1199
      %v1236 = vadd.f32 %v1124, %v1200
      %v1237 = vadd.f32 %v1125, %v1201
      %v1238 = vadd.f32 %v1126, %v1202
      %v1239 = vadd.f32 %v1127, %v1203
      %v1240 = vadd.f32 %v1128, %v1204
      %v1241 = vadd.f32 %v1129, %v1205
      %v1242 = vadd.f32 %v1130, %v1206
      %v1243 = vadd.f32 %v1131, %v1207
      %v1244 = vadd.f32 %v1132, %v1208
      %v1245 = vadd.f32 %v1133, %v1209
      %v1246 = vadd.f32 %v1134, %v1210
      %v1247 = vadd.f32 %v1135, %v1211
      %v1248 = vadd.f32 %v1136, %v1212
      %v1249 = vadd.f32 %v1137, %v1213
      %v1250 = vadd.f32 %v1138, %v1214
      %v1251 = vadd.f32 %v1139, %v1215
      %v1252 = vadd.f32 %v1140, %v1216
      %v1253 = vadd.f32 %v1141, %v1217
      %v1254 = vadd.f32 %v1142, %v1218
      %v1255 = vadd.f32 %v1143, %v1219
      %v1256 = vadd.f32 %v1144, %v1220
      %v1257 = vadd.f32 %v1145, %v1221
      %v1258 = vadd.f32 %v1146, %v1222
      %v1259 = vadd.f32 %v1147, %v1223
      %v1260 = vadd.f32 %v1148, %v1224
      %v1261 = vld [vmem:[#allocation2 + $0x11a] sm:$0xff]
      %v1262 = vld [vmem:[#allocation2 + $0x122] sm:$0xff]
      %v1263 = vld [vmem:[#allocation2 + $0x12a] sm:$0x3f]
      %v1264 = vlaneseq
      %v1265 = vshrl.u32 %v1264, 7
      %v1266 = vsub.s32 3, %v1265
      %v1267 = vrot.slane %v956, %v1266
      %v1268 = vmul.f32 %v1151, %v1267
      %v1269 = vmul.f32 %v1152, %v1267
      %v1270 = vmul.f32 %v1153, %v1267
      %v1271 = vmul.f32 %v1154, %v1267
      %v1272 = vmul.f32 %v1155, %v1267
      %v1273 = vmul.f32 %v1156, %v1267
      %v1274 = vmul.f32 %v1157, %v1267
      %v1275 = vmul.f32 %v1158, %v1267
      %v1276 = vmul.f32 %v1159, %v1267
      %v1277 = vmul.f32 %v1160, %v1267
      %v1278 = vmul.f32 %v1161, %v1267
      %v1279 = vmul.f32 %v1162, %v1267
      %v1280 = vmul.f32 %v1163, %v1267
      %v1281 = vmul.f32 %v1164, %v1267
      %v1282 = vmul.f32 %v1165, %v1267
      %v1283 = vmul.f32 %v1166, %v1267
      %v1284 = vmul.f32 %v1167, %v1267
      %v1285 = vmul.f32 %v1168, %v1267
      %v1286 = vmul.f32 %v1169, %v1267
      %v1287 = vmul.f32 %v1170, %v1267
      %v1288 = vmul.f32 %v1171, %v1267
      %v1289 = vmul.f32 %v1172, %v1267
      %v1290 = vmul.f32 %v1173, %v1267
      %v1291 = vmul.f32 %v1174, %v1267
      %v1292 = vmul.f32 %v1175, %v1267
      %v1293 = vmul.f32 %v1176, %v1267
      %v1294 = vmul.f32 %v1177, %v1267
      %v1295 = vmul.f32 %v1178, %v1267
      %v1296 = vmul.f32 %v1179, %v1267
      %v1297 = vmul.f32 %v1180, %v1267
      %v1298 = vmul.f32 %v1181, %v1267
      %v1299 = vmul.f32 %v1182, %v1267
      %v1300 = vmul.f32 %v1183, %v1267
      %v1301 = vmul.f32 %v1261, %v1267
      %v1302 = vmul.f32 %v1262, %v1267
      %v1303 = vmul.f32 %v1263, %v1267
      %v1304 = vadd.f32 %v1225, %v1268
      %v1305 = vadd.f32 %v1226, %v1269
      %v1306 = vadd.f32 %v1227, %v1270
      %v1307 = vadd.f32 %v1228, %v1271
      %v1308 = vadd.f32 %v1229, %v1272
      %v1309 = vadd.f32 %v1230, %v1273
      %v1310 = vadd.f32 %v1231, %v1274
      %v1311 = vadd.f32 %v1232, %v1275
      %v1312 = vadd.f32 %v1233, %v1276
      %v1313 = vadd.f32 %v1234, %v1277
      %v1314 = vadd.f32 %v1235, %v1278
      %v1315 = vadd.f32 %v1236, %v1279
      %v1316 = vadd.f32 %v1237, %v1280
      %v1317 = vadd.f32 %v1238, %v1281
      %v1318 = vadd.f32 %v1239, %v1282
      %v1319 = vadd.f32 %v1240, %v1283
      %v1320 = vadd.f32 %v1241, %v1284
      %v1321 = vadd.f32 %v1242, %v1285
      %v1322 = vadd.f32 %v1243, %v1286
      %v1323 = vadd.f32 %v1244, %v1287
      %v1324 = vadd.f32 %v1245, %v1288
      %v1325 = vadd.f32 %v1246, %v1289
      %v1326 = vadd.f32 %v1247, %v1290
      %v1327 = vadd.f32 %v1248, %v1291
      %v1328 = vadd.f32 %v1249, %v1292
      %v1329 = vadd.f32 %v1250, %v1293
      %v1330 = vadd.f32 %v1251, %v1294
      %v1331 = vadd.f32 %v1252, %v1295
      %v1332 = vadd.f32 %v1253, %v1296
      %v1333 = vadd.f32 %v1254, %v1297
      %v1334 = vadd.f32 %v1255, %v1298
      %v1335 = vadd.f32 %v1256, %v1299
      %v1336 = vadd.f32 %v1257, %v1300
      %v1337 = vadd.f32 %v1258, %v1301
      %v1338 = vadd.f32 %v1259, %v1302
      %v1339 = vadd.f32 %v1260, %v1303
      %v1340 = vld [vmem:[#allocation2 + $0x13] sm:$0xff]
      %v1341 = vld [vmem:[#allocation2 + $0x1b] sm:$0xff]
      %v1342 = vld [vmem:[#allocation2 + $0x23] sm:$0xff]
      %v1343 = vld [vmem:[#allocation2 + $0x2b] sm:$0xff]
      %v1344 = vld [vmem:[#allocation2 + $0x33] sm:$0xff]
      %v1345 = vld [vmem:[#allocation2 + $0x3b] sm:$0xff]
      %v1346 = vld [vmem:[#allocation2 + $0x43] sm:$0xff]
      %v1347 = vld [vmem:[#allocation2 + $0x4b] sm:$0xff]
      %v1348 = vld [vmem:[#allocation2 + $0x53] sm:$0xff]
      %v1349 = vld [vmem:[#allocation2 + $0x5b] sm:$0xff]
      %v1350 = vld [vmem:[#allocation2 + $0x63] sm:$0xff]
      %v1351 = vld [vmem:[#allocation2 + $0x6b] sm:$0xff]
      %v1352 = vld [vmem:[#allocation2 + $0x73] sm:$0xff]
      %v1353 = vld [vmem:[#allocation2 + $0x7b] sm:$0xff]
      %v1354 = vld [vmem:[#allocation2 + $0x83] sm:$0xff]
      %v1355 = vld [vmem:[#allocation2 + $0x8b] sm:$0xff]
      %v1356 = vld [vmem:[#allocation2 + $0x93] sm:$0xff]
      %v1357 = vld [vmem:[#allocation2 + $0x9b] sm:$0xff]
      %v1358 = vld [vmem:[#allocation2 + $0xa3] sm:$0xff]
      %v1359 = vld [vmem:[#allocation2 + $0xab] sm:$0xff]
      %v1360 = vld [vmem:[#allocation2 + $0xb3] sm:$0xff]
      %v1361 = vld [vmem:[#allocation2 + $0xbb] sm:$0xff]
      %v1362 = vld [vmem:[#allocation2 + $0xc3] sm:$0xff]
      %v1363 = vld [vmem:[#allocation2 + $0xcb] sm:$0xff]
      %v1364 = vld [vmem:[#allocation2 + $0xd3] sm:$0xff]
      %v1365 = vld [vmem:[#allocation2 + $0xdb] sm:$0xff]
      %v1366 = vld [vmem:[#allocation2 + $0xe3] sm:$0xff]
      %v1367 = vld [vmem:[#allocation2 + $0xeb] sm:$0xff]
      %v1368 = vld [vmem:[#allocation2 + $0xf3] sm:$0xff]
      %v1369 = vld [vmem:[#allocation2 + $0xfb] sm:$0xff]
      %v1370 = vld [vmem:[#allocation2 + $0x103] sm:$0xff]
      %v1371 = vld [vmem:[#allocation2 + $0x10b] sm:$0xff]
      %v1372 = vld [vmem:[#allocation2 + $0x113] sm:$0xff]
      %v1373 = vld [vmem:[#allocation2 + $0x11b] sm:$0xff]
      %v1374 = vld [vmem:[#allocation2 + $0x123] sm:$0xff]
      %v1375 = vld [vmem:[#allocation2 + $0x12b] sm:$0x3f]
      %v1376 = vlaneseq
      %v1377 = vshrl.u32 %v1376, 7
      %v1378 = vsub.s32 4, %v1377
      %v1379 = vrot.slane %v956, %v1378
      %v1380 = vmul.f32 %v1340, %v1379
      %v1381 = vmul.f32 %v1341, %v1379
      %v1382 = vmul.f32 %v1342, %v1379
      %v1383 = vmul.f32 %v1343, %v1379
      %v1384 = vmul.f32 %v1344, %v1379
      %v1385 = vmul.f32 %v1345, %v1379
      %v1386 = vmul.f32 %v1346, %v1379
      %v1387 = vmul.f32 %v1347, %v1379
      %v1388 = vmul.f32 %v1348, %v1379
      %v1389 = vmul.f32 %v1349, %v1379
      %v1390 = vmul.f32 %v1350, %v1379
      %v1391 = vmul.f32 %v1351, %v1379
      %v1392 = vmul.f32 %v1352, %v1379
      %v1393 = vmul.f32 %v1353, %v1379
      %v1394 = vmul.f32 %v1354, %v1379
      %v1395 = vmul.f32 %v1355, %v1379
      %v1396 = vmul.f32 %v1356, %v1379
      %v1397 = vmul.f32 %v1357, %v1379
      %v1398 = vmul.f32 %v1358, %v1379
      %v1399 = vmul.f32 %v1359, %v1379
      %v1400 = vmul.f32 %v1360, %v1379
      %v1401 = vmul.f32 %v1361, %v1379
      %v1402 = vmul.f32 %v1362, %v1379
      %v1403 = vmul.f32 %v1363, %v1379
      %v1404 = vmul.f32 %v1364, %v1379
      %v1405 = vmul.f32 %v1365, %v1379
      %v1406 = vmul.f32 %v1366, %v1379
      %v1407 = vmul.f32 %v1367, %v1379
      %v1408 = vmul.f32 %v1368, %v1379
      %v1409 = vmul.f32 %v1369, %v1379
      %v1410 = vmul.f32 %v1370, %v1379
      %v1411 = vmul.f32 %v1371, %v1379
      %v1412 = vmul.f32 %v1372, %v1379
      %v1413 = vmul.f32 %v1373, %v1379
      %v1414 = vmul.f32 %v1374, %v1379
      %v1415 = vmul.f32 %v1375, %v1379
      %v1416 = vadd.f32 %v1304, %v1380
      %v1417 = vadd.f32 %v1305, %v1381
      %v1418 = vadd.f32 %v1306, %v1382
      %v1419 = vadd.f32 %v1307, %v1383
      %v1420 = vadd.f32 %v1308, %v1384
      %v1421 = vadd.f32 %v1309, %v1385
      %v1422 = vadd.f32 %v1310, %v1386
      %v1423 = vadd.f32 %v1311, %v1387
      %v1424 = vadd.f32 %v1312, %v1388
      %v1425 = vadd.f32 %v1313, %v1389
      %v1426 = vadd.f32 %v1314, %v1390
      %v1427 = vadd.f32 %v1315, %v1391
      %v1428 = vadd.f32 %v1316, %v1392
      %v1429 = vadd.f32 %v1317, %v1393
      %v1430 = vadd.f32 %v1318, %v1394
      %v1431 = vadd.f32 %v1319, %v1395
      %v1432 = vadd.f32 %v1320, %v1396
      %v1433 = vadd.f32 %v1321, %v1397
      %v1434 = vadd.f32 %v1322, %v1398
      %v1435 = vadd.f32 %v1323, %v1399
      %v1436 = vadd.f32 %v1324, %v1400
      %v1437 = vadd.f32 %v1325, %v1401
      %v1438 = vadd.f32 %v1326, %v1402
      %v1439 = vadd.f32 %v1327, %v1403
      %v1440 = vadd.f32 %v1328, %v1404
      %v1441 = vadd.f32 %v1329, %v1405
      %v1442 = vadd.f32 %v1330, %v1406
      %v1443 = vadd.f32 %v1331, %v1407
      %v1444 = vadd.f32 %v1332, %v1408
      %v1445 = vadd.f32 %v1333, %v1409
      %v1446 = vadd.f32 %v1334, %v1410
      %v1447 = vadd.f32 %v1335, %v1411
      %v1448 = vadd.f32 %v1336, %v1412
      %v1449 = vadd.f32 %v1337, %v1413
      %v1450 = vadd.f32 %v1338, %v1414
      %v1451 = vadd.f32 %v1339, %v1415
      %v1452 = vld [vmem:[#allocation2 + $0x14] sm:$0xff]
      %v1453 = vld [vmem:[#allocation2 + $0x1c] sm:$0xff]
      %v1454 = vld [vmem:[#allocation2 + $0x24] sm:$0xff]
      %v1455 = vld [vmem:[#allocation2 + $0x2c] sm:$0xff]
      %v1456 = vld [vmem:[#allocation2 + $0x34] sm:$0xff]
      %v1457 = vld [vmem:[#allocation2 + $0x3c] sm:$0xff]
      %v1458 = vld [vmem:[#allocation2 + $0x44] sm:$0xff]
      %v1459 = vld [vmem:[#allocation2 + $0x4c] sm:$0xff]
      %v1460 = vld [vmem:[#allocation2 + $0x54] sm:$0xff]
      %v1461 = vld [vmem:[#allocation2 + $0x5c] sm:$0xff]
      %v1462 = vld [vmem:[#allocation2 + $0x64] sm:$0xff]
      %v1463 = vld [vmem:[#allocation2 + $0x6c] sm:$0xff]
      %v1464 = vld [vmem:[#allocation2 + $0x74] sm:$0xff]
      %v1465 = vld [vmem:[#allocation2 + $0x7c] sm:$0xff]
      %v1466 = vld [vmem:[#allocation2 + $0x84] sm:$0xff]
      %v1467 = vld [vmem:[#allocation2 + $0x8c] sm:$0xff]
      %v1468 = vld [vmem:[#allocation2 + $0x94] sm:$0xff]
      %v1469 = vld [vmem:[#allocation2 + $0x9c] sm:$0xff]
      %v1470 = vld [vmem:[#allocation2 + $0xa4] sm:$0xff]
      %v1471 = vld [vmem:[#allocation2 + $0xac] sm:$0xff]
      %v1472 = vld [vmem:[#allocation2 + $0xb4] sm:$0xff]
      %v1473 = vld [vmem:[#allocation2 + $0xbc] sm:$0xff]
      %v1474 = vld [vmem:[#allocation2 + $0xc4] sm:$0xff]
      %v1475 = vld [vmem:[#allocation2 + $0xcc] sm:$0xff]
      %v1476 = vld [vmem:[#allocation2 + $0xd4] sm:$0xff]
      %v1477 = vld [vmem:[#allocation2 + $0xdc] sm:$0xff]
      %v1478 = vld [vmem:[#allocation2 + $0xe4] sm:$0xff]
      %v1479 = vld [vmem:[#allocation2 + $0xec] sm:$0xff]
      %v1480 = vld [vmem:[#allocation2 + $0xf4] sm:$0xff]
      %v1481 = vld [vmem:[#allocation2 + $0xfc] sm:$0xff]
      %v1482 = vld [vmem:[#allocation2 + $0x104] sm:$0xff]
      %v1483 = vld [vmem:[#allocation2 + $0x10c] sm:$0xff]
      %v1484 = vld [vmem:[#allocation2 + $0x114] sm:$0xff]
      %v1485 = vld [vmem:[#allocation2 + $0x11c] sm:$0xff]
      %v1486 = vld [vmem:[#allocation2 + $0x124] sm:$0xff]
      %v1487 = vld [vmem:[#allocation2 + $0x12c] sm:$0x3f]
      %v1488 = vlaneseq
      %v1489 = vshrl.u32 %v1488, 7
      %v1490 = vsub.s32 5, %v1489
      %v1491 = vrot.slane %v956, %v1490
      %v1492 = vmul.f32 %v1452, %v1491
      %v1493 = vmul.f32 %v1453, %v1491
      %v1494 = vmul.f32 %v1454, %v1491
      %v1495 = vmul.f32 %v1455, %v1491
      %v1496 = vmul.f32 %v1456, %v1491
      %v1497 = vmul.f32 %v1457, %v1491
      %v1498 = vmul.f32 %v1458, %v1491
      %v1499 = vmul.f32 %v1459, %v1491
      %v1500 = vmul.f32 %v1460, %v1491
      %v1501 = vmul.f32 %v1461, %v1491
      %v1502 = vmul.f32 %v1462, %v1491
      %v1503 = vmul.f32 %v1463, %v1491
      %v1504 = vmul.f32 %v1464, %v1491
      %v1505 = vmul.f32 %v1465, %v1491
      %v1506 = vmul.f32 %v1466, %v1491
      %v1507 = vmul.f32 %v1467, %v1491
      %v1508 = vmul.f32 %v1468, %v1491
      %v1509 = vmul.f32 %v1469, %v1491
      %v1510 = vmul.f32 %v1470, %v1491
      %v1511 = vmul.f32 %v1471, %v1491
      %v1512 = vmul.f32 %v1472, %v1491
      %v1513 = vmul.f32 %v1473, %v1491
      %v1514 = vmul.f32 %v1474, %v1491
      %v1515 = vmul.f32 %v1475, %v1491
      %v1516 = vmul.f32 %v1476, %v1491
      %v1517 = vmul.f32 %v1477, %v1491
      %v1518 = vmul.f32 %v1478, %v1491
      %v1519 = vmul.f32 %v1479, %v1491
      %v1520 = vmul.f32 %v1480, %v1491
      %v1521 = vmul.f32 %v1481, %v1491
      %v1522 = vmul.f32 %v1482, %v1491
      %v1523 = vmul.f32 %v1483, %v1491
      %v1524 = vmul.f32 %v1484, %v1491
      %v1525 = vmul.f32 %v1485, %v1491
      %v1526 = vmul.f32 %v1486, %v1491
      %v1527 = vmul.f32 %v1487, %v1491
      %v1528 = vadd.f32 %v1416, %v1492
      %v1529 = vadd.f32 %v1417, %v1493
      %v1530 = vadd.f32 %v1418, %v1494
      %v1531 = vadd.f32 %v1419, %v1495
      %v1532 = vadd.f32 %v1420, %v1496
      %v1533 = vadd.f32 %v1421, %v1497
      %v1534 = vadd.f32 %v1422, %v1498
      %v1535 = vadd.f32 %v1423, %v1499
      %v1536 = vadd.f32 %v1424, %v1500
      %v1537 = vadd.f32 %v1425, %v1501
      %v1538 = vadd.f32 %v1426, %v1502
      %v1539 = vadd.f32 %v1427, %v1503
      %v1540 = vadd.f32 %v1428, %v1504
      %v1541 = vadd.f32 %v1429, %v1505
      %v1542 = vadd.f32 %v1430, %v1506
      %v1543 = vadd.f32 %v1431, %v1507
      %v1544 = vadd.f32 %v1432, %v1508
      %v1545 = vadd.f32 %v1433, %v1509
      %v1546 = vadd.f32 %v1434, %v1510
      %v1547 = vadd.f32 %v1435, %v1511
      %v1548 = vadd.f32 %v1436, %v1512
      %v1549 = vadd.f32 %v1437, %v1513
      %v1550 = vadd.f32 %v1438, %v1514
      %v1551 = vadd.f32 %v1439, %v1515
      %v1552 = vadd.f32 %v1440, %v1516
      %v1553 = vadd.f32 %v1441, %v1517
      %v1554 = vadd.f32 %v1442, %v1518
      %v1555 = vadd.f32 %v1443, %v1519
      %v1556 = vadd.f32 %v1444, %v1520
      %v1557 = vadd.f32 %v1445, %v1521
      %v1558 = vadd.f32 %v1446, %v1522
      %v1559 = vadd.f32 %v1447, %v1523
      %v1560 = vadd.f32 %v1448, %v1524
      %v1561 = vadd.f32 %v1449, %v1525
      %v1562 = vadd.f32 %v1450, %v1526
      %v1563 = vadd.f32 %v1451, %v1527
      %v1564 = vld [vmem:[#allocation2 + $0x12c] sm:$0xff]
      %v1565 = vld [vmem:[#allocation2 + $0x134] sm:$0xff]
      %v1566 = vld [vmem:[#allocation2 + $0x13c] sm:$0x3f]
      %v1567 = vlaneseq
      %v1568 = vshrl.u32 %v1567, 7
      %v1569 = vsub.s32 6, %v1568
      %v1570 = vrot.slane %v956, %v1569
      %v1571 = vmul.f32 %v1454, %v1570
      %v1572 = vmul.f32 %v1455, %v1570
      %v1573 = vmul.f32 %v1456, %v1570
      %v1574 = vmul.f32 %v1457, %v1570
      %v1575 = vmul.f32 %v1458, %v1570
      %v1576 = vmul.f32 %v1459, %v1570
      %v1577 = vmul.f32 %v1460, %v1570
      %v1578 = vmul.f32 %v1461, %v1570
      %v1579 = vmul.f32 %v1462, %v1570
      %v1580 = vmul.f32 %v1463, %v1570
      %v1581 = vmul.f32 %v1464, %v1570
      %v1582 = vmul.f32 %v1465, %v1570
      %v1583 = vmul.f32 %v1466, %v1570
      %v1584 = vmul.f32 %v1467, %v1570
      %v1585 = vmul.f32 %v1468, %v1570
      %v1586 = vmul.f32 %v1469, %v1570
      %v1587 = vmul.f32 %v1470, %v1570
      %v1588 = vmul.f32 %v1471, %v1570
      %v1589 = vmul.f32 %v1472, %v1570
      %v1590 = vmul.f32 %v1473, %v1570
      %v1591 = vmul.f32 %v1474, %v1570
      %v1592 = vmul.f32 %v1475, %v1570
      %v1593 = vmul.f32 %v1476, %v1570
      %v1594 = vmul.f32 %v1477, %v1570
      %v1595 = vmul.f32 %v1478, %v1570
      %v1596 = vmul.f32 %v1479, %v1570
      %v1597 = vmul.f32 %v1480, %v1570
      %v1598 = vmul.f32 %v1481, %v1570
      %v1599 = vmul.f32 %v1482, %v1570
      %v1600 = vmul.f32 %v1483, %v1570
      %v1601 = vmul.f32 %v1484, %v1570
      %v1602 = vmul.f32 %v1485, %v1570
      %v1603 = vmul.f32 %v1486, %v1570
      %v1604 = vmul.f32 %v1564, %v1570
      %v1605 = vmul.f32 %v1565, %v1570
      %v1606 = vmul.f32 %v1566, %v1570
      %v1607 = vadd.f32 %v1528, %v1571
      %v1608 = vadd.f32 %v1529, %v1572
      %v1609 = vadd.f32 %v1530, %v1573
      %v1610 = vadd.f32 %v1531, %v1574
      %v1611 = vadd.f32 %v1532, %v1575
      %v1612 = vadd.f32 %v1533, %v1576
      %v1613 = vadd.f32 %v1534, %v1577
      %v1614 = vadd.f32 %v1535, %v1578
      %v1615 = vadd.f32 %v1536, %v1579
      %v1616 = vadd.f32 %v1537, %v1580
      %v1617 = vadd.f32 %v1538, %v1581
      %v1618 = vadd.f32 %v1539, %v1582
      %v1619 = vadd.f32 %v1540, %v1583
      %v1620 = vadd.f32 %v1541, %v1584
      %v1621 = vadd.f32 %v1542, %v1585
      %v1622 = vadd.f32 %v1543, %v1586
      %v1623 = vadd.f32 %v1544, %v1587
      %v1624 = vadd.f32 %v1545, %v1588
      %v1625 = vadd.f32 %v1546, %v1589
      %v1626 = vadd.f32 %v1547, %v1590
      %v1627 = vadd.f32 %v1548, %v1591
      %v1628 = vadd.f32 %v1549, %v1592
      %v1629 = vadd.f32 %v1550, %v1593
      %v1630 = vadd.f32 %v1551, %v1594
      %v1631 = vadd.f32 %v1552, %v1595
      %v1632 = vadd.f32 %v1553, %v1596
      %v1633 = vadd.f32 %v1554, %v1597
      %v1634 = vadd.f32 %v1555, %v1598
      %v1635 = vadd.f32 %v1556, %v1599
      %v1636 = vadd.f32 %v1557, %v1600
      %v1637 = vadd.f32 %v1558, %v1601
      %v1638 = vadd.f32 %v1559, %v1602
      %v1639 = vadd.f32 %v1560, %v1603
      %v1640 = vadd.f32 %v1561, %v1604
      %v1641 = vadd.f32 %v1562, %v1605
      %v1642 = vadd.f32 %v1563, %v1606
      %v1643 = vld [vmem:[#allocation2 + $0x25] sm:$0xff]
      %v1644 = vld [vmem:[#allocation2 + $0x2d] sm:$0xff]
      %v1645 = vld [vmem:[#allocation2 + $0x35] sm:$0xff]
      %v1646 = vld [vmem:[#allocation2 + $0x3d] sm:$0xff]
      %v1647 = vld [vmem:[#allocation2 + $0x45] sm:$0xff]
      %v1648 = vld [vmem:[#allocation2 + $0x4d] sm:$0xff]
      %v1649 = vld [vmem:[#allocation2 + $0x55] sm:$0xff]
      %v1650 = vld [vmem:[#allocation2 + $0x5d] sm:$0xff]
      %v1651 = vld [vmem:[#allocation2 + $0x65] sm:$0xff]
      %v1652 = vld [vmem:[#allocation2 + $0x6d] sm:$0xff]
      %v1653 = vld [vmem:[#allocation2 + $0x75] sm:$0xff]
      %v1654 = vld [vmem:[#allocation2 + $0x7d] sm:$0xff]
      %v1655 = vld [vmem:[#allocation2 + $0x85] sm:$0xff]
      %v1656 = vld [vmem:[#allocation2 + $0x8d] sm:$0xff]
      %v1657 = vld [vmem:[#allocation2 + $0x95] sm:$0xff]
      %v1658 = vld [vmem:[#allocation2 + $0x9d] sm:$0xff]
      %v1659 = vld [vmem:[#allocation2 + $0xa5] sm:$0xff]
      %v1660 = vld [vmem:[#allocation2 + $0xad] sm:$0xff]
      %v1661 = vld [vmem:[#allocation2 + $0xb5] sm:$0xff]
      %v1662 = vld [vmem:[#allocation2 + $0xbd] sm:$0xff]
      %v1663 = vld [vmem:[#allocation2 + $0xc5] sm:$0xff]
      %v1664 = vld [vmem:[#allocation2 + $0xcd] sm:$0xff]
      %v1665 = vld [vmem:[#allocation2 + $0xd5] sm:$0xff]
      %v1666 = vld [vmem:[#allocation2 + $0xdd] sm:$0xff]
      %v1667 = vld [vmem:[#allocation2 + $0xe5] sm:$0xff]
      %v1668 = vld [vmem:[#allocation2 + $0xed] sm:$0xff]
      %v1669 = vld [vmem:[#allocation2 + $0xf5] sm:$0xff]
      %v1670 = vld [vmem:[#allocation2 + $0xfd] sm:$0xff]
      %v1671 = vld [vmem:[#allocation2 + $0x105] sm:$0xff]
      %v1672 = vld [vmem:[#allocation2 + $0x10d] sm:$0xff]
      %v1673 = vld [vmem:[#allocation2 + $0x115] sm:$0xff]
      %v1674 = vld [vmem:[#allocation2 + $0x11d] sm:$0xff]
      %v1675 = vld [vmem:[#allocation2 + $0x125] sm:$0xff]
      %v1676 = vld [vmem:[#allocation2 + $0x12d] sm:$0xff]
      %v1677 = vld [vmem:[#allocation2 + $0x135] sm:$0xff]
      %v1678 = vld [vmem:[#allocation2 + $0x13d] sm:$0x3f]
      %v1679 = vlaneseq
      %v1680 = vshrl.u32 %v1679, 7
      %v1681 = vsub.s32 7, %v1680
      %v1682 = vrot.slane %v956, %v1681
      %v1683 = vmul.f32 %v1643, %v1682
      %v1684 = vmul.f32 %v1644, %v1682
      %v1685 = vmul.f32 %v1645, %v1682
      %v1686 = vmul.f32 %v1646, %v1682
      %v1687 = vmul.f32 %v1647, %v1682
      %v1688 = vmul.f32 %v1648, %v1682
      %v1689 = vmul.f32 %v1649, %v1682
      %v1690 = vmul.f32 %v1650, %v1682
      %v1691 = vmul.f32 %v1651, %v1682
      %v1692 = vmul.f32 %v1652, %v1682
      %v1693 = vmul.f32 %v1653, %v1682
      %v1694 = vmul.f32 %v1654, %v1682
      %v1695 = vmul.f32 %v1655, %v1682
      %v1696 = vmul.f32 %v1656, %v1682
      %v1697 = vmul.f32 %v1657, %v1682
      %v1698 = vmul.f32 %v1658, %v1682
      %v1699 = vmul.f32 %v1659, %v1682
      %v1700 = vmul.f32 %v1660, %v1682
      %v1701 = vmul.f32 %v1661, %v1682
      %v1702 = vmul.f32 %v1662, %v1682
      %v1703 = vmul.f32 %v1663, %v1682
      %v1704 = vmul.f32 %v1664, %v1682
      %v1705 = vmul.f32 %v1665, %v1682
      %v1706 = vmul.f32 %v1666, %v1682
      %v1707 = vmul.f32 %v1667, %v1682
      %v1708 = vmul.f32 %v1668, %v1682
      %v1709 = vmul.f32 %v1669, %v1682
      %v1710 = vmul.f32 %v1670, %v1682
      %v1711 = vmul.f32 %v1671, %v1682
      %v1712 = vmul.f32 %v1672, %v1682
      %v1713 = vmul.f32 %v1673, %v1682
      %v1714 = vmul.f32 %v1674, %v1682
      %v1715 = vmul.f32 %v1675, %v1682
      %v1716 = vmul.f32 %v1676, %v1682
      %v1717 = vmul.f32 %v1677, %v1682
      %v1718 = vmul.f32 %v1678, %v1682
      %v1719 = vadd.f32 %v1607, %v1683
      %v1720 = vadd.f32 %v1608, %v1684
      %v1721 = vadd.f32 %v1609, %v1685
      %v1722 = vadd.f32 %v1610, %v1686
      %v1723 = vadd.f32 %v1611, %v1687
      %v1724 = vadd.f32 %v1612, %v1688
      %v1725 = vadd.f32 %v1613, %v1689
      %v1726 = vadd.f32 %v1614, %v1690
      %v1727 = vadd.f32 %v1615, %v1691
      %v1728 = vadd.f32 %v1616, %v1692
      %v1729 = vadd.f32 %v1617, %v1693
      %v1730 = vadd.f32 %v1618, %v1694
      %v1731 = vadd.f32 %v1619, %v1695
      %v1732 = vadd.f32 %v1620, %v1696
      %v1733 = vadd.f32 %v1621, %v1697
      %v1734 = vadd.f32 %v1622, %v1698
      %v1735 = vadd.f32 %v1623, %v1699
      %v1736 = vadd.f32 %v1624, %v1700
      %v1737 = vadd.f32 %v1625, %v1701
      %v1738 = vadd.f32 %v1626, %v1702
      %v1739 = vadd.f32 %v1627, %v1703
      %v1740 = vadd.f32 %v1628, %v1704
      %v1741 = vadd.f32 %v1629, %v1705
      %v1742 = vadd.f32 %v1630, %v1706
      %v1743 = vadd.f32 %v1631, %v1707
      %v1744 = vadd.f32 %v1632, %v1708
      %v1745 = vadd.f32 %v1633, %v1709
      %v1746 = vadd.f32 %v1634, %v1710
      %v1747 = vadd.f32 %v1635, %v1711
      %v1748 = vadd.f32 %v1636, %v1712
      %v1749 = vadd.f32 %v1637, %v1713
      %v1750 = vadd.f32 %v1638, %v1714
      %v1751 = vadd.f32 %v1639, %v1715
      %v1752 = vadd.f32 %v1640, %v1716
      %v1753 = vadd.f32 %v1641, %v1717
      %v1754 = vadd.f32 %v1642, %v1718
      %v1755 = vld [vmem:[#allocation2 + $0x26] sm:$0xff]
      %v1756 = vld [vmem:[#allocation2 + $0x2e] sm:$0xff]
      %v1757 = vld [vmem:[#allocation2 + $0x36] sm:$0xff]
      %v1758 = vld [vmem:[#allocation2 + $0x3e] sm:$0xff]
      %v1759 = vld [vmem:[#allocation2 + $0x46] sm:$0xff]
      %v1760 = vld [vmem:[#allocation2 + $0x4e] sm:$0xff]
      %v1761 = vld [vmem:[#allocation2 + $0x56] sm:$0xff]
      %v1762 = vld [vmem:[#allocation2 + $0x5e] sm:$0xff]
      %v1763 = vld [vmem:[#allocation2 + $0x66] sm:$0xff]
      %v1764 = vld [vmem:[#allocation2 + $0x6e] sm:$0xff]
      %v1765 = vld [vmem:[#allocation2 + $0x76] sm:$0xff]
      %v1766 = vld [vmem:[#allocation2 + $0x7e] sm:$0xff]
      %v1767 = vld [vmem:[#allocation2 + $0x86] sm:$0xff]
      %v1768 = vld [vmem:[#allocation2 + $0x8e] sm:$0xff]
      %v1769 = vld [vmem:[#allocation2 + $0x96] sm:$0xff]
      %v1770 = vld [vmem:[#allocation2 + $0x9e] sm:$0xff]
      %v1771 = vld [vmem:[#allocation2 + $0xa6] sm:$0xff]
      %v1772 = vld [vmem:[#allocation2 + $0xae] sm:$0xff]
      %v1773 = vld [vmem:[#allocation2 + $0xb6] sm:$0xff]
      %v1774 = vld [vmem:[#allocation2 + $0xbe] sm:$0xff]
      %v1775 = vld [vmem:[#allocation2 + $0xc6] sm:$0xff]
      %v1776 = vld [vmem:[#allocation2 + $0xce] sm:$0xff]
      %v1777 = vld [vmem:[#allocation2 + $0xd6] sm:$0xff]
      %v1778 = vld [vmem:[#allocation2 + $0xde] sm:$0xff]
      %v1779 = vld [vmem:[#allocation2 + $0xe6] sm:$0xff]
      %v1780 = vld [vmem:[#allocation2 + $0xee] sm:$0xff]
      %v1781 = vld [vmem:[#allocation2 + $0xf6] sm:$0xff]
      %v1782 = vld [vmem:[#allocation2 + $0xfe] sm:$0xff]
      %v1783 = vld [vmem:[#allocation2 + $0x106] sm:$0xff]
      %v1784 = vld [vmem:[#allocation2 + $0x10e] sm:$0xff]
      %v1785 = vld [vmem:[#allocation2 + $0x116] sm:$0xff]
      %v1786 = vld [vmem:[#allocation2 + $0x11e] sm:$0xff]
      %v1787 = vld [vmem:[#allocation2 + $0x126] sm:$0xff]
      %v1788 = vld [vmem:[#allocation2 + $0x12e] sm:$0xff]
      %v1789 = vld [vmem:[#allocation2 + $0x136] sm:$0xff]
      %v1790 = vld [vmem:[#allocation2 + $0x13e] sm:$0x3f]
      %v1791 = vlaneseq
      %v1792 = vshrl.u32 %v1791, 7
      %v1793 = vsub.s32 0, %v1792
      %v1794 = vrot.slane %v957, %v1793
      %v1795 = vmul.f32 %v1755, %v1794
      %v1796 = vmul.f32 %v1756, %v1794
      %v1797 = vmul.f32 %v1757, %v1794
      %v1798 = vmul.f32 %v1758, %v1794
      %v1799 = vmul.f32 %v1759, %v1794
      %v1800 = vmul.f32 %v1760, %v1794
      %v1801 = vmul.f32 %v1761, %v1794
      %v1802 = vmul.f32 %v1762, %v1794
      %v1803 = vmul.f32 %v1763, %v1794
      %v1804 = vmul.f32 %v1764, %v1794
      %v1805 = vmul.f32 %v1765, %v1794
      %v1806 = vmul.f32 %v1766, %v1794
      %v1807 = vmul.f32 %v1767, %v1794
      %v1808 = vmul.f32 %v1768, %v1794
      %v1809 = vmul.f32 %v1769, %v1794
      %v1810 = vmul.f32 %v1770, %v1794
      %v1811 = vmul.f32 %v1771, %v1794
      %v1812 = vmul.f32 %v1772, %v1794
      %v1813 = vmul.f32 %v1773, %v1794
      %v1814 = vmul.f32 %v1774, %v1794
      %v1815 = vmul.f32 %v1775, %v1794
      %v1816 = vmul.f32 %v1776, %v1794
      %v1817 = vmul.f32 %v1777, %v1794
      %v1818 = vmul.f32 %v1778, %v1794
      %v1819 = vmul.f32 %v1779, %v1794
      %v1820 = vmul.f32 %v1780, %v1794
      %v1821 = vmul.f32 %v1781, %v1794
      %v1822 = vmul.f32 %v1782, %v1794
      %v1823 = vmul.f32 %v1783, %v1794
      %v1824 = vmul.f32 %v1784, %v1794
      %v1825 = vmul.f32 %v1785, %v1794
      %v1826 = vmul.f32 %v1786, %v1794
      %v1827 = vmul.f32 %v1787, %v1794
      %v1828 = vmul.f32 %v1788, %v1794
      %v1829 = vmul.f32 %v1789, %v1794
      %v1830 = vmul.f32 %v1790, %v1794
      %v1831 = vadd.f32 %v1719, %v1795
      %v1832 = vadd.f32 %v1720, %v1796
      %v1833 = vadd.f32 %v1721, %v1797
      %v1834 = vadd.f32 %v1722, %v1798
      %v1835 = vadd.f32 %v1723, %v1799
      %v1836 = vadd.f32 %v1724, %v1800
      %v1837 = vadd.f32 %v1725, %v1801
      %v1838 = vadd.f32 %v1726, %v1802
      %v1839 = vadd.f32 %v1727, %v1803
      %v1840 = vadd.f32 %v1728, %v1804
      %v1841 = vadd.f32 %v1729, %v1805
      %v1842 = vadd.f32 %v1730, %v1806
      %v1843 = vadd.f32 %v1731, %v1807
      %v1844 = vadd.f32 %v1732, %v1808
      %v1845 = vadd.f32 %v1733, %v1809
      %v1846 = vadd.f32 %v1734, %v1810
      %v1847 = vadd.f32 %v1735, %v1811
      %v1848 = vadd.f32 %v1736, %v1812
      %v1849 = vadd.f32 %v1737, %v1813
      %v1850 = vadd.f32 %v1738, %v1814
      %v1851 = vadd.f32 %v1739, %v1815
      %v1852 = vadd.f32 %v1740, %v1816
      %v1853 = vadd.f32 %v1741, %v1817
      %v1854 = vadd.f32 %v1742, %v1818
      %v1855 = vadd.f32 %v1743, %v1819
      %v1856 = vadd.f32 %v1744, %v1820
      %v1857 = vadd.f32 %v1745, %v1821
      %v1858 = vadd.f32 %v1746, %v1822
      %v1859 = vadd.f32 %v1747, %v1823
      %v1860 = vadd.f32 %v1748, %v1824
      %v1861 = vadd.f32 %v1749, %v1825
      %v1862 = vadd.f32 %v1750, %v1826
      %v1863 = vadd.f32 %v1751, %v1827
      %v1864 = vadd.f32 %v1752, %v1828
      %v1865 = vadd.f32 %v1753, %v1829
      %v1866 = vadd.f32 %v1754, %v1830
      %v1868 = vlaneseq
      %v1869 = vshrl.u32 %v1868, 7
      %v1870 = vsub.s32 0, %v1869
      %v1871 = vrot.slane %v958, %v1870
      %v1873 = vadd.f32 %v1831, %v1871
      %v1874 = vadd.f32 %v1832, %v1871
      %v1875 = vadd.f32 %v1833, %v1871
      %v1876 = vadd.f32 %v1834, %v1871
      %v1877 = vadd.f32 %v1835, %v1871
      %v1878 = vadd.f32 %v1836, %v1871
      %v1879 = vadd.f32 %v1837, %v1871
      %v1880 = vadd.f32 %v1838, %v1871
      %v1881 = vadd.f32 %v1839, %v1871
      %v1882 = vadd.f32 %v1840, %v1871
      %v1883 = vadd.f32 %v1841, %v1871
      %v1884 = vadd.f32 %v1842, %v1871
      %v1885 = vadd.f32 %v1843, %v1871
      %v1886 = vadd.f32 %v1844, %v1871
      %v1887 = vadd.f32 %v1845, %v1871
      %v1888 = vadd.f32 %v1846, %v1871
      %v1889 = vadd.f32 %v1847, %v1871
      %v1890 = vadd.f32 %v1848, %v1871
      %v1891 = vadd.f32 %v1849, %v1871
      %v1892 = vadd.f32 %v1850, %v1871
      %v1893 = vadd.f32 %v1851, %v1871
      %v1894 = vadd.f32 %v1852, %v1871
      %v1895 = vadd.f32 %v1853, %v1871
      %v1896 = vadd.f32 %v1854, %v1871
      %v1897 = vadd.f32 %v1855, %v1871
      %v1898 = vadd.f32 %v1856, %v1871
      %v1899 = vadd.f32 %v1857, %v1871
      %v1900 = vadd.f32 %v1858, %v1871
      %v1901 = vadd.f32 %v1859, %v1871
      %v1902 = vadd.f32 %v1860, %v1871
      %v1903 = vadd.f32 %v1861, %v1871
      %v1904 = vadd.f32 %v1862, %v1871
      %v1905 = vadd.f32 %v1863, %v1871
      %v1906 = vadd.f32 %v1864, %v1871
      %v1907 = vadd.f32 %v1865, %v1871
      %v1908 = vadd.f32 %v1866, %v1871
      %vm1909 = vcmp.ge.f32.partialorder %v1873, 0.0
      %vm1910 = vcmp.ge.f32.partialorder %v1874, 0.0
      %vm1911 = vcmp.ge.f32.partialorder %v1875, 0.0
      %vm1912 = vcmp.ge.f32.partialorder %v1876, 0.0
      %vm1913 = vcmp.ge.f32.partialorder %v1877, 0.0
      %vm1914 = vcmp.ge.f32.partialorder %v1878, 0.0
      %vm1915 = vcmp.ge.f32.partialorder %v1879, 0.0
      %vm1916 = vcmp.ge.f32.partialorder %v1880, 0.0
      %vm1917 = vcmp.ge.f32.partialorder %v1881, 0.0
      %vm1918 = vcmp.ge.f32.partialorder %v1882, 0.0
      %vm1919 = vcmp.ge.f32.partialorder %v1883, 0.0
      %vm1920 = vcmp.ge.f32.partialorder %v1884, 0.0
      %vm1921 = vcmp.ge.f32.partialorder %v1885, 0.0
      %vm1922 = vcmp.ge.f32.partialorder %v1886, 0.0
      %vm1923 = vcmp.ge.f32.partialorder %v1887, 0.0
      %vm1924 = vcmp.ge.f32.partialorder %v1888, 0.0
      %vm1925 = vcmp.ge.f32.partialorder %v1889, 0.0
      %vm1926 = vcmp.ge.f32.partialorder %v1890, 0.0
      %vm1927 = vcmp.ge.f32.partialorder %v1891, 0.0
      %vm1928 = vcmp.ge.f32.partialorder %v1892, 0.0
      %vm1929 = vcmp.ge.f32.partialorder %v1893, 0.0
      %vm1930 = vcmp.ge.f32.partialorder %v1894, 0.0
      %vm1931 = vcmp.ge.f32.partialorder %v1895, 0.0
      %vm1932 = vcmp.ge.f32.partialorder %v1896, 0.0
      %vm1933 = vcmp.ge.f32.partialorder %v1897, 0.0
      %vm1934 = vcmp.ge.f32.partialorder %v1898, 0.0
      %vm1935 = vcmp.ge.f32.partialorder %v1899, 0.0
      %vm1936 = vcmp.ge.f32.partialorder %v1900, 0.0
      %vm1937 = vcmp.ge.f32.partialorder %v1901, 0.0
      %vm1938 = vcmp.ge.f32.partialorder %v1902, 0.0
      %vm1939 = vcmp.ge.f32.partialorder %v1903, 0.0
      %vm1940 = vcmp.ge.f32.partialorder %v1904, 0.0
      %vm1941 = vcmp.ge.f32.partialorder %v1905, 0.0
      %vm1942 = vcmp.ge.f32.partialorder %v1906, 0.0
      %vm1943 = vcmp.ge.f32.partialorder %v1907, 0.0
      %vm1944 = vcmp.ge.f32.partialorder %v1908, 0.0
      %v1945 = vmul.f32 %v1873, 0.1
      %v1946 = vmul.f32 %v1874, 0.1
      %v1947 = vmul.f32 %v1875, 0.1
      %v1948 = vmul.f32 %v1876, 0.1
      %v1949 = vmul.f32 %v1877, 0.1
      %v1950 = vmul.f32 %v1878, 0.1
      %v1951 = vmul.f32 %v1879, 0.1
      %v1952 = vmul.f32 %v1880, 0.1
      %v1953 = vmul.f32 %v1881, 0.1
      %v1954 = vmul.f32 %v1882, 0.1
      %v1955 = vmul.f32 %v1883, 0.1
      %v1956 = vmul.f32 %v1884, 0.1
      %v1957 = vmul.f32 %v1885, 0.1
      %v1958 = vmul.f32 %v1886, 0.1
      %v1959 = vmul.f32 %v1887, 0.1
      %v1960 = vmul.f32 %v1888, 0.1
      %v1961 = vmul.f32 %v1889, 0.1
      %v1962 = vmul.f32 %v1890, 0.1
      %v1963 = vmul.f32 %v1891, 0.1
      %v1964 = vmul.f32 %v1892, 0.1
      %v1965 = vmul.f32 %v1893, 0.1
      %v1966 = vmul.f32 %v1894, 0.1
      %v1967 = vmul.f32 %v1895, 0.1
      %v1968 = vmul.f32 %v1896, 0.1
      %v1969 = vmul.f32 %v1897, 0.1
      %v1970 = vmul.f32 %v1898, 0.1
      %v1971 = vmul.f32 %v1899, 0.1
      %v1972 = vmul.f32 %v1900, 0.1
      %v1973 = vmul.f32 %v1901, 0.1
      %v1974 = vmul.f32 %v1902, 0.1
      %v1975 = vmul.f32 %v1903, 0.1
      %v1976 = vmul.f32 %v1904, 0.1
      %v1977 = vmul.f32 %v1905, 0.1
      %v1978 = vmul.f32 %v1906, 0.1
      %v1979 = vmul.f32 %v1907, 0.1
      %v1980 = vmul.f32 %v1908, 0.1
      %v1981 = vsel %vm1909, %v1873, %v1945
      %v1982 = vsel %vm1910, %v1874, %v1946
      %v1983 = vsel %vm1911, %v1875, %v1947
      %v1984 = vsel %vm1912, %v1876, %v1948
      %v1985 = vsel %vm1913, %v1877, %v1949
      %v1986 = vsel %vm1914, %v1878, %v1950
      %v1987 = vsel %vm1915, %v1879, %v1951
      %v1988 = vsel %vm1916, %v1880, %v1952
      %v1989 = vsel %vm1917, %v1881, %v1953
      %v1990 = vsel %vm1918, %v1882, %v1954
      %v1991 = vsel %vm1919, %v1883, %v1955
      %v1992 = vsel %vm1920, %v1884, %v1956
      %v1993 = vsel %vm1921, %v1885, %v1957
      %v1994 = vsel %vm1922, %v1886, %v1958
      %v1995 = vsel %vm1923, %v1887, %v1959
      %v1996 = vsel %vm1924, %v1888, %v1960
      %v1997 = vsel %vm1925, %v1889, %v1961
      %v1998 = vsel %vm1926, %v1890, %v1962
      %v1999 = vsel %vm1927, %v1891, %v1963
      %v2000 = vsel %vm1928, %v1892, %v1964
      %v2001 = vsel %vm1929, %v1893, %v1965
      %v2002 = vsel %vm1930, %v1894, %v1966
      %v2003 = vsel %vm1931, %v1895, %v1967
      %v2004 = vsel %vm1932, %v1896, %v1968
      %v2005 = vsel %vm1933, %v1897, %v1969
      %v2006 = vsel %vm1934, %v1898, %v1970
      %v2007 = vsel %vm1935, %v1899, %v1971
      %v2008 = vsel %vm1936, %v1900, %v1972
      %v2009 = vsel %vm1937, %v1901, %v1973
      %v2010 = vsel %vm1938, %v1902, %v1974
      %v2011 = vsel %vm1939, %v1903, %v1975
      %v2012 = vsel %vm1940, %v1904, %v1976
      %v2013 = vsel %vm1941, %v1905, %v1977
      %v2014 = vsel %vm1942, %v1906, %v1978
      %v2015 = vsel %vm1943, %v1907, %v1979
      %v2016 = vsel %vm1944, %v1908, %v1980
      %v2017 = vpack.c.bf16 %v1982, %v1981
      %v2018 = vpack.c.bf16 %v1984, %v1983
      %v2019 = vpack.c.bf16 %v1986, %v1985
      %v2020 = vpack.c.bf16 %v1988, %v1987
      %v2021 = vpack.c.bf16 %v1990, %v1989
      %v2022 = vpack.c.bf16 %v1992, %v1991
      %v2023 = vpack.c.bf16 %v1994, %v1993
      %v2024 = vpack.c.bf16 %v1996, %v1995
      %v2025 = vpack.c.bf16 %v1998, %v1997
      %v2026 = vpack.c.bf16 %v2000, %v1999
      %v2027 = vpack.c.bf16 %v2002, %v2001
      %v2028 = vpack.c.bf16 %v2004, %v2003
      %v2029 = vpack.c.bf16 %v2006, %v2005
      %v2030 = vpack.c.bf16 %v2008, %v2007
      %v2031 = vpack.c.bf16 %v2010, %v2009
      %v2032 = vpack.c.bf16 %v2012, %v2011
      %v2033 = vpack.c.bf16 %v2014, %v2013
      %v2034 = vpack.c.bf16 %v2016, %v2015
      %v2036 = vlaneseq
      %v2037 = vshrl.u32 %v2036, 7
      %v2038 = vsub.s32 0, %v2037
      %v2039 = vrot.slane %v960, %v2038
      %v2042 = vsel %vm881, %v2017, 0
      %v2045 = vsel %vm881, %v2018, 0
      %v2048 = vsel %vm881, %v2019, 0
      %v2051 = vsel %vm881, %v2020, 0
      %v2054 = vsel %vm881, %v2021, 0
      %v2057 = vsel %vm881, %v2022, 0
      %v2060 = vsel %vm881, %v2023, 0
      %v2063 = vsel %vm881, %v2024, 0
      %v2066 = vsel %vm881, %v2025, 0
      %v2069 = vsel %vm881, %v2026, 0
      %v2072 = vsel %vm881, %v2027, 0
      %v2075 = vsel %vm881, %v2028, 0
      %v2078 = vsel %vm881, %v2029, 0
      %v2081 = vsel %vm881, %v2030, 0
      %v2084 = vsel %vm881, %v2031, 0
      %v2087 = vsel %vm881, %v2032, 0
      %v2090 = vsel %vm881, %v2033, 0
      %v2093 = vsel %vm881, %v2034, 0
      %vm2095 = vcmask 1043456
      %v2097 = vsel %vm2095, %v959, 0
      %2099 = vmatprep.subr.bf16.mxu0 0
      %2100 = vmatpush1.bf16.msra.mxu0 %v2097
      %2101 = vmatprep.subr.bf16.mxu0 0
      %2102 = vmatpush1.bf16.msra.mxu0 0
      %2103 = vmatprep.subr.bf16.mxu0 0
      %2104 = vmatpush1.bf16.msra.mxu0 0
      %2105 = vmatprep.subr.bf16.mxu0 0
      %2106 = vmatpush1.bf16.msra.mxu0 0
      %2107 = vmatprep.subr.bf16.mxu0 0
      %2108 = vmatpush1.bf16.msra.mxu0 0
      %2109 = vmatprep.subr.bf16.mxu0 0
      %2110 = vmatpush1.bf16.msra.mxu0 0
      %2111 = vmatprep.subr.bf16.mxu0 0
      %2112 = vmatpush1.bf16.msra.mxu0 0
      %2113 = vmatprep.subr.bf16.mxu0 0
      %2114 = vmatpush1.bf16.msra.mxu0 0
      %2115 = vmatprep.subr.bf16.mxu0 0
      %2116 = vmatpush1.bf16.msra.mxu0 0
      %2117 = vmatprep.subr.bf16.mxu0 0
      %2118 = vmatpush1.bf16.msra.mxu0 0
      %2119 = vmatprep.subr.bf16.mxu0 0
      %2120 = vmatpush1.bf16.msra.mxu0 0
      %2121 = vmatprep.subr.bf16.mxu0 0
      %2122 = vmatpush1.bf16.msra.mxu0 0
      %2123 = vmatprep.subr.bf16.mxu0 0
      %2124 = vmatpush1.bf16.msra.mxu0 0
      %2125 = vmatprep.subr.bf16.mxu0 0
      %2126 = vmatpush1.bf16.msra.mxu0 0
      %2127 = vmatprep.subr.bf16.mxu0 0
      %2128 = vmatpush1.bf16.msra.mxu0 0
      %2129 = vmatprep.subr.bf16.mxu0 0
      %2130 = vmatpush1.bf16.msra.mxu0 0
      %2131 = vmatprep.mubr.bf16.mxu0 0
      %2132 = vmatmul.mubr.bf16.gmra.mrb[0].mxu0 %v2042
      %v2133 = vpop.f32.mrb[0].mxu0
      %v2134 = vadd.f32 %v2039, %v2133
      %v2135 = vpop.f32.mrb[0].mxu0
      %v2136 = vpop.f32.mrb[0].mxu0
      %v2137 = vadd.f32 %v2039, %v2136
      %v2138 = vpop.f32.mrb[0].mxu0
      %2139 = vmatprep.mubr.bf16.mxu0 0
      %2140 = vmatmul.mubr.bf16.gmra.mrb[0].mxu0 %v2045
      %v2141 = vpop.f32.mrb[0].mxu0
      %v2142 = vadd.f32 %v2039, %v2141
      %v2143 = vpop.f32.mrb[0].mxu0
      %v2144 = vpop.f32.mrb[0].mxu0
      %v2145 = vadd.f32 %v2039, %v2144
      %v2146 = vpop.f32.mrb[0].mxu0
      %2147 = vmatprep.mubr.bf16.mxu0 0
      %2148 = vmatmul.mubr.bf16.gmra.mrb[0].mxu0 %v2048
      %v2149 = vpop.f32.mrb[0].mxu0
      %v2150 = vadd.f32 %v2039, %v2149
      %v2151 = vpop.f32.mrb[0].mxu0
      %v2152 = vpop.f32.mrb[0].mxu0
      %v2153 = vadd.f32 %v2039, %v2152
      %v2154 = vpop.f32.mrb[0].mxu0
      %2155 = vmatprep.mubr.bf16.mxu0 0
      %2156 = vmatmul.mubr.bf16.gmra.mrb[0].mxu0 %v2051
      %v2157 = vpop.f32.mrb[0].mxu0
      %v2158 = vadd.f32 %v2039, %v2157
      %v2159 = vpop.f32.mrb[0].mxu0
      %v2160 = vpop.f32.mrb[0].mxu0
      %v2161 = vadd.f32 %v2039, %v2160
      %v2162 = vpop.f32.mrb[0].mxu0
      %2163 = vmatprep.mubr.bf16.mxu0 0
      %2164 = vmatmul.mubr.bf16.gmra.mrb[0].mxu0 %v2054
      %v2165 = vpop.f32.mrb[0].mxu0
      %v2166 = vadd.f32 %v2039, %v2165
      %v2167 = vpop.f32.mrb[0].mxu0
      %v2168 = vpop.f32.mrb[0].mxu0
      %v2169 = vadd.f32 %v2039, %v2168
      %v2170 = vpop.f32.mrb[0].mxu0
      %2171 = vmatprep.mubr.bf16.mxu0 0
      %2172 = vmatmul.mubr.bf16.gmra.mrb[0].mxu0 %v2057
      %v2173 = vpop.f32.mrb[0].mxu0
      %v2174 = vadd.f32 %v2039, %v2173
      %v2175 = vpop.f32.mrb[0].mxu0
      %v2176 = vpop.f32.mrb[0].mxu0
      %v2177 = vadd.f32 %v2039, %v2176
      %v2178 = vpop.f32.mrb[0].mxu0
      %2179 = vmatprep.mubr.bf16.mxu0 0
      %2180 = vmatmul.mubr.bf16.gmra.mrb[0].mxu0 %v2060
      %v2181 = vpop.f32.mrb[0].mxu0
      %v2182 = vadd.f32 %v2039, %v2181
      %v2183 = vpop.f32.mrb[0].mxu0
      %v2184 = vpop.f32.mrb[0].mxu0
      %v2185 = vadd.f32 %v2039, %v2184
      %v2186 = vpop.f32.mrb[0].mxu0
      %2187 = vmatprep.mubr.bf16.mxu0 0
      %2188 = vmatmul.mubr.bf16.gmra.mrb[0].mxu0 %v2063
      %v2189 = vpop.f32.mrb[0].mxu0
      %v2190 = vadd.f32 %v2039, %v2189
      %v2191 = vpop.f32.mrb[0].mxu0
      %v2192 = vpop.f32.mrb[0].mxu0
      %v2193 = vadd.f32 %v2039, %v2192
      %v2194 = vpop.f32.mrb[0].mxu0
      %2195 = vmatprep.mubr.bf16.mxu0 0
      %2196 = vmatmul.mubr.bf16.gmra.mrb[0].mxu0 %v2066
      %v2197 = vpop.f32.mrb[0].mxu0
      %v2198 = vadd.f32 %v2039, %v2197
      %v2199 = vpop.f32.mrb[0].mxu0
      %v2200 = vpop.f32.mrb[0].mxu0
      %v2201 = vadd.f32 %v2039, %v2200
      %v2202 = vpop.f32.mrb[0].mxu0
      %2203 = vmatprep.mubr.bf16.mxu0 0
      %2204 = vmatmul.mubr.bf16.gmra.mrb[0].mxu0 %v2069
      %v2205 = vpop.f32.mrb[0].mxu0
      %v2206 = vadd.f32 %v2039, %v2205
      %v2207 = vpop.f32.mrb[0].mxu0
      %v2208 = vpop.f32.mrb[0].mxu0
      %v2209 = vadd.f32 %v2039, %v2208
      %v2210 = vpop.f32.mrb[0].mxu0
      %2211 = vmatprep.mubr.bf16.mxu0 0
      %2212 = vmatmul.mubr.bf16.gmra.mrb[0].mxu0 %v2072
      %v2213 = vpop.f32.mrb[0].mxu0
      %v2214 = vadd.f32 %v2039, %v2213
      %v2215 = vpop.f32.mrb[0].mxu0
      %v2216 = vpop.f32.mrb[0].mxu0
      %v2217 = vadd.f32 %v2039, %v2216
      %v2218 = vpop.f32.mrb[0].mxu0
      %2219 = vmatprep.mubr.bf16.mxu0 0
      %2220 = vmatmul.mubr.bf16.gmra.mrb[0].mxu0 %v2075
      %v2221 = vpop.f32.mrb[0].mxu0
      %v2222 = vadd.f32 %v2039, %v2221
      %v2223 = vpop.f32.mrb[0].mxu0
      %v2224 = vpop.f32.mrb[0].mxu0
      %v2225 = vadd.f32 %v2039, %v2224
      %v2226 = vpop.f32.mrb[0].mxu0
      %2227 = vmatprep.mubr.bf16.mxu0 0
      %2228 = vmatmul.mubr.bf16.gmra.mrb[0].mxu0 %v2078
      %v2229 = vpop.f32.mrb[0].mxu0
      %v2230 = vadd.f32 %v2039, %v2229
      %v2231 = vpop.f32.mrb[0].mxu0
      %v2232 = vpop.f32.mrb[0].mxu0
      %v2233 = vadd.f32 %v2039, %v2232
      %v2234 = vpop.f32.mrb[0].mxu0
      %2235 = vmatprep.mubr.bf16.mxu0 0
      %2236 = vmatmul.mubr.bf16.gmra.mrb[0].mxu0 %v2081
      %v2237 = vpop.f32.mrb[0].mxu0
      %v2238 = vadd.f32 %v2039, %v2237
      %v2239 = vpop.f32.mrb[0].mxu0
      %v2240 = vpop.f32.mrb[0].mxu0
      %v2241 = vadd.f32 %v2039, %v2240
      %v2242 = vpop.f32.mrb[0].mxu0
      %2243 = vmatprep.mubr.bf16.mxu0 0
      %2244 = vmatmul.mubr.bf16.gmra.mrb[0].mxu0 %v2084
      %v2245 = vpop.f32.mrb[0].mxu0
      %v2246 = vadd.f32 %v2039, %v2245
      %v2247 = vpop.f32.mrb[0].mxu0
      %v2248 = vpop.f32.mrb[0].mxu0
      %v2249 = vadd.f32 %v2039, %v2248
      %v2250 = vpop.f32.mrb[0].mxu0
      %2251 = vmatprep.mubr.bf16.mxu0 0
      %2252 = vmatmul.mubr.bf16.gmra.mrb[0].mxu0 %v2087
      %v2253 = vpop.f32.mrb[0].mxu0
      %v2254 = vadd.f32 %v2039, %v2253
      %v2255 = vpop.f32.mrb[0].mxu0
      %v2256 = vpop.f32.mrb[0].mxu0
      %v2257 = vadd.f32 %v2039, %v2256
      %v2258 = vpop.f32.mrb[0].mxu0
      %2259 = vmatprep.mubr.bf16.mxu0 0
      %2260 = vmatmul.mubr.bf16.gmra.mrb[0].mxu0 %v2090
      %v2261 = vpop.f32.mrb[0].mxu0
      %v2262 = vadd.f32 %v2039, %v2261
      %v2263 = vpop.f32.mrb[0].mxu0
      %v2264 = vpop.f32.mrb[0].mxu0
      %v2265 = vadd.f32 %v2039, %v2264
      %v2266 = vpop.f32.mrb[0].mxu0
      %2267 = vmatprep.mubr.bf16.mxu0 0
      %2268 = vmatmul.mubr.bf16.gmra.mrb[0].mxu0 %v2093
      %v2269 = vpop.f32.mrb[0].mxu0
      %v2270 = vadd.f32 %v2039, %v2269
      %v2271 = vpop.f32.mrb[0].mxu0
      %v2272 = vpop.f32.mrb[0].mxu0
      %v2273 = vadd.f32 %v2039, %v2272
      %v2274 = vpop.f32.mrb[0].mxu0
      %2275 = vdwg.mxu0
      %vm2276 = vcmp.ge.f32.partialorder %v2134, 0.0
      %vm2277 = vcmp.ge.f32.partialorder %v2137, 0.0
      %vm2278 = vcmp.ge.f32.partialorder %v2142, 0.0
      %vm2279 = vcmp.ge.f32.partialorder %v2145, 0.0
      %vm2280 = vcmp.ge.f32.partialorder %v2150, 0.0
      %vm2281 = vcmp.ge.f32.partialorder %v2153, 0.0
      %vm2282 = vcmp.ge.f32.partialorder %v2158, 0.0
      %vm2283 = vcmp.ge.f32.partialorder %v2161, 0.0
      %vm2284 = vcmp.ge.f32.partialorder %v2166, 0.0
      %vm2285 = vcmp.ge.f32.partialorder %v2169, 0.0
      %vm2286 = vcmp.ge.f32.partialorder %v2174, 0.0
      %vm2287 = vcmp.ge.f32.partialorder %v2177, 0.0
      %vm2288 = vcmp.ge.f32.partialorder %v2182, 0.0
      %vm2289 = vcmp.ge.f32.partialorder %v2185, 0.0
      %vm2290 = vcmp.ge.f32.partialorder %v2190, 0.0
      %vm2291 = vcmp.ge.f32.partialorder %v2193, 0.0
      %vm2292 = vcmp.ge.f32.partialorder %v2198, 0.0
      %vm2293 = vcmp.ge.f32.partialorder %v2201, 0.0
      %vm2294 = vcmp.ge.f32.partialorder %v2206, 0.0
      %vm2295 = vcmp.ge.f32.partialorder %v2209, 0.0
      %vm2296 = vcmp.ge.f32.partialorder %v2214, 0.0
      %vm2297 = vcmp.ge.f32.partialorder %v2217, 0.0
      %vm2298 = vcmp.ge.f32.partialorder %v2222, 0.0
      %vm2299 = vcmp.ge.f32.partialorder %v2225, 0.0
      %vm2300 = vcmp.ge.f32.partialorder %v2230, 0.0
      %vm2301 = vcmp.ge.f32.partialorder %v2233, 0.0
      %vm2302 = vcmp.ge.f32.partialorder %v2238, 0.0
      %vm2303 = vcmp.ge.f32.partialorder %v2241, 0.0
      %vm2304 = vcmp.ge.f32.partialorder %v2246, 0.0
      %vm2305 = vcmp.ge.f32.partialorder %v2249, 0.0
      %vm2306 = vcmp.ge.f32.partialorder %v2254, 0.0
      %vm2307 = vcmp.ge.f32.partialorder %v2257, 0.0
      %vm2308 = vcmp.ge.f32.partialorder %v2262, 0.0
      %vm2309 = vcmp.ge.f32.partialorder %v2265, 0.0
      %vm2310 = vcmp.ge.f32.partialorder %v2270, 0.0
      %vm2311 = vcmp.ge.f32.partialorder %v2273, 0.0
      %v2312 = vmul.f32 %v2134, 0.1
      %v2313 = vmul.f32 %v2137, 0.1
      %v2314 = vmul.f32 %v2142, 0.1
      %v2315 = vmul.f32 %v2145, 0.1
      %v2316 = vmul.f32 %v2150, 0.1
      %v2317 = vmul.f32 %v2153, 0.1
      %v2318 = vmul.f32 %v2158, 0.1
      %v2319 = vmul.f32 %v2161, 0.1
      %v2320 = vmul.f32 %v2166, 0.1
      %v2321 = vmul.f32 %v2169, 0.1
      %v2322 = vmul.f32 %v2174, 0.1
      %v2323 = vmul.f32 %v2177, 0.1
      %v2324 = vmul.f32 %v2182, 0.1
      %v2325 = vmul.f32 %v2185, 0.1
      %v2326 = vmul.f32 %v2190, 0.1
      %v2327 = vmul.f32 %v2193, 0.1
      %v2328 = vmul.f32 %v2198, 0.1
      %v2329 = vmul.f32 %v2201, 0.1
      %v2330 = vmul.f32 %v2206, 0.1
      %v2331 = vmul.f32 %v2209, 0.1
      %v2332 = vmul.f32 %v2214, 0.1
      %v2333 = vmul.f32 %v2217, 0.1
      %v2334 = vmul.f32 %v2222, 0.1
      %v2335 = vmul.f32 %v2225, 0.1
      %v2336 = vmul.f32 %v2230, 0.1
      %v2337 = vmul.f32 %v2233, 0.1
      %v2338 = vmul.f32 %v2238, 0.1
      %v2339 = vmul.f32 %v2241, 0.1
      %v2340 = vmul.f32 %v2246, 0.1
      %v2341 = vmul.f32 %v2249, 0.1
      %v2342 = vmul.f32 %v2254, 0.1
      %v2343 = vmul.f32 %v2257, 0.1
      %v2344 = vmul.f32 %v2262, 0.1
      %v2345 = vmul.f32 %v2265, 0.1
      %v2346 = vmul.f32 %v2270, 0.1
      %v2347 = vmul.f32 %v2273, 0.1
      %v2348 = vsel %vm2276, %v2134, %v2312
      %v2349 = vsel %vm2277, %v2137, %v2313
      %v2350 = vsel %vm2278, %v2142, %v2314
      %v2351 = vsel %vm2279, %v2145, %v2315
      %v2352 = vsel %vm2280, %v2150, %v2316
      %v2353 = vsel %vm2281, %v2153, %v2317
      %v2354 = vsel %vm2282, %v2158, %v2318
      %v2355 = vsel %vm2283, %v2161, %v2319
      %v2356 = vsel %vm2284, %v2166, %v2320
      %v2357 = vsel %vm2285, %v2169, %v2321
      %v2358 = vsel %vm2286, %v2174, %v2322
      %v2359 = vsel %vm2287, %v2177, %v2323
      %v2360 = vsel %vm2288, %v2182, %v2324
      %v2361 = vsel %vm2289, %v2185, %v2325
      %v2362 = vsel %vm2290, %v2190, %v2326
      %v2363 = vsel %vm2291, %v2193, %v2327
      %v2364 = vsel %vm2292, %v2198, %v2328
      %v2365 = vsel %vm2293, %v2201, %v2329
      %v2366 = vsel %vm2294, %v2206, %v2330
      %v2367 = vsel %vm2295, %v2209, %v2331
      %v2368 = vsel %vm2296, %v2214, %v2332
      %v2369 = vsel %vm2297, %v2217, %v2333
      %v2370 = vsel %vm2298, %v2222, %v2334
      %v2371 = vsel %vm2299, %v2225, %v2335
      %v2372 = vsel %vm2300, %v2230, %v2336
      %v2373 = vsel %vm2301, %v2233, %v2337
      %v2374 = vsel %vm2302, %v2238, %v2338
      %v2375 = vsel %vm2303, %v2241, %v2339
      %v2376 = vsel %vm2304, %v2246, %v2340
      %v2377 = vsel %vm2305, %v2249, %v2341
      %v2378 = vsel %vm2306, %v2254, %v2342
      %v2379 = vsel %vm2307, %v2257, %v2343
      %v2380 = vsel %vm2308, %v2262, %v2344
      %v2381 = vsel %vm2309, %v2265, %v2345
      %v2382 = vsel %vm2310, %v2270, %v2346
      %v2383 = vsel %vm2311, %v2273, %v2347
      %vm2384 = vcmask 130048
      %2385 = vst.msk [vmem:[#allocation3] sm:$0xff] %vm2384, 0.0
      %2386 = vst.msk [vmem:[#allocation3 + $0x8] sm:$0xff] %vm2384, 0.0
      %2387 = vst.msk [vmem:[#allocation3 + $0x10] sm:$0xff] %vm2384, 0.0
      %2388 = vst.msk [vmem:[#allocation3 + $0x18] sm:$0xff] %vm2384, 0.0
      %2389 = vst.msk [vmem:[#allocation3 + $0x20] sm:$0xff] %vm2384, 0.0
      %2390 = vst.msk [vmem:[#allocation3 + $0x28] sm:$0xff] %vm2384, 0.0
      %2391 = vst.msk [vmem:[#allocation3 + $0x30] sm:$0xff] %vm2384, 0.0
      %2392 = vst.msk [vmem:[#allocation3 + $0x38] sm:$0xff] %vm2384, 0.0
      %2393 = vst.msk [vmem:[#allocation3 + $0x40] sm:$0xff] %vm2384, 0.0
      %2394 = vst.msk [vmem:[#allocation3 + $0x48] sm:$0xff] %vm2384, 0.0
      %2395 = vst.msk [vmem:[#allocation3 + $0x50] sm:$0xff] %vm2384, 0.0
      %2396 = vst.msk [vmem:[#allocation3 + $0x58] sm:$0xff] %vm2384, 0.0
      %2397 = vst.msk [vmem:[#allocation3 + $0x60] sm:$0xff] %vm2384, 0.0
      %2398 = vst.msk [vmem:[#allocation3 + $0x68] sm:$0xff] %vm2384, 0.0
      %2399 = vst.msk [vmem:[#allocation3 + $0x70] sm:$0xff] %vm2384, 0.0
      %2400 = vst.msk [vmem:[#allocation3 + $0x78] sm:$0xff] %vm2384, 0.0
      %2401 = vst.msk [vmem:[#allocation3 + $0x80] sm:$0xff] %vm2384, 0.0
      %2402 = vst.msk [vmem:[#allocation3 + $0x88] sm:$0xff] %vm2384, 0.0
      %2403 = vst.msk [vmem:[#allocation3 + $0x90] sm:$0xff] %vm2384, 0.0
      %2404 = vst.msk [vmem:[#allocation3 + $0x98] sm:$0xff] %vm2384, 0.0
      %2405 = vst.msk [vmem:[#allocation3 + $0xa0] sm:$0xff] %vm2384, 0.0
      %2406 = vst.msk [vmem:[#allocation3 + $0xa8] sm:$0xff] %vm2384, 0.0
      %2407 = vst.msk [vmem:[#allocation3 + $0xb0] sm:$0xff] %vm2384, 0.0
      %2408 = vst.msk [vmem:[#allocation3 + $0xb8] sm:$0xff] %vm2384, 0.0
      %2409 = vst.msk [vmem:[#allocation3 + $0xc0] sm:$0xff] %vm2384, 0.0
      %2410 = vst.msk [vmem:[#allocation3 + $0xc8] sm:$0xff] %vm2384, 0.0
      %2411 = vst.msk [vmem:[#allocation3 + $0xd0] sm:$0xff] %vm2384, 0.0
      %2412 = vst.msk [vmem:[#allocation3 + $0xd8] sm:$0xff] %vm2384, 0.0
      %2413 = vst.msk [vmem:[#allocation3 + $0xe0] sm:$0xff] %vm2384, 0.0
      %2414 = vst.msk [vmem:[#allocation3 + $0xe8] sm:$0xff] %vm2384, 0.0
      %2415 = vst.msk [vmem:[#allocation3 + $0xf0] sm:$0xff] %vm2384, 0.0
      %2416 = vst.msk [vmem:[#allocation3 + $0xf8] sm:$0xff] %vm2384, 0.0
      %2417 = vst.msk [vmem:[#allocation3 + $0x100] sm:$0xff] %vm2384, 0.0
      %2418 = vst.msk [vmem:[#allocation3 + $0x108] sm:$0xff] %vm2384, 0.0
      %2419 = vst.msk [vmem:[#allocation3 + $0x110] sm:$0xff] %vm2384, 0.0
      %2420 = vst.msk [vmem:[#allocation3 + $0x118] sm:$0xff] %vm2384, 0.0
      %2421 = vst.msk [vmem:[#allocation3 + $0x120] sm:$0xff] %vm2384, 0.0
      %2422 = vst.msk [vmem:[#allocation3 + $0x128] sm:$0xff] %vm2384, 0.0
      %2423 = vst.msk [vmem:[#allocation3 + $0x130] sm:$0xff] %vm2384, 0.0
      %2424 = vst.msk [vmem:[#allocation3 + $0x138] sm:$0xff] %vm2384, 0.0
      %vm2425 = vcmask 125952
      %2426 = vst.msk [vmem:[#allocation3 + $0x140] sm:$0xf] %vm2425, 0.0
      %2427 = vst.msk [vmem:[#allocation3 + $0x13] sm:$0xff] %vm2384, %v2348
      %2428 = vst.msk [vmem:[#allocation3 + $0x1b] sm:$0xff] %vm2384, %v2349
      %vm2429 = vcmask 130050
      %2430 = vst.msk [vmem:[#allocation3 + $0x23] sm:$0xfc] %vm2429, %v2350
      %2431 = vst.msk [vmem:[#allocation3 + $0x2b] sm:$0xff] %vm2384, %v2351
      %vm2432 = vcmask 123904
      %2433 = vst.msk [vmem:[#allocation3 + $0x33] sm:$0x3] %vm2432, %v2352
      %vm2434 = vcmask 130052
      %2435 = vst.msk [vmem:[#allocation3 + $0x33] sm:$0xf0] %vm2434, %v2352
      %2436 = vst.msk [vmem:[#allocation3 + $0x3b] sm:$0xff] %vm2384, %v2353
      %2437 = vst.msk [vmem:[#allocation3 + $0x43] sm:$0xf] %vm2425, %v2354
      %vm2438 = vcmask 130054
      %2439 = vst.msk [vmem:[#allocation3 + $0x43] sm:$0xc0] %vm2438, %v2354
      %2440 = vst.msk [vmem:[#allocation3 + $0x4b] sm:$0xff] %vm2384, %v2355
      %vm2441 = vcmask 128000
      %2442 = vst.msk [vmem:[#allocation3 + $0x53] sm:$0x3f] %vm2441, %v2356
      %2443 = vst.msk [vmem:[#allocation3 + $0x5b] sm:$0xff] %vm2384, %v2357
      %2444 = vst.msk [vmem:[#allocation3 + $0x63] sm:$0xff] %vm2384, %v2358
      %2445 = vst.msk [vmem:[#allocation3 + $0x6b] sm:$0xfc] %vm2429, %v2359
      %2446 = vst.msk [vmem:[#allocation3 + $0x73] sm:$0xff] %vm2384, %v2360
      %2447 = vst.msk [vmem:[#allocation3 + $0x7b] sm:$0x3] %vm2432, %v2361
      %2448 = vst.msk [vmem:[#allocation3 + $0x7b] sm:$0xf0] %vm2434, %v2361
      %2449 = vst.msk [vmem:[#allocation3 + $0x83] sm:$0xff] %vm2384, %v2362
      %2450 = vst.msk [vmem:[#allocation3 + $0x8b] sm:$0xf] %vm2425, %v2363
      %2451 = vst.msk [vmem:[#allocation3 + $0x8b] sm:$0xc0] %vm2438, %v2363
      %2452 = vst.msk [vmem:[#allocation3 + $0x93] sm:$0xff] %vm2384, %v2364
      %2453 = vst.msk [vmem:[#allocation3 + $0x9b] sm:$0x3f] %vm2441, %v2365
      %2454 = vst.msk [vmem:[#allocation3 + $0xa3] sm:$0xff] %vm2384, %v2366
      %2455 = vst.msk [vmem:[#allocation3 + $0xab] sm:$0xff] %vm2384, %v2367
      %2456 = vst.msk [vmem:[#allocation3 + $0xb3] sm:$0xfc] %vm2429, %v2368
      %2457 = vst.msk [vmem:[#allocation3 + $0xbb] sm:$0xff] %vm2384, %v2369
      %2458 = vst.msk [vmem:[#allocation3 + $0xc3] sm:$0x3] %vm2432, %v2370
      %2459 = vst.msk [vmem:[#allocation3 + $0xc3] sm:$0xf0] %vm2434, %v2370
      %2460 = vst.msk [vmem:[#allocation3 + $0xcb] sm:$0xff] %vm2384, %v2371
      %2461 = vst.msk [vmem:[#allocation3 + $0xd3] sm:$0xf] %vm2425, %v2372
      %2462 = vst.msk [vmem:[#allocation3 + $0xd3] sm:$0xc0] %vm2438, %v2372
      %2463 = vst.msk [vmem:[#allocation3 + $0xdb] sm:$0xff] %vm2384, %v2373
      %2464 = vst.msk [vmem:[#allocation3 + $0xe3] sm:$0x3f] %vm2441, %v2374
      %2465 = vst.msk [vmem:[#allocation3 + $0xeb] sm:$0xff] %vm2384, %v2375
      %2466 = vst.msk [vmem:[#allocation3 + $0xf3] sm:$0xff] %vm2384, %v2376
      %2467 = vst.msk [vmem:[#allocation3 + $0xfb] sm:$0xfc] %vm2429, %v2377
      %2468 = vst.msk [vmem:[#allocation3 + $0x103] sm:$0xff] %vm2384, %v2378
      %2469 = vst.msk [vmem:[#allocation3 + $0x10b] sm:$0x3] %vm2432, %v2379
      %2470 = vst.msk [vmem:[#allocation3 + $0x10b] sm:$0xf0] %vm2434, %v2379
      %2471 = vst.msk [vmem:[#allocation3 + $0x113] sm:$0xff] %vm2384, %v2380
      %2472 = vst.msk [vmem:[#allocation3 + $0x11b] sm:$0xf] %vm2425, %v2381
      %2473 = vst.msk [vmem:[#allocation3 + $0x11b] sm:$0xc0] %vm2438, %v2381
      %2474 = vst.msk [vmem:[#allocation3 + $0x123] sm:$0xff] %vm2384, %v2382
      %2475 = vst.msk [vmem:[#allocation3 + $0x12b] sm:$0x3f] %vm2441, %v2383
      %s2476 = scalar_lea.vmem %s3, 32
      %v2477 = vld [vmem:[%s2476] sm:$0xff]
      %v2478 = vld [vmem:[%s2476 + $0x10] sm:$0x1]
      %s2479 = scalar_lea.vmem %s4, 2
      %v2480 = vld [vmem:[%s2479] sm:$0x1]
      %s2481 = scalar_lea.vmem %s5, 256
      %v2482 = vld [vmem:[%s2481] sm:$0xf]
      %v2483 = vld [vmem:[%s2481 + $0x8] sm:$0xf]
      %s2484 = scalar_lea.vmem %s6, 2
      %v2485 = vld [vmem:[%s2484] sm:$0x1]
      %v2486 = vld [vmem:[#allocation3] sm:$0xff]
      %v2487 = vld [vmem:[#allocation3 + $0x8] sm:$0xff]
      %v2488 = vld [vmem:[#allocation3 + $0x10] sm:$0xff]
      %v2489 = vld [vmem:[#allocation3 + $0x18] sm:$0xff]
      %v2490 = vld [vmem:[#allocation3 + $0x20] sm:$0xff]
      %v2491 = vld [vmem:[#allocation3 + $0x28] sm:$0xff]
      %v2492 = vld [vmem:[#allocation3 + $0x30] sm:$0xff]
      %v2493 = vld [vmem:[#allocation3 + $0x38] sm:$0xff]
      %v2494 = vld [vmem:[#allocation3 + $0x40] sm:$0xff]
      %v2495 = vld [vmem:[#allocation3 + $0x48] sm:$0xff]
      %v2496 = vld [vmem:[#allocation3 + $0x50] sm:$0xff]
      %v2497 = vld [vmem:[#allocation3 + $0x58] sm:$0xff]
      %v2498 = vld [vmem:[#allocation3 + $0x60] sm:$0xff]
      %v2499 = vld [vmem:[#allocation3 + $0x68] sm:$0xff]
      %v2500 = vld [vmem:[#allocation3 + $0x70] sm:$0xff]
      %v2501 = vld [vmem:[#allocation3 + $0x78] sm:$0xff]
      %v2502 = vld [vmem:[#allocation3 + $0x80] sm:$0xff]
      %v2503 = vld [vmem:[#allocation3 + $0x88] sm:$0xff]
      %v2504 = vld [vmem:[#allocation3 + $0x90] sm:$0xff]
      %v2505 = vld [vmem:[#allocation3 + $0x98] sm:$0xff]
      %v2506 = vld [vmem:[#allocation3 + $0xa0] sm:$0xff]
      %v2507 = vld [vmem:[#allocation3 + $0xa8] sm:$0xff]
      %v2508 = vld [vmem:[#allocation3 + $0xb0] sm:$0xff]
      %v2509 = vld [vmem:[#allocation3 + $0xb8] sm:$0xff]
      %v2510 = vld [vmem:[#allocation3 + $0xc0] sm:$0xff]
      %v2511 = vld [vmem:[#allocation3 + $0xc8] sm:$0xff]
      %v2512 = vld [vmem:[#allocation3 + $0xd0] sm:$0xff]
      %v2513 = vld [vmem:[#allocation3 + $0xd8] sm:$0xff]
      %v2514 = vld [vmem:[#allocation3 + $0xe0] sm:$0xff]
      %v2515 = vld [vmem:[#allocation3 + $0xe8] sm:$0xff]
      %v2516 = vld [vmem:[#allocation3 + $0xf0] sm:$0xff]
      %v2517 = vld [vmem:[#allocation3 + $0xf8] sm:$0xff]
      %v2518 = vld [vmem:[#allocation3 + $0x100] sm:$0xff]
      %v2519 = vld [vmem:[#allocation3 + $0x108] sm:$0xff]
      %v2520 = vld [vmem:[#allocation3 + $0x110] sm:$0xff]
      %v2521 = vld [vmem:[#allocation3 + $0x118] sm:$0x3f]
      %v2522 = vlaneseq
      %v2523 = vshrl.u32 %v2522, 7
      %v2524 = vsub.s32 0, %v2523
      %v2525 = vrot.slane %v2477, %v2524
      %v2526 = vmul.f32 %v2486, %v2525
      %v2527 = vmul.f32 %v2487, %v2525
      %v2528 = vmul.f32 %v2488, %v2525
      %v2529 = vmul.f32 %v2489, %v2525
      %v2530 = vmul.f32 %v2490, %v2525
      %v2531 = vmul.f32 %v2491, %v2525
      %v2532 = vmul.f32 %v2492, %v2525
      %v2533 = vmul.f32 %v2493, %v2525
      %v2534 = vmul.f32 %v2494, %v2525
      %v2535 = vmul.f32 %v2495, %v2525
      %v2536 = vmul.f32 %v2496, %v2525
      %v2537 = vmul.f32 %v2497, %v2525
      %v2538 = vmul.f32 %v2498, %v2525
      %v2539 = vmul.f32 %v2499, %v2525
      %v2540 = vmul.f32 %v2500, %v2525
      %v2541 = vmul.f32 %v2501, %v2525
      %v2542 = vmul.f32 %v2502, %v2525
      %v2543 = vmul.f32 %v2503, %v2525
      %v2544 = vmul.f32 %v2504, %v2525
      %v2545 = vmul.f32 %v2505, %v2525
      %v2546 = vmul.f32 %v2506, %v2525
      %v2547 = vmul.f32 %v2507, %v2525
      %v2548 = vmul.f32 %v2508, %v2525
      %v2549 = vmul.f32 %v2509, %v2525
      %v2550 = vmul.f32 %v2510, %v2525
      %v2551 = vmul.f32 %v2511, %v2525
      %v2552 = vmul.f32 %v2512, %v2525
      %v2553 = vmul.f32 %v2513, %v2525
      %v2554 = vmul.f32 %v2514, %v2525
      %v2555 = vmul.f32 %v2515, %v2525
      %v2556 = vmul.f32 %v2516, %v2525
      %v2557 = vmul.f32 %v2517, %v2525
      %v2558 = vmul.f32 %v2518, %v2525
      %v2559 = vmul.f32 %v2519, %v2525
      %v2560 = vmul.f32 %v2520, %v2525
      %v2561 = vmul.f32 %v2521, %v2525
      %v2562 = vld [vmem:[#allocation3 + $0x1] sm:$0xff]
      %v2563 = vld [vmem:[#allocation3 + $0x9] sm:$0xff]
      %v2564 = vld [vmem:[#allocation3 + $0x11] sm:$0xff]
      %v2565 = vld [vmem:[#allocation3 + $0x19] sm:$0xff]
      %v2566 = vld [vmem:[#allocation3 + $0x21] sm:$0xff]
      %v2567 = vld [vmem:[#allocation3 + $0x29] sm:$0xff]
      %v2568 = vld [vmem:[#allocation3 + $0x31] sm:$0xff]
      %v2569 = vld [vmem:[#allocation3 + $0x39] sm:$0xff]
      %v2570 = vld [vmem:[#allocation3 + $0x41] sm:$0xff]
      %v2571 = vld [vmem:[#allocation3 + $0x49] sm:$0xff]
      %v2572 = vld [vmem:[#allocation3 + $0x51] sm:$0xff]
      %v2573 = vld [vmem:[#allocation3 + $0x59] sm:$0xff]
      %v2574 = vld [vmem:[#allocation3 + $0x61] sm:$0xff]
      %v2575 = vld [vmem:[#allocation3 + $0x69] sm:$0xff]
      %v2576 = vld [vmem:[#allocation3 + $0x71] sm:$0xff]
      %v2577 = vld [vmem:[#allocation3 + $0x79] sm:$0xff]
      %v2578 = vld [vmem:[#allocation3 + $0x81] sm:$0xff]
      %v2579 = vld [vmem:[#allocation3 + $0x89] sm:$0xff]
      %v2580 = vld [vmem:[#allocation3 + $0x91] sm:$0xff]
      %v2581 = vld [vmem:[#allocation3 + $0x99] sm:$0xff]
      %v2582 = vld [vmem:[#allocation3 + $0xa1] sm:$0xff]
      %v2583 = vld [vmem:[#allocation3 + $0xa9] sm:$0xff]
      %v2584 = vld [vmem:[#allocation3 + $0xb1] sm:$0xff]
      %v2585 = vld [vmem:[#allocation3 + $0xb9] sm:$0xff]
      %v2586 = vld [vmem:[#allocation3 + $0xc1] sm:$0xff]
      %v2587 = vld [vmem:[#allocation3 + $0xc9] sm:$0xff]
      %v2588 = vld [vmem:[#allocation3 + $0xd1] sm:$0xff]
      %v2589 = vld [vmem:[#allocation3 + $0xd9] sm:$0xff]
      %v2590 = vld [vmem:[#allocation3 + $0xe1] sm:$0xff]
      %v2591 = vld [vmem:[#allocation3 + $0xe9] sm:$0xff]
      %v2592 = vld [vmem:[#allocation3 + $0xf1] sm:$0xff]
      %v2593 = vld [vmem:[#allocation3 + $0xf9] sm:$0xff]
      %v2594 = vld [vmem:[#allocation3 + $0x101] sm:$0xff]
      %v2595 = vld [vmem:[#allocation3 + $0x109] sm:$0xff]
      %v2596 = vld [vmem:[#allocation3 + $0x111] sm:$0xff]
      %v2597 = vld [vmem:[#allocation3 + $0x119] sm:$0x3f]
      %v2598 = vlaneseq
      %v2599 = vshrl.u32 %v2598, 7
      %v2600 = vsub.s32 1, %v2599
      %v2601 = vrot.slane %v2477, %v2600
      %v2602 = vmul.f32 %v2562, %v2601
      %v2603 = vmul.f32 %v2563, %v2601
      %v2604 = vmul.f32 %v2564, %v2601
      %v2605 = vmul.f32 %v2565, %v2601
      %v2606 = vmul.f32 %v2566, %v2601
      %v2607 = vmul.f32 %v2567, %v2601
      %v2608 = vmul.f32 %v2568, %v2601
      %v2609 = vmul.f32 %v2569, %v2601
      %v2610 = vmul.f32 %v2570, %v2601
      %v2611 = vmul.f32 %v2571, %v2601
      %v2612 = vmul.f32 %v2572, %v2601
      %v2613 = vmul.f32 %v2573, %v2601
      %v2614 = vmul.f32 %v2574, %v2601
      %v2615 = vmul.f32 %v2575, %v2601
      %v2616 = vmul.f32 %v2576, %v2601
      %v2617 = vmul.f32 %v2577, %v2601
      %v2618 = vmul.f32 %v2578, %v2601
      %v2619 = vmul.f32 %v2579, %v2601
      %v2620 = vmul.f32 %v2580, %v2601
      %v2621 = vmul.f32 %v2581, %v2601
      %v2622 = vmul.f32 %v2582, %v2601
      %v2623 = vmul.f32 %v2583, %v2601
      %v2624 = vmul.f32 %v2584, %v2601
      %v2625 = vmul.f32 %v2585, %v2601
      %v2626 = vmul.f32 %v2586, %v2601
      %v2627 = vmul.f32 %v2587, %v2601
      %v2628 = vmul.f32 %v2588, %v2601
      %v2629 = vmul.f32 %v2589, %v2601
      %v2630 = vmul.f32 %v2590, %v2601
      %v2631 = vmul.f32 %v2591, %v2601
      %v2632 = vmul.f32 %v2592, %v2601
      %v2633 = vmul.f32 %v2593, %v2601
      %v2634 = vmul.f32 %v2594, %v2601
      %v2635 = vmul.f32 %v2595, %v2601
      %v2636 = vmul.f32 %v2596, %v2601
      %v2637 = vmul.f32 %v2597, %v2601
      %v2638 = vadd.f32 %v2526, %v2602
      %v2639 = vadd.f32 %v2527, %v2603
      %v2640 = vadd.f32 %v2528, %v2604
      %v2641 = vadd.f32 %v2529, %v2605
      %v2642 = vadd.f32 %v2530, %v2606
      %v2643 = vadd.f32 %v2531, %v2607
      %v2644 = vadd.f32 %v2532, %v2608
      %v2645 = vadd.f32 %v2533, %v2609
      %v2646 = vadd.f32 %v2534, %v2610
      %v2647 = vadd.f32 %v2535, %v2611
      %v2648 = vadd.f32 %v2536, %v2612
      %v2649 = vadd.f32 %v2537, %v2613
      %v2650 = vadd.f32 %v2538, %v2614
      %v2651 = vadd.f32 %v2539, %v2615
      %v2652 = vadd.f32 %v2540, %v2616
      %v2653 = vadd.f32 %v2541, %v2617
      %v2654 = vadd.f32 %v2542, %v2618
      %v2655 = vadd.f32 %v2543, %v2619
      %v2656 = vadd.f32 %v2544, %v2620
      %v2657 = vadd.f32 %v2545, %v2621
      %v2658 = vadd.f32 %v2546, %v2622
      %v2659 = vadd.f32 %v2547, %v2623
      %v2660 = vadd.f32 %v2548, %v2624
      %v2661 = vadd.f32 %v2549, %v2625
      %v2662 = vadd.f32 %v2550, %v2626
      %v2663 = vadd.f32 %v2551, %v2627
      %v2664 = vadd.f32 %v2552, %v2628
      %v2665 = vadd.f32 %v2553, %v2629
      %v2666 = vadd.f32 %v2554, %v2630
      %v2667 = vadd.f32 %v2555, %v2631
      %v2668 = vadd.f32 %v2556, %v2632
      %v2669 = vadd.f32 %v2557, %v2633
      %v2670 = vadd.f32 %v2558, %v2634
      %v2671 = vadd.f32 %v2559, %v2635
      %v2672 = vadd.f32 %v2560, %v2636
      %v2673 = vadd.f32 %v2561, %v2637
      %v2674 = vld [vmem:[#allocation3 + $0x2] sm:$0xff]
      %v2675 = vld [vmem:[#allocation3 + $0xa] sm:$0xff]
      %v2676 = vld [vmem:[#allocation3 + $0x12] sm:$0xff]
      %v2677 = vld [vmem:[#allocation3 + $0x1a] sm:$0xff]
      %v2678 = vld [vmem:[#allocation3 + $0x22] sm:$0xff]
      %v2679 = vld [vmem:[#allocation3 + $0x2a] sm:$0xff]
      %v2680 = vld [vmem:[#allocation3 + $0x32] sm:$0xff]
      %v2681 = vld [vmem:[#allocation3 + $0x3a] sm:$0xff]
      %v2682 = vld [vmem:[#allocation3 + $0x42] sm:$0xff]
      %v2683 = vld [vmem:[#allocation3 + $0x4a] sm:$0xff]
      %v2684 = vld [vmem:[#allocation3 + $0x52] sm:$0xff]
      %v2685 = vld [vmem:[#allocation3 + $0x5a] sm:$0xff]
      %v2686 = vld [vmem:[#allocation3 + $0x62] sm:$0xff]
      %v2687 = vld [vmem:[#allocation3 + $0x6a] sm:$0xff]
      %v2688 = vld [vmem:[#allocation3 + $0x72] sm:$0xff]
      %v2689 = vld [vmem:[#allocation3 + $0x7a] sm:$0xff]
      %v2690 = vld [vmem:[#allocation3 + $0x82] sm:$0xff]
      %v2691 = vld [vmem:[#allocation3 + $0x8a] sm:$0xff]
      %v2692 = vld [vmem:[#allocation3 + $0x92] sm:$0xff]
      %v2693 = vld [vmem:[#allocation3 + $0x9a] sm:$0xff]
      %v2694 = vld [vmem:[#allocation3 + $0xa2] sm:$0xff]
      %v2695 = vld [vmem:[#allocation3 + $0xaa] sm:$0xff]
      %v2696 = vld [vmem:[#allocation3 + $0xb2] sm:$0xff]
      %v2697 = vld [vmem:[#allocation3 + $0xba] sm:$0xff]
      %v2698 = vld [vmem:[#allocation3 + $0xc2] sm:$0xff]
      %v2699 = vld [vmem:[#allocation3 + $0xca] sm:$0xff]
      %v2700 = vld [vmem:[#allocation3 + $0xd2] sm:$0xff]
      %v2701 = vld [vmem:[#allocation3 + $0xda] sm:$0xff]
      %v2702 = vld [vmem:[#allocation3 + $0xe2] sm:$0xff]
      %v2703 = vld [vmem:[#allocation3 + $0xea] sm:$0xff]
      %v2704 = vld [vmem:[#allocation3 + $0xf2] sm:$0xff]
      %v2705 = vld [vmem:[#allocation3 + $0xfa] sm:$0xff]
      %v2706 = vld [vmem:[#allocation3 + $0x102] sm:$0xff]
      %v2707 = vld [vmem:[#allocation3 + $0x10a] sm:$0xff]
      %v2708 = vld [vmem:[#allocation3 + $0x112] sm:$0xff]
      %v2709 = vld [vmem:[#allocation3 + $0x11a] sm:$0x3f]
      %v2710 = vlaneseq
      %v2711 = vshrl.u32 %v2710, 7
      %v2712 = vsub.s32 2, %v2711
      %v2713 = vrot.slane %v2477, %v2712
      %v2714 = vmul.f32 %v2674, %v2713
      %v2715 = vmul.f32 %v2675, %v2713
      %v2716 = vmul.f32 %v2676, %v2713
      %v2717 = vmul.f32 %v2677, %v2713
      %v2718 = vmul.f32 %v2678, %v2713
      %v2719 = vmul.f32 %v2679, %v2713
      %v2720 = vmul.f32 %v2680, %v2713
      %v2721 = vmul.f32 %v2681, %v2713
      %v2722 = vmul.f32 %v2682, %v2713
      %v2723 = vmul.f32 %v2683, %v2713
      %v2724 = vmul.f32 %v2684, %v2713
      %v2725 = vmul.f32 %v2685, %v2713
      %v2726 = vmul.f32 %v2686, %v2713
      %v2727 = vmul.f32 %v2687, %v2713
      %v2728 = vmul.f32 %v2688, %v2713
      %v2729 = vmul.f32 %v2689, %v2713
      %v2730 = vmul.f32 %v2690, %v2713
      %v2731 = vmul.f32 %v2691, %v2713
      %v2732 = vmul.f32 %v2692, %v2713
      %v2733 = vmul.f32 %v2693, %v2713
      %v2734 = vmul.f32 %v2694, %v2713
      %v2735 = vmul.f32 %v2695, %v2713
      %v2736 = vmul.f32 %v2696, %v2713
      %v2737 = vmul.f32 %v2697, %v2713
      %v2738 = vmul.f32 %v2698, %v2713
      %v2739 = vmul.f32 %v2699, %v2713
      %v2740 = vmul.f32 %v2700, %v2713
      %v2741 = vmul.f32 %v2701, %v2713
      %v2742 = vmul.f32 %v2702, %v2713
      %v2743 = vmul.f32 %v2703, %v2713
      %v2744 = vmul.f32 %v2704, %v2713
      %v2745 = vmul.f32 %v2705, %v2713
      %v2746 = vmul.f32 %v2706, %v2713
      %v2747 = vmul.f32 %v2707, %v2713
      %v2748 = vmul.f32 %v2708, %v2713
      %v2749 = vmul.f32 %v2709, %v2713
      %v2750 = vadd.f32 %v2638, %v2714
      %v2751 = vadd.f32 %v2639, %v2715
      %v2752 = vadd.f32 %v2640, %v2716
      %v2753 = vadd.f32 %v2641, %v2717
      %v2754 = vadd.f32 %v2642, %v2718
      %v2755 = vadd.f32 %v2643, %v2719
      %v2756 = vadd.f32 %v2644, %v2720
      %v2757 = vadd.f32 %v2645, %v2721
      %v2758 = vadd.f32 %v2646, %v2722
      %v2759 = vadd.f32 %v2647, %v2723
      %v2760 = vadd.f32 %v2648, %v2724
      %v2761 = vadd.f32 %v2649, %v2725
      %v2762 = vadd.f32 %v2650, %v2726
      %v2763 = vadd.f32 %v2651, %v2727
      %v2764 = vadd.f32 %v2652, %v2728
      %v2765 = vadd.f32 %v2653, %v2729
      %v2766 = vadd.f32 %v2654, %v2730
      %v2767 = vadd.f32 %v2655, %v2731
      %v2768 = vadd.f32 %v2656, %v2732
      %v2769 = vadd.f32 %v2657, %v2733
      %v2770 = vadd.f32 %v2658, %v2734
      %v2771 = vadd.f32 %v2659, %v2735
      %v2772 = vadd.f32 %v2660, %v2736
      %v2773 = vadd.f32 %v2661, %v2737
      %v2774 = vadd.f32 %v2662, %v2738
      %v2775 = vadd.f32 %v2663, %v2739
      %v2776 = vadd.f32 %v2664, %v2740
      %v2777 = vadd.f32 %v2665, %v2741
      %v2778 = vadd.f32 %v2666, %v2742
      %v2779 = vadd.f32 %v2667, %v2743
      %v2780 = vadd.f32 %v2668, %v2744
      %v2781 = vadd.f32 %v2669, %v2745
      %v2782 = vadd.f32 %v2670, %v2746
      %v2783 = vadd.f32 %v2671, %v2747
      %v2784 = vadd.f32 %v2672, %v2748
      %v2785 = vadd.f32 %v2673, %v2749
      %v2786 = vld [vmem:[#allocation3 + $0x11a] sm:$0xff]
      %v2787 = vld [vmem:[#allocation3 + $0x122] sm:$0xff]
      %v2788 = vld [vmem:[#allocation3 + $0x12a] sm:$0x3f]
      %v2789 = vlaneseq
      %v2790 = vshrl.u32 %v2789, 7
      %v2791 = vsub.s32 3, %v2790
      %v2792 = vrot.slane %v2477, %v2791
      %v2793 = vmul.f32 %v2676, %v2792
      %v2794 = vmul.f32 %v2677, %v2792
      %v2795 = vmul.f32 %v2678, %v2792
      %v2796 = vmul.f32 %v2679, %v2792
      %v2797 = vmul.f32 %v2680, %v2792
      %v2798 = vmul.f32 %v2681, %v2792
      %v2799 = vmul.f32 %v2682, %v2792
      %v2800 = vmul.f32 %v2683, %v2792
      %v2801 = vmul.f32 %v2684, %v2792
      %v2802 = vmul.f32 %v2685, %v2792
      %v2803 = vmul.f32 %v2686, %v2792
      %v2804 = vmul.f32 %v2687, %v2792
      %v2805 = vmul.f32 %v2688, %v2792
      %v2806 = vmul.f32 %v2689, %v2792
      %v2807 = vmul.f32 %v2690, %v2792
      %v2808 = vmul.f32 %v2691, %v2792
      %v2809 = vmul.f32 %v2692, %v2792
      %v2810 = vmul.f32 %v2693, %v2792
      %v2811 = vmul.f32 %v2694, %v2792
      %v2812 = vmul.f32 %v2695, %v2792
      %v2813 = vmul.f32 %v2696, %v2792
      %v2814 = vmul.f32 %v2697, %v2792
      %v2815 = vmul.f32 %v2698, %v2792
      %v2816 = vmul.f32 %v2699, %v2792
      %v2817 = vmul.f32 %v2700, %v2792
      %v2818 = vmul.f32 %v2701, %v2792
      %v2819 = vmul.f32 %v2702, %v2792
      %v2820 = vmul.f32 %v2703, %v2792
      %v2821 = vmul.f32 %v2704, %v2792
      %v2822 = vmul.f32 %v2705, %v2792
      %v2823 = vmul.f32 %v2706, %v2792
      %v2824 = vmul.f32 %v2707, %v2792
      %v2825 = vmul.f32 %v2708, %v2792
      %v2826 = vmul.f32 %v2786, %v2792
      %v2827 = vmul.f32 %v2787, %v2792
      %v2828 = vmul.f32 %v2788, %v2792
      %v2829 = vadd.f32 %v2750, %v2793
      %v2830 = vadd.f32 %v2751, %v2794
      %v2831 = vadd.f32 %v2752, %v2795
      %v2832 = vadd.f32 %v2753, %v2796
      %v2833 = vadd.f32 %v2754, %v2797
      %v2834 = vadd.f32 %v2755, %v2798
      %v2835 = vadd.f32 %v2756, %v2799
      %v2836 = vadd.f32 %v2757, %v2800
      %v2837 = vadd.f32 %v2758, %v2801
      %v2838 = vadd.f32 %v2759, %v2802
      %v2839 = vadd.f32 %v2760, %v2803
      %v2840 = vadd.f32 %v2761, %v2804
      %v2841 = vadd.f32 %v2762, %v2805
      %v2842 = vadd.f32 %v2763, %v2806
      %v2843 = vadd.f32 %v2764, %v2807
      %v2844 = vadd.f32 %v2765, %v2808
      %v2845 = vadd.f32 %v2766, %v2809
      %v2846 = vadd.f32 %v2767, %v2810
      %v2847 = vadd.f32 %v2768, %v2811
      %v2848 = vadd.f32 %v2769, %v2812
      %v2849 = vadd.f32 %v2770, %v2813
      %v2850 = vadd.f32 %v2771, %v2814
      %v2851 = vadd.f32 %v2772, %v2815
      %v2852 = vadd.f32 %v2773, %v2816
      %v2853 = vadd.f32 %v2774, %v2817
      %v2854 = vadd.f32 %v2775, %v2818
      %v2855 = vadd.f32 %v2776, %v2819
      %v2856 = vadd.f32 %v2777, %v2820
      %v2857 = vadd.f32 %v2778, %v2821
      %v2858 = vadd.f32 %v2779, %v2822
      %v2859 = vadd.f32 %v2780, %v2823
      %v2860 = vadd.f32 %v2781, %v2824
      %v2861 = vadd.f32 %v2782, %v2825
      %v2862 = vadd.f32 %v2783, %v2826
      %v2863 = vadd.f32 %v2784, %v2827
      %v2864 = vadd.f32 %v2785, %v2828
      %v2865 = vld [vmem:[#allocation3 + $0x13] sm:$0xff]
      %v2866 = vld [vmem:[#allocation3 + $0x1b] sm:$0xff]
      %v2867 = vld [vmem:[#allocation3 + $0x23] sm:$0xff]
      %v2868 = vld [vmem:[#allocation3 + $0x2b] sm:$0xff]
      %v2869 = vld [vmem:[#allocation3 + $0x33] sm:$0xff]
      %v2870 = vld [vmem:[#allocation3 + $0x3b] sm:$0xff]
      %v2871 = vld [vmem:[#allocation3 + $0x43] sm:$0xff]
      %v2872 = vld [vmem:[#allocation3 + $0x4b] sm:$0xff]
      %v2873 = vld [vmem:[#allocation3 + $0x53] sm:$0xff]
      %v2874 = vld [vmem:[#allocation3 + $0x5b] sm:$0xff]
      %v2875 = vld [vmem:[#allocation3 + $0x63] sm:$0xff]
      %v2876 = vld [vmem:[#allocation3 + $0x6b] sm:$0xff]
      %v2877 = vld [vmem:[#allocation3 + $0x73] sm:$0xff]
      %v2878 = vld [vmem:[#allocation3 + $0x7b] sm:$0xff]
      %v2879 = vld [vmem:[#allocation3 + $0x83] sm:$0xff]
      %v2880 = vld [vmem:[#allocation3 + $0x8b] sm:$0xff]
      %v2881 = vld [vmem:[#allocation3 + $0x93] sm:$0xff]
      %v2882 = vld [vmem:[#allocation3 + $0x9b] sm:$0xff]
      %v2883 = vld [vmem:[#allocation3 + $0xa3] sm:$0xff]
      %v2884 = vld [vmem:[#allocation3 + $0xab] sm:$0xff]
      %v2885 = vld [vmem:[#allocation3 + $0xb3] sm:$0xff]
      %v2886 = vld [vmem:[#allocation3 + $0xbb] sm:$0xff]
      %v2887 = vld [vmem:[#allocation3 + $0xc3] sm:$0xff]
      %v2888 = vld [vmem:[#allocation3 + $0xcb] sm:$0xff]
      %v2889 = vld [vmem:[#allocation3 + $0xd3] sm:$0xff]
      %v2890 = vld [vmem:[#allocation3 + $0xdb] sm:$0xff]
      %v2891 = vld [vmem:[#allocation3 + $0xe3] sm:$0xff]
      %v2892 = vld [vmem:[#allocation3 + $0xeb] sm:$0xff]
      %v2893 = vld [vmem:[#allocation3 + $0xf3] sm:$0xff]
      %v2894 = vld [vmem:[#allocation3 + $0xfb] sm:$0xff]
      %v2895 = vld [vmem:[#allocation3 + $0x103] sm:$0xff]
      %v2896 = vld [vmem:[#allocation3 + $0x10b] sm:$0xff]
      %v2897 = vld [vmem:[#allocation3 + $0x113] sm:$0xff]
      %v2898 = vld [vmem:[#allocation3 + $0x11b] sm:$0xff]
      %v2899 = vld [vmem:[#allocation3 + $0x123] sm:$0xff]
      %v2900 = vld [vmem:[#allocation3 + $0x12b] sm:$0x3f]
      %v2901 = vlaneseq
      %v2902 = vshrl.u32 %v2901, 7
      %v2903 = vsub.s32 4, %v2902
      %v2904 = vrot.slane %v2477, %v2903
      %v2905 = vmul.f32 %v2865, %v2904
      %v2906 = vmul.f32 %v2866, %v2904
      %v2907 = vmul.f32 %v2867, %v2904
      %v2908 = vmul.f32 %v2868, %v2904
      %v2909 = vmul.f32 %v2869, %v2904
      %v2910 = vmul.f32 %v2870, %v2904
      %v2911 = vmul.f32 %v2871, %v2904
      %v2912 = vmul.f32 %v2872, %v2904
      %v2913 = vmul.f32 %v2873, %v2904
      %v2914 = vmul.f32 %v2874, %v2904
      %v2915 = vmul.f32 %v2875, %v2904
      %v2916 = vmul.f32 %v2876, %v2904
      %v2917 = vmul.f32 %v2877, %v2904
      %v2918 = vmul.f32 %v2878, %v2904
      %v2919 = vmul.f32 %v2879, %v2904
      %v2920 = vmul.f32 %v2880, %v2904
      %v2921 = vmul.f32 %v2881, %v2904
      %v2922 = vmul.f32 %v2882, %v2904
      %v2923 = vmul.f32 %v2883, %v2904
      %v2924 = vmul.f32 %v2884, %v2904
      %v2925 = vmul.f32 %v2885, %v2904
      %v2926 = vmul.f32 %v2886, %v2904
      %v2927 = vmul.f32 %v2887, %v2904
      %v2928 = vmul.f32 %v2888, %v2904
      %v2929 = vmul.f32 %v2889, %v2904
      %v2930 = vmul.f32 %v2890, %v2904
      %v2931 = vmul.f32 %v2891, %v2904
      %v2932 = vmul.f32 %v2892, %v2904
      %v2933 = vmul.f32 %v2893, %v2904
      %v2934 = vmul.f32 %v2894, %v2904
      %v2935 = vmul.f32 %v2895, %v2904
      %v2936 = vmul.f32 %v2896, %v2904
      %v2937 = vmul.f32 %v2897, %v2904
      %v2938 = vmul.f32 %v2898, %v2904
      %v2939 = vmul.f32 %v2899, %v2904
      %v2940 = vmul.f32 %v2900, %v2904
      %v2941 = vadd.f32 %v2829, %v2905
      %v2942 = vadd.f32 %v2830, %v2906
      %v2943 = vadd.f32 %v2831, %v2907
      %v2944 = vadd.f32 %v2832, %v2908
      %v2945 = vadd.f32 %v2833, %v2909
      %v2946 = vadd.f32 %v2834, %v2910
      %v2947 = vadd.f32 %v2835, %v2911
      %v2948 = vadd.f32 %v2836, %v2912
      %v2949 = vadd.f32 %v2837, %v2913
      %v2950 = vadd.f32 %v2838, %v2914
      %v2951 = vadd.f32 %v2839, %v2915
      %v2952 = vadd.f32 %v2840, %v2916
      %v2953 = vadd.f32 %v2841, %v2917
      %v2954 = vadd.f32 %v2842, %v2918
      %v2955 = vadd.f32 %v2843, %v2919
      %v2956 = vadd.f32 %v2844, %v2920
      %v2957 = vadd.f32 %v2845, %v2921
      %v2958 = vadd.f32 %v2846, %v2922
      %v2959 = vadd.f32 %v2847, %v2923
      %v2960 = vadd.f32 %v2848, %v2924
      %v2961 = vadd.f32 %v2849, %v2925
      %v2962 = vadd.f32 %v2850, %v2926
      %v2963 = vadd.f32 %v2851, %v2927
      %v2964 = vadd.f32 %v2852, %v2928
      %v2965 = vadd.f32 %v2853, %v2929
      %v2966 = vadd.f32 %v2854, %v2930
      %v2967 = vadd.f32 %v2855, %v2931
      %v2968 = vadd.f32 %v2856, %v2932
      %v2969 = vadd.f32 %v2857, %v2933
      %v2970 = vadd.f32 %v2858, %v2934
      %v2971 = vadd.f32 %v2859, %v2935
      %v2972 = vadd.f32 %v2860, %v2936
      %v2973 = vadd.f32 %v2861, %v2937
      %v2974 = vadd.f32 %v2862, %v2938
      %v2975 = vadd.f32 %v2863, %v2939
      %v2976 = vadd.f32 %v2864, %v2940
      %v2977 = vld [vmem:[#allocation3 + $0x14] sm:$0xff]
      %v2978 = vld [vmem:[#allocation3 + $0x1c] sm:$0xff]
      %v2979 = vld [vmem:[#allocation3 + $0x24] sm:$0xff]
      %v2980 = vld [vmem:[#allocation3 + $0x2c] sm:$0xff]
      %v2981 = vld [vmem:[#allocation3 + $0x34] sm:$0xff]
      %v2982 = vld [vmem:[#allocation3 + $0x3c] sm:$0xff]
      %v2983 = vld [vmem:[#allocation3 + $0x44] sm:$0xff]
      %v2984 = vld [vmem:[#allocation3 + $0x4c] sm:$0xff]
      %v2985 = vld [vmem:[#allocation3 + $0x54] sm:$0xff]
      %v2986 = vld [vmem:[#allocation3 + $0x5c] sm:$0xff]
      %v2987 = vld [vmem:[#allocation3 + $0x64] sm:$0xff]
      %v2988 = vld [vmem:[#allocation3 + $0x6c] sm:$0xff]
      %v2989 = vld [vmem:[#allocation3 + $0x74] sm:$0xff]
      %v2990 = vld [vmem:[#allocation3 + $0x7c] sm:$0xff]
      %v2991 = vld [vmem:[#allocation3 + $0x84] sm:$0xff]
      %v2992 = vld [vmem:[#allocation3 + $0x8c] sm:$0xff]
      %v2993 = vld [vmem:[#allocation3 + $0x94] sm:$0xff]
      %v2994 = vld [vmem:[#allocation3 + $0x9c] sm:$0xff]
      %v2995 = vld [vmem:[#allocation3 + $0xa4] sm:$0xff]
      %v2996 = vld [vmem:[#allocation3 + $0xac] sm:$0xff]
      %v2997 = vld [vmem:[#allocation3 + $0xb4] sm:$0xff]
      %v2998 = vld [vmem:[#allocation3 + $0xbc] sm:$0xff]
      %v2999 = vld [vmem:[#allocation3 + $0xc4] sm:$0xff]
      %v3000 = vld [vmem:[#allocation3 + $0xcc] sm:$0xff]
      %v3001 = vld [vmem:[#allocation3 + $0xd4] sm:$0xff]
      %v3002 = vld [vmem:[#allocation3 + $0xdc] sm:$0xff]
      %v3003 = vld [vmem:[#allocation3 + $0xe4] sm:$0xff]
      %v3004 = vld [vmem:[#allocation3 + $0xec] sm:$0xff]
      %v3005 = vld [vmem:[#allocation3 + $0xf4] sm:$0xff]
      %v3006 = vld [vmem:[#allocation3 + $0xfc] sm:$0xff]
      %v3007 = vld [vmem:[#allocation3 + $0x104] sm:$0xff]
      %v3008 = vld [vmem:[#allocation3 + $0x10c] sm:$0xff]
      %v3009 = vld [vmem:[#allocation3 + $0x114] sm:$0xff]
      %v3010 = vld [vmem:[#allocation3 + $0x11c] sm:$0xff]
      %v3011 = vld [vmem:[#allocation3 + $0x124] sm:$0xff]
      %v3012 = vld [vmem:[#allocation3 + $0x12c] sm:$0x3f]
      %v3013 = vlaneseq
      %v3014 = vshrl.u32 %v3013, 7
      %v3015 = vsub.s32 5, %v3014
      %v3016 = vrot.slane %v2477, %v3015
      %v3017 = vmul.f32 %v2977, %v3016
      %v3018 = vmul.f32 %v2978, %v3016
      %v3019 = vmul.f32 %v2979, %v3016
      %v3020 = vmul.f32 %v2980, %v3016
      %v3021 = vmul.f32 %v2981, %v3016
      %v3022 = vmul.f32 %v2982, %v3016
      %v3023 = vmul.f32 %v2983, %v3016
      %v3024 = vmul.f32 %v2984, %v3016
      %v3025 = vmul.f32 %v2985, %v3016
      %v3026 = vmul.f32 %v2986, %v3016
      %v3027 = vmul.f32 %v2987, %v3016
      %v3028 = vmul.f32 %v2988, %v3016
      %v3029 = vmul.f32 %v2989, %v3016
      %v3030 = vmul.f32 %v2990, %v3016
      %v3031 = vmul.f32 %v2991, %v3016
      %v3032 = vmul.f32 %v2992, %v3016
      %v3033 = vmul.f32 %v2993, %v3016
      %v3034 = vmul.f32 %v2994, %v3016
      %v3035 = vmul.f32 %v2995, %v3016
      %v3036 = vmul.f32 %v2996, %v3016
      %v3037 = vmul.f32 %v2997, %v3016
      %v3038 = vmul.f32 %v2998, %v3016
      %v3039 = vmul.f32 %v2999, %v3016
      %v3040 = vmul.f32 %v3000, %v3016
      %v3041 = vmul.f32 %v3001, %v3016
      %v3042 = vmul.f32 %v3002, %v3016
      %v3043 = vmul.f32 %v3003, %v3016
      %v3044 = vmul.f32 %v3004, %v3016
      %v3045 = vmul.f32 %v3005, %v3016
      %v3046 = vmul.f32 %v3006, %v3016
      %v3047 = vmul.f32 %v3007, %v3016
      %v3048 = vmul.f32 %v3008, %v3016
      %v3049 = vmul.f32 %v3009, %v3016
      %v3050 = vmul.f32 %v3010, %v3016
      %v3051 = vmul.f32 %v3011, %v3016
      %v3052 = vmul.f32 %v3012, %v3016
      %v3053 = vadd.f32 %v2941, %v3017
      %v3054 = vadd.f32 %v2942, %v3018
      %v3055 = vadd.f32 %v2943, %v3019
      %v3056 = vadd.f32 %v2944, %v3020
      %v3057 = vadd.f32 %v2945, %v3021
      %v3058 = vadd.f32 %v2946, %v3022
      %v3059 = vadd.f32 %v2947, %v3023
      %v3060 = vadd.f32 %v2948, %v3024
      %v3061 = vadd.f32 %v2949, %v3025
      %v3062 = vadd.f32 %v2950, %v3026
      %v3063 = vadd.f32 %v2951, %v3027
      %v3064 = vadd.f32 %v2952, %v3028
      %v3065 = vadd.f32 %v2953, %v3029
      %v3066 = vadd.f32 %v2954, %v3030
      %v3067 = vadd.f32 %v2955, %v3031
      %v3068 = vadd.f32 %v2956, %v3032
      %v3069 = vadd.f32 %v2957, %v3033
      %v3070 = vadd.f32 %v2958, %v3034
      %v3071 = vadd.f32 %v2959, %v3035
      %v3072 = vadd.f32 %v2960, %v3036
      %v3073 = vadd.f32 %v2961, %v3037
      %v3074 = vadd.f32 %v2962, %v3038
      %v3075 = vadd.f32 %v2963, %v3039
      %v3076 = vadd.f32 %v2964, %v3040
      %v3077 = vadd.f32 %v2965, %v3041
      %v3078 = vadd.f32 %v2966, %v3042
      %v3079 = vadd.f32 %v2967, %v3043
      %v3080 = vadd.f32 %v2968, %v3044
      %v3081 = vadd.f32 %v2969, %v3045
      %v3082 = vadd.f32 %v2970, %v3046
      %v3083 = vadd.f32 %v2971, %v3047
      %v3084 = vadd.f32 %v2972, %v3048
      %v3085 = vadd.f32 %v2973, %v3049
      %v3086 = vadd.f32 %v2974, %v3050
      %v3087 = vadd.f32 %v2975, %v3051
      %v3088 = vadd.f32 %v2976, %v3052
      %v3089 = vld [vmem:[#allocation3 + $0x12c] sm:$0xff]
      %v3090 = vld [vmem:[#allocation3 + $0x134] sm:$0xff]
      %v3091 = vld [vmem:[#allocation3 + $0x13c] sm:$0x3f]
      %v3092 = vlaneseq
      %v3093 = vshrl.u32 %v3092, 7
      %v3094 = vsub.s32 6, %v3093
      %v3095 = vrot.slane %v2477, %v3094
      %v3096 = vmul.f32 %v2979, %v3095
      %v3097 = vmul.f32 %v2980, %v3095
      %v3098 = vmul.f32 %v2981, %v3095
      %v3099 = vmul.f32 %v2982, %v3095
      %v3100 = vmul.f32 %v2983, %v3095
      %v3101 = vmul.f32 %v2984, %v3095
      %v3102 = vmul.f32 %v2985, %v3095
      %v3103 = vmul.f32 %v2986, %v3095
      %v3104 = vmul.f32 %v2987, %v3095
      %v3105 = vmul.f32 %v2988, %v3095
      %v3106 = vmul.f32 %v2989, %v3095
      %v3107 = vmul.f32 %v2990, %v3095
      %v3108 = vmul.f32 %v2991, %v3095
      %v3109 = vmul.f32 %v2992, %v3095
      %v3110 = vmul.f32 %v2993, %v3095
      %v3111 = vmul.f32 %v2994, %v3095
      %v3112 = vmul.f32 %v2995, %v3095
      %v3113 = vmul.f32 %v2996, %v3095
      %v3114 = vmul.f32 %v2997, %v3095
      %v3115 = vmul.f32 %v2998, %v3095
      %v3116 = vmul.f32 %v2999, %v3095
      %v3117 = vmul.f32 %v3000, %v3095
      %v3118 = vmul.f32 %v3001, %v3095
      %v3119 = vmul.f32 %v3002, %v3095
      %v3120 = vmul.f32 %v3003, %v3095
      %v3121 = vmul.f32 %v3004, %v3095
      %v3122 = vmul.f32 %v3005, %v3095
      %v3123 = vmul.f32 %v3006, %v3095
      %v3124 = vmul.f32 %v3007, %v3095
      %v3125 = vmul.f32 %v3008, %v3095
      %v3126 = vmul.f32 %v3009, %v3095
      %v3127 = vmul.f32 %v3010, %v3095
      %v3128 = vmul.f32 %v3011, %v3095
      %v3129 = vmul.f32 %v3089, %v3095
      %v3130 = vmul.f32 %v3090, %v3095
      %v3131 = vmul.f32 %v3091, %v3095
      %v3132 = vadd.f32 %v3053, %v3096
      %v3133 = vadd.f32 %v3054, %v3097
      %v3134 = vadd.f32 %v3055, %v3098
      %v3135 = vadd.f32 %v3056, %v3099
      %v3136 = vadd.f32 %v3057, %v3100
      %v3137 = vadd.f32 %v3058, %v3101
      %v3138 = vadd.f32 %v3059, %v3102
      %v3139 = vadd.f32 %v3060, %v3103
      %v3140 = vadd.f32 %v3061, %v3104
      %v3141 = vadd.f32 %v3062, %v3105
      %v3142 = vadd.f32 %v3063, %v3106
      %v3143 = vadd.f32 %v3064, %v3107
      %v3144 = vadd.f32 %v3065, %v3108
      %v3145 = vadd.f32 %v3066, %v3109
      %v3146 = vadd.f32 %v3067, %v3110
      %v3147 = vadd.f32 %v3068, %v3111
      %v3148 = vadd.f32 %v3069, %v3112
      %v3149 = vadd.f32 %v3070, %v3113
      %v3150 = vadd.f32 %v3071, %v3114
      %v3151 = vadd.f32 %v3072, %v3115
      %v3152 = vadd.f32 %v3073, %v3116
      %v3153 = vadd.f32 %v3074, %v3117
      %v3154 = vadd.f32 %v3075, %v3118
      %v3155 = vadd.f32 %v3076, %v3119
      %v3156 = vadd.f32 %v3077, %v3120
      %v3157 = vadd.f32 %v3078, %v3121
      %v3158 = vadd.f32 %v3079, %v3122
      %v3159 = vadd.f32 %v3080, %v3123
      %v3160 = vadd.f32 %v3081, %v3124
      %v3161 = vadd.f32 %v3082, %v3125
      %v3162 = vadd.f32 %v3083, %v3126
      %v3163 = vadd.f32 %v3084, %v3127
      %v3164 = vadd.f32 %v3085, %v3128
      %v3165 = vadd.f32 %v3086, %v3129
      %v3166 = vadd.f32 %v3087, %v3130
      %v3167 = vadd.f32 %v3088, %v3131
      %v3168 = vld [vmem:[#allocation3 + $0x25] sm:$0xff]
      %v3169 = vld [vmem:[#allocation3 + $0x2d] sm:$0xff]
      %v3170 = vld [vmem:[#allocation3 + $0x35] sm:$0xff]
      %v3171 = vld [vmem:[#allocation3 + $0x3d] sm:$0xff]
      %v3172 = vld [vmem:[#allocation3 + $0x45] sm:$0xff]
      %v3173 = vld [vmem:[#allocation3 + $0x4d] sm:$0xff]
      %v3174 = vld [vmem:[#allocation3 + $0x55] sm:$0xff]
      %v3175 = vld [vmem:[#allocation3 + $0x5d] sm:$0xff]
      %v3176 = vld [vmem:[#allocation3 + $0x65] sm:$0xff]
      %v3177 = vld [vmem:[#allocation3 + $0x6d] sm:$0xff]
      %v3178 = vld [vmem:[#allocation3 + $0x75] sm:$0xff]
      %v3179 = vld [vmem:[#allocation3 + $0x7d] sm:$0xff]
      %v3180 = vld [vmem:[#allocation3 + $0x85] sm:$0xff]
      %v3181 = vld [vmem:[#allocation3 + $0x8d] sm:$0xff]
      %v3182 = vld [vmem:[#allocation3 + $0x95] sm:$0xff]
      %v3183 = vld [vmem:[#allocation3 + $0x9d] sm:$0xff]
      %v3184 = vld [vmem:[#allocation3 + $0xa5] sm:$0xff]
      %v3185 = vld [vmem:[#allocation3 + $0xad] sm:$0xff]
      %v3186 = vld [vmem:[#allocation3 + $0xb5] sm:$0xff]
      %v3187 = vld [vmem:[#allocation3 + $0xbd] sm:$0xff]
      %v3188 = vld [vmem:[#allocation3 + $0xc5] sm:$0xff]
      %v3189 = vld [vmem:[#allocation3 + $0xcd] sm:$0xff]
      %v3190 = vld [vmem:[#allocation3 + $0xd5] sm:$0xff]
      %v3191 = vld [vmem:[#allocation3 + $0xdd] sm:$0xff]
      %v3192 = vld [vmem:[#allocation3 + $0xe5] sm:$0xff]
      %v3193 = vld [vmem:[#allocation3 + $0xed] sm:$0xff]
      %v3194 = vld [vmem:[#allocation3 + $0xf5] sm:$0xff]
      %v3195 = vld [vmem:[#allocation3 + $0xfd] sm:$0xff]
      %v3196 = vld [vmem:[#allocation3 + $0x105] sm:$0xff]
      %v3197 = vld [vmem:[#allocation3 + $0x10d] sm:$0xff]
      %v3198 = vld [vmem:[#allocation3 + $0x115] sm:$0xff]
      %v3199 = vld [vmem:[#allocation3 + $0x11d] sm:$0xff]
      %v3200 = vld [vmem:[#allocation3 + $0x125] sm:$0xff]
      %v3201 = vld [vmem:[#allocation3 + $0x12d] sm:$0xff]
      %v3202 = vld [vmem:[#allocation3 + $0x135] sm:$0xff]
      %v3203 = vld [vmem:[#allocation3 + $0x13d] sm:$0x3f]
      %v3204 = vlaneseq
      %v3205 = vshrl.u32 %v3204, 7
      %v3206 = vsub.s32 7, %v3205
      %v3207 = vrot.slane %v2477, %v3206
      %v3208 = vmul.f32 %v3168, %v3207
      %v3209 = vmul.f32 %v3169, %v3207
      %v3210 = vmul.f32 %v3170, %v3207
      %v3211 = vmul.f32 %v3171, %v3207
      %v3212 = vmul.f32 %v3172, %v3207
      %v3213 = vmul.f32 %v3173, %v3207
      %v3214 = vmul.f32 %v3174, %v3207
      %v3215 = vmul.f32 %v3175, %v3207
      %v3216 = vmul.f32 %v3176, %v3207
      %v3217 = vmul.f32 %v3177, %v3207
      %v3218 = vmul.f32 %v3178, %v3207
      %v3219 = vmul.f32 %v3179, %v3207
      %v3220 = vmul.f32 %v3180, %v3207
      %v3221 = vmul.f32 %v3181, %v3207
      %v3222 = vmul.f32 %v3182, %v3207
      %v3223 = vmul.f32 %v3183, %v3207
      %v3224 = vmul.f32 %v3184, %v3207
      %v3225 = vmul.f32 %v3185, %v3207
      %v3226 = vmul.f32 %v3186, %v3207
      %v3227 = vmul.f32 %v3187, %v3207
      %v3228 = vmul.f32 %v3188, %v3207
      %v3229 = vmul.f32 %v3189, %v3207
      %v3230 = vmul.f32 %v3190, %v3207
      %v3231 = vmul.f32 %v3191, %v3207
      %v3232 = vmul.f32 %v3192, %v3207
      %v3233 = vmul.f32 %v3193, %v3207
      %v3234 = vmul.f32 %v3194, %v3207
      %v3235 = vmul.f32 %v3195, %v3207
      %v3236 = vmul.f32 %v3196, %v3207
      %v3237 = vmul.f32 %v3197, %v3207
      %v3238 = vmul.f32 %v3198, %v3207
      %v3239 = vmul.f32 %v3199, %v3207
      %v3240 = vmul.f32 %v3200, %v3207
      %v3241 = vmul.f32 %v3201, %v3207
      %v3242 = vmul.f32 %v3202, %v3207
      %v3243 = vmul.f32 %v3203, %v3207
      %v3244 = vadd.f32 %v3132, %v3208
      %v3245 = vadd.f32 %v3133, %v3209
      %v3246 = vadd.f32 %v3134, %v3210
      %v3247 = vadd.f32 %v3135, %v3211
      %v3248 = vadd.f32 %v3136, %v3212
      %v3249 = vadd.f32 %v3137, %v3213
      %v3250 = vadd.f32 %v3138, %v3214
      %v3251 = vadd.f32 %v3139, %v3215
      %v3252 = vadd.f32 %v3140, %v3216
      %v3253 = vadd.f32 %v3141, %v3217
      %v3254 = vadd.f32 %v3142, %v3218
      %v3255 = vadd.f32 %v3143, %v3219
      %v3256 = vadd.f32 %v3144, %v3220
      %v3257 = vadd.f32 %v3145, %v3221
      %v3258 = vadd.f32 %v3146, %v3222
      %v3259 = vadd.f32 %v3147, %v3223
      %v3260 = vadd.f32 %v3148, %v3224
      %v3261 = vadd.f32 %v3149, %v3225
      %v3262 = vadd.f32 %v3150, %v3226
      %v3263 = vadd.f32 %v3151, %v3227
      %v3264 = vadd.f32 %v3152, %v3228
      %v3265 = vadd.f32 %v3153, %v3229
      %v3266 = vadd.f32 %v3154, %v3230
      %v3267 = vadd.f32 %v3155, %v3231
      %v3268 = vadd.f32 %v3156, %v3232
      %v3269 = vadd.f32 %v3157, %v3233
      %v3270 = vadd.f32 %v3158, %v3234
      %v3271 = vadd.f32 %v3159, %v3235
      %v3272 = vadd.f32 %v3160, %v3236
      %v3273 = vadd.f32 %v3161, %v3237
      %v3274 = vadd.f32 %v3162, %v3238
      %v3275 = vadd.f32 %v3163, %v3239
      %v3276 = vadd.f32 %v3164, %v3240
      %v3277 = vadd.f32 %v3165, %v3241
      %v3278 = vadd.f32 %v3166, %v3242
      %v3279 = vadd.f32 %v3167, %v3243
      %v3280 = vld [vmem:[#allocation3 + $0x26] sm:$0xff]
      %v3281 = vld [vmem:[#allocation3 + $0x2e] sm:$0xff]
      %v3282 = vld [vmem:[#allocation3 + $0x36] sm:$0xff]
      %v3283 = vld [vmem:[#allocation3 + $0x3e] sm:$0xff]
      %v3284 = vld [vmem:[#allocation3 + $0x46] sm:$0xff]
      %v3285 = vld [vmem:[#allocation3 + $0x4e] sm:$0xff]
      %v3286 = vld [vmem:[#allocation3 + $0x56] sm:$0xff]
      %v3287 = vld [vmem:[#allocation3 + $0x5e] sm:$0xff]
      %v3288 = vld [vmem:[#allocation3 + $0x66] sm:$0xff]
      %v3289 = vld [vmem:[#allocation3 + $0x6e] sm:$0xff]
      %v3290 = vld [vmem:[#allocation3 + $0x76] sm:$0xff]
      %v3291 = vld [vmem:[#allocation3 + $0x7e] sm:$0xff]
      %v3292 = vld [vmem:[#allocation3 + $0x86] sm:$0xff]
      %v3293 = vld [vmem:[#allocation3 + $0x8e] sm:$0xff]
      %v3294 = vld [vmem:[#allocation3 + $0x96] sm:$0xff]
      %v3295 = vld [vmem:[#allocation3 + $0x9e] sm:$0xff]
      %v3296 = vld [vmem:[#allocation3 + $0xa6] sm:$0xff]
      %v3297 = vld [vmem:[#allocation3 + $0xae] sm:$0xff]
      %v3298 = vld [vmem:[#allocation3 + $0xb6] sm:$0xff]
      %v3299 = vld [vmem:[#allocation3 + $0xbe] sm:$0xff]
      %v3300 = vld [vmem:[#allocation3 + $0xc6] sm:$0xff]
      %v3301 = vld [vmem:[#allocation3 + $0xce] sm:$0xff]
      %v3302 = vld [vmem:[#allocation3 + $0xd6] sm:$0xff]
      %v3303 = vld [vmem:[#allocation3 + $0xde] sm:$0xff]
      %v3304 = vld [vmem:[#allocation3 + $0xe6] sm:$0xff]
      %v3305 = vld [vmem:[#allocation3 + $0xee] sm:$0xff]
      %v3306 = vld [vmem:[#allocation3 + $0xf6] sm:$0xff]
      %v3307 = vld [vmem:[#allocation3 + $0xfe] sm:$0xff]
      %v3308 = vld [vmem:[#allocation3 + $0x106] sm:$0xff]
      %v3309 = vld [vmem:[#allocation3 + $0x10e] sm:$0xff]
      %v3310 = vld [vmem:[#allocation3 + $0x116] sm:$0xff]
      %v3311 = vld [vmem:[#allocation3 + $0x11e] sm:$0xff]
      %v3312 = vld [vmem:[#allocation3 + $0x126] sm:$0xff]
      %v3313 = vld [vmem:[#allocation3 + $0x12e] sm:$0xff]
      %v3314 = vld [vmem:[#allocation3 + $0x136] sm:$0xff]
      %v3315 = vld [vmem:[#allocation3 + $0x13e] sm:$0x3f]
      %v3316 = vlaneseq
      %v3317 = vshrl.u32 %v3316, 7
      %v3318 = vsub.s32 0, %v3317
      %v3319 = vrot.slane %v2478, %v3318
      %v3320 = vmul.f32 %v3280, %v3319
      %v3321 = vmul.f32 %v3281, %v3319
      %v3322 = vmul.f32 %v3282, %v3319
      %v3323 = vmul.f32 %v3283, %v3319
      %v3324 = vmul.f32 %v3284, %v3319
      %v3325 = vmul.f32 %v3285, %v3319
      %v3326 = vmul.f32 %v3286, %v3319
      %v3327 = vmul.f32 %v3287, %v3319
      %v3328 = vmul.f32 %v3288, %v3319
      %v3329 = vmul.f32 %v3289, %v3319
      %v3330 = vmul.f32 %v3290, %v3319
      %v3331 = vmul.f32 %v3291, %v3319
      %v3332 = vmul.f32 %v3292, %v3319
      %v3333 = vmul.f32 %v3293, %v3319
      %v3334 = vmul.f32 %v3294, %v3319
      %v3335 = vmul.f32 %v3295, %v3319
      %v3336 = vmul.f32 %v3296, %v3319
      %v3337 = vmul.f32 %v3297, %v3319
      %v3338 = vmul.f32 %v3298, %v3319
      %v3339 = vmul.f32 %v3299, %v3319
      %v3340 = vmul.f32 %v3300, %v3319
      %v3341 = vmul.f32 %v3301, %v3319
      %v3342 = vmul.f32 %v3302, %v3319
      %v3343 = vmul.f32 %v3303, %v3319
      %v3344 = vmul.f32 %v3304, %v3319
      %v3345 = vmul.f32 %v3305, %v3319
      %v3346 = vmul.f32 %v3306, %v3319
      %v3347 = vmul.f32 %v3307, %v3319
      %v3348 = vmul.f32 %v3308, %v3319
      %v3349 = vmul.f32 %v3309, %v3319
      %v3350 = vmul.f32 %v3310, %v3319
      %v3351 = vmul.f32 %v3311, %v3319
      %v3352 = vmul.f32 %v3312, %v3319
      %v3353 = vmul.f32 %v3313, %v3319
      %v3354 = vmul.f32 %v3314, %v3319
      %v3355 = vmul.f32 %v3315, %v3319
      %v3356 = vadd.f32 %v3244, %v3320
      %v3357 = vadd.f32 %v3245, %v3321
      %v3358 = vadd.f32 %v3246, %v3322
      %v3359 = vadd.f32 %v3247, %v3323
      %v3360 = vadd.f32 %v3248, %v3324
      %v3361 = vadd.f32 %v3249, %v3325
      %v3362 = vadd.f32 %v3250, %v3326
      %v3363 = vadd.f32 %v3251, %v3327
      %v3364 = vadd.f32 %v3252, %v3328
      %v3365 = vadd.f32 %v3253, %v3329
      %v3366 = vadd.f32 %v3254, %v3330
      %v3367 = vadd.f32 %v3255, %v3331
      %v3368 = vadd.f32 %v3256, %v3332
      %v3369 = vadd.f32 %v3257, %v3333
      %v3370 = vadd.f32 %v3258, %v3334
      %v3371 = vadd.f32 %v3259, %v3335
      %v3372 = vadd.f32 %v3260, %v3336
      %v3373 = vadd.f32 %v3261, %v3337
      %v3374 = vadd.f32 %v3262, %v3338
      %v3375 = vadd.f32 %v3263, %v3339
      %v3376 = vadd.f32 %v3264, %v3340
      %v3377 = vadd.f32 %v3265, %v3341
      %v3378 = vadd.f32 %v3266, %v3342
      %v3379 = vadd.f32 %v3267, %v3343
      %v3380 = vadd.f32 %v3268, %v3344
      %v3381 = vadd.f32 %v3269, %v3345
      %v3382 = vadd.f32 %v3270, %v3346
      %v3383 = vadd.f32 %v3271, %v3347
      %v3384 = vadd.f32 %v3272, %v3348
      %v3385 = vadd.f32 %v3273, %v3349
      %v3386 = vadd.f32 %v3274, %v3350
      %v3387 = vadd.f32 %v3275, %v3351
      %v3388 = vadd.f32 %v3276, %v3352
      %v3389 = vadd.f32 %v3277, %v3353
      %v3390 = vadd.f32 %v3278, %v3354
      %v3391 = vadd.f32 %v3279, %v3355
      %v3393 = vlaneseq
      %v3394 = vshrl.u32 %v3393, 7
      %v3395 = vsub.s32 0, %v3394
      %v3396 = vrot.slane %v2480, %v3395
      %v3398 = vadd.f32 %v3356, %v3396
      %v3399 = vadd.f32 %v3357, %v3396
      %v3400 = vadd.f32 %v3358, %v3396
      %v3401 = vadd.f32 %v3359, %v3396
      %v3402 = vadd.f32 %v3360, %v3396
      %v3403 = vadd.f32 %v3361, %v3396
      %v3404 = vadd.f32 %v3362, %v3396
      %v3405 = vadd.f32 %v3363, %v3396
      %v3406 = vadd.f32 %v3364, %v3396
      %v3407 = vadd.f32 %v3365, %v3396
      %v3408 = vadd.f32 %v3366, %v3396
      %v3409 = vadd.f32 %v3367, %v3396
      %v3410 = vadd.f32 %v3368, %v3396
      %v3411 = vadd.f32 %v3369, %v3396
      %v3412 = vadd.f32 %v3370, %v3396
      %v3413 = vadd.f32 %v3371, %v3396
      %v3414 = vadd.f32 %v3372, %v3396
      %v3415 = vadd.f32 %v3373, %v3396
      %v3416 = vadd.f32 %v3374, %v3396
      %v3417 = vadd.f32 %v3375, %v3396
      %v3418 = vadd.f32 %v3376, %v3396
      %v3419 = vadd.f32 %v3377, %v3396
      %v3420 = vadd.f32 %v3378, %v3396
      %v3421 = vadd.f32 %v3379, %v3396
      %v3422 = vadd.f32 %v3380, %v3396
      %v3423 = vadd.f32 %v3381, %v3396
      %v3424 = vadd.f32 %v3382, %v3396
      %v3425 = vadd.f32 %v3383, %v3396
      %v3426 = vadd.f32 %v3384, %v3396
      %v3427 = vadd.f32 %v3385, %v3396
      %v3428 = vadd.f32 %v3386, %v3396
      %v3429 = vadd.f32 %v3387, %v3396
      %v3430 = vadd.f32 %v3388, %v3396
      %v3431 = vadd.f32 %v3389, %v3396
      %v3432 = vadd.f32 %v3390, %v3396
      %v3433 = vadd.f32 %v3391, %v3396
      %vm3434 = vcmp.ge.f32.partialorder %v3398, 0.0
      %vm3435 = vcmp.ge.f32.partialorder %v3399, 0.0
      %vm3436 = vcmp.ge.f32.partialorder %v3400, 0.0
      %vm3437 = vcmp.ge.f32.partialorder %v3401, 0.0
      %vm3438 = vcmp.ge.f32.partialorder %v3402, 0.0
      %vm3439 = vcmp.ge.f32.partialorder %v3403, 0.0
      %vm3440 = vcmp.ge.f32.partialorder %v3404, 0.0
      %vm3441 = vcmp.ge.f32.partialorder %v3405, 0.0
      %vm3442 = vcmp.ge.f32.partialorder %v3406, 0.0
      %vm3443 = vcmp.ge.f32.partialorder %v3407, 0.0
      %vm3444 = vcmp.ge.f32.partialorder %v3408, 0.0
      %vm3445 = vcmp.ge.f32.partialorder %v3409, 0.0
      %vm3446 = vcmp.ge.f32.partialorder %v3410, 0.0
      %vm3447 = vcmp.ge.f32.partialorder %v3411, 0.0
      %vm3448 = vcmp.ge.f32.partialorder %v3412, 0.0
      %vm3449 = vcmp.ge.f32.partialorder %v3413, 0.0
      %vm3450 = vcmp.ge.f32.partialorder %v3414, 0.0
      %vm3451 = vcmp.ge.f32.partialorder %v3415, 0.0
      %vm3452 = vcmp.ge.f32.partialorder %v3416, 0.0
      %vm3453 = vcmp.ge.f32.partialorder %v3417, 0.0
      %vm3454 = vcmp.ge.f32.partialorder %v3418, 0.0
      %vm3455 = vcmp.ge.f32.partialorder %v3419, 0.0
      %vm3456 = vcmp.ge.f32.partialorder %v3420, 0.0
      %vm3457 = vcmp.ge.f32.partialorder %v3421, 0.0
      %vm3458 = vcmp.ge.f32.partialorder %v3422, 0.0
      %vm3459 = vcmp.ge.f32.partialorder %v3423, 0.0
      %vm3460 = vcmp.ge.f32.partialorder %v3424, 0.0
      %vm3461 = vcmp.ge.f32.partialorder %v3425, 0.0
      %vm3462 = vcmp.ge.f32.partialorder %v3426, 0.0
      %vm3463 = vcmp.ge.f32.partialorder %v3427, 0.0
      %vm3464 = vcmp.ge.f32.partialorder %v3428, 0.0
      %vm3465 = vcmp.ge.f32.partialorder %v3429, 0.0
      %vm3466 = vcmp.ge.f32.partialorder %v3430, 0.0
      %vm3467 = vcmp.ge.f32.partialorder %v3431, 0.0
      %vm3468 = vcmp.ge.f32.partialorder %v3432, 0.0
      %vm3469 = vcmp.ge.f32.partialorder %v3433, 0.0
      %v3470 = vmul.f32 %v3398, 0.1
      %v3471 = vmul.f32 %v3399, 0.1
      %v3472 = vmul.f32 %v3400, 0.1
      %v3473 = vmul.f32 %v3401, 0.1
      %v3474 = vmul.f32 %v3402, 0.1
      %v3475 = vmul.f32 %v3403, 0.1
      %v3476 = vmul.f32 %v3404, 0.1
      %v3477 = vmul.f32 %v3405, 0.1
      %v3478 = vmul.f32 %v3406, 0.1
      %v3479 = vmul.f32 %v3407, 0.1
      %v3480 = vmul.f32 %v3408, 0.1
      %v3481 = vmul.f32 %v3409, 0.1
      %v3482 = vmul.f32 %v3410, 0.1
      %v3483 = vmul.f32 %v3411, 0.1
      %v3484 = vmul.f32 %v3412, 0.1
      %v3485 = vmul.f32 %v3413, 0.1
      %v3486 = vmul.f32 %v3414, 0.1
      %v3487 = vmul.f32 %v3415, 0.1
      %v3488 = vmul.f32 %v3416, 0.1
      %v3489 = vmul.f32 %v3417, 0.1
      %v3490 = vmul.f32 %v3418, 0.1
      %v3491 = vmul.f32 %v3419, 0.1
      %v3492 = vmul.f32 %v3420, 0.1
      %v3493 = vmul.f32 %v3421, 0.1
      %v3494 = vmul.f32 %v3422, 0.1
      %v3495 = vmul.f32 %v3423, 0.1
      %v3496 = vmul.f32 %v3424, 0.1
      %v3497 = vmul.f32 %v3425, 0.1
      %v3498 = vmul.f32 %v3426, 0.1
      %v3499 = vmul.f32 %v3427, 0.1
      %v3500 = vmul.f32 %v3428, 0.1
      %v3501 = vmul.f32 %v3429, 0.1
      %v3502 = vmul.f32 %v3430, 0.1
      %v3503 = vmul.f32 %v3431, 0.1
      %v3504 = vmul.f32 %v3432, 0.1
      %v3505 = vmul.f32 %v3433, 0.1
      %v3506 = vsel %vm3434, %v3398, %v3470
      %v3507 = vsel %vm3435, %v3399, %v3471
      %v3508 = vsel %vm3436, %v3400, %v3472
      %v3509 = vsel %vm3437, %v3401, %v3473
      %v3510 = vsel %vm3438, %v3402, %v3474
      %v3511 = vsel %vm3439, %v3403, %v3475
      %v3512 = vsel %vm3440, %v3404, %v3476
      %v3513 = vsel %vm3441, %v3405, %v3477
      %v3514 = vsel %vm3442, %v3406, %v3478
      %v3515 = vsel %vm3443, %v3407, %v3479
      %v3516 = vsel %vm3444, %v3408, %v3480
      %v3517 = vsel %vm3445, %v3409, %v3481
      %v3518 = vsel %vm3446, %v3410, %v3482
      %v3519 = vsel %vm3447, %v3411, %v3483
      %v3520 = vsel %vm3448, %v3412, %v3484
      %v3521 = vsel %vm3449, %v3413, %v3485
      %v3522 = vsel %vm3450, %v3414, %v3486
      %v3523 = vsel %vm3451, %v3415, %v3487
      %v3524 = vsel %vm3452, %v3416, %v3488
      %v3525 = vsel %vm3453, %v3417, %v3489
      %v3526 = vsel %vm3454, %v3418, %v3490
      %v3527 = vsel %vm3455, %v3419, %v3491
      %v3528 = vsel %vm3456, %v3420, %v3492
      %v3529 = vsel %vm3457, %v3421, %v3493
      %v3530 = vsel %vm3458, %v3422, %v3494
      %v3531 = vsel %vm3459, %v3423, %v3495
      %v3532 = vsel %vm3460, %v3424, %v3496
      %v3533 = vsel %vm3461, %v3425, %v3497
      %v3534 = vsel %vm3462, %v3426, %v3498
      %v3535 = vsel %vm3463, %v3427, %v3499
      %v3536 = vsel %vm3464, %v3428, %v3500
      %v3537 = vsel %vm3465, %v3429, %v3501
      %v3538 = vsel %vm3466, %v3430, %v3502
      %v3539 = vsel %vm3467, %v3431, %v3503
      %v3540 = vsel %vm3468, %v3432, %v3504
      %v3541 = vsel %vm3469, %v3433, %v3505
      %v3542 = vpack.c.bf16 %v3507, %v3506
      %v3543 = vpack.c.bf16 %v3509, %v3508
      %v3544 = vpack.c.bf16 %v3511, %v3510
      %v3545 = vpack.c.bf16 %v3513, %v3512
      %v3546 = vpack.c.bf16 %v3515, %v3514
      %v3547 = vpack.c.bf16 %v3517, %v3516
      %v3548 = vpack.c.bf16 %v3519, %v3518
      %v3549 = vpack.c.bf16 %v3521, %v3520
      %v3550 = vpack.c.bf16 %v3523, %v3522
      %v3551 = vpack.c.bf16 %v3525, %v3524
      %v3552 = vpack.c.bf16 %v3527, %v3526
      %v3553 = vpack.c.bf16 %v3529, %v3528
      %v3554 = vpack.c.bf16 %v3531, %v3530
      %v3555 = vpack.c.bf16 %v3533, %v3532
      %v3556 = vpack.c.bf16 %v3535, %v3534
      %v3557 = vpack.c.bf16 %v3537, %v3536
      %v3558 = vpack.c.bf16 %v3539, %v3538
      %v3559 = vpack.c.bf16 %v3541, %v3540
      %v3560 = vld [vmem:[%s7] sm:$0xff]
      %v3561 = vld [vmem:[%s7 + $0x8] sm:$0xf]
      %v3562 = vld [vmem:[%s7 + $0xc] sm:$0xff]
      %v3563 = vld [vmem:[%s7 + $0x14] sm:$0xf]
      %v3564 = vld [vmem:[%s7 + $0x18] sm:$0xff]
      %v3565 = vld [vmem:[%s7 + $0x20] sm:$0xf]
      %v3566 = vld [vmem:[%s7 + $0x24] sm:$0xff]
      %v3567 = vld [vmem:[%s7 + $0x2c] sm:$0xf]
      %v3568 = vld [vmem:[%s7 + $0x30] sm:$0xff]
      %v3569 = vld [vmem:[%s7 + $0x38] sm:$0xf]
      %v3570 = vld [vmem:[%s7 + $0x3c] sm:$0xff]
      %v3571 = vld [vmem:[%s7 + $0x44] sm:$0xf]
      %v3572 = vld [vmem:[%s7 + $0x48] sm:$0xff]
      %v3573 = vld [vmem:[%s7 + $0x50] sm:$0xf]
      %v3574 = vld [vmem:[%s7 + $0x54] sm:$0xff]
      %v3575 = vld [vmem:[%s7 + $0x5c] sm:$0xf]
      %v3592 = vunpack.c.l.b16 %v3560
      %v3593 = vunpack.c.h.b16 %v3560
      %v3594 = vunpack.c.l.b16 %v3561
      %v3595 = vunpack.c.l.b16 %v3562
      %v3596 = vunpack.c.h.b16 %v3562
      %v3597 = vunpack.c.l.b16 %v3563
      %v3598 = vunpack.c.l.b16 %v3564
      %v3599 = vunpack.c.h.b16 %v3564
      %v3600 = vunpack.c.l.b16 %v3565
      %v3601 = vunpack.c.l.b16 %v3566
      %v3602 = vunpack.c.h.b16 %v3566
      %v3603 = vunpack.c.l.b16 %v3567
      %v3604 = vunpack.c.l.b16 %v3568
      %v3605 = vunpack.c.h.b16 %v3568
      %v3606 = vunpack.c.l.b16 %v3569
      %v3607 = vunpack.c.l.b16 %v3570
      %v3608 = vunpack.c.h.b16 %v3570
      %v3609 = vunpack.c.l.b16 %v3571
      %v3610 = vunpack.c.l.b16 %v3572
      %v3611 = vunpack.c.h.b16 %v3572
      %v3612 = vunpack.c.l.b16 %v3573
      %v3613 = vunpack.c.l.b16 %v3574
      %v3614 = vunpack.c.h.b16 %v3574
      %v3615 = vunpack.c.l.b16 %v3575
      %v3616 = vpack.c.b16 %v3595, %v3592
      %v3617 = vpack.c.b16 %v3596, %v3593
      %v3618 = vpack.c.b16 %v3597, %v3594
      %v3619 = vpack.c.b16 %v3601, %v3598
      %v3620 = vpack.c.b16 %v3602, %v3599
      %v3621 = vpack.c.b16 %v3603, %v3600
      %v3622 = vpack.c.b16 %v3607, %v3604
      %v3623 = vpack.c.b16 %v3608, %v3605
      %v3624 = vpack.c.b16 %v3609, %v3606
      %v3625 = vpack.c.b16 %v3613, %v3610
      %v3626 = vpack.c.b16 %v3614, %v3611
      %v3627 = vpack.c.b16 %v3615, %v3612
      %vm3636 = vcmask 244736
      %v3638 = vsel %vm3636, %v3618, 0
      %v3641 = vsel %vm3636, %v3621, 0
      %v3644 = vsel %vm3636, %v3624, 0
      %v3647 = vsel %vm3636, %v3627, 0
      %vm3649 = vcmask 1046528
      %v3651 = vsel %vm3649, %v3559, 0
      %3653 = vmatprep.subr.bf16.mxu0 0
      %3654 = vmatpush1.bf16.msra.mxu0 %v3542
      %3655 = vmatprep.subr.bf16.mxu0 0
      %3656 = vmatpush1.bf16.msra.mxu0 %v3543
      %3657 = vmatprep.subr.bf16.mxu0 0
      %3658 = vmatpush1.bf16.msra.mxu0 %v3544
      %3659 = vmatprep.subr.bf16.mxu0 0
      %3660 = vmatpush1.bf16.msra.mxu0 %v3545
      %3661 = vmatprep.subr.bf16.mxu0 0
      %3662 = vmatpush1.bf16.msra.mxu0 %v3546
      %3663 = vmatprep.subr.bf16.mxu0 0
      %3664 = vmatpush1.bf16.msra.mxu0 %v3547
      %3665 = vmatprep.subr.bf16.mxu0 0
      %3666 = vmatpush1.bf16.msra.mxu0 %v3548
      %3667 = vmatprep.subr.bf16.mxu0 0
      %3668 = vmatpush1.bf16.msra.mxu0 %v3549
      %3669 = vmatprep.subr.bf16.mxu0 0
      %3670 = vmatpush1.bf16.msra.mxu0 %v3550
      %3671 = vmatprep.subr.bf16.mxu0 0
      %3672 = vmatpush1.bf16.msra.mxu0 %v3551
      %3673 = vmatprep.subr.bf16.mxu0 0
      %3674 = vmatpush1.bf16.msra.mxu0 %v3552
      %3675 = vmatprep.subr.bf16.mxu0 0
      %3676 = vmatpush1.bf16.msra.mxu0 %v3553
      %3677 = vmatprep.subr.bf16.mxu0 0
      %3678 = vmatpush1.bf16.msra.mxu0 %v3554
      %3679 = vmatprep.subr.bf16.mxu0 0
      %3680 = vmatpush1.bf16.msra.mxu0 %v3555
      %3681 = vmatprep.subr.bf16.mxu0 0
      %3682 = vmatpush1.bf16.msra.mxu0 %v3556
      %3683 = vmatprep.subr.bf16.mxu0 0
      %3684 = vmatpush1.bf16.msra.mxu0 %v3557
      %3685 = vmatprep.mubr.bf16.mxu0 %v3617
      %3686 = vmatmul.mubr.bf16.gmra.mrb[0].mxu0 %v3616
      %v3687 = vpop.f32.mrb[0].mxu0
      %v3688 = vadd.f32 0.0, %v3687
      %v3689 = vpop.f32.mrb[0].mxu0
      %v3690 = vpop.f32.mrb[0].mxu0
      %v3691 = vadd.f32 0.0, %v3690
      %v3692 = vpop.f32.mrb[0].mxu0
      %3693 = vmatprep.mubr.bf16.mxu0 %v3620
      %3694 = vmatmul.mubr.bf16.gmra.mrb[0].mxu0 %v3619
      %v3695 = vpop.f32.mrb[0].mxu0
      %v3696 = vadd.f32 0.0, %v3695
      %v3697 = vpop.f32.mrb[0].mxu0
      %v3698 = vpop.f32.mrb[0].mxu0
      %v3699 = vadd.f32 0.0, %v3698
      %v3700 = vpop.f32.mrb[0].mxu0
      %3701 = vmatprep.mubr.bf16.mxu0 %v3623
      %3702 = vmatmul.mubr.bf16.gmra.mrb[0].mxu0 %v3622
      %v3703 = vpop.f32.mrb[0].mxu0
      %v3704 = vadd.f32 0.0, %v3703
      %v3705 = vpop.f32.mrb[0].mxu0
      %v3706 = vpop.f32.mrb[0].mxu0
      %v3707 = vadd.f32 0.0, %v3706
      %v3708 = vpop.f32.mrb[0].mxu0
      %3709 = vmatprep.mubr.bf16.mxu0 %v3626
      %3710 = vmatmul.mubr.bf16.gmra.mrb[0].mxu0 %v3625
      %v3711 = vpop.f32.mrb[0].mxu0
      %v3712 = vadd.f32 0.0, %v3711
      %v3713 = vpop.f32.mrb[0].mxu0
      %v3714 = vpop.f32.mrb[0].mxu0
      %v3715 = vadd.f32 0.0, %v3714
      %v3716 = vpop.f32.mrb[0].mxu0
      %3717 = vdwg.mxu0
      %3718 = vmatprep.subr.bf16.mxu0 0
      %3719 = vmatpush1.bf16.msra.mxu0 %v3558
      %3720 = vmatprep.subr.bf16.mxu0 0
      %3721 = vmatpush1.bf16.msra.mxu0 %v3651
      %3722 = vmatprep.subr.bf16.mxu0 0
      %3723 = vmatpush1.bf16.msra.mxu0 0
      %3724 = vmatprep.subr.bf16.mxu0 0
      %3725 = vmatpush1.bf16.msra.mxu0 0
      %3726 = vmatprep.subr.bf16.mxu0 0
      %3727 = vmatpush1.bf16.msra.mxu0 0
      %3728 = vmatprep.subr.bf16.mxu0 0
      %3729 = vmatpush1.bf16.msra.mxu0 0
      %3730 = vmatprep.subr.bf16.mxu0 0
      %3731 = vmatpush1.bf16.msra.mxu0 0
      %3732 = vmatprep.subr.bf16.mxu0 0
      %3733 = vmatpush1.bf16.msra.mxu0 0
      %3734 = vmatprep.subr.bf16.mxu0 0
      %3735 = vmatpush1.bf16.msra.mxu0 0
      %3736 = vmatprep.subr.bf16.mxu0 0
      %3737 = vmatpush1.bf16.msra.mxu0 0
      %3738 = vmatprep.subr.bf16.mxu0 0
      %3739 = vmatpush1.bf16.msra.mxu0 0
      %3740 = vmatprep.subr.bf16.mxu0 0
      %3741 = vmatpush1.bf16.msra.mxu0 0
      %3742 = vmatprep.subr.bf16.mxu0 0
      %3743 = vmatpush1.bf16.msra.mxu0 0
      %3744 = vmatprep.subr.bf16.mxu0 0
      %3745 = vmatpush1.bf16.msra.mxu0 0
      %3746 = vmatprep.subr.bf16.mxu0 0
      %3747 = vmatpush1.bf16.msra.mxu0 0
      %3748 = vmatprep.subr.bf16.mxu0 0
      %3749 = vmatpush1.bf16.msra.mxu0 0
      %3750 = vmatprep.mubr.bf16.mxu0 0
      %3751 = vmatmul.mubr.bf16.gmra.mrb[0].mxu0 %v3638
      %v3752 = vpop.f32.mrb[0].mxu0
      %v3753 = vadd.f32 %v3688, %v3752
      %v3754 = vpop.f32.mrb[0].mxu0
      %v3755 = vpop.f32.mrb[0].mxu0
      %v3756 = vadd.f32 %v3691, %v3755
      %v3757 = vpop.f32.mrb[0].mxu0
      %3758 = vmatprep.mubr.bf16.mxu0 0
      %3759 = vmatmul.mubr.bf16.gmra.mrb[0].mxu0 %v3641
      %v3760 = vpop.f32.mrb[0].mxu0
      %v3761 = vadd.f32 %v3696, %v3760
      %v3762 = vpop.f32.mrb[0].mxu0
      %v3763 = vpop.f32.mrb[0].mxu0
      %v3764 = vadd.f32 %v3699, %v3763
      %v3765 = vpop.f32.mrb[0].mxu0
      %3766 = vmatprep.mubr.bf16.mxu0 0
      %3767 = vmatmul.mubr.bf16.gmra.mrb[0].mxu0 %v3644
      %v3768 = vpop.f32.mrb[0].mxu0
      %v3769 = vadd.f32 %v3704, %v3768
      %v3770 = vpop.f32.mrb[0].mxu0
      %v3771 = vpop.f32.mrb[0].mxu0
      %v3772 = vadd.f32 %v3707, %v3771
      %v3773 = vpop.f32.mrb[0].mxu0
      %3774 = vmatprep.mubr.bf16.mxu0 0
      %3775 = vmatmul.mubr.bf16.gmra.mrb[0].mxu0 %v3647
      %v3776 = vpop.f32.mrb[0].mxu0
      %v3777 = vadd.f32 %v3712, %v3776
      %v3778 = vpop.f32.mrb[0].mxu0
      %v3779 = vpop.f32.mrb[0].mxu0
      %v3780 = vadd.f32 %v3715, %v3779
      %v3781 = vpop.f32.mrb[0].mxu0
      %3782 = vdwg.mxu0
      %v3783 = vpack.c.bf16 %v3756, %v3753
      %v3784 = vpack.c.bf16 %v3764, %v3761
      %v3785 = vpack.c.bf16 %v3772, %v3769
      %v3786 = vpack.c.bf16 %v3780, %v3777
      %v3788 = vlaneseq
      %v3789 = vshrl.u32 %v3788, 7
      %v3790 = vsub.s32 0, %v3789
      %v3791 = vrot.slane %v2485, %v3790
      %v3795 = vunpack.c.l.b16 %v2482
      %v3796 = vunpack.c.l.b16 %v2483
      %v3797 = vpack.c.b16 %v3796, %v3795
      %v3800 = vsel %vm2384, %v3783, 0
      %v3803 = vsel %vm2384, %v3784, 0
      %v3806 = vsel %vm2384, %v3785, 0
      %v3809 = vsel %vm2384, %v3786, 0
      %3811 = vmatprep.subr.bf16.mxu0 0
      %3812 = vmatpush1.bf16.msra.mxu0 %v3797
      %3813 = vmatprep.subr.bf16.mxu0 0
      %3814 = vmatpush1.bf16.msra.mxu0 0
      %3815 = vmatprep.subr.bf16.mxu0 0
      %3816 = vmatpush1.bf16.msra.mxu0 0
      %3817 = vmatprep.subr.bf16.mxu0 0
      %3818 = vmatpush1.bf16.msra.mxu0 0
      %3819 = vmatprep.subr.bf16.mxu0 0
      %3820 = vmatpush1.bf16.msra.mxu0 0
      %3821 = vmatprep.subr.bf16.mxu0 0
      %3822 = vmatpush1.bf16.msra.mxu0 0
      %3823 = vmatprep.subr.bf16.mxu0 0
      %3824 = vmatpush1.bf16.msra.mxu0 0
      %3825 = vmatprep.subr.bf16.mxu0 0
      %3826 = vmatpush1.bf16.msra.mxu0 0
      %3827 = vmatprep.subr.bf16.mxu0 0
      %3828 = vmatpush1.bf16.msra.mxu0 0
      %3829 = vmatprep.subr.bf16.mxu0 0
      %3830 = vmatpush1.bf16.msra.mxu0 0
      %3831 = vmatprep.subr.bf16.mxu0 0
      %3832 = vmatpush1.bf16.msra.mxu0 0
      %3833 = vmatprep.subr.bf16.mxu0 0
      %3834 = vmatpush1.bf16.msra.mxu0 0
      %3835 = vmatprep.subr.bf16.mxu0 0
      %3836 = vmatpush1.bf16.msra.mxu0 0
      %3837 = vmatprep.subr.bf16.mxu0 0
      %3838 = vmatpush1.bf16.msra.mxu0 0
      %3839 = vmatprep.subr.bf16.mxu0 0
      %3840 = vmatpush1.bf16.msra.mxu0 0
      %3841 = vmatprep.subr.bf16.mxu0 0
      %3842 = vmatpush1.bf16.msra.mxu0 0
      %3843 = vmatprep.mubr.bf16.mxu0 0
      %3844 = vmatmul.mubr.bf16.gmra.mrb[0].mxu0 %v3800
      %v3845 = vpop.f32.mrb[0].mxu0
      %v3846 = vadd.f32 %v3791, %v3845
      %v3847 = vpop.f32.mrb[0].mxu0
      %v3848 = vpop.f32.mrb[0].mxu0
      %v3849 = vadd.f32 %v3791, %v3848
      %v3850 = vpop.f32.mrb[0].mxu0
      %3851 = vmatprep.mubr.bf16.mxu0 0
      %3852 = vmatmul.mubr.bf16.gmra.mrb[0].mxu0 %v3803
      %v3853 = vpop.f32.mrb[0].mxu0
      %v3854 = vadd.f32 %v3791, %v3853
      %v3855 = vpop.f32.mrb[0].mxu0
      %v3856 = vpop.f32.mrb[0].mxu0
      %v3857 = vadd.f32 %v3791, %v3856
      %v3858 = vpop.f32.mrb[0].mxu0
      %3859 = vmatprep.mubr.bf16.mxu0 0
      %3860 = vmatmul.mubr.bf16.gmra.mrb[0].mxu0 %v3806
      %v3861 = vpop.f32.mrb[0].mxu0
      %v3862 = vadd.f32 %v3791, %v3861
      %v3863 = vpop.f32.mrb[0].mxu0
      %v3864 = vpop.f32.mrb[0].mxu0
      %v3865 = vadd.f32 %v3791, %v3864
      %v3866 = vpop.f32.mrb[0].mxu0
      %3867 = vmatprep.mubr.bf16.mxu0 0
      %3868 = vmatmul.mubr.bf16.gmra.mrb[0].mxu0 %v3809
      %v3869 = vpop.f32.mrb[0].mxu0
      %v3870 = vadd.f32 %v3791, %v3869
      %v3871 = vpop.f32.mrb[0].mxu0
      %v3872 = vpop.f32.mrb[0].mxu0
      %v3873 = vadd.f32 %v3791, %v3872
      %v3874 = vpop.f32.mrb[0].mxu0
      %3875 = vdwg.mxu0
      %vm3876 = vcmp.ge.f32.partialorder %v3846, 0.0
      %vm3877 = vcmp.ge.f32.partialorder %v3849, 0.0
      %vm3878 = vcmp.ge.f32.partialorder %v3854, 0.0
      %vm3879 = vcmp.ge.f32.partialorder %v3857, 0.0
      %vm3880 = vcmp.ge.f32.partialorder %v3862, 0.0
      %vm3881 = vcmp.ge.f32.partialorder %v3865, 0.0
      %vm3882 = vcmp.ge.f32.partialorder %v3870, 0.0
      %vm3883 = vcmp.ge.f32.partialorder %v3873, 0.0
      %v3884 = vmul.f32 %v3846, 0.1
      %v3885 = vmul.f32 %v3849, 0.1
      %v3886 = vmul.f32 %v3854, 0.1
      %v3887 = vmul.f32 %v3857, 0.1
      %v3888 = vmul.f32 %v3862, 0.1
      %v3889 = vmul.f32 %v3865, 0.1
      %v3890 = vmul.f32 %v3870, 0.1
      %v3891 = vmul.f32 %v3873, 0.1
      %v3892 = vsel %vm3876, %v3846, %v3884
      %v3893 = vsel %vm3877, %v3849, %v3885
      %v3894 = vsel %vm3878, %v3854, %v3886
      %v3895 = vsel %vm3879, %v3857, %v3887
      %v3896 = vsel %vm3880, %v3862, %v3888
      %v3897 = vsel %vm3881, %v3865, %v3889
      %v3898 = vsel %vm3882, %v3870, %v3890
      %v3899 = vsel %vm3883, %v3873, %v3891
      %3900 = vst.msk [vmem:[#allocation4] sm:$0xff] %vm575, 0.0
      %3901 = vst.msk [vmem:[#allocation4 + $0x8] sm:$0xff] %vm575, 0.0
      %3902 = vst.msk [vmem:[#allocation4 + $0x10] sm:$0xff] %vm575, 0.0
      %3903 = vst.msk [vmem:[#allocation4 + $0x18] sm:$0xff] %vm575, 0.0
      %3904 = vst.msk [vmem:[#allocation4 + $0x20] sm:$0xff] %vm575, 0.0
      %3905 = vst.msk [vmem:[#allocation4 + $0x28] sm:$0xff] %vm575, 0.0
      %3906 = vst.msk [vmem:[#allocation4 + $0x30] sm:$0xff] %vm575, 0.0
      %3907 = vst.msk [vmem:[#allocation4 + $0x38] sm:$0xff] %vm575, 0.0
      %3908 = vst.msk [vmem:[#allocation4 + $0x40] sm:$0xff] %vm575, 0.0
      %3909 = vst.msk [vmem:[#allocation4 + $0x48] sm:$0xff] %vm575, 0.0
      %3910 = vst.msk [vmem:[#allocation4 + $0x50] sm:$0xff] %vm575, 0.0
      %3911 = vst.msk [vmem:[#allocation4 + $0x58] sm:$0xff] %vm575, 0.0
      %vm3912 = vcmask 257024
      %3913 = vst.msk [vmem:[#allocation4 + $0x60] sm:$0xf] %vm3912, 0.0
      %3914 = vst.msk [vmem:[#allocation4 + $0xb] sm:$0xff] %vm575, %v3892
      %3915 = vst.msk [vmem:[#allocation4 + $0x15] sm:$0xff] %vm575, %v3893
      %3916 = vst.msk [vmem:[#allocation4 + $0x1f] sm:$0xff] %vm575, %v3894
      %3917 = vst.msk [vmem:[#allocation4 + $0x29] sm:$0xff] %vm575, %v3895
      %3918 = vst.msk [vmem:[#allocation4 + $0x33] sm:$0xff] %vm575, %v3896
      %3919 = vst.msk [vmem:[#allocation4 + $0x3d] sm:$0xff] %vm575, %v3897
      %3920 = vst.msk [vmem:[#allocation4 + $0x47] sm:$0xff] %vm575, %v3898
      %3921 = vst.msk [vmem:[#allocation4 + $0x51] sm:$0xff] %vm575, %v3899
      %s3922 = scalar_lea.vmem %s3, 64
      %v3923 = vld [vmem:[%s3922] sm:$0xff]
      %v3924 = vld [vmem:[%s3922 + $0x10] sm:$0x1]
      %s3925 = scalar_lea.vmem %s4, 4
      %v3926 = vld [vmem:[%s3925] sm:$0x1]
      %s3927 = scalar_lea.vmem %s5, 512
      %v3928 = vld [vmem:[%s3927] sm:$0xf]
      %v3929 = vld [vmem:[%s3927 + $0x8] sm:$0xf]
      %v3930 = vld [vmem:[%s3927 + $0x10] sm:$0xf]
      %v3931 = vld [vmem:[%s3927 + $0x18] sm:$0xf]
      %s3932 = scalar_lea.vmem %s6, 4
      %v3933 = vld [vmem:[%s3932] sm:$0x1]
      %v3934 = vld [vmem:[#allocation4] sm:$0xff]
      %v3935 = vld [vmem:[#allocation4 + $0x8] sm:$0xff]
      %v3936 = vld [vmem:[#allocation4 + $0x10] sm:$0xff]
      %v3937 = vld [vmem:[#allocation4 + $0x18] sm:$0xff]
      %v3938 = vld [vmem:[#allocation4 + $0x20] sm:$0xff]
      %v3939 = vld [vmem:[#allocation4 + $0x28] sm:$0xff]
      %v3940 = vld [vmem:[#allocation4 + $0x30] sm:$0xff]
      %v3941 = vld [vmem:[#allocation4 + $0x38] sm:$0xff]
      %v3942 = vld [vmem:[#allocation4 + $0x40] sm:$0xff]
      %v3943 = vld [vmem:[#allocation4 + $0x48] sm:$0x3f]
      %v3944 = vlaneseq
      %v3945 = vshrl.u32 %v3944, 7
      %v3946 = vsub.s32 0, %v3945
      %v3947 = vrot.slane %v3923, %v3946
      %v3948 = vmul.f32 %v3934, %v3947
      %v3949 = vmul.f32 %v3935, %v3947
      %v3950 = vmul.f32 %v3936, %v3947
      %v3951 = vmul.f32 %v3937, %v3947
      %v3952 = vmul.f32 %v3938, %v3947
      %v3953 = vmul.f32 %v3939, %v3947
      %v3954 = vmul.f32 %v3940, %v3947
      %v3955 = vmul.f32 %v3941, %v3947
      %v3956 = vmul.f32 %v3942, %v3947
      %v3957 = vmul.f32 %v3943, %v3947
      %v3958 = vld [vmem:[#allocation4 + $0x1] sm:$0xff]
      %v3959 = vld [vmem:[#allocation4 + $0x9] sm:$0xff]
      %v3960 = vld [vmem:[#allocation4 + $0x11] sm:$0xff]
      %v3961 = vld [vmem:[#allocation4 + $0x19] sm:$0xff]
      %v3962 = vld [vmem:[#allocation4 + $0x21] sm:$0xff]
      %v3963 = vld [vmem:[#allocation4 + $0x29] sm:$0xff]
      %v3964 = vld [vmem:[#allocation4 + $0x31] sm:$0xff]
      %v3965 = vld [vmem:[#allocation4 + $0x39] sm:$0xff]
      %v3966 = vld [vmem:[#allocation4 + $0x41] sm:$0xff]
      %v3967 = vld [vmem:[#allocation4 + $0x49] sm:$0x3f]
      %v3968 = vlaneseq
      %v3969 = vshrl.u32 %v3968, 7
      %v3970 = vsub.s32 1, %v3969
      %v3971 = vrot.slane %v3923, %v3970
      %v3972 = vmul.f32 %v3958, %v3971
      %v3973 = vmul.f32 %v3959, %v3971
      %v3974 = vmul.f32 %v3960, %v3971
      %v3975 = vmul.f32 %v3961, %v3971
      %v3976 = vmul.f32 %v3962, %v3971
      %v3977 = vmul.f32 %v3963, %v3971
      %v3978 = vmul.f32 %v3964, %v3971
      %v3979 = vmul.f32 %v3965, %v3971
      %v3980 = vmul.f32 %v3966, %v3971
      %v3981 = vmul.f32 %v3967, %v3971
      %v3982 = vadd.f32 %v3948, %v3972
      %v3983 = vadd.f32 %v3949, %v3973
      %v3984 = vadd.f32 %v3950, %v3974
      %v3985 = vadd.f32 %v3951, %v3975
      %v3986 = vadd.f32 %v3952, %v3976
      %v3987 = vadd.f32 %v3953, %v3977
      %v3988 = vadd.f32 %v3954, %v3978
      %v3989 = vadd.f32 %v3955, %v3979
      %v3990 = vadd.f32 %v3956, %v3980
      %v3991 = vadd.f32 %v3957, %v3981
      %v3992 = vld [vmem:[#allocation4 + $0x2] sm:$0xff]
      %v3993 = vld [vmem:[#allocation4 + $0xa] sm:$0xff]
      %v3994 = vld [vmem:[#allocation4 + $0x12] sm:$0xff]
      %v3995 = vld [vmem:[#allocation4 + $0x1a] sm:$0xff]
      %v3996 = vld [vmem:[#allocation4 + $0x22] sm:$0xff]
      %v3997 = vld [vmem:[#allocation4 + $0x2a] sm:$0xff]
      %v3998 = vld [vmem:[#allocation4 + $0x32] sm:$0xff]
      %v3999 = vld [vmem:[#allocation4 + $0x3a] sm:$0xff]
      %v4000 = vld [vmem:[#allocation4 + $0x42] sm:$0xff]
      %v4001 = vld [vmem:[#allocation4 + $0x4a] sm:$0x3f]
      %v4002 = vlaneseq
      %v4003 = vshrl.u32 %v4002, 7
      %v4004 = vsub.s32 2, %v4003
      %v4005 = vrot.slane %v3923, %v4004
      %v4006 = vmul.f32 %v3992, %v4005
      %v4007 = vmul.f32 %v3993, %v4005
      %v4008 = vmul.f32 %v3994, %v4005
      %v4009 = vmul.f32 %v3995, %v4005
      %v4010 = vmul.f32 %v3996, %v4005
      %v4011 = vmul.f32 %v3997, %v4005
      %v4012 = vmul.f32 %v3998, %v4005
      %v4013 = vmul.f32 %v3999, %v4005
      %v4014 = vmul.f32 %v4000, %v4005
      %v4015 = vmul.f32 %v4001, %v4005
      %v4016 = vadd.f32 %v3982, %v4006
      %v4017 = vadd.f32 %v3983, %v4007
      %v4018 = vadd.f32 %v3984, %v4008
      %v4019 = vadd.f32 %v3985, %v4009
      %v4020 = vadd.f32 %v3986, %v4010
      %v4021 = vadd.f32 %v3987, %v4011
      %v4022 = vadd.f32 %v3988, %v4012
      %v4023 = vadd.f32 %v3989, %v4013
      %v4024 = vadd.f32 %v3990, %v4014
      %v4025 = vadd.f32 %v3991, %v4015
      %v4026 = vld [vmem:[#allocation4 + $0x4a] sm:$0xff]
      %v4027 = vld [vmem:[#allocation4 + $0x52] sm:$0x3f]
      %v4028 = vlaneseq
      %v4029 = vshrl.u32 %v4028, 7
      %v4030 = vsub.s32 3, %v4029
      %v4031 = vrot.slane %v3923, %v4030
      %v4032 = vmul.f32 %v3993, %v4031
      %v4033 = vmul.f32 %v3994, %v4031
      %v4034 = vmul.f32 %v3995, %v4031
      %v4035 = vmul.f32 %v3996, %v4031
      %v4036 = vmul.f32 %v3997, %v4031
      %v4037 = vmul.f32 %v3998, %v4031
      %v4038 = vmul.f32 %v3999, %v4031
      %v4039 = vmul.f32 %v4000, %v4031
      %v4040 = vmul.f32 %v4026, %v4031
      %v4041 = vmul.f32 %v4027, %v4031
      %v4042 = vadd.f32 %v4016, %v4032
      %v4043 = vadd.f32 %v4017, %v4033
      %v4044 = vadd.f32 %v4018, %v4034
      %v4045 = vadd.f32 %v4019, %v4035
      %v4046 = vadd.f32 %v4020, %v4036
      %v4047 = vadd.f32 %v4021, %v4037
      %v4048 = vadd.f32 %v4022, %v4038
      %v4049 = vadd.f32 %v4023, %v4039
      %v4050 = vadd.f32 %v4024, %v4040
      %v4051 = vadd.f32 %v4025, %v4041
      %v4052 = vld [vmem:[#allocation4 + $0xb] sm:$0xff]
      %v4053 = vld [vmem:[#allocation4 + $0x13] sm:$0xff]
      %v4054 = vld [vmem:[#allocation4 + $0x1b] sm:$0xff]
      %v4055 = vld [vmem:[#allocation4 + $0x23] sm:$0xff]
      %v4056 = vld [vmem:[#allocation4 + $0x2b] sm:$0xff]
      %v4057 = vld [vmem:[#allocation4 + $0x33] sm:$0xff]
      %v4058 = vld [vmem:[#allocation4 + $0x3b] sm:$0xff]
      %v4059 = vld [vmem:[#allocation4 + $0x43] sm:$0xff]
      %v4060 = vld [vmem:[#allocation4 + $0x4b] sm:$0xff]
      %v4061 = vld [vmem:[#allocation4 + $0x53] sm:$0x3f]
      %v4062 = vlaneseq
      %v4063 = vshrl.u32 %v4062, 7
      %v4064 = vsub.s32 4, %v4063
      %v4065 = vrot.slane %v3923, %v4064
      %v4066 = vmul.f32 %v4052, %v4065
      %v4067 = vmul.f32 %v4053, %v4065
      %v4068 = vmul.f32 %v4054, %v4065
      %v4069 = vmul.f32 %v4055, %v4065
      %v4070 = vmul.f32 %v4056, %v4065
      %v4071 = vmul.f32 %v4057, %v4065
      %v4072 = vmul.f32 %v4058, %v4065
      %v4073 = vmul.f32 %v4059, %v4065
      %v4074 = vmul.f32 %v4060, %v4065
      %v4075 = vmul.f32 %v4061, %v4065
      %v4076 = vadd.f32 %v4042, %v4066
      %v4077 = vadd.f32 %v4043, %v4067
      %v4078 = vadd.f32 %v4044, %v4068
      %v4079 = vadd.f32 %v4045, %v4069
      %v4080 = vadd.f32 %v4046, %v4070
      %v4081 = vadd.f32 %v4047, %v4071
      %v4082 = vadd.f32 %v4048, %v4072
      %v4083 = vadd.f32 %v4049, %v4073
      %v4084 = vadd.f32 %v4050, %v4074
      %v4085 = vadd.f32 %v4051, %v4075
      %v4086 = vld [vmem:[#allocation4 + $0xc] sm:$0xff]
      %v4087 = vld [vmem:[#allocation4 + $0x14] sm:$0xff]
      %v4088 = vld [vmem:[#allocation4 + $0x1c] sm:$0xff]
      %v4089 = vld [vmem:[#allocation4 + $0x24] sm:$0xff]
      %v4090 = vld [vmem:[#allocation4 + $0x2c] sm:$0xff]
      %v4091 = vld [vmem:[#allocation4 + $0x34] sm:$0xff]
      %v4092 = vld [vmem:[#allocation4 + $0x3c] sm:$0xff]
      %v4093 = vld [vmem:[#allocation4 + $0x44] sm:$0xff]
      %v4094 = vld [vmem:[#allocation4 + $0x4c] sm:$0xff]
      %v4095 = vld [vmem:[#allocation4 + $0x54] sm:$0x3f]
      %v4096 = vlaneseq
      %v4097 = vshrl.u32 %v4096, 7
      %v4098 = vsub.s32 5, %v4097
      %v4099 = vrot.slane %v3923, %v4098
      %v4100 = vmul.f32 %v4086, %v4099
      %v4101 = vmul.f32 %v4087, %v4099
      %v4102 = vmul.f32 %v4088, %v4099
      %v4103 = vmul.f32 %v4089, %v4099
      %v4104 = vmul.f32 %v4090, %v4099
      %v4105 = vmul.f32 %v4091, %v4099
      %v4106 = vmul.f32 %v4092, %v4099
      %v4107 = vmul.f32 %v4093, %v4099
      %v4108 = vmul.f32 %v4094, %v4099
      %v4109 = vmul.f32 %v4095, %v4099
      %v4110 = vadd.f32 %v4076, %v4100
      %v4111 = vadd.f32 %v4077, %v4101
      %v4112 = vadd.f32 %v4078, %v4102
      %v4113 = vadd.f32 %v4079, %v4103
      %v4114 = vadd.f32 %v4080, %v4104
      %v4115 = vadd.f32 %v4081, %v4105
      %v4116 = vadd.f32 %v4082, %v4106
      %v4117 = vadd.f32 %v4083, %v4107
      %v4118 = vadd.f32 %v4084, %v4108
      %v4119 = vadd.f32 %v4085, %v4109
      %v4120 = vld [vmem:[#allocation4 + $0x54] sm:$0xff]
      %v4121 = vld [vmem:[#allocation4 + $0x5c] sm:$0x3f]
      %v4122 = vlaneseq
      %v4123 = vshrl.u32 %v4122, 7
      %v4124 = vsub.s32 6, %v4123
      %v4125 = vrot.slane %v3923, %v4124
      %v4126 = vmul.f32 %v4087, %v4125
      %v4127 = vmul.f32 %v4088, %v4125
      %v4128 = vmul.f32 %v4089, %v4125
      %v4129 = vmul.f32 %v4090, %v4125
      %v4130 = vmul.f32 %v4091, %v4125
      %v4131 = vmul.f32 %v4092, %v4125
      %v4132 = vmul.f32 %v4093, %v4125
      %v4133 = vmul.f32 %v4094, %v4125
      %v4134 = vmul.f32 %v4120, %v4125
      %v4135 = vmul.f32 %v4121, %v4125
      %v4136 = vadd.f32 %v4110, %v4126
      %v4137 = vadd.f32 %v4111, %v4127
      %v4138 = vadd.f32 %v4112, %v4128
      %v4139 = vadd.f32 %v4113, %v4129
      %v4140 = vadd.f32 %v4114, %v4130
      %v4141 = vadd.f32 %v4115, %v4131
      %v4142 = vadd.f32 %v4116, %v4132
      %v4143 = vadd.f32 %v4117, %v4133
      %v4144 = vadd.f32 %v4118, %v4134
      %v4145 = vadd.f32 %v4119, %v4135
      %v4146 = vld [vmem:[#allocation4 + $0x15] sm:$0xff]
      %v4147 = vld [vmem:[#allocation4 + $0x1d] sm:$0xff]
      %v4148 = vld [vmem:[#allocation4 + $0x25] sm:$0xff]
      %v4149 = vld [vmem:[#allocation4 + $0x2d] sm:$0xff]
      %v4150 = vld [vmem:[#allocation4 + $0x35] sm:$0xff]
      %v4151 = vld [vmem:[#allocation4 + $0x3d] sm:$0xff]
      %v4152 = vld [vmem:[#allocation4 + $0x45] sm:$0xff]
      %v4153 = vld [vmem:[#allocation4 + $0x4d] sm:$0xff]
      %v4154 = vld [vmem:[#allocation4 + $0x55] sm:$0xff]
      %v4155 = vld [vmem:[#allocation4 + $0x5d] sm:$0x3f]
      %v4156 = vlaneseq
      %v4157 = vshrl.u32 %v4156, 7
      %v4158 = vsub.s32 7, %v4157
      %v4159 = vrot.slane %v3923, %v4158
      %v4160 = vmul.f32 %v4146, %v4159
      %v4161 = vmul.f32 %v4147, %v4159
      %v4162 = vmul.f32 %v4148, %v4159
      %v4163 = vmul.f32 %v4149, %v4159
      %v4164 = vmul.f32 %v4150, %v4159
      %v4165 = vmul.f32 %v4151, %v4159
      %v4166 = vmul.f32 %v4152, %v4159
      %v4167 = vmul.f32 %v4153, %v4159
      %v4168 = vmul.f32 %v4154, %v4159
      %v4169 = vmul.f32 %v4155, %v4159
      %v4170 = vadd.f32 %v4136, %v4160
      %v4171 = vadd.f32 %v4137, %v4161
      %v4172 = vadd.f32 %v4138, %v4162
      %v4173 = vadd.f32 %v4139, %v4163
      %v4174 = vadd.f32 %v4140, %v4164
      %v4175 = vadd.f32 %v4141, %v4165
      %v4176 = vadd.f32 %v4142, %v4166
      %v4177 = vadd.f32 %v4143, %v4167
      %v4178 = vadd.f32 %v4144, %v4168
      %v4179 = vadd.f32 %v4145, %v4169
      %v4180 = vld [vmem:[#allocation4 + $0x16] sm:$0xff]
      %v4181 = vld [vmem:[#allocation4 + $0x1e] sm:$0xff]
      %v4182 = vld [vmem:[#allocation4 + $0x26] sm:$0xff]
      %v4183 = vld [vmem:[#allocation4 + $0x2e] sm:$0xff]
      %v4184 = vld [vmem:[#allocation4 + $0x36] sm:$0xff]
      %v4185 = vld [vmem:[#allocation4 + $0x3e] sm:$0xff]
      %v4186 = vld [vmem:[#allocation4 + $0x46] sm:$0xff]
      %v4187 = vld [vmem:[#allocation4 + $0x4e] sm:$0xff]
      %v4188 = vld [vmem:[#allocation4 + $0x56] sm:$0xff]
      %v4189 = vld [vmem:[#allocation4 + $0x5e] sm:$0x3f]
      %v4190 = vlaneseq
      %v4191 = vshrl.u32 %v4190, 7
      %v4192 = vsub.s32 0, %v4191
      %v4193 = vrot.slane %v3924, %v4192
      %v4194 = vmul.f32 %v4180, %v4193
      %v4195 = vmul.f32 %v4181, %v4193
      %v4196 = vmul.f32 %v4182, %v4193
      %v4197 = vmul.f32 %v4183, %v4193
      %v4198 = vmul.f32 %v4184, %v4193
      %v4199 = vmul.f32 %v4185, %v4193
      %v4200 = vmul.f32 %v4186, %v4193
      %v4201 = vmul.f32 %v4187, %v4193
      %v4202 = vmul.f32 %v4188, %v4193
      %v4203 = vmul.f32 %v4189, %v4193
      %v4204 = vadd.f32 %v4170, %v4194
      %v4205 = vadd.f32 %v4171, %v4195
      %v4206 = vadd.f32 %v4172, %v4196
      %v4207 = vadd.f32 %v4173, %v4197
      %v4208 = vadd.f32 %v4174, %v4198
      %v4209 = vadd.f32 %v4175, %v4199
      %v4210 = vadd.f32 %v4176, %v4200
      %v4211 = vadd.f32 %v4177, %v4201
      %v4212 = vadd.f32 %v4178, %v4202
      %v4213 = vadd.f32 %v4179, %v4203
      %v4215 = vlaneseq
      %v4216 = vshrl.u32 %v4215, 7
      %v4217 = vsub.s32 0, %v4216
      %v4218 = vrot.slane %v3926, %v4217
      %v4220 = vadd.f32 %v4204, %v4218
      %v4221 = vadd.f32 %v4205, %v4218
      %v4222 = vadd.f32 %v4206, %v4218
      %v4223 = vadd.f32 %v4207, %v4218
      %v4224 = vadd.f32 %v4208, %v4218
      %v4225 = vadd.f32 %v4209, %v4218
      %v4226 = vadd.f32 %v4210, %v4218
      %v4227 = vadd.f32 %v4211, %v4218
      %v4228 = vadd.f32 %v4212, %v4218
      %v4229 = vadd.f32 %v4213, %v4218
      %vm4230 = vcmp.ge.f32.partialorder %v4220, 0.0
      %vm4231 = vcmp.ge.f32.partialorder %v4221, 0.0
      %vm4232 = vcmp.ge.f32.partialorder %v4222, 0.0
      %vm4233 = vcmp.ge.f32.partialorder %v4223, 0.0
      %vm4234 = vcmp.ge.f32.partialorder %v4224, 0.0
      %vm4235 = vcmp.ge.f32.partialorder %v4225, 0.0
      %vm4236 = vcmp.ge.f32.partialorder %v4226, 0.0
      %vm4237 = vcmp.ge.f32.partialorder %v4227, 0.0
      %vm4238 = vcmp.ge.f32.partialorder %v4228, 0.0
      %vm4239 = vcmp.ge.f32.partialorder %v4229, 0.0
      %v4240 = vmul.f32 %v4220, 0.1
      %v4241 = vmul.f32 %v4221, 0.1
      %v4242 = vmul.f32 %v4222, 0.1
      %v4243 = vmul.f32 %v4223, 0.1
      %v4244 = vmul.f32 %v4224, 0.1
      %v4245 = vmul.f32 %v4225, 0.1
      %v4246 = vmul.f32 %v4226, 0.1
      %v4247 = vmul.f32 %v4227, 0.1
      %v4248 = vmul.f32 %v4228, 0.1
      %v4249 = vmul.f32 %v4229, 0.1
      %v4250 = vsel %vm4230, %v4220, %v4240
      %v4251 = vsel %vm4231, %v4221, %v4241
      %v4252 = vsel %vm4232, %v4222, %v4242
      %v4253 = vsel %vm4233, %v4223, %v4243
      %v4254 = vsel %vm4234, %v4224, %v4244
      %v4255 = vsel %vm4235, %v4225, %v4245
      %v4256 = vsel %vm4236, %v4226, %v4246
      %v4257 = vsel %vm4237, %v4227, %v4247
      %v4258 = vsel %vm4238, %v4228, %v4248
      %v4259 = vsel %vm4239, %v4229, %v4249
      %v4260 = vpack.c.bf16 %v4251, %v4250
      %v4261 = vpack.c.bf16 %v4253, %v4252
      %v4262 = vpack.c.bf16 %v4255, %v4254
      %v4263 = vpack.c.bf16 %v4257, %v4256
      %v4264 = vpack.c.bf16 %v4259, %v4258
      %v4266 = vlaneseq
      %v4267 = vshrl.u32 %v4266, 7
      %v4268 = vsub.s32 0, %v4267
      %v4269 = vrot.slane %v3933, %v4268
      %v4275 = vunpack.c.l.b16 %v3928
      %v4276 = vunpack.c.l.b16 %v3929
      %v4277 = vunpack.c.l.b16 %v3930
      %v4278 = vunpack.c.l.b16 %v3931
      %v4279 = vpack.c.b16 %v4276, %v4275
      %v4280 = vpack.c.b16 %v4278, %v4277
      %v4284 = vsel %vm575, %v4260, 0
      %v4287 = vsel %vm575, %v4261, 0
      %v4290 = vsel %vm575, %v4262, 0
      %v4293 = vsel %vm575, %v4263, 0
      %v4296 = vsel %vm575, %v4264, 0
      %4298 = vmatprep.subr.bf16.mxu0 0
      %4299 = vmatpush1.bf16.msra.mxu0 %v4279
      %4300 = vmatprep.subr.bf16.mxu0 0
      %4301 = vmatpush1.bf16.msra.mxu0 %v4280
      %4302 = vmatprep.subr.bf16.mxu0 0
      %4303 = vmatpush1.bf16.msra.mxu0 0
      %4304 = vmatprep.subr.bf16.mxu0 0
      %4305 = vmatpush1.bf16.msra.mxu0 0
      %4306 = vmatprep.subr.bf16.mxu0 0
      %4307 = vmatpush1.bf16.msra.mxu0 0
      %4308 = vmatprep.subr.bf16.mxu0 0
      %4309 = vmatpush1.bf16.msra.mxu0 0
      %4310 = vmatprep.subr.bf16.mxu0 0
      %4311 = vmatpush1.bf16.msra.mxu0 0
      %4312 = vmatprep.subr.bf16.mxu0 0
      %4313 = vmatpush1.bf16.msra.mxu0 0
      %4314 = vmatprep.subr.bf16.mxu0 0
      %4315 = vmatpush1.bf16.msra.mxu0 0
      %4316 = vmatprep.subr.bf16.mxu0 0
      %4317 = vmatpush1.bf16.msra.mxu0 0
      %4318 = vmatprep.subr.bf16.mxu0 0
      %4319 = vmatpush1.bf16.msra.mxu0 0
      %4320 = vmatprep.subr.bf16.mxu0 0
      %4321 = vmatpush1.bf16.msra.mxu0 0
      %4322 = vmatprep.subr.bf16.mxu0 0
      %4323 = vmatpush1.bf16.msra.mxu0 0
      %4324 = vmatprep.subr.bf16.mxu0 0
      %4325 = vmatpush1.bf16.msra.mxu0 0
      %4326 = vmatprep.subr.bf16.mxu0 0
      %4327 = vmatpush1.bf16.msra.mxu0 0
      %4328 = vmatprep.subr.bf16.mxu0 0
      %4329 = vmatpush1.bf16.msra.mxu0 0
      %4330 = vmatprep.mubr.bf16.mxu0 0
      %4331 = vmatmul.mubr.bf16.gmra.mrb[0].mxu0 %v4284
      %v4332 = vpop.f32.mrb[0].mxu0
      %v4333 = vadd.f32 %v4269, %v4332
      %v4334 = vpop.f32.mrb[0].mxu0
      %v4335 = vpop.f32.mrb[0].mxu0
      %v4336 = vadd.f32 %v4269, %v4335
      %v4337 = vpop.f32.mrb[0].mxu0
      %4338 = vmatprep.mubr.bf16.mxu0 0
      %4339 = vmatmul.mubr.bf16.gmra.mrb[0].mxu0 %v4287
      %v4340 = vpop.f32.mrb[0].mxu0
      %v4341 = vadd.f32 %v4269, %v4340
      %v4342 = vpop.f32.mrb[0].mxu0
      %v4343 = vpop.f32.mrb[0].mxu0
      %v4344 = vadd.f32 %v4269, %v4343
      %v4345 = vpop.f32.mrb[0].mxu0
      %4346 = vmatprep.mubr.bf16.mxu0 0
      %4347 = vmatmul.mubr.bf16.gmra.mrb[0].mxu0 %v4290
      %v4348 = vpop.f32.mrb[0].mxu0
      %v4349 = vadd.f32 %v4269, %v4348
      %v4350 = vpop.f32.mrb[0].mxu0
      %v4351 = vpop.f32.mrb[0].mxu0
      %v4352 = vadd.f32 %v4269, %v4351
      %v4353 = vpop.f32.mrb[0].mxu0
      %4354 = vmatprep.mubr.bf16.mxu0 0
      %4355 = vmatmul.mubr.bf16.gmra.mrb[0].mxu0 %v4293
      %v4356 = vpop.f32.mrb[0].mxu0
      %v4357 = vadd.f32 %v4269, %v4356
      %v4358 = vpop.f32.mrb[0].mxu0
      %v4359 = vpop.f32.mrb[0].mxu0
      %v4360 = vadd.f32 %v4269, %v4359
      %v4361 = vpop.f32.mrb[0].mxu0
      %4362 = vmatprep.mubr.bf16.mxu0 0
      %4363 = vmatmul.mubr.bf16.gmra.mrb[0].mxu0 %v4296
      %v4364 = vpop.f32.mrb[0].mxu0
      %v4365 = vadd.f32 %v4269, %v4364
      %v4366 = vpop.f32.mrb[0].mxu0
      %v4367 = vpop.f32.mrb[0].mxu0
      %v4368 = vadd.f32 %v4269, %v4367
      %v4369 = vpop.f32.mrb[0].mxu0
      %4370 = vdwg.mxu0
      %vm4371 = vcmp.ge.f32.partialorder %v4333, 0.0
      %vm4372 = vcmp.ge.f32.partialorder %v4336, 0.0
      %vm4373 = vcmp.ge.f32.partialorder %v4341, 0.0
      %vm4374 = vcmp.ge.f32.partialorder %v4344, 0.0
      %vm4375 = vcmp.ge.f32.partialorder %v4349, 0.0
      %vm4376 = vcmp.ge.f32.partialorder %v4352, 0.0
      %vm4377 = vcmp.ge.f32.partialorder %v4357, 0.0
      %vm4378 = vcmp.ge.f32.partialorder %v4360, 0.0
      %vm4379 = vcmp.ge.f32.partialorder %v4365, 0.0
      %vm4380 = vcmp.ge.f32.partialorder %v4368, 0.0
      %v4381 = vmul.f32 %v4333, 0.1
      %v4382 = vmul.f32 %v4336, 0.1
      %v4383 = vmul.f32 %v4341, 0.1
      %v4384 = vmul.f32 %v4344, 0.1
      %v4385 = vmul.f32 %v4349, 0.1
      %v4386 = vmul.f32 %v4352, 0.1
      %v4387 = vmul.f32 %v4357, 0.1
      %v4388 = vmul.f32 %v4360, 0.1
      %v4389 = vmul.f32 %v4365, 0.1
      %v4390 = vmul.f32 %v4368, 0.1
      %v4391 = vsel %vm4371, %v4333, %v4381
      %v4392 = vsel %vm4372, %v4336, %v4382
      %v4393 = vsel %vm4373, %v4341, %v4383
      %v4394 = vsel %vm4374, %v4344, %v4384
      %v4395 = vsel %vm4375, %v4349, %v4385
      %v4396 = vsel %vm4376, %v4352, %v4386
      %v4397 = vsel %vm4377, %v4357, %v4387
      %v4398 = vsel %vm4378, %v4360, %v4388
      %v4399 = vsel %vm4379, %v4365, %v4389
      %v4400 = vsel %vm4380, %v4368, %v4390
      %4401 = vst.msk [vmem:[#allocation5] sm:$0xff] %vm575, 0.0
      %4402 = vst.msk [vmem:[#allocation5 + $0x8] sm:$0xff] %vm575, 0.0
      %4403 = vst.msk [vmem:[#allocation5 + $0x10] sm:$0xff] %vm575, 0.0
      %4404 = vst.msk [vmem:[#allocation5 + $0x18] sm:$0xff] %vm575, 0.0
      %4405 = vst.msk [vmem:[#allocation5 + $0x20] sm:$0xff] %vm575, 0.0
      %4406 = vst.msk [vmem:[#allocation5 + $0x28] sm:$0xff] %vm575, 0.0
      %4407 = vst.msk [vmem:[#allocation5 + $0x30] sm:$0xff] %vm575, 0.0
      %4408 = vst.msk [vmem:[#allocation5 + $0x38] sm:$0xff] %vm575, 0.0
      %4409 = vst.msk [vmem:[#allocation5 + $0x40] sm:$0xff] %vm575, 0.0
      %4410 = vst.msk [vmem:[#allocation5 + $0x48] sm:$0xff] %vm575, 0.0
      %4411 = vst.msk [vmem:[#allocation5 + $0x50] sm:$0xff] %vm575, 0.0
      %4412 = vst.msk [vmem:[#allocation5 + $0x58] sm:$0xff] %vm575, 0.0
      %4413 = vst.msk [vmem:[#allocation5 + $0x60] sm:$0xf] %vm3912, 0.0
      %4414 = vst.msk [vmem:[#allocation5 + $0xb] sm:$0xff] %vm575, %v4391
      %vm4415 = vcmask 261122
      %4416 = vst.msk [vmem:[#allocation5 + $0x13] sm:$0xfc] %vm4415, %v4392
      %vm4417 = vcmask 254976
      %4418 = vst.msk [vmem:[#allocation5 + $0x1b] sm:$0x3] %vm4417, %v4393
      %vm4419 = vcmask 261124
      %4420 = vst.msk [vmem:[#allocation5 + $0x1b] sm:$0xf0] %vm4419, %v4393
      %4421 = vst.msk [vmem:[#allocation5 + $0x23] sm:$0xf] %vm3912, %v4394
      %vm4422 = vcmask 261126
      %4423 = vst.msk [vmem:[#allocation5 + $0x23] sm:$0xc0] %vm4422, %v4394
      %vm4424 = vcmask 259072
      %4425 = vst.msk [vmem:[#allocation5 + $0x2b] sm:$0x3f] %vm4424, %v4395
      %4426 = vst.msk [vmem:[#allocation5 + $0x33] sm:$0xff] %vm575, %v4396
      %4427 = vst.msk [vmem:[#allocation5 + $0x3b] sm:$0xfc] %vm4415, %v4397
      %4428 = vst.msk [vmem:[#allocation5 + $0x43] sm:$0x3] %vm4417, %v4398
      %4429 = vst.msk [vmem:[#allocation5 + $0x43] sm:$0xf0] %vm4419, %v4398
      %4430 = vst.msk [vmem:[#allocation5 + $0x4b] sm:$0xf] %vm3912, %v4399
      %4431 = vst.msk [vmem:[#allocation5 + $0x4b] sm:$0xc0] %vm4422, %v4399
      %4432 = vst.msk [vmem:[#allocation5 + $0x53] sm:$0x3f] %vm4424, %v4400
      %s4433 = scalar_lea.vmem %s3, 96
      %v4434 = vld [vmem:[%s4433] sm:$0xff]
      %v4435 = vld [vmem:[%s4433 + $0x10] sm:$0x1]
      %s4436 = scalar_lea.vmem %s4, 6
      %v4437 = vld [vmem:[%s4436] sm:$0x1]
      %s4438 = scalar_lea.vmem %s5, 768
      %v4439 = vld [vmem:[%s4438] sm:$0xf]
      %v4440 = vld [vmem:[%s4438 + $0x8] sm:$0xf]
      %v4441 = vld [vmem:[%s4438 + $0x10] sm:$0xf]
      %v4442 = vld [vmem:[%s4438 + $0x18] sm:$0xf]
      %s4443 = scalar_lea.vmem %s6, 6
      %v4444 = vld [vmem:[%s4443] sm:$0x1]
      %v4445 = vld [vmem:[#allocation5] sm:$0xff]
      %v4446 = vld [vmem:[#allocation5 + $0x8] sm:$0xff]
      %v4447 = vld [vmem:[#allocation5 + $0x10] sm:$0xff]
      %v4448 = vld [vmem:[#allocation5 + $0x18] sm:$0xff]
      %v4449 = vld [vmem:[#allocation5 + $0x20] sm:$0xff]
      %v4450 = vld [vmem:[#allocation5 + $0x28] sm:$0xff]
      %v4451 = vld [vmem:[#allocation5 + $0x30] sm:$0xff]
      %v4452 = vld [vmem:[#allocation5 + $0x38] sm:$0xff]
      %v4453 = vld [vmem:[#allocation5 + $0x40] sm:$0xff]
      %v4454 = vld [vmem:[#allocation5 + $0x48] sm:$0x3f]
      %v4455 = vlaneseq
      %v4456 = vshrl.u32 %v4455, 7
      %v4457 = vsub.s32 0, %v4456
      %v4458 = vrot.slane %v4434, %v4457
      %v4459 = vmul.f32 %v4445, %v4458
      %v4460 = vmul.f32 %v4446, %v4458
      %v4461 = vmul.f32 %v4447, %v4458
      %v4462 = vmul.f32 %v4448, %v4458
      %v4463 = vmul.f32 %v4449, %v4458
      %v4464 = vmul.f32 %v4450, %v4458
      %v4465 = vmul.f32 %v4451, %v4458
      %v4466 = vmul.f32 %v4452, %v4458
      %v4467 = vmul.f32 %v4453, %v4458
      %v4468 = vmul.f32 %v4454, %v4458
      %v4469 = vld [vmem:[#allocation5 + $0x1] sm:$0xff]
      %v4470 = vld [vmem:[#allocation5 + $0x9] sm:$0xff]
      %v4471 = vld [vmem:[#allocation5 + $0x11] sm:$0xff]
      %v4472 = vld [vmem:[#allocation5 + $0x19] sm:$0xff]
      %v4473 = vld [vmem:[#allocation5 + $0x21] sm:$0xff]
      %v4474 = vld [vmem:[#allocation5 + $0x29] sm:$0xff]
      %v4475 = vld [vmem:[#allocation5 + $0x31] sm:$0xff]
      %v4476 = vld [vmem:[#allocation5 + $0x39] sm:$0xff]
      %v4477 = vld [vmem:[#allocation5 + $0x41] sm:$0xff]
      %v4478 = vld [vmem:[#allocation5 + $0x49] sm:$0x3f]
      %v4479 = vlaneseq
      %v4480 = vshrl.u32 %v4479, 7
      %v4481 = vsub.s32 1, %v4480
      %v4482 = vrot.slane %v4434, %v4481
      %v4483 = vmul.f32 %v4469, %v4482
      %v4484 = vmul.f32 %v4470, %v4482
      %v4485 = vmul.f32 %v4471, %v4482
      %v4486 = vmul.f32 %v4472, %v4482
      %v4487 = vmul.f32 %v4473, %v4482
      %v4488 = vmul.f32 %v4474, %v4482
      %v4489 = vmul.f32 %v4475, %v4482
      %v4490 = vmul.f32 %v4476, %v4482
      %v4491 = vmul.f32 %v4477, %v4482
      %v4492 = vmul.f32 %v4478, %v4482
      %v4493 = vadd.f32 %v4459, %v4483
      %v4494 = vadd.f32 %v4460, %v4484
      %v4495 = vadd.f32 %v4461, %v4485
      %v4496 = vadd.f32 %v4462, %v4486
      %v4497 = vadd.f32 %v4463, %v4487
      %v4498 = vadd.f32 %v4464, %v4488
      %v4499 = vadd.f32 %v4465, %v4489
      %v4500 = vadd.f32 %v4466, %v4490
      %v4501 = vadd.f32 %v4467, %v4491
      %v4502 = vadd.f32 %v4468, %v4492
      %v4503 = vld [vmem:[#allocation5 + $0x2] sm:$0xff]
      %v4504 = vld [vmem:[#allocation5 + $0xa] sm:$0xff]
      %v4505 = vld [vmem:[#allocation5 + $0x12] sm:$0xff]
      %v4506 = vld [vmem:[#allocation5 + $0x1a] sm:$0xff]
      %v4507 = vld [vmem:[#allocation5 + $0x22] sm:$0xff]
      %v4508 = vld [vmem:[#allocation5 + $0x2a] sm:$0xff]
      %v4509 = vld [vmem:[#allocation5 + $0x32] sm:$0xff]
      %v4510 = vld [vmem:[#allocation5 + $0x3a] sm:$0xff]
      %v4511 = vld [vmem:[#allocation5 + $0x42] sm:$0xff]
      %v4512 = vld [vmem:[#allocation5 + $0x4a] sm:$0x3f]
      %v4513 = vlaneseq
      %v4514 = vshrl.u32 %v4513, 7
      %v4515 = vsub.s32 2, %v4514
      %v4516 = vrot.slane %v4434, %v4515
      %v4517 = vmul.f32 %v4503, %v4516
      %v4518 = vmul.f32 %v4504, %v4516
      %v4519 = vmul.f32 %v4505, %v4516
      %v4520 = vmul.f32 %v4506, %v4516
      %v4521 = vmul.f32 %v4507, %v4516
      %v4522 = vmul.f32 %v4508, %v4516
      %v4523 = vmul.f32 %v4509, %v4516
      %v4524 = vmul.f32 %v4510, %v4516
      %v4525 = vmul.f32 %v4511, %v4516
      %v4526 = vmul.f32 %v4512, %v4516
      %v4527 = vadd.f32 %v4493, %v4517
      %v4528 = vadd.f32 %v4494, %v4518
      %v4529 = vadd.f32 %v4495, %v4519
      %v4530 = vadd.f32 %v4496, %v4520
      %v4531 = vadd.f32 %v4497, %v4521
      %v4532 = vadd.f32 %v4498, %v4522
      %v4533 = vadd.f32 %v4499, %v4523
      %v4534 = vadd.f32 %v4500, %v4524
      %v4535 = vadd.f32 %v4501, %v4525
      %v4536 = vadd.f32 %v4502, %v4526
      %v4537 = vld [vmem:[#allocation5 + $0x4a] sm:$0xff]
      %v4538 = vld [vmem:[#allocation5 + $0x52] sm:$0x3f]
      %v4539 = vlaneseq
      %v4540 = vshrl.u32 %v4539, 7
      %v4541 = vsub.s32 3, %v4540
      %v4542 = vrot.slane %v4434, %v4541
      %v4543 = vmul.f32 %v4504, %v4542
      %v4544 = vmul.f32 %v4505, %v4542
      %v4545 = vmul.f32 %v4506, %v4542
      %v4546 = vmul.f32 %v4507, %v4542
      %v4547 = vmul.f32 %v4508, %v4542
      %v4548 = vmul.f32 %v4509, %v4542
      %v4549 = vmul.f32 %v4510, %v4542
      %v4550 = vmul.f32 %v4511, %v4542
      %v4551 = vmul.f32 %v4537, %v4542
      %v4552 = vmul.f32 %v4538, %v4542
      %v4553 = vadd.f32 %v4527, %v4543
      %v4554 = vadd.f32 %v4528, %v4544
      %v4555 = vadd.f32 %v4529, %v4545
      %v4556 = vadd.f32 %v4530, %v4546
      %v4557 = vadd.f32 %v4531, %v4547
      %v4558 = vadd.f32 %v4532, %v4548
      %v4559 = vadd.f32 %v4533, %v4549
      %v4560 = vadd.f32 %v4534, %v4550
      %v4561 = vadd.f32 %v4535, %v4551
      %v4562 = vadd.f32 %v4536, %v4552
      %v4563 = vld [vmem:[#allocation5 + $0xb] sm:$0xff]
      %v4564 = vld [vmem:[#allocation5 + $0x13] sm:$0xff]
      %v4565 = vld [vmem:[#allocation5 + $0x1b] sm:$0xff]
      %v4566 = vld [vmem:[#allocation5 + $0x23] sm:$0xff]
      %v4567 = vld [vmem:[#allocation5 + $0x2b] sm:$0xff]
      %v4568 = vld [vmem:[#allocation5 + $0x33] sm:$0xff]
      %v4569 = vld [vmem:[#allocation5 + $0x3b] sm:$0xff]
      %v4570 = vld [vmem:[#allocation5 + $0x43] sm:$0xff]
      %v4571 = vld [vmem:[#allocation5 + $0x4b] sm:$0xff]
      %v4572 = vld [vmem:[#allocation5 + $0x53] sm:$0x3f]
      %v4573 = vlaneseq
      %v4574 = vshrl.u32 %v4573, 7
      %v4575 = vsub.s32 4, %v4574
      %v4576 = vrot.slane %v4434, %v4575
      %v4577 = vmul.f32 %v4563, %v4576
      %v4578 = vmul.f32 %v4564, %v4576
      %v4579 = vmul.f32 %v4565, %v4576
      %v4580 = vmul.f32 %v4566, %v4576
      %v4581 = vmul.f32 %v4567, %v4576
      %v4582 = vmul.f32 %v4568, %v4576
      %v4583 = vmul.f32 %v4569, %v4576
      %v4584 = vmul.f32 %v4570, %v4576
      %v4585 = vmul.f32 %v4571, %v4576
      %v4586 = vmul.f32 %v4572, %v4576
      %v4587 = vadd.f32 %v4553, %v4577
      %v4588 = vadd.f32 %v4554, %v4578
      %v4589 = vadd.f32 %v4555, %v4579
      %v4590 = vadd.f32 %v4556, %v4580
      %v4591 = vadd.f32 %v4557, %v4581
      %v4592 = vadd.f32 %v4558, %v4582
      %v4593 = vadd.f32 %v4559, %v4583
      %v4594 = vadd.f32 %v4560, %v4584
      %v4595 = vadd.f32 %v4561, %v4585
      %v4596 = vadd.f32 %v4562, %v4586
      %v4597 = vld [vmem:[#allocation5 + $0xc] sm:$0xff]
      %v4598 = vld [vmem:[#allocation5 + $0x14] sm:$0xff]
      %v4599 = vld [vmem:[#allocation5 + $0x1c] sm:$0xff]
      %v4600 = vld [vmem:[#allocation5 + $0x24] sm:$0xff]
      %v4601 = vld [vmem:[#allocation5 + $0x2c] sm:$0xff]
      %v4602 = vld [vmem:[#allocation5 + $0x34] sm:$0xff]
      %v4603 = vld [vmem:[#allocation5 + $0x3c] sm:$0xff]
      %v4604 = vld [vmem:[#allocation5 + $0x44] sm:$0xff]
      %v4605 = vld [vmem:[#allocation5 + $0x4c] sm:$0xff]
      %v4606 = vld [vmem:[#allocation5 + $0x54] sm:$0x3f]
      %v4607 = vlaneseq
      %v4608 = vshrl.u32 %v4607, 7
      %v4609 = vsub.s32 5, %v4608
      %v4610 = vrot.slane %v4434, %v4609
      %v4611 = vmul.f32 %v4597, %v4610
      %v4612 = vmul.f32 %v4598, %v4610
      %v4613 = vmul.f32 %v4599, %v4610
      %v4614 = vmul.f32 %v4600, %v4610
      %v4615 = vmul.f32 %v4601, %v4610
      %v4616 = vmul.f32 %v4602, %v4610
      %v4617 = vmul.f32 %v4603, %v4610
      %v4618 = vmul.f32 %v4604, %v4610
      %v4619 = vmul.f32 %v4605, %v4610
      %v4620 = vmul.f32 %v4606, %v4610
      %v4621 = vadd.f32 %v4587, %v4611
      %v4622 = vadd.f32 %v4588, %v4612
      %v4623 = vadd.f32 %v4589, %v4613
      %v4624 = vadd.f32 %v4590, %v4614
      %v4625 = vadd.f32 %v4591, %v4615
      %v4626 = vadd.f32 %v4592, %v4616
      %v4627 = vadd.f32 %v4593, %v4617
      %v4628 = vadd.f32 %v4594, %v4618
      %v4629 = vadd.f32 %v4595, %v4619
      %v4630 = vadd.f32 %v4596, %v4620
      %v4631 = vld [vmem:[#allocation5 + $0x54] sm:$0xff]
      %v4632 = vld [vmem:[#allocation5 + $0x5c] sm:$0x3f]
      %v4633 = vlaneseq
      %v4634 = vshrl.u32 %v4633, 7
      %v4635 = vsub.s32 6, %v4634
      %v4636 = vrot.slane %v4434, %v4635
      %v4637 = vmul.f32 %v4598, %v4636
      %v4638 = vmul.f32 %v4599, %v4636
      %v4639 = vmul.f32 %v4600, %v4636
      %v4640 = vmul.f32 %v4601, %v4636
      %v4641 = vmul.f32 %v4602, %v4636
      %v4642 = vmul.f32 %v4603, %v4636
      %v4643 = vmul.f32 %v4604, %v4636
      %v4644 = vmul.f32 %v4605, %v4636
      %v4645 = vmul.f32 %v4631, %v4636
      %v4646 = vmul.f32 %v4632, %v4636
      %v4647 = vadd.f32 %v4621, %v4637
      %v4648 = vadd.f32 %v4622, %v4638
      %v4649 = vadd.f32 %v4623, %v4639
      %v4650 = vadd.f32 %v4624, %v4640
      %v4651 = vadd.f32 %v4625, %v4641
      %v4652 = vadd.f32 %v4626, %v4642
      %v4653 = vadd.f32 %v4627, %v4643
      %v4654 = vadd.f32 %v4628, %v4644
      %v4655 = vadd.f32 %v4629, %v4645
      %v4656 = vadd.f32 %v4630, %v4646
      %v4657 = vld [vmem:[#allocation5 + $0x15] sm:$0xff]
      %v4658 = vld [vmem:[#allocation5 + $0x1d] sm:$0xff]
      %v4659 = vld [vmem:[#allocation5 + $0x25] sm:$0xff]
      %v4660 = vld [vmem:[#allocation5 + $0x2d] sm:$0xff]
      %v4661 = vld [vmem:[#allocation5 + $0x35] sm:$0xff]
      %v4662 = vld [vmem:[#allocation5 + $0x3d] sm:$0xff]
      %v4663 = vld [vmem:[#allocation5 + $0x45] sm:$0xff]
      %v4664 = vld [vmem:[#allocation5 + $0x4d] sm:$0xff]
      %v4665 = vld [vmem:[#allocation5 + $0x55] sm:$0xff]
      %v4666 = vld [vmem:[#allocation5 + $0x5d] sm:$0x3f]
      %v4667 = vlaneseq
      %v4668 = vshrl.u32 %v4667, 7
      %v4669 = vsub.s32 7, %v4668
      %v4670 = vrot.slane %v4434, %v4669
      %v4671 = vmul.f32 %v4657, %v4670
      %v4672 = vmul.f32 %v4658, %v4670
      %v4673 = vmul.f32 %v4659, %v4670
      %v4674 = vmul.f32 %v4660, %v4670
      %v4675 = vmul.f32 %v4661, %v4670
      %v4676 = vmul.f32 %v4662, %v4670
      %v4677 = vmul.f32 %v4663, %v4670
      %v4678 = vmul.f32 %v4664, %v4670
      %v4679 = vmul.f32 %v4665, %v4670
      %v4680 = vmul.f32 %v4666, %v4670
      %v4681 = vadd.f32 %v4647, %v4671
      %v4682 = vadd.f32 %v4648, %v4672
      %v4683 = vadd.f32 %v4649, %v4673
      %v4684 = vadd.f32 %v4650, %v4674
      %v4685 = vadd.f32 %v4651, %v4675
      %v4686 = vadd.f32 %v4652, %v4676
      %v4687 = vadd.f32 %v4653, %v4677
      %v4688 = vadd.f32 %v4654, %v4678
      %v4689 = vadd.f32 %v4655, %v4679
      %v4690 = vadd.f32 %v4656, %v4680
      %v4691 = vld [vmem:[#allocation5 + $0x16] sm:$0xff]
      %v4692 = vld [vmem:[#allocation5 + $0x1e] sm:$0xff]
      %v4693 = vld [vmem:[#allocation5 + $0x26] sm:$0xff]
      %v4694 = vld [vmem:[#allocation5 + $0x2e] sm:$0xff]
      %v4695 = vld [vmem:[#allocation5 + $0x36] sm:$0xff]
      %v4696 = vld [vmem:[#allocation5 + $0x3e] sm:$0xff]
      %v4697 = vld [vmem:[#allocation5 + $0x46] sm:$0xff]
      %v4698 = vld [vmem:[#allocation5 + $0x4e] sm:$0xff]
      %v4699 = vld [vmem:[#allocation5 + $0x56] sm:$0xff]
      %v4700 = vld [vmem:[#allocation5 + $0x5e] sm:$0x3f]
      %v4701 = vlaneseq
      %v4702 = vshrl.u32 %v4701, 7
      %v4703 = vsub.s32 0, %v4702
      %v4704 = vrot.slane %v4435, %v4703
      %v4705 = vmul.f32 %v4691, %v4704
      %v4706 = vmul.f32 %v4692, %v4704
      %v4707 = vmul.f32 %v4693, %v4704
      %v4708 = vmul.f32 %v4694, %v4704
      %v4709 = vmul.f32 %v4695, %v4704
      %v4710 = vmul.f32 %v4696, %v4704
      %v4711 = vmul.f32 %v4697, %v4704
      %v4712 = vmul.f32 %v4698, %v4704
      %v4713 = vmul.f32 %v4699, %v4704
      %v4714 = vmul.f32 %v4700, %v4704
      %v4715 = vadd.f32 %v4681, %v4705
      %v4716 = vadd.f32 %v4682, %v4706
      %v4717 = vadd.f32 %v4683, %v4707
      %v4718 = vadd.f32 %v4684, %v4708
      %v4719 = vadd.f32 %v4685, %v4709
      %v4720 = vadd.f32 %v4686, %v4710
      %v4721 = vadd.f32 %v4687, %v4711
      %v4722 = vadd.f32 %v4688, %v4712
      %v4723 = vadd.f32 %v4689, %v4713
      %v4724 = vadd.f32 %v4690, %v4714
      %v4726 = vlaneseq
      %v4727 = vshrl.u32 %v4726, 7
      %v4728 = vsub.s32 0, %v4727
      %v4729 = vrot.slane %v4437, %v4728
      %v4731 = vadd.f32 %v4715, %v4729
      %v4732 = vadd.f32 %v4716, %v4729
      %v4733 = vadd.f32 %v4717, %v4729
      %v4734 = vadd.f32 %v4718, %v4729
      %v4735 = vadd.f32 %v4719, %v4729
      %v4736 = vadd.f32 %v4720, %v4729
      %v4737 = vadd.f32 %v4721, %v4729
      %v4738 = vadd.f32 %v4722, %v4729
      %v4739 = vadd.f32 %v4723, %v4729
      %v4740 = vadd.f32 %v4724, %v4729
      %vm4741 = vcmp.ge.f32.partialorder %v4731, 0.0
      %vm4742 = vcmp.ge.f32.partialorder %v4732, 0.0
      %vm4743 = vcmp.ge.f32.partialorder %v4733, 0.0
      %vm4744 = vcmp.ge.f32.partialorder %v4734, 0.0
      %vm4745 = vcmp.ge.f32.partialorder %v4735, 0.0
      %vm4746 = vcmp.ge.f32.partialorder %v4736, 0.0
      %vm4747 = vcmp.ge.f32.partialorder %v4737, 0.0
      %vm4748 = vcmp.ge.f32.partialorder %v4738, 0.0
      %vm4749 = vcmp.ge.f32.partialorder %v4739, 0.0
      %vm4750 = vcmp.ge.f32.partialorder %v4740, 0.0
      %v4751 = vmul.f32 %v4731, 0.1
      %v4752 = vmul.f32 %v4732, 0.1
      %v4753 = vmul.f32 %v4733, 0.1
      %v4754 = vmul.f32 %v4734, 0.1
      %v4755 = vmul.f32 %v4735, 0.1
      %v4756 = vmul.f32 %v4736, 0.1
      %v4757 = vmul.f32 %v4737, 0.1
      %v4758 = vmul.f32 %v4738, 0.1
      %v4759 = vmul.f32 %v4739, 0.1
      %v4760 = vmul.f32 %v4740, 0.1
      %v4761 = vsel %vm4741, %v4731, %v4751
      %v4762 = vsel %vm4742, %v4732, %v4752
      %v4763 = vsel %vm4743, %v4733, %v4753
      %v4764 = vsel %vm4744, %v4734, %v4754
      %v4765 = vsel %vm4745, %v4735, %v4755
      %v4766 = vsel %vm4746, %v4736, %v4756
      %v4767 = vsel %vm4747, %v4737, %v4757
      %v4768 = vsel %vm4748, %v4738, %v4758
      %v4769 = vsel %vm4749, %v4739, %v4759
      %v4770 = vsel %vm4750, %v4740, %v4760
      %v4771 = vpack.c.bf16 %v4762, %v4761
      %v4772 = vpack.c.bf16 %v4764, %v4763
      %v4773 = vpack.c.bf16 %v4766, %v4765
      %v4774 = vpack.c.bf16 %v4768, %v4767
      %v4775 = vpack.c.bf16 %v4770, %v4769
      %v4776 = vld [vmem:[%s8] sm:$0xf]
      %v4777 = vld [vmem:[%s8 + $0x4] sm:$0xf]
      %v4780 = vunpack.c.l.b16 %v4776
      %v4781 = vunpack.c.l.b16 %v4777
      %v4782 = vpack.c.b16 %v4781, %v4780
      %vm4783 = vcmask 637952
      %v4785 = vsel %vm4783, %v4782, 0
      %v4788 = vsel %vm3649, %v4775, 0
      %4790 = vmatprep.subr.bf16.mxu0 0
      %4791 = vmatpush1.bf16.msra.mxu0 %v4771
      %4792 = vmatprep.subr.bf16.mxu0 0
      %4793 = vmatpush1.bf16.msra.mxu0 %v4772
      %4794 = vmatprep.subr.bf16.mxu0 0
      %4795 = vmatpush1.bf16.msra.mxu0 %v4773
      %4796 = vmatprep.subr.bf16.mxu0 0
      %4797 = vmatpush1.bf16.msra.mxu0 %v4774
      %4798 = vmatprep.subr.bf16.mxu0 0
      %4799 = vmatpush1.bf16.msra.mxu0 %v4788
      %4800 = vmatprep.subr.bf16.mxu0 0
      %4801 = vmatpush1.bf16.msra.mxu0 0
      %4802 = vmatprep.subr.bf16.mxu0 0
      %4803 = vmatpush1.bf16.msra.mxu0 0
      %4804 = vmatprep.subr.bf16.mxu0 0
      %4805 = vmatpush1.bf16.msra.mxu0 0
      %4806 = vmatprep.subr.bf16.mxu0 0
      %4807 = vmatpush1.bf16.msra.mxu0 0
      %4808 = vmatprep.subr.bf16.mxu0 0
      %4809 = vmatpush1.bf16.msra.mxu0 0
      %4810 = vmatprep.subr.bf16.mxu0 0
      %4811 = vmatpush1.bf16.msra.mxu0 0
      %4812 = vmatprep.subr.bf16.mxu0 0
      %4813 = vmatpush1.bf16.msra.mxu0 0
      %4814 = vmatprep.subr.bf16.mxu0 0
      %4815 = vmatpush1.bf16.msra.mxu0 0
      %4816 = vmatprep.subr.bf16.mxu0 0
      %4817 = vmatpush1.bf16.msra.mxu0 0
      %4818 = vmatprep.subr.bf16.mxu0 0
      %4819 = vmatpush1.bf16.msra.mxu0 0
      %4820 = vmatprep.subr.bf16.mxu0 0
      %4821 = vmatpush1.bf16.msra.mxu0 0
      %4822 = vmatprep.mubr.bf16.mxu0 0
      %4823 = vmatmul.mubr.bf16.gmra.mrb[0].mxu0 %v4785
      %v4824 = vpop.f32.mrb[0].mxu0
      %v4825 = vadd.f32 0.0, %v4824
      %v4826 = vpop.f32.mrb[0].mxu0
      %v4827 = vpop.f32.mrb[0].mxu0
      %v4828 = vadd.f32 0.0, %v4827
      %v4829 = vpop.f32.mrb[0].mxu0
      %4830 = vdwg.mxu0
      %v4831 = vpack.c.bf16 %v4828, %v4825
      %v4833 = vlaneseq
      %v4834 = vshrl.u32 %v4833, 7
      %v4835 = vsub.s32 0, %v4834
      %v4836 = vrot.slane %v4444, %v4835
      %v4842 = vunpack.c.l.b16 %v4439
      %v4843 = vunpack.c.l.b16 %v4440
      %v4844 = vunpack.c.l.b16 %v4441
      %v4845 = vunpack.c.l.b16 %v4442
      %v4846 = vpack.c.b16 %v4843, %v4842
      %v4847 = vpack.c.b16 %v4845, %v4844
      %v4851 = vsel %vm575, %v4831, 0
      %4853 = vmatprep.subr.bf16.mxu0 0
      %4854 = vmatpush1.bf16.msra.mxu0 %v4846
      %4855 = vmatprep.subr.bf16.mxu0 0
      %4856 = vmatpush1.bf16.msra.mxu0 %v4847
      %4857 = vmatprep.subr.bf16.mxu0 0
      %4858 = vmatpush1.bf16.msra.mxu0 0
      %4859 = vmatprep.subr.bf16.mxu0 0
      %4860 = vmatpush1.bf16.msra.mxu0 0
      %4861 = vmatprep.subr.bf16.mxu0 0
      %4862 = vmatpush1.bf16.msra.mxu0 0
      %4863 = vmatprep.subr.bf16.mxu0 0
      %4864 = vmatpush1.bf16.msra.mxu0 0
      %4865 = vmatprep.subr.bf16.mxu0 0
      %4866 = vmatpush1.bf16.msra.mxu0 0
      %4867 = vmatprep.subr.bf16.mxu0 0
      %4868 = vmatpush1.bf16.msra.mxu0 0
      %4869 = vmatprep.subr.bf16.mxu0 0
      %4870 = vmatpush1.bf16.msra.mxu0 0
      %4871 = vmatprep.subr.bf16.mxu0 0
      %4872 = vmatpush1.bf16.msra.mxu0 0
      %4873 = vmatprep.subr.bf16.mxu0 0
      %4874 = vmatpush1.bf16.msra.mxu0 0
      %4875 = vmatprep.subr.bf16.mxu0 0
      %4876 = vmatpush1.bf16.msra.mxu0 0
      %4877 = vmatprep.subr.bf16.mxu0 0
      %4878 = vmatpush1.bf16.msra.mxu0 0
      %4879 = vmatprep.subr.bf16.mxu0 0
      %4880 = vmatpush1.bf16.msra.mxu0 0
      %4881 = vmatprep.subr.bf16.mxu0 0
      %4882 = vmatpush1.bf16.msra.mxu0 0
      %4883 = vmatprep.subr.bf16.mxu0 0
      %4884 = vmatpush1.bf16.msra.mxu0 0
      %4885 = vmatprep.mubr.bf16.mxu0 0
      %4886 = vmatmul.mubr.bf16.gmra.mrb[0].mxu0 %v4851
      %v4887 = vpop.f32.mrb[0].mxu0
      %v4888 = vadd.f32 %v4836, %v4887
      %v4889 = vpop.f32.mrb[0].mxu0
      %v4890 = vpop.f32.mrb[0].mxu0
      %v4891 = vadd.f32 %v4836, %v4890
      %v4892 = vpop.f32.mrb[0].mxu0
      %4893 = vdwg.mxu0
      %vm4894 = vcmp.ge.f32.partialorder %v4888, 0.0
      %vm4895 = vcmp.ge.f32.partialorder %v4891, 0.0
      %v4896 = vmul.f32 %v4888, 0.1
      %v4897 = vmul.f32 %v4891, 0.1
      %v4898 = vsel %vm4894, %v4888, %v4896
      %v4899 = vsel %vm4895, %v4891, %v4897
      %vm4900 = vcmask 523264
      %4901 = vst.msk [vmem:[#allocation6] sm:$0xff] %vm4900, 0.0
      %4902 = vst.msk [vmem:[#allocation6 + $0x8] sm:$0xff] %vm4900, 0.0
      %4903 = vst.msk [vmem:[#allocation6 + $0x10] sm:$0xff] %vm4900, 0.0
      %4904 = vst.msk [vmem:[#allocation6 + $0x18] sm:$0xff] %vm4900, 0.0
      %vm4905 = vcmask 519168
      %4906 = vst.msk [vmem:[#allocation6 + $0x20] sm:$0xf] %vm4905, 0.0
      %4907 = vst.msk [vmem:[#allocation6 + $0x7] sm:$0xf] %vm4905, %v4898
      %vm4908 = vcmask 523268
      %4909 = vst.msk [vmem:[#allocation6 + $0x9] sm:$0xf0] %vm4908, %v4898
      %4910 = vst.msk [vmem:[#allocation6 + $0x13] sm:$0xf] %vm4905, %v4899
      %4911 = vst.msk [vmem:[#allocation6 + $0x15] sm:$0xf0] %vm4908, %v4899
      %s4912 = scalar_lea.vmem %s3, 128
      %v4913 = vld [vmem:[%s4912] sm:$0xff]
      %v4914 = vld [vmem:[%s4912 + $0x10] sm:$0x1]
      %s4915 = scalar_lea.vmem %s4, 8
      %v4916 = vld [vmem:[%s4915] sm:$0x1]
      %s4917 = scalar_lea.vmem %s5, 1024
      %v4918 = vld [vmem:[%s4917] sm:$0xf]
      %v4919 = vld [vmem:[%s4917 + $0x8] sm:$0xf]
      %v4920 = vld [vmem:[%s4917 + $0x10] sm:$0xf]
      %v4921 = vld [vmem:[%s4917 + $0x18] sm:$0xf]
      %v4922 = vld [vmem:[%s4917 + $0x20] sm:$0xf]
      %v4923 = vld [vmem:[%s4917 + $0x28] sm:$0xf]
      %v4924 = vld [vmem:[%s4917 + $0x30] sm:$0xf]
      %v4925 = vld [vmem:[%s4917 + $0x38] sm:$0xf]
      %s4926 = scalar_lea.vmem %s6, 8
      %v4927 = vld [vmem:[%s4926] sm:$0x1]
      %v4928 = vld [vmem:[#allocation6] sm:$0xff]
      %v4929 = vld [vmem:[#allocation6 + $0x8] sm:$0xff]
      %v4930 = vld [vmem:[#allocation6 + $0x10] sm:$0x3f]
      %v4931 = vlaneseq
      %v4932 = vshrl.u32 %v4931, 7
      %v4933 = vsub.s32 0, %v4932
      %v4934 = vrot.slane %v4913, %v4933
      %v4935 = vmul.f32 %v4928, %v4934
      %v4936 = vmul.f32 %v4929, %v4934
      %v4937 = vmul.f32 %v4930, %v4934
      %v4938 = vld [vmem:[#allocation6 + $0x1] sm:$0xff]
      %v4939 = vld [vmem:[#allocation6 + $0x9] sm:$0xff]
      %v4940 = vld [vmem:[#allocation6 + $0x11] sm:$0x3f]
      %v4941 = vlaneseq
      %v4942 = vshrl.u32 %v4941, 7
      %v4943 = vsub.s32 1, %v4942
      %v4944 = vrot.slane %v4913, %v4943
      %v4945 = vmul.f32 %v4938, %v4944
      %v4946 = vmul.f32 %v4939, %v4944
      %v4947 = vmul.f32 %v4940, %v4944
      %v4948 = vadd.f32 %v4935, %v4945
      %v4949 = vadd.f32 %v4936, %v4946
      %v4950 = vadd.f32 %v4937, %v4947
      %v4951 = vld [vmem:[#allocation6 + $0x2] sm:$0xff]
      %v4952 = vld [vmem:[#allocation6 + $0xa] sm:$0xff]
      %v4953 = vld [vmem:[#allocation6 + $0x12] sm:$0x3f]
      %v4954 = vlaneseq
      %v4955 = vshrl.u32 %v4954, 7
      %v4956 = vsub.s32 2, %v4955
      %v4957 = vrot.slane %v4913, %v4956
      %v4958 = vmul.f32 %v4951, %v4957
      %v4959 = vmul.f32 %v4952, %v4957
      %v4960 = vmul.f32 %v4953, %v4957
      %v4961 = vadd.f32 %v4948, %v4958
      %v4962 = vadd.f32 %v4949, %v4959
      %v4963 = vadd.f32 %v4950, %v4960
      %v4964 = vld [vmem:[#allocation6 + $0x6] sm:$0xff]
      %v4965 = vld [vmem:[#allocation6 + $0xe] sm:$0xff]
      %v4966 = vld [vmem:[#allocation6 + $0x16] sm:$0x3f]
      %v4967 = vlaneseq
      %v4968 = vshrl.u32 %v4967, 7
      %v4969 = vsub.s32 3, %v4968
      %v4970 = vrot.slane %v4913, %v4969
      %v4971 = vmul.f32 %v4964, %v4970
      %v4972 = vmul.f32 %v4965, %v4970
      %v4973 = vmul.f32 %v4966, %v4970
      %v4974 = vadd.f32 %v4961, %v4971
      %v4975 = vadd.f32 %v4962, %v4972
      %v4976 = vadd.f32 %v4963, %v4973
      %v4977 = vld [vmem:[#allocation6 + $0x7] sm:$0xff]
      %v4978 = vld [vmem:[#allocation6 + $0xf] sm:$0xff]
      %v4979 = vld [vmem:[#allocation6 + $0x17] sm:$0x3f]
      %v4980 = vlaneseq
      %v4981 = vshrl.u32 %v4980, 7
      %v4982 = vsub.s32 4, %v4981
      %v4983 = vrot.slane %v4913, %v4982
      %v4984 = vmul.f32 %v4977, %v4983
      %v4985 = vmul.f32 %v4978, %v4983
      %v4986 = vmul.f32 %v4979, %v4983
      %v4987 = vadd.f32 %v4974, %v4984
      %v4988 = vadd.f32 %v4975, %v4985
      %v4989 = vadd.f32 %v4976, %v4986
      %v4990 = vld [vmem:[#allocation6 + $0x10] sm:$0xff]
      %v4991 = vld [vmem:[#allocation6 + $0x18] sm:$0x3f]
      %v4992 = vlaneseq
      %v4993 = vshrl.u32 %v4992, 7
      %v4994 = vsub.s32 5, %v4993
      %v4995 = vrot.slane %v4913, %v4994
      %v4996 = vmul.f32 %v4929, %v4995
      %v4997 = vmul.f32 %v4990, %v4995
      %v4998 = vmul.f32 %v4991, %v4995
      %v4999 = vadd.f32 %v4987, %v4996
      %v5000 = vadd.f32 %v4988, %v4997
      %v5001 = vadd.f32 %v4989, %v4998
      %v5002 = vld [vmem:[#allocation6 + $0xc] sm:$0xff]
      %v5003 = vld [vmem:[#allocation6 + $0x14] sm:$0xff]
      %v5004 = vld [vmem:[#allocation6 + $0x1c] sm:$0x3f]
      %v5005 = vlaneseq
      %v5006 = vshrl.u32 %v5005, 7
      %v5007 = vsub.s32 6, %v5006
      %v5008 = vrot.slane %v4913, %v5007
      %v5009 = vmul.f32 %v5002, %v5008
      %v5010 = vmul.f32 %v5003, %v5008
      %v5011 = vmul.f32 %v5004, %v5008
      %v5012 = vadd.f32 %v4999, %v5009
      %v5013 = vadd.f32 %v5000, %v5010
      %v5014 = vadd.f32 %v5001, %v5011
      %v5015 = vld [vmem:[#allocation6 + $0xd] sm:$0xff]
      %v5016 = vld [vmem:[#allocation6 + $0x15] sm:$0xff]
      %v5017 = vld [vmem:[#allocation6 + $0x1d] sm:$0x3f]
      %v5018 = vlaneseq
      %v5019 = vshrl.u32 %v5018, 7
      %v5020 = vsub.s32 7, %v5019
      %v5021 = vrot.slane %v4913, %v5020
      %v5022 = vmul.f32 %v5015, %v5021
      %v5023 = vmul.f32 %v5016, %v5021
      %v5024 = vmul.f32 %v5017, %v5021
      %v5025 = vadd.f32 %v5012, %v5022
      %v5026 = vadd.f32 %v5013, %v5023
      %v5027 = vadd.f32 %v5014, %v5024
      %v5028 = vld [vmem:[#allocation6 + $0x16] sm:$0xff]
      %v5029 = vld [vmem:[#allocation6 + $0x1e] sm:$0x3f]
      %v5030 = vlaneseq
      %v5031 = vshrl.u32 %v5030, 7
      %v5032 = vsub.s32 0, %v5031
      %v5033 = vrot.slane %v4914, %v5032
      %v5034 = vmul.f32 %v4965, %v5033
      %v5035 = vmul.f32 %v5028, %v5033
      %v5036 = vmul.f32 %v5029, %v5033
      %v5037 = vadd.f32 %v5025, %v5034
      %v5038 = vadd.f32 %v5026, %v5035
      %v5039 = vadd.f32 %v5027, %v5036
      %v5041 = vlaneseq
      %v5042 = vshrl.u32 %v5041, 7
      %v5043 = vsub.s32 0, %v5042
      %v5044 = vrot.slane %v4916, %v5043
      %v5046 = vadd.f32 %v5037, %v5044
      %v5047 = vadd.f32 %v5038, %v5044
      %v5048 = vadd.f32 %v5039, %v5044
      %vm5049 = vcmp.ge.f32.partialorder %v5046, 0.0
      %vm5050 = vcmp.ge.f32.partialorder %v5047, 0.0
      %vm5051 = vcmp.ge.f32.partialorder %v5048, 0.0
      %v5052 = vmul.f32 %v5046, 0.1
      %v5053 = vmul.f32 %v5047, 0.1
      %v5054 = vmul.f32 %v5048, 0.1
      %v5055 = vsel %vm5049, %v5046, %v5052
      %v5056 = vsel %vm5050, %v5047, %v5053
      %v5057 = vsel %vm5051, %v5048, %v5054
      %v5058 = vpack.c.bf16 %v5056, %v5055
      %v5059 = vpack.c.bf16 %v5057, %v5057
      %v5061 = vlaneseq
      %v5062 = vshrl.u32 %v5061, 7
      %v5063 = vsub.s32 0, %v5062
      %v5064 = vrot.slane %v4927, %v5063
      %v5074 = vunpack.c.l.b16 %v4918
      %v5075 = vunpack.c.l.b16 %v4919
      %v5076 = vunpack.c.l.b16 %v4920
      %v5077 = vunpack.c.l.b16 %v4921
      %v5078 = vunpack.c.l.b16 %v4922
      %v5079 = vunpack.c.l.b16 %v4923
      %v5080 = vunpack.c.l.b16 %v4924
      %v5081 = vunpack.c.l.b16 %v4925
      %v5082 = vpack.c.b16 %v5075, %v5074
      %v5083 = vpack.c.b16 %v5077, %v5076
      %v5084 = vpack.c.b16 %v5079, %v5078
      %v5085 = vpack.c.b16 %v5081, %v5080
      %v5091 = vsel %vm4900, %v5058, 0
      %v5094 = vsel %vm4900, %v5059, 0
      %5096 = vmatprep.subr.bf16.mxu0 0
      %5097 = vmatpush1.bf16.msra.mxu0 %v5082
      %5098 = vmatprep.subr.bf16.mxu0 0
      %5099 = vmatpush1.bf16.msra.mxu0 %v5083
      %5100 = vmatprep.subr.bf16.mxu0 0
      %5101 = vmatpush1.bf16.msra.mxu0 %v5084
      %5102 = vmatprep.subr.bf16.mxu0 0
      %5103 = vmatpush1.bf16.msra.mxu0 %v5085
      %5104 = vmatprep.subr.bf16.mxu0 0
      %5105 = vmatpush1.bf16.msra.mxu0 0
      %5106 = vmatprep.subr.bf16.mxu0 0
      %5107 = vmatpush1.bf16.msra.mxu0 0
      %5108 = vmatprep.subr.bf16.mxu0 0
      %5109 = vmatpush1.bf16.msra.mxu0 0
      %5110 = vmatprep.subr.bf16.mxu0 0
      %5111 = vmatpush1.bf16.msra.mxu0 0
      %5112 = vmatprep.subr.bf16.mxu0 0
      %5113 = vmatpush1.bf16.msra.mxu0 0
      %5114 = vmatprep.subr.bf16.mxu0 0
      %5115 = vmatpush1.bf16.msra.mxu0 0
      %5116 = vmatprep.subr.bf16.mxu0 0
      %5117 = vmatpush1.bf16.msra.mxu0 0
      %5118 = vmatprep.subr.bf16.mxu0 0
      %5119 = vmatpush1.bf16.msra.mxu0 0
      %5120 = vmatprep.subr.bf16.mxu0 0
      %5121 = vmatpush1.bf16.msra.mxu0 0
      %5122 = vmatprep.subr.bf16.mxu0 0
      %5123 = vmatpush1.bf16.msra.mxu0 0
      %5124 = vmatprep.subr.bf16.mxu0 0
      %5125 = vmatpush1.bf16.msra.mxu0 0
      %5126 = vmatprep.subr.bf16.mxu0 0
      %5127 = vmatpush1.bf16.msra.mxu0 0
      %5128 = vmatprep.mubr.bf16.mxu0 0
      %5129 = vmatmul.mubr.bf16.gmra.mrb[0].mxu0 %v5091
      %v5130 = vpop.f32.mrb[0].mxu0
      %v5131 = vadd.f32 %v5064, %v5130
      %v5132 = vpop.f32.mrb[0].mxu0
      %v5133 = vpop.f32.mrb[0].mxu0
      %v5134 = vadd.f32 %v5064, %v5133
      %v5135 = vpop.f32.mrb[0].mxu0
      %5136 = vmatprep.mubr.bf16.mxu0 0
      %5137 = vmatmul.mubr.bf16.gmra.mrb[0].mxu0 %v5094
      %v5138 = vpop.f32.mrb[0].mxu0
      %v5139 = vadd.f32 %v5064, %v5138
      %v5140 = vpop.f32.mrb[0].mxu0
      %v5141 = vpop.f32.mrb[0].mxu0
      %v5142 = vpop.f32.mrb[0].mxu0
      %5143 = vdwg.mxu0
      %vm5144 = vcmp.ge.f32.partialorder %v5131, 0.0
      %vm5145 = vcmp.ge.f32.partialorder %v5134, 0.0
      %vm5146 = vcmp.ge.f32.partialorder %v5139, 0.0
      %v5147 = vmul.f32 %v5131, 0.1
      %v5148 = vmul.f32 %v5134, 0.1
      %v5149 = vmul.f32 %v5139, 0.1
      %v5150 = vsel %vm5144, %v5131, %v5147
      %v5151 = vsel %vm5145, %v5134, %v5148
      %v5152 = vsel %vm5146, %v5139, %v5149
      %5153 = vst.msk [vmem:[#allocation7] sm:$0xff] %vm4900, 0.0
      %5154 = vst.msk [vmem:[#allocation7 + $0x8] sm:$0xff] %vm4900, 0.0
      %5155 = vst.msk [vmem:[#allocation7 + $0x10] sm:$0xff] %vm4900, 0.0
      %5156 = vst.msk [vmem:[#allocation7 + $0x18] sm:$0xff] %vm4900, 0.0
      %5157 = vst.msk [vmem:[#allocation7 + $0x20] sm:$0xf] %vm4905, 0.0
      %5158 = vst.msk [vmem:[#allocation7 + $0x7] sm:$0xf] %vm4905, %v5150
      %vm5159 = vcmask 523270
      %5160 = vst.msk [vmem:[#allocation7 + $0x7] sm:$0xc0] %vm5159, %v5150
      %vm5161 = vcmask 517120
      %5162 = vst.msk [vmem:[#allocation7 + $0xf] sm:$0x3] %vm5161, %v5151
      %5163 = vst.msk [vmem:[#allocation7 + $0xf] sm:$0xf0] %vm4908, %v5151
      %vm5164 = vcmask 521218
      %5165 = vst.msk [vmem:[#allocation7 + $0x17] sm:$0x3c] %vm5164, %v5152
      %s5166 = scalar_lea.vmem %s3, 160
      %v5167 = vld [vmem:[%s5166] sm:$0xff]
      %v5168 = vld [vmem:[%s5166 + $0x10] sm:$0x1]
      %s5169 = scalar_lea.vmem %s4, 10
      %v5170 = vld [vmem:[%s5169] sm:$0x1]
      %s5171 = scalar_lea.vmem %s5, 1280
      %v5172 = vld [vmem:[%s5171] sm:$0xf]
      %v5173 = vld [vmem:[%s5171 + $0x8] sm:$0xf]
      %v5174 = vld [vmem:[%s5171 + $0x10] sm:$0xf]
      %v5175 = vld [vmem:[%s5171 + $0x18] sm:$0xf]
      %v5176 = vld [vmem:[%s5171 + $0x20] sm:$0xf]
      %v5177 = vld [vmem:[%s5171 + $0x28] sm:$0xf]
      %v5178 = vld [vmem:[%s5171 + $0x30] sm:$0xf]
      %v5179 = vld [vmem:[%s5171 + $0x38] sm:$0xf]
      %s5180 = scalar_lea.vmem %s6, 10
      %v5181 = vld [vmem:[%s5180] sm:$0x1]
      %v5182 = vld [vmem:[#allocation7] sm:$0xff]
      %v5183 = vld [vmem:[#allocation7 + $0x8] sm:$0xff]
      %v5184 = vld [vmem:[#allocation7 + $0x10] sm:$0x3f]
      %v5185 = vlaneseq
      %v5186 = vshrl.u32 %v5185, 7
      %v5187 = vsub.s32 0, %v5186
      %v5188 = vrot.slane %v5167, %v5187
      %v5189 = vmul.f32 %v5182, %v5188
      %v5190 = vmul.f32 %v5183, %v5188
      %v5191 = vmul.f32 %v5184, %v5188
      %v5192 = vld [vmem:[#allocation7 + $0x1] sm:$0xff]
      %v5193 = vld [vmem:[#allocation7 + $0x9] sm:$0xff]
      %v5194 = vld [vmem:[#allocation7 + $0x11] sm:$0x3f]
      %v5195 = vlaneseq
      %v5196 = vshrl.u32 %v5195, 7
      %v5197 = vsub.s32 1, %v5196
      %v5198 = vrot.slane %v5167, %v5197
      %v5199 = vmul.f32 %v5192, %v5198
      %v5200 = vmul.f32 %v5193, %v5198
      %v5201 = vmul.f32 %v5194, %v5198
      %v5202 = vadd.f32 %v5189, %v5199
      %v5203 = vadd.f32 %v5190, %v5200
      %v5204 = vadd.f32 %v5191, %v5201
      %v5205 = vld [vmem:[#allocation7 + $0x2] sm:$0xff]
      %v5206 = vld [vmem:[#allocation7 + $0xa] sm:$0xff]
      %v5207 = vld [vmem:[#allocation7 + $0x12] sm:$0x3f]
      %v5208 = vlaneseq
      %v5209 = vshrl.u32 %v5208, 7
      %v5210 = vsub.s32 2, %v5209
      %v5211 = vrot.slane %v5167, %v5210
      %v5212 = vmul.f32 %v5205, %v5211
      %v5213 = vmul.f32 %v5206, %v5211
      %v5214 = vmul.f32 %v5207, %v5211
      %v5215 = vadd.f32 %v5202, %v5212
      %v5216 = vadd.f32 %v5203, %v5213
      %v5217 = vadd.f32 %v5204, %v5214
      %v5218 = vld [vmem:[#allocation7 + $0x6] sm:$0xff]
      %v5219 = vld [vmem:[#allocation7 + $0xe] sm:$0xff]
      %v5220 = vld [vmem:[#allocation7 + $0x16] sm:$0x3f]
      %v5221 = vlaneseq
      %v5222 = vshrl.u32 %v5221, 7
      %v5223 = vsub.s32 3, %v5222
      %v5224 = vrot.slane %v5167, %v5223
      %v5225 = vmul.f32 %v5218, %v5224
      %v5226 = vmul.f32 %v5219, %v5224
      %v5227 = vmul.f32 %v5220, %v5224
      %v5228 = vadd.f32 %v5215, %v5225
      %v5229 = vadd.f32 %v5216, %v5226
      %v5230 = vadd.f32 %v5217, %v5227
      %v5231 = vld [vmem:[#allocation7 + $0x7] sm:$0xff]
      %v5232 = vld [vmem:[#allocation7 + $0xf] sm:$0xff]
      %v5233 = vld [vmem:[#allocation7 + $0x17] sm:$0x3f]
      %v5234 = vlaneseq
      %v5235 = vshrl.u32 %v5234, 7
      %v5236 = vsub.s32 4, %v5235
      %v5237 = vrot.slane %v5167, %v5236
      %v5238 = vmul.f32 %v5231, %v5237
      %v5239 = vmul.f32 %v5232, %v5237
      %v5240 = vmul.f32 %v5233, %v5237
      %v5241 = vadd.f32 %v5228, %v5238
      %v5242 = vadd.f32 %v5229, %v5239
      %v5243 = vadd.f32 %v5230, %v5240
      %v5244 = vld [vmem:[#allocation7 + $0x10] sm:$0xff]
      %v5245 = vld [vmem:[#allocation7 + $0x18] sm:$0x3f]
      %v5246 = vlaneseq
      %v5247 = vshrl.u32 %v5246, 7
      %v5248 = vsub.s32 5, %v5247
      %v5249 = vrot.slane %v5167, %v5248
      %v5250 = vmul.f32 %v5183, %v5249
      %v5251 = vmul.f32 %v5244, %v5249
      %v5252 = vmul.f32 %v5245, %v5249
      %v5253 = vadd.f32 %v5241, %v5250
      %v5254 = vadd.f32 %v5242, %v5251
      %v5255 = vadd.f32 %v5243, %v5252
      %v5256 = vld [vmem:[#allocation7 + $0xc] sm:$0xff]
      %v5257 = vld [vmem:[#allocation7 + $0x14] sm:$0xff]
      %v5258 = vld [vmem:[#allocation7 + $0x1c] sm:$0x3f]
      %v5259 = vlaneseq
      %v5260 = vshrl.u32 %v5259, 7
      %v5261 = vsub.s32 6, %v5260
      %v5262 = vrot.slane %v5167, %v5261
      %v5263 = vmul.f32 %v5256, %v5262
      %v5264 = vmul.f32 %v5257, %v5262
      %v5265 = vmul.f32 %v5258, %v5262
      %v5266 = vadd.f32 %v5253, %v5263
      %v5267 = vadd.f32 %v5254, %v5264
      %v5268 = vadd.f32 %v5255, %v5265
      %v5269 = vld [vmem:[#allocation7 + $0xd] sm:$0xff]
      %v5270 = vld [vmem:[#allocation7 + $0x15] sm:$0xff]
      %v5271 = vld [vmem:[#allocation7 + $0x1d] sm:$0x3f]
      %v5272 = vlaneseq
      %v5273 = vshrl.u32 %v5272, 7
      %v5274 = vsub.s32 7, %v5273
      %v5275 = vrot.slane %v5167, %v5274
      %v5276 = vmul.f32 %v5269, %v5275
      %v5277 = vmul.f32 %v5270, %v5275
      %v5278 = vmul.f32 %v5271, %v5275
      %v5279 = vadd.f32 %v5266, %v5276
      %v5280 = vadd.f32 %v5267, %v5277
      %v5281 = vadd.f32 %v5268, %v5278
      %v5282 = vld [vmem:[#allocation7 + $0x16] sm:$0xff]
      %v5283 = vld [vmem:[#allocation7 + $0x1e] sm:$0x3f]
      %v5284 = vlaneseq
      %v5285 = vshrl.u32 %v5284, 7
      %v5286 = vsub.s32 0, %v5285
      %v5287 = vrot.slane %v5168, %v5286
      %v5288 = vmul.f32 %v5219, %v5287
      %v5289 = vmul.f32 %v5282, %v5287
      %v5290 = vmul.f32 %v5283, %v5287
      %v5291 = vadd.f32 %v5279, %v5288
      %v5292 = vadd.f32 %v5280, %v5289
      %v5293 = vadd.f32 %v5281, %v5290
      %v5295 = vlaneseq
      %v5296 = vshrl.u32 %v5295, 7
      %v5297 = vsub.s32 0, %v5296
      %v5298 = vrot.slane %v5170, %v5297
      %v5300 = vadd.f32 %v5291, %v5298
      %v5301 = vadd.f32 %v5292, %v5298
      %v5302 = vadd.f32 %v5293, %v5298
      %vm5303 = vcmp.ge.f32.partialorder %v5300, 0.0
      %vm5304 = vcmp.ge.f32.partialorder %v5301, 0.0
      %vm5305 = vcmp.ge.f32.partialorder %v5302, 0.0
      %v5306 = vmul.f32 %v5300, 0.1
      %v5307 = vmul.f32 %v5301, 0.1
      %v5308 = vmul.f32 %v5302, 0.1
      %v5309 = vsel %vm5303, %v5300, %v5306
      %v5310 = vsel %vm5304, %v5301, %v5307
      %v5311 = vsel %vm5305, %v5302, %v5308
      %v5312 = vpack.c.bf16 %v5310, %v5309
      %v5313 = vpack.c.bf16 %v5311, %v5311
      %v5314 = vld [vmem:[%s9] sm:$0x3]
      %vm5315 = vcmask 179200
      %v5317 = vsel %vm5315, %v5314, 0
      %vm5319 = vcmask 1042432
      %v5321 = vsel %vm5319, %v5313, 0
      %5323 = vmatprep.subr.bf16.mxu0 0
      %5324 = vmatpush1.bf16.msra.mxu0 %v5312
      %5325 = vmatprep.subr.bf16.mxu0 0
      %5326 = vmatpush1.bf16.msra.mxu0 %v5321
      %5327 = vmatprep.subr.bf16.mxu0 0
      %5328 = vmatpush1.bf16.msra.mxu0 0
      %5329 = vmatprep.subr.bf16.mxu0 0
      %5330 = vmatpush1.bf16.msra.mxu0 0
      %5331 = vmatprep.subr.bf16.mxu0 0
      %5332 = vmatpush1.bf16.msra.mxu0 0
      %5333 = vmatprep.subr.bf16.mxu0 0
      %5334 = vmatpush1.bf16.msra.mxu0 0
      %5335 = vmatprep.subr.bf16.mxu0 0
      %5336 = vmatpush1.bf16.msra.mxu0 0
      %5337 = vmatprep.subr.bf16.mxu0 0
      %5338 = vmatpush1.bf16.msra.mxu0 0
      %5339 = vmatprep.subr.bf16.mxu0 0
      %5340 = vmatpush1.bf16.msra.mxu0 0
      %5341 = vmatprep.subr.bf16.mxu0 0
      %5342 = vmatpush1.bf16.msra.mxu0 0
      %5343 = vmatprep.subr.bf16.mxu0 0
      %5344 = vmatpush1.bf16.msra.mxu0 0
      %5345 = vmatprep.subr.bf16.mxu0 0
      %5346 = vmatpush1.bf16.msra.mxu0 0
      %5347 = vmatprep.subr.bf16.mxu0 0
      %5348 = vmatpush1.bf16.msra.mxu0 0
      %5349 = vmatprep.subr.bf16.mxu0 0
      %5350 = vmatpush1.bf16.msra.mxu0 0
      %5351 = vmatprep.subr.bf16.mxu0 0
      %5352 = vmatpush1.bf16.msra.mxu0 0
      %5353 = vmatprep.subr.bf16.mxu0 0
      %5354 = vmatpush1.bf16.msra.mxu0 0
      %5355 = vmatprep.mubr.bf16.mxu0 0
      %5356 = vmatmul.mubr.bf16.gmra.mrb[0].mxu0 %v5317
      %v5357 = vpop.f32.mrb[0].mxu0
      %v5358 = vadd.f32 0.0, %v5357
      %v5359 = vpop.f32.mrb[0].mxu0
      %v5360 = vpop.f32.mrb[0].mxu0
      %v5361 = vpop.f32.mrb[0].mxu0
      %5362 = vdwg.mxu0
      %v5363 = vpack.c.bf16 %v5358, %v5358
      %v5365 = vlaneseq
      %v5366 = vshrl.u32 %v5365, 7
      %v5367 = vsub.s32 0, %v5366
      %v5368 = vrot.slane %v5181, %v5367
      %v5378 = vunpack.c.l.b16 %v5172
      %v5379 = vunpack.c.l.b16 %v5173
      %v5380 = vunpack.c.l.b16 %v5174
      %v5381 = vunpack.c.l.b16 %v5175
      %v5382 = vunpack.c.l.b16 %v5176
      %v5383 = vunpack.c.l.b16 %v5177
      %v5384 = vunpack.c.l.b16 %v5178
      %v5385 = vunpack.c.l.b16 %v5179
      %v5386 = vpack.c.b16 %v5379, %v5378
      %v5387 = vpack.c.b16 %v5381, %v5380
      %v5388 = vpack.c.b16 %v5383, %v5382
      %v5389 = vpack.c.b16 %v5385, %v5384
      %v5395 = vsel %vm4900, %v5363, 0
      %5397 = vmatprep.subr.bf16.mxu0 0
      %5398 = vmatpush1.bf16.msra.mxu0 %v5386
      %5399 = vmatprep.subr.bf16.mxu0 0
      %5400 = vmatpush1.bf16.msra.mxu0 %v5387
      %5401 = vmatprep.subr.bf16.mxu0 0
      %5402 = vmatpush1.bf16.msra.mxu0 %v5388
      %5403 = vmatprep.subr.bf16.mxu0 0
      %5404 = vmatpush1.bf16.msra.mxu0 %v5389
      %5405 = vmatprep.subr.bf16.mxu0 0
      %5406 = vmatpush1.bf16.msra.mxu0 0
      %5407 = vmatprep.subr.bf16.mxu0 0
      %5408 = vmatpush1.bf16.msra.mxu0 0
      %5409 = vmatprep.subr.bf16.mxu0 0
      %5410 = vmatpush1.bf16.msra.mxu0 0
      %5411 = vmatprep.subr.bf16.mxu0 0
      %5412 = vmatpush1.bf16.msra.mxu0 0
      %5413 = vmatprep.subr.bf16.mxu0 0
      %5414 = vmatpush1.bf16.msra.mxu0 0
      %5415 = vmatprep.subr.bf16.mxu0 0
      %5416 = vmatpush1.bf16.msra.mxu0 0
      %5417 = vmatprep.subr.bf16.mxu0 0
      %5418 = vmatpush1.bf16.msra.mxu0 0
      %5419 = vmatprep.subr.bf16.mxu0 0
      %5420 = vmatpush1.bf16.msra.mxu0 0
      %5421 = vmatprep.subr.bf16.mxu0 0
      %5422 = vmatpush1.bf16.msra.mxu0 0
      %5423 = vmatprep.subr.bf16.mxu0 0
      %5424 = vmatpush1.bf16.msra.mxu0 0
      %5425 = vmatprep.subr.bf16.mxu0 0
      %5426 = vmatpush1.bf16.msra.mxu0 0
      %5427 = vmatprep.subr.bf16.mxu0 0
      %5428 = vmatpush1.bf16.msra.mxu0 0
      %5429 = vmatprep.mubr.bf16.mxu0 0
      %5430 = vmatmul.mubr.bf16.gmra.mrb[0].mxu0 %v5395
      %v5431 = vpop.f32.mrb[0].mxu0
      %v5432 = vadd.f32 %v5368, %v5431
      %v5433 = vpop.f32.mrb[0].mxu0
      %v5434 = vpop.f32.mrb[0].mxu0
      %v5435 = vpop.f32.mrb[0].mxu0
      %5436 = vdwg.mxu0
      %vm5437 = vcmp.ge.f32.partialorder %v5432, 0.0
      %v5438 = vmul.f32 %v5432, 0.1
      %v5439 = vsel %vm5437, %v5432, %v5438
      %5440 = vst [vmem:[#allocation8] sm:$0xff] 0.0
      %5441 = vst [vmem:[#allocation8 + $0x8] sm:$0xff] 0.0
      %5442 = vst [vmem:[#allocation8 + $0x5] sm:$0x3] %v5439
      %5443 = vst [vmem:[#allocation8 + $0x7] sm:$0xc] %v5439
      %s5444 = scalar_lea.vmem %s3, 192
      %v5445 = vld [vmem:[%s5444] sm:$0xff]
      %v5446 = vld [vmem:[%s5444 + $0x10] sm:$0x1]
      %s5447 = scalar_lea.vmem %s4, 12
      %v5448 = vld [vmem:[%s5447] sm:$0x1]
      %s5449 = scalar_lea.vmem %s5, 1536
      %v5450 = vld [vmem:[%s5449] sm:$0xf]
      %v5451 = vld [vmem:[%s5449 + $0x8] sm:$0xf]
      %v5452 = vld [vmem:[%s5449 + $0x10] sm:$0xf]
      %v5453 = vld [vmem:[%s5449 + $0x18] sm:$0xf]
      %v5454 = vld [vmem:[%s5449 + $0x20] sm:$0xf]
      %v5455 = vld [vmem:[%s5449 + $0x28] sm:$0xf]
      %v5456 = vld [vmem:[%s5449 + $0x30] sm:$0xf]
      %v5457 = vld [vmem:[%s5449 + $0x38] sm:$0xf]
      %v5458 = vld [vmem:[%s5449 + $0x40] sm:$0xf]
      %v5459 = vld [vmem:[%s5449 + $0x48] sm:$0xf]
      %v5460 = vld [vmem:[%s5449 + $0x50] sm:$0xf]
      %v5461 = vld [vmem:[%s5449 + $0x58] sm:$0xf]
      %v5462 = vld [vmem:[%s5449 + $0x60] sm:$0xf]
      %v5463 = vld [vmem:[%s5449 + $0x68] sm:$0xf]
      %v5464 = vld [vmem:[%s5449 + $0x70] sm:$0xf]
      %v5465 = vld [vmem:[%s5449 + $0x78] sm:$0xf]
      %s5466 = scalar_lea.vmem %s6, 12
      %v5467 = vld [vmem:[%s5466] sm:$0x1]
      %v5468 = vld [vmem:[#allocation8] sm:$0x3f]
      %v5469 = vlaneseq
      %v5470 = vshrl.u32 %v5469, 7
      %v5471 = vsub.s32 0, %v5470
      %v5472 = vrot.slane %v5445, %v5471
      %v5473 = vmul.f32 %v5468, %v5472
      %v5474 = vld [vmem:[#allocation8 + $0x1] sm:$0x3f]
      %v5475 = vlaneseq
      %v5476 = vshrl.u32 %v5475, 7
      %v5477 = vsub.s32 1, %v5476
      %v5478 = vrot.slane %v5445, %v5477
      %v5479 = vmul.f32 %v5474, %v5478
      %v5480 = vadd.f32 %v5473, %v5479
      %v5481 = vld [vmem:[#allocation8 + $0x2] sm:$0x3f]
      %v5482 = vlaneseq
      %v5483 = vshrl.u32 %v5482, 7
      %v5484 = vsub.s32 2, %v5483
      %v5485 = vrot.slane %v5445, %v5484
      %v5486 = vmul.f32 %v5481, %v5485
      %v5487 = vadd.f32 %v5480, %v5486
      %v5488 = vld [vmem:[#allocation8 + $0x4] sm:$0x3f]
      %v5489 = vlaneseq
      %v5490 = vshrl.u32 %v5489, 7
      %v5491 = vsub.s32 3, %v5490
      %v5492 = vrot.slane %v5445, %v5491
      %v5493 = vmul.f32 %v5488, %v5492
      %v5494 = vadd.f32 %v5487, %v5493
      %v5495 = vld [vmem:[#allocation8 + $0x5] sm:$0x3f]
      %v5496 = vlaneseq
      %v5497 = vshrl.u32 %v5496, 7
      %v5498 = vsub.s32 4, %v5497
      %v5499 = vrot.slane %v5445, %v5498
      %v5500 = vmul.f32 %v5495, %v5499
      %v5501 = vadd.f32 %v5494, %v5500
      %v5502 = vld [vmem:[#allocation8 + $0x6] sm:$0x3f]
      %v5503 = vlaneseq
      %v5504 = vshrl.u32 %v5503, 7
      %v5505 = vsub.s32 5, %v5504
      %v5506 = vrot.slane %v5445, %v5505
      %v5507 = vmul.f32 %v5502, %v5506
      %v5508 = vadd.f32 %v5501, %v5507
      %v5509 = vld [vmem:[#allocation8 + $0x8] sm:$0x3f]
      %v5510 = vlaneseq
      %v5511 = vshrl.u32 %v5510, 7
      %v5512 = vsub.s32 6, %v5511
      %v5513 = vrot.slane %v5445, %v5512
      %v5514 = vmul.f32 %v5509, %v5513
      %v5515 = vadd.f32 %v5508, %v5514
      %v5516 = vld [vmem:[#allocation8 + $0x9] sm:$0x3f]
      %v5517 = vlaneseq
      %v5518 = vshrl.u32 %v5517, 7
      %v5519 = vsub.s32 7, %v5518
      %v5520 = vrot.slane %v5445, %v5519
      %v5521 = vmul.f32 %v5516, %v5520
      %v5522 = vadd.f32 %v5515, %v5521
      %v5523 = vld [vmem:[#allocation8 + $0xa] sm:$0x3f]
      %v5524 = vlaneseq
      %v5525 = vshrl.u32 %v5524, 7
      %v5526 = vsub.s32 0, %v5525
      %v5527 = vrot.slane %v5446, %v5526
      %v5528 = vmul.f32 %v5523, %v5527
      %v5529 = vadd.f32 %v5522, %v5528
      %v5531 = vlaneseq
      %v5532 = vshrl.u32 %v5531, 7
      %v5533 = vsub.s32 0, %v5532
      %v5534 = vrot.slane %v5448, %v5533
      %v5536 = vadd.f32 %v5529, %v5534
      %vm5537 = vcmp.ge.f32.partialorder %v5536, 0.0
      %v5538 = vmul.f32 %v5536, 0.1
      %v5539 = vsel %vm5537, %v5536, %v5538
      %v5540 = vpack.c.bf16 %v5539, %v5539
      %v5542 = vlaneseq
      %v5543 = vshrl.u32 %v5542, 7
      %v5544 = vsub.s32 0, %v5543
      %v5545 = vrot.slane %v5467, %v5544
      %v5563 = vunpack.c.l.b16 %v5450
      %v5564 = vunpack.c.l.b16 %v5451
      %v5565 = vunpack.c.l.b16 %v5452
      %v5566 = vunpack.c.l.b16 %v5453
      %v5567 = vunpack.c.l.b16 %v5454
      %v5568 = vunpack.c.l.b16 %v5455
      %v5569 = vunpack.c.l.b16 %v5456
      %v5570 = vunpack.c.l.b16 %v5457
      %v5571 = vunpack.c.l.b16 %v5458
      %v5572 = vunpack.c.l.b16 %v5459
      %v5573 = vunpack.c.l.b16 %v5460
      %v5574 = vunpack.c.l.b16 %v5461
      %v5575 = vunpack.c.l.b16 %v5462
      %v5576 = vunpack.c.l.b16 %v5463
      %v5577 = vunpack.c.l.b16 %v5464
      %v5578 = vunpack.c.l.b16 %v5465
      %v5579 = vpack.c.b16 %v5564, %v5563
      %v5580 = vpack.c.b16 %v5566, %v5565
      %v5581 = vpack.c.b16 %v5568, %v5567
      %v5582 = vpack.c.b16 %v5570, %v5569
      %v5583 = vpack.c.b16 %v5572, %v5571
      %v5584 = vpack.c.b16 %v5574, %v5573
      %v5585 = vpack.c.b16 %v5576, %v5575
      %v5586 = vpack.c.b16 %v5578, %v5577
      %5595 = vmatprep.subr.bf16.mxu0 0
      %5596 = vmatpush1.bf16.msra.mxu0 %v5579
      %5597 = vmatprep.subr.bf16.mxu0 0
      %5598 = vmatpush1.bf16.msra.mxu0 %v5580
      %5599 = vmatprep.subr.bf16.mxu0 0
      %5600 = vmatpush1.bf16.msra.mxu0 %v5581
      %5601 = vmatprep.subr.bf16.mxu0 0
      %5602 = vmatpush1.bf16.msra.mxu0 %v5582
      %5603 = vmatprep.subr.bf16.mxu0 0
      %5604 = vmatpush1.bf16.msra.mxu0 %v5583
      %5605 = vmatprep.subr.bf16.mxu0 0
      %5606 = vmatpush1.bf16.msra.mxu0 %v5584
      %5607 = vmatprep.subr.bf16.mxu0 0
      %5608 = vmatpush1.bf16.msra.mxu0 %v5585
      %5609 = vmatprep.subr.bf16.mxu0 0
      %5610 = vmatpush1.bf16.msra.mxu0 %v5586
      %5611 = vmatprep.subr.bf16.mxu0 0
      %5612 = vmatpush1.bf16.msra.mxu0 0
      %5613 = vmatprep.subr.bf16.mxu0 0
      %5614 = vmatpush1.bf16.msra.mxu0 0
      %5615 = vmatprep.subr.bf16.mxu0 0
      %5616 = vmatpush1.bf16.msra.mxu0 0
      %5617 = vmatprep.subr.bf16.mxu0 0
      %5618 = vmatpush1.bf16.msra.mxu0 0
      %5619 = vmatprep.subr.bf16.mxu0 0
      %5620 = vmatpush1.bf16.msra.mxu0 0
      %5621 = vmatprep.subr.bf16.mxu0 0
      %5622 = vmatpush1.bf16.msra.mxu0 0
      %5623 = vmatprep.subr.bf16.mxu0 0
      %5624 = vmatpush1.bf16.msra.mxu0 0
      %5625 = vmatprep.subr.bf16.mxu0 0
      %5626 = vmatpush1.bf16.msra.mxu0 0
      %5627 = vmatprep.mubr.bf16.mxu0 0
      %5628 = vmatmul.mubr.bf16.gmra.mrb[0].mxu0 %v5540
      %v5629 = vpop.f32.mrb[0].mxu0
      %v5630 = vadd.f32 %v5545, %v5629
      %v5631 = vpop.f32.mrb[0].mxu0
      %v5632 = vpop.f32.mrb[0].mxu0
      %v5633 = vpop.f32.mrb[0].mxu0
      %5634 = vdwg.mxu0
      %vm5635 = vcmp.ge.f32.partialorder %v5630, 0.0
      %v5636 = vmul.f32 %v5630, 0.1
      %v5637 = vsel %vm5635, %v5630, %v5636
      %5638 = vst [vmem:[#allocation9] sm:$0xff] 0.0
      %5639 = vst [vmem:[#allocation9 + $0x8] sm:$0xff] 0.0
      %5640 = vst [vmem:[#allocation9 + $0x5] sm:$0x3] %v5637
      %5641 = vst [vmem:[#allocation9 + $0x5] sm:$0x30] %v5637
      %s5642 = scalar_lea.vmem %s3, 224
      %v5643 = vld [vmem:[%s5642] sm:$0xff]
      %v5644 = vld [vmem:[%s5642 + $0x10] sm:$0x1]
      %s5645 = scalar_lea.vmem %s4, 14
      %v5646 = vld [vmem:[%s5645] sm:$0x1]
      %s5647 = scalar_lea.vmem %s5, 1792
      %v5648 = vld [vmem:[%s5647] sm:$0xf]
      %v5649 = vld [vmem:[%s5647 + $0x8] sm:$0xf]
      %v5650 = vld [vmem:[%s5647 + $0x10] sm:$0xf]
      %v5651 = vld [vmem:[%s5647 + $0x18] sm:$0xf]
      %v5652 = vld [vmem:[%s5647 + $0x20] sm:$0xf]
      %v5653 = vld [vmem:[%s5647 + $0x28] sm:$0xf]
      %v5654 = vld [vmem:[%s5647 + $0x30] sm:$0xf]
      %v5655 = vld [vmem:[%s5647 + $0x38] sm:$0xf]
      %v5656 = vld [vmem:[%s5647 + $0x40] sm:$0xf]
      %v5657 = vld [vmem:[%s5647 + $0x48] sm:$0xf]
      %v5658 = vld [vmem:[%s5647 + $0x50] sm:$0xf]
      %v5659 = vld [vmem:[%s5647 + $0x58] sm:$0xf]
      %v5660 = vld [vmem:[%s5647 + $0x60] sm:$0xf]
      %v5661 = vld [vmem:[%s5647 + $0x68] sm:$0xf]
      %v5662 = vld [vmem:[%s5647 + $0x70] sm:$0xf]
      %v5663 = vld [vmem:[%s5647 + $0x78] sm:$0xf]
      %s5664 = scalar_lea.vmem %s6, 14
      %v5665 = vld [vmem:[%s5664] sm:$0x1]
      %v5666 = vld [vmem:[#allocation9] sm:$0x3f]
      %v5667 = vlaneseq
      %v5668 = vshrl.u32 %v5667, 7
      %v5669 = vsub.s32 0, %v5668
      %v5670 = vrot.slane %v5643, %v5669
      %v5671 = vmul.f32 %v5666, %v5670
      %v5672 = vld [vmem:[#allocation9 + $0x1] sm:$0x3f]
      %v5673 = vlaneseq
      %v5674 = vshrl.u32 %v5673, 7
      %v5675 = vsub.s32 1, %v5674
      %v5676 = vrot.slane %v5643, %v5675
      %v5677 = vmul.f32 %v5672, %v5676
      %v5678 = vadd.f32 %v5671, %v5677
      %v5679 = vld [vmem:[#allocation9 + $0x2] sm:$0x3f]
      %v5680 = vlaneseq
      %v5681 = vshrl.u32 %v5680, 7
      %v5682 = vsub.s32 2, %v5681
      %v5683 = vrot.slane %v5643, %v5682
      %v5684 = vmul.f32 %v5679, %v5683
      %v5685 = vadd.f32 %v5678, %v5684
      %v5686 = vld [vmem:[#allocation9 + $0x4] sm:$0x3f]
      %v5687 = vlaneseq
      %v5688 = vshrl.u32 %v5687, 7
      %v5689 = vsub.s32 3, %v5688
      %v5690 = vrot.slane %v5643, %v5689
      %v5691 = vmul.f32 %v5686, %v5690
      %v5692 = vadd.f32 %v5685, %v5691
      %v5693 = vld [vmem:[#allocation9 + $0x5] sm:$0x3f]
      %v5694 = vlaneseq
      %v5695 = vshrl.u32 %v5694, 7
      %v5696 = vsub.s32 4, %v5695
      %v5697 = vrot.slane %v5643, %v5696
      %v5698 = vmul.f32 %v5693, %v5697
      %v5699 = vadd.f32 %v5692, %v5698
      %v5700 = vld [vmem:[#allocation9 + $0x6] sm:$0x3f]
      %v5701 = vlaneseq
      %v5702 = vshrl.u32 %v5701, 7
      %v5703 = vsub.s32 5, %v5702
      %v5704 = vrot.slane %v5643, %v5703
      %v5705 = vmul.f32 %v5700, %v5704
      %v5706 = vadd.f32 %v5699, %v5705
      %v5707 = vld [vmem:[#allocation9 + $0x8] sm:$0x3f]
      %v5708 = vlaneseq
      %v5709 = vshrl.u32 %v5708, 7
      %v5710 = vsub.s32 6, %v5709
      %v5711 = vrot.slane %v5643, %v5710
      %v5712 = vmul.f32 %v5707, %v5711
      %v5713 = vadd.f32 %v5706, %v5712
      %v5714 = vld [vmem:[#allocation9 + $0x9] sm:$0x3f]
      %v5715 = vlaneseq
      %v5716 = vshrl.u32 %v5715, 7
      %v5717 = vsub.s32 7, %v5716
      %v5718 = vrot.slane %v5643, %v5717
      %v5719 = vmul.f32 %v5714, %v5718
      %v5720 = vadd.f32 %v5713, %v5719
      %v5721 = vld [vmem:[#allocation9 + $0xa] sm:$0x3f]
      %v5722 = vlaneseq
      %v5723 = vshrl.u32 %v5722, 7
      %v5724 = vsub.s32 0, %v5723
      %v5725 = vrot.slane %v5644, %v5724
      %v5726 = vmul.f32 %v5721, %v5725
      %v5727 = vadd.f32 %v5720, %v5726
      %v5729 = vlaneseq
      %v5730 = vshrl.u32 %v5729, 7
      %v5731 = vsub.s32 0, %v5730
      %v5732 = vrot.slane %v5646, %v5731
      %v5734 = vadd.f32 %v5727, %v5732
      %vm5735 = vcmp.ge.f32.partialorder %v5734, 0.0
      %v5736 = vmul.f32 %v5734, 0.1
      %v5737 = vsel %vm5735, %v5734, %v5736
      %v5738 = vpack.c.bf16 %v5737, %v5737
      %v5740 = vlaneseq
      %v5741 = vshrl.u32 %v5740, 7
      %v5742 = vsub.s32 0, %v5741
      %v5743 = vrot.slane %v5665, %v5742
      %v5761 = vunpack.c.l.b16 %v5648
      %v5762 = vunpack.c.l.b16 %v5649
      %v5763 = vunpack.c.l.b16 %v5650
      %v5764 = vunpack.c.l.b16 %v5651
      %v5765 = vunpack.c.l.b16 %v5652
      %v5766 = vunpack.c.l.b16 %v5653
      %v5767 = vunpack.c.l.b16 %v5654
      %v5768 = vunpack.c.l.b16 %v5655
      %v5769 = vunpack.c.l.b16 %v5656
      %v5770 = vunpack.c.l.b16 %v5657
      %v5771 = vunpack.c.l.b16 %v5658
      %v5772 = vunpack.c.l.b16 %v5659
      %v5773 = vunpack.c.l.b16 %v5660
      %v5774 = vunpack.c.l.b16 %v5661
      %v5775 = vunpack.c.l.b16 %v5662
      %v5776 = vunpack.c.l.b16 %v5663
      %v5777 = vpack.c.b16 %v5762, %v5761
      %v5778 = vpack.c.b16 %v5764, %v5763
      %v5779 = vpack.c.b16 %v5766, %v5765
      %v5780 = vpack.c.b16 %v5768, %v5767
      %v5781 = vpack.c.b16 %v5770, %v5769
      %v5782 = vpack.c.b16 %v5772, %v5771
      %v5783 = vpack.c.b16 %v5774, %v5773
      %v5784 = vpack.c.b16 %v5776, %v5775
      %5793 = vmatprep.subr.bf16.mxu0 0
      %5794 = vmatpush1.bf16.msra.mxu0 %v5777
      %5795 = vmatprep.subr.bf16.mxu0 0
      %5796 = vmatpush1.bf16.msra.mxu0 %v5778
      %5797 = vmatprep.subr.bf16.mxu0 0
      %5798 = vmatpush1.bf16.msra.mxu0 %v5779
      %5799 = vmatprep.subr.bf16.mxu0 0
      %5800 = vmatpush1.bf16.msra.mxu0 %v5780
      %5801 = vmatprep.subr.bf16.mxu0 0
      %5802 = vmatpush1.bf16.msra.mxu0 %v5781
      %5803 = vmatprep.subr.bf16.mxu0 0
      %5804 = vmatpush1.bf16.msra.mxu0 %v5782
      %5805 = vmatprep.subr.bf16.mxu0 0
      %5806 = vmatpush1.bf16.msra.mxu0 %v5783
      %5807 = vmatprep.subr.bf16.mxu0 0
      %5808 = vmatpush1.bf16.msra.mxu0 %v5784
      %5809 = vmatprep.subr.bf16.mxu0 0
      %5810 = vmatpush1.bf16.msra.mxu0 0
      %5811 = vmatprep.subr.bf16.mxu0 0
      %5812 = vmatpush1.bf16.msra.mxu0 0
      %5813 = vmatprep.subr.bf16.mxu0 0
      %5814 = vmatpush1.bf16.msra.mxu0 0
      %5815 = vmatprep.subr.bf16.mxu0 0
      %5816 = vmatpush1.bf16.msra.mxu0 0
      %5817 = vmatprep.subr.bf16.mxu0 0
      %5818 = vmatpush1.bf16.msra.mxu0 0
      %5819 = vmatprep.subr.bf16.mxu0 0
      %5820 = vmatpush1.bf16.msra.mxu0 0
      %5821 = vmatprep.subr.bf16.mxu0 0
      %5822 = vmatpush1.bf16.msra.mxu0 0
      %5823 = vmatprep.subr.bf16.mxu0 0
      %5824 = vmatpush1.bf16.msra.mxu0 0
      %5825 = vmatprep.mubr.bf16.mxu0 0
      %5826 = vmatmul.mubr.bf16.gmra.mrb[0].mxu0 %v5738
      %v5827 = vpop.f32.mrb[0].mxu0
      %v5828 = vadd.f32 %v5743, %v5827
      %v5829 = vpop.f32.mrb[0].mxu0
      %v5830 = vpop.f32.mrb[0].mxu0
      %v5831 = vpop.f32.mrb[0].mxu0
      %5832 = vdwg.mxu0
      %vm5833 = vcmp.ge.f32.partialorder %v5828, 0.0
      %v5834 = vmul.f32 %v5828, 0.1
      %v5835 = vsel %vm5833, %v5828, %v5834
      %5836 = vst [vmem:[#allocation10] sm:$0xff] 0.0
      %5837 = vst [vmem:[#allocation10 + $0x8] sm:$0xff] 0.0
      %5838 = vst [vmem:[#allocation10 + $0x5] sm:$0x3] %v5835
      %5839 = vst [vmem:[#allocation10 + $0x5] sm:$0x30] %v5835
      %s5840 = scalar_lea.vmem %s3, 256
      %v5841 = vld [vmem:[%s5840] sm:$0xff]
      %v5842 = vld [vmem:[%s5840 + $0x10] sm:$0x1]
      %s5843 = scalar_lea.vmem %s4, 16
      %v5844 = vld [vmem:[%s5843] sm:$0x1]
      %s5845 = scalar_lea.vmem %s5, 2048
      %v5846 = vld [vmem:[%s5845] sm:$0xf]
      %v5847 = vld [vmem:[%s5845 + $0x8] sm:$0xf]
      %v5848 = vld [vmem:[%s5845 + $0x10] sm:$0xf]
      %v5849 = vld [vmem:[%s5845 + $0x18] sm:$0xf]
      %v5850 = vld [vmem:[%s5845 + $0x20] sm:$0xf]
      %v5851 = vld [vmem:[%s5845 + $0x28] sm:$0xf]
      %v5852 = vld [vmem:[%s5845 + $0x30] sm:$0xf]
      %v5853 = vld [vmem:[%s5845 + $0x38] sm:$0xf]
      %v5854 = vld [vmem:[%s5845 + $0x40] sm:$0xf]
      %v5855 = vld [vmem:[%s5845 + $0x48] sm:$0xf]
      %v5856 = vld [vmem:[%s5845 + $0x50] sm:$0xf]
      %v5857 = vld [vmem:[%s5845 + $0x58] sm:$0xf]
      %v5858 = vld [vmem:[%s5845 + $0x60] sm:$0xf]
      %v5859 = vld [vmem:[%s5845 + $0x68] sm:$0xf]
      %v5860 = vld [vmem:[%s5845 + $0x70] sm:$0xf]
      %v5861 = vld [vmem:[%s5845 + $0x78] sm:$0xf]
      %s5862 = scalar_lea.vmem %s6, 16
      %v5863 = vld [vmem:[%s5862] sm:$0x1]
      %v5864 = vld [vmem:[#allocation10] sm:$0x3f]
      %v5865 = vlaneseq
      %v5866 = vshrl.u32 %v5865, 7
      %v5867 = vsub.s32 0, %v5866
      %v5868 = vrot.slane %v5841, %v5867
      %v5869 = vmul.f32 %v5864, %v5868
      %v5870 = vld [vmem:[#allocation10 + $0x1] sm:$0x3f]
      %v5871 = vlaneseq
      %v5872 = vshrl.u32 %v5871, 7
      %v5873 = vsub.s32 1, %v5872
      %v5874 = vrot.slane %v5841, %v5873
      %v5875 = vmul.f32 %v5870, %v5874
      %v5876 = vadd.f32 %v5869, %v5875
      %v5877 = vld [vmem:[#allocation10 + $0x2] sm:$0x3f]
      %v5878 = vlaneseq
      %v5879 = vshrl.u32 %v5878, 7
      %v5880 = vsub.s32 2, %v5879
      %v5881 = vrot.slane %v5841, %v5880
      %v5882 = vmul.f32 %v5877, %v5881
      %v5883 = vadd.f32 %v5876, %v5882
      %v5884 = vld [vmem:[#allocation10 + $0x4] sm:$0x3f]
      %v5885 = vlaneseq
      %v5886 = vshrl.u32 %v5885, 7
      %v5887 = vsub.s32 3, %v5886
      %v5888 = vrot.slane %v5841, %v5887
      %v5889 = vmul.f32 %v5884, %v5888
      %v5890 = vadd.f32 %v5883, %v5889
      %v5891 = vld [vmem:[#allocation10 + $0x5] sm:$0x3f]
      %v5892 = vlaneseq
      %v5893 = vshrl.u32 %v5892, 7
      %v5894 = vsub.s32 4, %v5893
      %v5895 = vrot.slane %v5841, %v5894
      %v5896 = vmul.f32 %v5891, %v5895
      %v5897 = vadd.f32 %v5890, %v5896
      %v5898 = vld [vmem:[#allocation10 + $0x6] sm:$0x3f]
      %v5899 = vlaneseq
      %v5900 = vshrl.u32 %v5899, 7
      %v5901 = vsub.s32 5, %v5900
      %v5902 = vrot.slane %v5841, %v5901
      %v5903 = vmul.f32 %v5898, %v5902
      %v5904 = vadd.f32 %v5897, %v5903
      %v5905 = vld [vmem:[#allocation10 + $0x8] sm:$0x3f]
      %v5906 = vlaneseq
      %v5907 = vshrl.u32 %v5906, 7
      %v5908 = vsub.s32 6, %v5907
      %v5909 = vrot.slane %v5841, %v5908
      %v5910 = vmul.f32 %v5905, %v5909
      %v5911 = vadd.f32 %v5904, %v5910
      %v5912 = vld [vmem:[#allocation10 + $0x9] sm:$0x3f]
      %v5913 = vlaneseq
      %v5914 = vshrl.u32 %v5913, 7
      %v5915 = vsub.s32 7, %v5914
      %v5916 = vrot.slane %v5841, %v5915
      %v5917 = vmul.f32 %v5912, %v5916
      %v5918 = vadd.f32 %v5911, %v5917
      %v5919 = vld [vmem:[#allocation10 + $0xa] sm:$0x3f]
      %v5920 = vlaneseq
      %v5921 = vshrl.u32 %v5920, 7
      %v5922 = vsub.s32 0, %v5921
      %v5923 = vrot.slane %v5842, %v5922
      %v5924 = vmul.f32 %v5919, %v5923
      %v5925 = vadd.f32 %v5918, %v5924
      %v5927 = vlaneseq
      %v5928 = vshrl.u32 %v5927, 7
      %v5929 = vsub.s32 0, %v5928
      %v5930 = vrot.slane %v5844, %v5929
      %v5932 = vadd.f32 %v5925, %v5930
      %vm5933 = vcmp.ge.f32.partialorder %v5932, 0.0
      %v5934 = vmul.f32 %v5932, 0.1
      %v5935 = vsel %vm5933, %v5932, %v5934
      %v5936 = vpack.c.bf16 %v5935, %v5935
      %v5938 = vlaneseq
      %v5939 = vshrl.u32 %v5938, 7
      %v5940 = vsub.s32 0, %v5939
      %v5941 = vrot.slane %v5863, %v5940
      %v5959 = vunpack.c.l.b16 %v5846
      %v5960 = vunpack.c.l.b16 %v5847
      %v5961 = vunpack.c.l.b16 %v5848
      %v5962 = vunpack.c.l.b16 %v5849
      %v5963 = vunpack.c.l.b16 %v5850
      %v5964 = vunpack.c.l.b16 %v5851
      %v5965 = vunpack.c.l.b16 %v5852
      %v5966 = vunpack.c.l.b16 %v5853
      %v5967 = vunpack.c.l.b16 %v5854
      %v5968 = vunpack.c.l.b16 %v5855
      %v5969 = vunpack.c.l.b16 %v5856
      %v5970 = vunpack.c.l.b16 %v5857
      %v5971 = vunpack.c.l.b16 %v5858
      %v5972 = vunpack.c.l.b16 %v5859
      %v5973 = vunpack.c.l.b16 %v5860
      %v5974 = vunpack.c.l.b16 %v5861
      %v5975 = vpack.c.b16 %v5960, %v5959
      %v5976 = vpack.c.b16 %v5962, %v5961
      %v5977 = vpack.c.b16 %v5964, %v5963
      %v5978 = vpack.c.b16 %v5966, %v5965
      %v5979 = vpack.c.b16 %v5968, %v5967
      %v5980 = vpack.c.b16 %v5970, %v5969
      %v5981 = vpack.c.b16 %v5972, %v5971
      %v5982 = vpack.c.b16 %v5974, %v5973
      %5991 = vmatprep.subr.bf16.mxu0 0
      %5992 = vmatpush1.bf16.msra.mxu0 %v5975
      %5993 = vmatprep.subr.bf16.mxu0 0
      %5994 = vmatpush1.bf16.msra.mxu0 %v5976
      %5995 = vmatprep.subr.bf16.mxu0 0
      %5996 = vmatpush1.bf16.msra.mxu0 %v5977
      %5997 = vmatprep.subr.bf16.mxu0 0
      %5998 = vmatpush1.bf16.msra.mxu0 %v5978
      %5999 = vmatprep.subr.bf16.mxu0 0
      %6000 = vmatpush1.bf16.msra.mxu0 %v5979
      %6001 = vmatprep.subr.bf16.mxu0 0
      %6002 = vmatpush1.bf16.msra.mxu0 %v5980
      %6003 = vmatprep.subr.bf16.mxu0 0
      %6004 = vmatpush1.bf16.msra.mxu0 %v5981
      %6005 = vmatprep.subr.bf16.mxu0 0
      %6006 = vmatpush1.bf16.msra.mxu0 %v5982
      %6007 = vmatprep.subr.bf16.mxu0 0
      %6008 = vmatpush1.bf16.msra.mxu0 0
      %6009 = vmatprep.subr.bf16.mxu0 0
      %6010 = vmatpush1.bf16.msra.mxu0 0
      %6011 = vmatprep.subr.bf16.mxu0 0
      %6012 = vmatpush1.bf16.msra.mxu0 0
      %6013 = vmatprep.subr.bf16.mxu0 0
      %6014 = vmatpush1.bf16.msra.mxu0 0
      %6015 = vmatprep.subr.bf16.mxu0 0
      %6016 = vmatpush1.bf16.msra.mxu0 0
      %6017 = vmatprep.subr.bf16.mxu0 0
      %6018 = vmatpush1.bf16.msra.mxu0 0
      %6019 = vmatprep.subr.bf16.mxu0 0
      %6020 = vmatpush1.bf16.msra.mxu0 0
      %6021 = vmatprep.subr.bf16.mxu0 0
      %6022 = vmatpush1.bf16.msra.mxu0 0
      %6023 = vmatprep.mubr.bf16.mxu0 0
      %6024 = vmatmul.mubr.bf16.gmra.mrb[0].mxu0 %v5936
      %v6025 = vpop.f32.mrb[0].mxu0
      %v6026 = vadd.f32 %v5941, %v6025
      %v6027 = vpop.f32.mrb[0].mxu0
      %v6028 = vpop.f32.mrb[0].mxu0
      %v6029 = vpop.f32.mrb[0].mxu0
      %6030 = vdwg.mxu0
      %vm6031 = vcmp.ge.f32.partialorder %v6026, 0.0
      %v6032 = vmul.f32 %v6026, 0.1
      %v6033 = vsel %vm6031, %v6026, %v6032
      %6034 = vst [vmem:[#allocation11] sm:$0xff] 0.0
      %6035 = vst [vmem:[#allocation11 + $0x8] sm:$0xff] 0.0
      %6036 = vst [vmem:[#allocation11 + $0x5] sm:$0x3] %v6033
      %6037 = vst [vmem:[#allocation11 + $0x5] sm:$0x30] %v6033
      %s6038 = scalar_lea.vmem %s3, 288
      %v6039 = vld [vmem:[%s6038] sm:$0xff]
      %v6040 = vld [vmem:[%s6038 + $0x10] sm:$0x1]
      %s6041 = scalar_lea.vmem %s4, 18
      %v6042 = vld [vmem:[%s6041] sm:$0x1]
      %s6043 = scalar_lea.vmem %s5, 2304
      %v6044 = vld [vmem:[%s6043] sm:$0xf]
      %v6045 = vld [vmem:[%s6043 + $0x8] sm:$0xf]
      %v6046 = vld [vmem:[%s6043 + $0x10] sm:$0xf]
      %v6047 = vld [vmem:[%s6043 + $0x18] sm:$0xf]
      %v6048 = vld [vmem:[%s6043 + $0x20] sm:$0xf]
      %v6049 = vld [vmem:[%s6043 + $0x28] sm:$0xf]
      %v6050 = vld [vmem:[%s6043 + $0x30] sm:$0xf]
      %v6051 = vld [vmem:[%s6043 + $0x38] sm:$0xf]
      %v6052 = vld [vmem:[%s6043 + $0x40] sm:$0xf]
      %v6053 = vld [vmem:[%s6043 + $0x48] sm:$0xf]
      %v6054 = vld [vmem:[%s6043 + $0x50] sm:$0xf]
      %v6055 = vld [vmem:[%s6043 + $0x58] sm:$0xf]
      %v6056 = vld [vmem:[%s6043 + $0x60] sm:$0xf]
      %v6057 = vld [vmem:[%s6043 + $0x68] sm:$0xf]
      %v6058 = vld [vmem:[%s6043 + $0x70] sm:$0xf]
      %v6059 = vld [vmem:[%s6043 + $0x78] sm:$0xf]
      %s6060 = scalar_lea.vmem %s6, 18
      %v6061 = vld [vmem:[%s6060] sm:$0x1]
      %v6062 = vld [vmem:[#allocation11] sm:$0x3f]
      %v6063 = vlaneseq
      %v6064 = vshrl.u32 %v6063, 7
      %v6065 = vsub.s32 0, %v6064
      %v6066 = vrot.slane %v6039, %v6065
      %v6067 = vmul.f32 %v6062, %v6066
      %v6068 = vld [vmem:[#allocation11 + $0x1] sm:$0x3f]
      %v6069 = vlaneseq
      %v6070 = vshrl.u32 %v6069, 7
      %v6071 = vsub.s32 1, %v6070
      %v6072 = vrot.slane %v6039, %v6071
      %v6073 = vmul.f32 %v6068, %v6072
      %v6074 = vadd.f32 %v6067, %v6073
      %v6075 = vld [vmem:[#allocation11 + $0x2] sm:$0x3f]
      %v6076 = vlaneseq
      %v6077 = vshrl.u32 %v6076, 7
      %v6078 = vsub.s32 2, %v6077
      %v6079 = vrot.slane %v6039, %v6078
      %v6080 = vmul.f32 %v6075, %v6079
      %v6081 = vadd.f32 %v6074, %v6080
      %v6082 = vld [vmem:[#allocation11 + $0x4] sm:$0x3f]
      %v6083 = vlaneseq
      %v6084 = vshrl.u32 %v6083, 7
      %v6085 = vsub.s32 3, %v6084
      %v6086 = vrot.slane %v6039, %v6085
      %v6087 = vmul.f32 %v6082, %v6086
      %v6088 = vadd.f32 %v6081, %v6087
      %v6089 = vld [vmem:[#allocation11 + $0x5] sm:$0x3f]
      %v6090 = vlaneseq
      %v6091 = vshrl.u32 %v6090, 7
      %v6092 = vsub.s32 4, %v6091
      %v6093 = vrot.slane %v6039, %v6092
      %v6094 = vmul.f32 %v6089, %v6093
      %v6095 = vadd.f32 %v6088, %v6094
      %v6096 = vld [vmem:[#allocation11 + $0x6] sm:$0x3f]
      %v6097 = vlaneseq
      %v6098 = vshrl.u32 %v6097, 7
      %v6099 = vsub.s32 5, %v6098
      %v6100 = vrot.slane %v6039, %v6099
      %v6101 = vmul.f32 %v6096, %v6100
      %v6102 = vadd.f32 %v6095, %v6101
      %v6103 = vld [vmem:[#allocation11 + $0x8] sm:$0x3f]
      %v6104 = vlaneseq
      %v6105 = vshrl.u32 %v6104, 7
      %v6106 = vsub.s32 6, %v6105
      %v6107 = vrot.slane %v6039, %v6106
      %v6108 = vmul.f32 %v6103, %v6107
      %v6109 = vadd.f32 %v6102, %v6108
      %v6110 = vld [vmem:[#allocation11 + $0x9] sm:$0x3f]
      %v6111 = vlaneseq
      %v6112 = vshrl.u32 %v6111, 7
      %v6113 = vsub.s32 7, %v6112
      %v6114 = vrot.slane %v6039, %v6113
      %v6115 = vmul.f32 %v6110, %v6114
      %v6116 = vadd.f32 %v6109, %v6115
      %v6117 = vld [vmem:[#allocation11 + $0xa] sm:$0x3f]
      %v6118 = vlaneseq
      %v6119 = vshrl.u32 %v6118, 7
      %v6120 = vsub.s32 0, %v6119
      %v6121 = vrot.slane %v6040, %v6120
      %v6122 = vmul.f32 %v6117, %v6121
      %v6123 = vadd.f32 %v6116, %v6122
      %v6125 = vlaneseq
      %v6126 = vshrl.u32 %v6125, 7
      %v6127 = vsub.s32 0, %v6126
      %v6128 = vrot.slane %v6042, %v6127
      %v6130 = vadd.f32 %v6123, %v6128
      %vm6131 = vcmp.ge.f32.partialorder %v6130, 0.0
      %v6132 = vmul.f32 %v6130, 0.1
      %v6133 = vsel %vm6131, %v6130, %v6132
      %v6134 = vpack.c.bf16 %v6133, %v6133
      %v6136 = vlaneseq
      %v6137 = vshrl.u32 %v6136, 7
      %v6138 = vsub.s32 0, %v6137
      %v6139 = vrot.slane %v6061, %v6138
      %v6157 = vunpack.c.l.b16 %v6044
      %v6158 = vunpack.c.l.b16 %v6045
      %v6159 = vunpack.c.l.b16 %v6046
      %v6160 = vunpack.c.l.b16 %v6047
      %v6161 = vunpack.c.l.b16 %v6048
      %v6162 = vunpack.c.l.b16 %v6049
      %v6163 = vunpack.c.l.b16 %v6050
      %v6164 = vunpack.c.l.b16 %v6051
      %v6165 = vunpack.c.l.b16 %v6052
      %v6166 = vunpack.c.l.b16 %v6053
      %v6167 = vunpack.c.l.b16 %v6054
      %v6168 = vunpack.c.l.b16 %v6055
      %v6169 = vunpack.c.l.b16 %v6056
      %v6170 = vunpack.c.l.b16 %v6057
      %v6171 = vunpack.c.l.b16 %v6058
      %v6172 = vunpack.c.l.b16 %v6059
      %v6173 = vpack.c.b16 %v6158, %v6157
      %v6174 = vpack.c.b16 %v6160, %v6159
      %v6175 = vpack.c.b16 %v6162, %v6161
      %v6176 = vpack.c.b16 %v6164, %v6163
      %v6177 = vpack.c.b16 %v6166, %v6165
      %v6178 = vpack.c.b16 %v6168, %v6167
      %v6179 = vpack.c.b16 %v6170, %v6169
      %v6180 = vpack.c.b16 %v6172, %v6171
      %6189 = vmatprep.subr.bf16.mxu0 0
      %6190 = vmatpush1.bf16.msra.mxu0 %v6173
      %6191 = vmatprep.subr.bf16.mxu0 0
      %6192 = vmatpush1.bf16.msra.mxu0 %v6174
      %6193 = vmatprep.subr.bf16.mxu0 0
      %6194 = vmatpush1.bf16.msra.mxu0 %v6175
      %6195 = vmatprep.subr.bf16.mxu0 0
      %6196 = vmatpush1.bf16.msra.mxu0 %v6176
      %6197 = vmatprep.subr.bf16.mxu0 0
      %6198 = vmatpush1.bf16.msra.mxu0 %v6177
      %6199 = vmatprep.subr.bf16.mxu0 0
      %6200 = vmatpush1.bf16.msra.mxu0 %v6178
      %6201 = vmatprep.subr.bf16.mxu0 0
      %6202 = vmatpush1.bf16.msra.mxu0 %v6179
      %6203 = vmatprep.subr.bf16.mxu0 0
      %6204 = vmatpush1.bf16.msra.mxu0 %v6180
      %6205 = vmatprep.subr.bf16.mxu0 0
      %6206 = vmatpush1.bf16.msra.mxu0 0
      %6207 = vmatprep.subr.bf16.mxu0 0
      %6208 = vmatpush1.bf16.msra.mxu0 0
      %6209 = vmatprep.subr.bf16.mxu0 0
      %6210 = vmatpush1.bf16.msra.mxu0 0
      %6211 = vmatprep.subr.bf16.mxu0 0
      %6212 = vmatpush1.bf16.msra.mxu0 0
      %6213 = vmatprep.subr.bf16.mxu0 0
      %6214 = vmatpush1.bf16.msra.mxu0 0
      %6215 = vmatprep.subr.bf16.mxu0 0
      %6216 = vmatpush1.bf16.msra.mxu0 0
      %6217 = vmatprep.subr.bf16.mxu0 0
      %6218 = vmatpush1.bf16.msra.mxu0 0
      %6219 = vmatprep.subr.bf16.mxu0 0
      %6220 = vmatpush1.bf16.msra.mxu0 0
      %6221 = vmatprep.mubr.bf16.mxu0 0
      %6222 = vmatmul.mubr.bf16.gmra.mrb[0].mxu0 %v6134
      %v6223 = vpop.f32.mrb[0].mxu0
      %v6224 = vadd.f32 %v6139, %v6223
      %v6225 = vpop.f32.mrb[0].mxu0
      %v6226 = vpop.f32.mrb[0].mxu0
      %v6227 = vpop.f32.mrb[0].mxu0
      %6228 = vdwg.mxu0
      %vm6229 = vcmp.ge.f32.partialorder %v6224, 0.0
      %v6230 = vmul.f32 %v6224, 0.1
      %v6231 = vsel %vm6229, %v6224, %v6230
      %6232 = vst [vmem:[#allocation12] sm:$0xff] 0.0
      %6233 = vst [vmem:[#allocation12 + $0x8] sm:$0xff] 0.0
      %6234 = vst [vmem:[#allocation12 + $0x5] sm:$0x3] %v6231
      %6235 = vst [vmem:[#allocation12 + $0x5] sm:$0x30] %v6231
      %s6236 = scalar_lea.vmem %s3, 320
      %v6237 = vld [vmem:[%s6236] sm:$0xff]
      %v6238 = vld [vmem:[%s6236 + $0x10] sm:$0x1]
      %s6239 = scalar_lea.vmem %s4, 20
      %v6240 = vld [vmem:[%s6239] sm:$0x1]
      %s6241 = scalar_lea.vmem %s5, 2560
      %v6242 = vld [vmem:[%s6241] sm:$0xf]
      %v6243 = vld [vmem:[%s6241 + $0x8] sm:$0xf]
      %v6244 = vld [vmem:[%s6241 + $0x10] sm:$0xf]
      %v6245 = vld [vmem:[%s6241 + $0x18] sm:$0xf]
      %v6246 = vld [vmem:[%s6241 + $0x20] sm:$0xf]
      %v6247 = vld [vmem:[%s6241 + $0x28] sm:$0xf]
      %v6248 = vld [vmem:[%s6241 + $0x30] sm:$0xf]
      %v6249 = vld [vmem:[%s6241 + $0x38] sm:$0xf]
      %v6250 = vld [vmem:[%s6241 + $0x40] sm:$0xf]
      %v6251 = vld [vmem:[%s6241 + $0x48] sm:$0xf]
      %v6252 = vld [vmem:[%s6241 + $0x50] sm:$0xf]
      %v6253 = vld [vmem:[%s6241 + $0x58] sm:$0xf]
      %v6254 = vld [vmem:[%s6241 + $0x60] sm:$0xf]
      %v6255 = vld [vmem:[%s6241 + $0x68] sm:$0xf]
      %v6256 = vld [vmem:[%s6241 + $0x70] sm:$0xf]
      %v6257 = vld [vmem:[%s6241 + $0x78] sm:$0xf]
      %s6258 = scalar_lea.vmem %s6, 20
      %v6259 = vld [vmem:[%s6258] sm:$0x1]
      %v6260 = vld [vmem:[#allocation12] sm:$0x3f]
      %v6261 = vlaneseq
      %v6262 = vshrl.u32 %v6261, 7
      %v6263 = vsub.s32 0, %v6262
      %v6264 = vrot.slane %v6237, %v6263
      %v6265 = vmul.f32 %v6260, %v6264
      %v6266 = vld [vmem:[#allocation12 + $0x1] sm:$0x3f]
      %v6267 = vlaneseq
      %v6268 = vshrl.u32 %v6267, 7
      %v6269 = vsub.s32 1, %v6268
      %v6270 = vrot.slane %v6237, %v6269
      %v6271 = vmul.f32 %v6266, %v6270
      %v6272 = vadd.f32 %v6265, %v6271
      %v6273 = vld [vmem:[#allocation12 + $0x2] sm:$0x3f]
      %v6274 = vlaneseq
      %v6275 = vshrl.u32 %v6274, 7
      %v6276 = vsub.s32 2, %v6275
      %v6277 = vrot.slane %v6237, %v6276
      %v6278 = vmul.f32 %v6273, %v6277
      %v6279 = vadd.f32 %v6272, %v6278
      %v6280 = vld [vmem:[#allocation12 + $0x4] sm:$0x3f]
      %v6281 = vlaneseq
      %v6282 = vshrl.u32 %v6281, 7
      %v6283 = vsub.s32 3, %v6282
      %v6284 = vrot.slane %v6237, %v6283
      %v6285 = vmul.f32 %v6280, %v6284
      %v6286 = vadd.f32 %v6279, %v6285
      %v6287 = vld [vmem:[#allocation12 + $0x5] sm:$0x3f]
      %v6288 = vlaneseq
      %v6289 = vshrl.u32 %v6288, 7
      %v6290 = vsub.s32 4, %v6289
      %v6291 = vrot.slane %v6237, %v6290
      %v6292 = vmul.f32 %v6287, %v6291
      %v6293 = vadd.f32 %v6286, %v6292
      %v6294 = vld [vmem:[#allocation12 + $0x6] sm:$0x3f]
      %v6295 = vlaneseq
      %v6296 = vshrl.u32 %v6295, 7
      %v6297 = vsub.s32 5, %v6296
      %v6298 = vrot.slane %v6237, %v6297
      %v6299 = vmul.f32 %v6294, %v6298
      %v6300 = vadd.f32 %v6293, %v6299
      %v6301 = vld [vmem:[#allocation12 + $0x8] sm:$0x3f]
      %v6302 = vlaneseq
      %v6303 = vshrl.u32 %v6302, 7
      %v6304 = vsub.s32 6, %v6303
      %v6305 = vrot.slane %v6237, %v6304
      %v6306 = vmul.f32 %v6301, %v6305
      %v6307 = vadd.f32 %v6300, %v6306
      %v6308 = vld [vmem:[#allocation12 + $0x9] sm:$0x3f]
      %v6309 = vlaneseq
      %v6310 = vshrl.u32 %v6309, 7
      %v6311 = vsub.s32 7, %v6310
      %v6312 = vrot.slane %v6237, %v6311
      %v6313 = vmul.f32 %v6308, %v6312
      %v6314 = vadd.f32 %v6307, %v6313
      %v6315 = vld [vmem:[#allocation12 + $0xa] sm:$0x3f]
      %v6316 = vlaneseq
      %v6317 = vshrl.u32 %v6316, 7
      %v6318 = vsub.s32 0, %v6317
      %v6319 = vrot.slane %v6238, %v6318
      %v6320 = vmul.f32 %v6315, %v6319
      %v6321 = vadd.f32 %v6314, %v6320
      %v6323 = vlaneseq
      %v6324 = vshrl.u32 %v6323, 7
      %v6325 = vsub.s32 0, %v6324
      %v6326 = vrot.slane %v6240, %v6325
      %v6328 = vadd.f32 %v6321, %v6326
      %vm6329 = vcmp.ge.f32.partialorder %v6328, 0.0
      %v6330 = vmul.f32 %v6328, 0.1
      %v6331 = vsel %vm6329, %v6328, %v6330
      %v6332 = vpack.c.bf16 %v6331, %v6331
      %v6334 = vlaneseq
      %v6335 = vshrl.u32 %v6334, 7
      %v6336 = vsub.s32 0, %v6335
      %v6337 = vrot.slane %v6259, %v6336
      %v6355 = vunpack.c.l.b16 %v6242
      %v6356 = vunpack.c.l.b16 %v6243
      %v6357 = vunpack.c.l.b16 %v6244
      %v6358 = vunpack.c.l.b16 %v6245
      %v6359 = vunpack.c.l.b16 %v6246
      %v6360 = vunpack.c.l.b16 %v6247
      %v6361 = vunpack.c.l.b16 %v6248
      %v6362 = vunpack.c.l.b16 %v6249
      %v6363 = vunpack.c.l.b16 %v6250
      %v6364 = vunpack.c.l.b16 %v6251
      %v6365 = vunpack.c.l.b16 %v6252
      %v6366 = vunpack.c.l.b16 %v6253
      %v6367 = vunpack.c.l.b16 %v6254
      %v6368 = vunpack.c.l.b16 %v6255
      %v6369 = vunpack.c.l.b16 %v6256
      %v6370 = vunpack.c.l.b16 %v6257
      %v6371 = vpack.c.b16 %v6356, %v6355
      %v6372 = vpack.c.b16 %v6358, %v6357
      %v6373 = vpack.c.b16 %v6360, %v6359
      %v6374 = vpack.c.b16 %v6362, %v6361
      %v6375 = vpack.c.b16 %v6364, %v6363
      %v6376 = vpack.c.b16 %v6366, %v6365
      %v6377 = vpack.c.b16 %v6368, %v6367
      %v6378 = vpack.c.b16 %v6370, %v6369
      %6387 = vmatprep.subr.bf16.mxu0 0
      %6388 = vmatpush1.bf16.msra.mxu0 %v6371
      %6389 = vmatprep.subr.bf16.mxu0 0
      %6390 = vmatpush1.bf16.msra.mxu0 %v6372
      %6391 = vmatprep.subr.bf16.mxu0 0
      %6392 = vmatpush1.bf16.msra.mxu0 %v6373
      %6393 = vmatprep.subr.bf16.mxu0 0
      %6394 = vmatpush1.bf16.msra.mxu0 %v6374
      %6395 = vmatprep.subr.bf16.mxu0 0
      %6396 = vmatpush1.bf16.msra.mxu0 %v6375
      %6397 = vmatprep.subr.bf16.mxu0 0
      %6398 = vmatpush1.bf16.msra.mxu0 %v6376
      %6399 = vmatprep.subr.bf16.mxu0 0
      %6400 = vmatpush1.bf16.msra.mxu0 %v6377
      %6401 = vmatprep.subr.bf16.mxu0 0
      %6402 = vmatpush1.bf16.msra.mxu0 %v6378
      %6403 = vmatprep.subr.bf16.mxu0 0
      %6404 = vmatpush1.bf16.msra.mxu0 0
      %6405 = vmatprep.subr.bf16.mxu0 0
      %6406 = vmatpush1.bf16.msra.mxu0 0
      %6407 = vmatprep.subr.bf16.mxu0 0
      %6408 = vmatpush1.bf16.msra.mxu0 0
      %6409 = vmatprep.subr.bf16.mxu0 0
      %6410 = vmatpush1.bf16.msra.mxu0 0
      %6411 = vmatprep.subr.bf16.mxu0 0
      %6412 = vmatpush1.bf16.msra.mxu0 0
      %6413 = vmatprep.subr.bf16.mxu0 0
      %6414 = vmatpush1.bf16.msra.mxu0 0
      %6415 = vmatprep.subr.bf16.mxu0 0
      %6416 = vmatpush1.bf16.msra.mxu0 0
      %6417 = vmatprep.subr.bf16.mxu0 0
      %6418 = vmatpush1.bf16.msra.mxu0 0
      %6419 = vmatprep.mubr.bf16.mxu0 0
      %6420 = vmatmul.mubr.bf16.gmra.mrb[0].mxu0 %v6332
      %v6421 = vpop.f32.mrb[0].mxu0
      %v6422 = vadd.f32 %v6337, %v6421
      %v6423 = vpop.f32.mrb[0].mxu0
      %v6424 = vpop.f32.mrb[0].mxu0
      %v6425 = vpop.f32.mrb[0].mxu0
      %6426 = vdwg.mxu0
      %vm6427 = vcmp.ge.f32.partialorder %v6422, 0.0
      %v6428 = vmul.f32 %v6422, 0.1
      %v6429 = vsel %vm6427, %v6422, %v6428
      %6430 = vst [vmem:[#allocation13] sm:$0xff] 0.0
      %6431 = vst [vmem:[#allocation13 + $0x8] sm:$0xff] 0.0
      %6432 = vst [vmem:[#allocation13 + $0x5] sm:$0x3] %v6429
      %6433 = vst [vmem:[#allocation13 + $0x5] sm:$0x30] %v6429
      %s6434 = scalar_lea.vmem %s3, 352
      %v6435 = vld [vmem:[%s6434] sm:$0xff]
      %v6436 = vld [vmem:[%s6434 + $0x10] sm:$0x1]
      %s6437 = scalar_lea.vmem %s4, 22
      %v6438 = vld [vmem:[%s6437] sm:$0x1]
      %s6439 = scalar_lea.vmem %s5, 2816
      %v6440 = vld [vmem:[%s6439] sm:$0xff]
      %v6441 = vld [vmem:[%s6439 + $0x8] sm:$0xff]
      %v6442 = vld [vmem:[%s6439 + $0x10] sm:$0xff]
      %v6443 = vld [vmem:[%s6439 + $0x18] sm:$0xff]
      %v6444 = vld [vmem:[%s6439 + $0x20] sm:$0xff]
      %v6445 = vld [vmem:[%s6439 + $0x28] sm:$0xff]
      %v6446 = vld [vmem:[%s6439 + $0x30] sm:$0xff]
      %v6447 = vld [vmem:[%s6439 + $0x38] sm:$0xff]
      %v6448 = vld [vmem:[%s6439 + $0x40] sm:$0xff]
      %v6449 = vld [vmem:[%s6439 + $0x48] sm:$0xff]
      %v6450 = vld [vmem:[%s6439 + $0x50] sm:$0xff]
      %v6451 = vld [vmem:[%s6439 + $0x58] sm:$0xff]
      %v6452 = vld [vmem:[%s6439 + $0x60] sm:$0xff]
      %v6453 = vld [vmem:[%s6439 + $0x68] sm:$0xff]
      %v6454 = vld [vmem:[%s6439 + $0x70] sm:$0xff]
      %v6455 = vld [vmem:[%s6439 + $0x78] sm:$0xff]
      %s6456 = scalar_lea.vmem %s6, 22
      %v6457 = vld [vmem:[%s6456] sm:$0x3]
      %v6458 = vld [vmem:[#allocation13] sm:$0x3f]
      %v6459 = vlaneseq
      %v6460 = vshrl.u32 %v6459, 7
      %v6461 = vsub.s32 0, %v6460
      %v6462 = vrot.slane %v6435, %v6461
      %v6463 = vmul.f32 %v6458, %v6462
      %v6464 = vld [vmem:[#allocation13 + $0x1] sm:$0x3f]
      %v6465 = vlaneseq
      %v6466 = vshrl.u32 %v6465, 7
      %v6467 = vsub.s32 1, %v6466
      %v6468 = vrot.slane %v6435, %v6467
      %v6469 = vmul.f32 %v6464, %v6468
      %v6470 = vadd.f32 %v6463, %v6469
      %v6471 = vld [vmem:[#allocation13 + $0x2] sm:$0x3f]
      %v6472 = vlaneseq
      %v6473 = vshrl.u32 %v6472, 7
      %v6474 = vsub.s32 2, %v6473
      %v6475 = vrot.slane %v6435, %v6474
      %v6476 = vmul.f32 %v6471, %v6475
      %v6477 = vadd.f32 %v6470, %v6476
      %v6478 = vld [vmem:[#allocation13 + $0x4] sm:$0x3f]
      %v6479 = vlaneseq
      %v6480 = vshrl.u32 %v6479, 7
      %v6481 = vsub.s32 3, %v6480
      %v6482 = vrot.slane %v6435, %v6481
      %v6483 = vmul.f32 %v6478, %v6482
      %v6484 = vadd.f32 %v6477, %v6483
      %v6485 = vld [vmem:[#allocation13 + $0x5] sm:$0x3f]
      %v6486 = vlaneseq
      %v6487 = vshrl.u32 %v6486, 7
      %v6488 = vsub.s32 4, %v6487
      %v6489 = vrot.slane %v6435, %v6488
      %v6490 = vmul.f32 %v6485, %v6489
      %v6491 = vadd.f32 %v6484, %v6490
      %v6492 = vld [vmem:[#allocation13 + $0x6] sm:$0x3f]
      %v6493 = vlaneseq
      %v6494 = vshrl.u32 %v6493, 7
      %v6495 = vsub.s32 5, %v6494
      %v6496 = vrot.slane %v6435, %v6495
      %v6497 = vmul.f32 %v6492, %v6496
      %v6498 = vadd.f32 %v6491, %v6497
      %v6499 = vld [vmem:[#allocation13 + $0x8] sm:$0x3f]
      %v6500 = vlaneseq
      %v6501 = vshrl.u32 %v6500, 7
      %v6502 = vsub.s32 6, %v6501
      %v6503 = vrot.slane %v6435, %v6502
      %v6504 = vmul.f32 %v6499, %v6503
      %v6505 = vadd.f32 %v6498, %v6504
      %v6506 = vld [vmem:[#allocation13 + $0x9] sm:$0x3f]
      %v6507 = vlaneseq
      %v6508 = vshrl.u32 %v6507, 7
      %v6509 = vsub.s32 7, %v6508
      %v6510 = vrot.slane %v6435, %v6509
      %v6511 = vmul.f32 %v6506, %v6510
      %v6512 = vadd.f32 %v6505, %v6511
      %v6513 = vld [vmem:[#allocation13 + $0xa] sm:$0x3f]
      %v6514 = vlaneseq
      %v6515 = vshrl.u32 %v6514, 7
      %v6516 = vsub.s32 0, %v6515
      %v6517 = vrot.slane %v6436, %v6516
      %v6518 = vmul.f32 %v6513, %v6517
      %v6519 = vadd.f32 %v6512, %v6518
      %v6521 = vlaneseq
      %v6522 = vshrl.u32 %v6521, 7
      %v6523 = vsub.s32 0, %v6522
      %v6524 = vrot.slane %v6438, %v6523
      %v6526 = vadd.f32 %v6519, %v6524
      %vm6527 = vcmp.ge.f32.partialorder %v6526, 0.0
      %v6528 = vmul.f32 %v6526, 0.1
      %v6529 = vsel %vm6527, %v6526, %v6528
      %v6530 = vpack.c.bf16 %v6529, %v6529
      %v6531 = vld [vmem:[%s10] sm:$0x1]
      %vm6532 = vcmask 48128
      %v6534 = vsel %vm6532, %v6531, 0
      %v6537 = vsel %vm5319, %v6530, 0
      %6539 = vmatprep.subr.bf16.mxu0 0
      %6540 = vmatpush1.bf16.msra.mxu0 %v6537
      %6541 = vmatprep.subr.bf16.mxu0 0
      %6542 = vmatpush1.bf16.msra.mxu0 0
      %6543 = vmatprep.subr.bf16.mxu0 0
      %6544 = vmatpush1.bf16.msra.mxu0 0
      %6545 = vmatprep.subr.bf16.mxu0 0
      %6546 = vmatpush1.bf16.msra.mxu0 0
      %6547 = vmatprep.subr.bf16.mxu0 0
      %6548 = vmatpush1.bf16.msra.mxu0 0
      %6549 = vmatprep.subr.bf16.mxu0 0
      %6550 = vmatpush1.bf16.msra.mxu0 0
      %6551 = vmatprep.subr.bf16.mxu0 0
      %6552 = vmatpush1.bf16.msra.mxu0 0
      %6553 = vmatprep.subr.bf16.mxu0 0
      %6554 = vmatpush1.bf16.msra.mxu0 0
      %6555 = vmatprep.subr.bf16.mxu0 0
      %6556 = vmatpush1.bf16.msra.mxu0 0
      %6557 = vmatprep.subr.bf16.mxu0 0
      %6558 = vmatpush1.bf16.msra.mxu0 0
      %6559 = vmatprep.subr.bf16.mxu0 0
      %6560 = vmatpush1.bf16.msra.mxu0 0
      %6561 = vmatprep.subr.bf16.mxu0 0
      %6562 = vmatpush1.bf16.msra.mxu0 0
      %6563 = vmatprep.subr.bf16.mxu0 0
      %6564 = vmatpush1.bf16.msra.mxu0 0
      %6565 = vmatprep.subr.bf16.mxu0 0
      %6566 = vmatpush1.bf16.msra.mxu0 0
      %6567 = vmatprep.subr.bf16.mxu0 0
      %6568 = vmatpush1.bf16.msra.mxu0 0
      %6569 = vmatprep.subr.bf16.mxu0 0
      %6570 = vmatpush1.bf16.msra.mxu0 0
      %6571 = vmatprep.mubr.bf16.mxu0 0
      %6572 = vmatmul.mubr.bf16.gmra.mrb[0].mxu0 %v6534
      %v6573 = vpop.f32.mrb[0].mxu0
      %v6574 = vadd.f32 0.0, %v6573
      %v6575 = vpop.f32.mrb[0].mxu0
      %v6576 = vpop.f32.mrb[0].mxu0
      %v6577 = vpop.f32.mrb[0].mxu0
      %6578 = vdwg.mxu0
      %v6579 = vpack.c.bf16 %v6574, %v6574
      %v6596 = vunpack.c.l.b16 %v6440
      %v6597 = vunpack.c.h.b16 %v6440
      %v6598 = vunpack.c.l.b16 %v6441
      %v6599 = vunpack.c.h.b16 %v6441
      %v6600 = vunpack.c.l.b16 %v6442
      %v6601 = vunpack.c.h.b16 %v6442
      %v6602 = vunpack.c.l.b16 %v6443
      %v6603 = vunpack.c.h.b16 %v6443
      %v6604 = vunpack.c.l.b16 %v6444
      %v6605 = vunpack.c.h.b16 %v6444
      %v6606 = vunpack.c.l.b16 %v6445
      %v6607 = vunpack.c.h.b16 %v6445
      %v6608 = vunpack.c.l.b16 %v6446
      %v6609 = vunpack.c.h.b16 %v6446
      %v6610 = vunpack.c.l.b16 %v6447
      %v6611 = vunpack.c.h.b16 %v6447
      %v6612 = vunpack.c.l.b16 %v6448
      %v6613 = vunpack.c.h.b16 %v6448
      %v6614 = vunpack.c.l.b16 %v6449
      %v6615 = vunpack.c.h.b16 %v6449
      %v6616 = vunpack.c.l.b16 %v6450
      %v6617 = vunpack.c.h.b16 %v6450
      %v6618 = vunpack.c.l.b16 %v6451
      %v6619 = vunpack.c.h.b16 %v6451
      %v6620 = vunpack.c.l.b16 %v6452
      %v6621 = vunpack.c.h.b16 %v6452
      %v6622 = vunpack.c.l.b16 %v6453
      %v6623 = vunpack.c.h.b16 %v6453
      %v6624 = vunpack.c.l.b16 %v6454
      %v6625 = vunpack.c.h.b16 %v6454
      %v6626 = vunpack.c.l.b16 %v6455
      %v6627 = vunpack.c.h.b16 %v6455
      %v6628 = vpack.c.b16 %v6598, %v6596
      %v6629 = vpack.c.b16 %v6599, %v6597
      %v6630 = vpack.c.b16 %v6602, %v6600
      %v6631 = vpack.c.b16 %v6603, %v6601
      %v6632 = vpack.c.b16 %v6606, %v6604
      %v6633 = vpack.c.b16 %v6607, %v6605
      %v6634 = vpack.c.b16 %v6610, %v6608
      %v6635 = vpack.c.b16 %v6611, %v6609
      %v6636 = vpack.c.b16 %v6614, %v6612
      %v6637 = vpack.c.b16 %v6615, %v6613
      %v6638 = vpack.c.b16 %v6618, %v6616
      %v6639 = vpack.c.b16 %v6619, %v6617
      %v6640 = vpack.c.b16 %v6622, %v6620
      %v6641 = vpack.c.b16 %v6623, %v6621
      %v6642 = vpack.c.b16 %v6626, %v6624
      %v6643 = vpack.c.b16 %v6627, %v6625
      %v6661 = vlaneseq
      %v6662 = vshrl.u32 %v6661, 7
      %v6663 = vsub.s32 0, %v6662
      %v6664 = vrot.slane %v6457, %v6663
      %v6665 = vlaneseq
      %v6666 = vshrl.u32 %v6665, 7
      %v6667 = vsub.s32 1, %v6666
      %v6668 = vrot.slane %v6457, %v6667
      %6671 = vmatprep.subr.bf16.mxu0 %v6629
      %6672 = vmatpush1.bf16.msra.mxu0 %v6628
      %6673 = vmatprep.subr.bf16.mxu0 %v6631
      %6674 = vmatpush1.bf16.msra.mxu0 %v6630
      %6675 = vmatprep.subr.bf16.mxu0 %v6633
      %6676 = vmatpush1.bf16.msra.mxu0 %v6632
      %6677 = vmatprep.subr.bf16.mxu0 %v6635
      %6678 = vmatpush1.bf16.msra.mxu0 %v6634
      %6679 = vmatprep.subr.bf16.mxu0 %v6637
      %6680 = vmatpush1.bf16.msra.mxu0 %v6636
      %6681 = vmatprep.subr.bf16.mxu0 %v6639
      %6682 = vmatpush1.bf16.msra.mxu0 %v6638
      %6683 = vmatprep.subr.bf16.mxu0 %v6641
      %6684 = vmatpush1.bf16.msra.mxu0 %v6640
      %6685 = vmatprep.subr.bf16.mxu0 %v6643
      %6686 = vmatpush1.bf16.msra.mxu0 %v6642
      %6687 = vmatprep.subr.bf16.mxu0 0
      %6688 = vmatpush1.bf16.msra.mxu0 0
      %6689 = vmatprep.subr.bf16.mxu0 0
      %6690 = vmatpush1.bf16.msra.mxu0 0
      %6691 = vmatprep.subr.bf16.mxu0 0
      %6692 = vmatpush1.bf16.msra.mxu0 0
      %6693 = vmatprep.subr.bf16.mxu0 0
      %6694 = vmatpush1.bf16.msra.mxu0 0
      %6695 = vmatprep.subr.bf16.mxu0 0
      %6696 = vmatpush1.bf16.msra.mxu0 0
      %6697 = vmatprep.subr.bf16.mxu0 0
      %6698 = vmatpush1.bf16.msra.mxu0 0
      %6699 = vmatprep.subr.bf16.mxu0 0
      %6700 = vmatpush1.bf16.msra.mxu0 0
      %6701 = vmatprep.subr.bf16.mxu0 0
      %6702 = vmatpush1.bf16.msra.mxu0 0
      %6703 = vmatprep.mubr.bf16.mxu0 0
      %6704 = vmatmul.mubr.bf16.gmra.mrb[0].mxu0 %v6579
      %v6705 = vpop.f32.mrb[0].mxu0
      %v6706 = vadd.f32 %v6664, %v6705
      %v6707 = vpop.f32.mrb[0].mxu0
      %v6708 = vadd.f32 %v6668, %v6707
      %v6709 = vpop.f32.mrb[0].mxu0
      %v6710 = vpop.f32.mrb[0].mxu0
      %6711 = vdwg.mxu0
      %vm6712 = vcmp.ge.f32.partialorder %v6706, 0.0
      %vm6713 = vcmp.ge.f32.partialorder %v6708, 0.0
      %v6714 = vmul.f32 %v6706, 0.1
      %v6715 = vmul.f32 %v6708, 0.1
      %v6716 = vsel %vm6712, %v6706, %v6714
      %v6717 = vsel %vm6713, %v6708, %v6715
      %6718 = vst [vmem:[#allocation14] sm:$0xff] 0.0
      %6719 = vst [vmem:[#allocation14 + $0x8] sm:$0xff] 0.0
      %6720 = vst [vmem:[#allocation14 + $0x10] sm:$0x1] 0.0
      %6721 = vst [vmem:[#allocation14 + $0x18] sm:$0x1] 0.0
      %v6724 = vcombine.low %v6716, %v6717
      %v6726 = vunpack.c.l.s4 1966171168
      %v6727 = vunpack.c.0.s8 %v6726
      %v6728 = vlaneseq
      %v6729 = vshrl.u32 %v6728, 7
      %v6730 = vsub.s32 %v6727, %v6729
      %v6731 = vrot.slane %v6724, %v6730
      %v6733 = vunpack.c.l.s4 1966171168
      %v6734 = vunpack.c.0.s8 %v6733
      %v6735 = vlaneseq
      %v6736 = vshrl.u32 %v6735, 7
      %v6737 = vsub.s32 %v6734, %v6736
      %v6738 = vrot.slane %v6731, %v6737
      %v6740 = vlaneseq
      %vm6741 = vcmp.ge.s32.totalorder %v6740, 0
      %vm6742 = vcmp.lt.s32.totalorder %v6740, 256
      %vm6743 = vmand %vm6741, %vm6742
      %s6744 = scalar_lea.vmem [#allocation14], 4
      %6745 = vst.msk [vmem:[%s6744] ss:$8 sm:$0x3] %vm6743, %v6738
      %6746 = vst.msk [vmem:[%s6744] ss:$8 sm:$0x0] %vm6743, %v6738
      %s6747 = scalar_lea.vmem %s3, 384
      %v6748 = vld [vmem:[%s6747] sm:$0xff]
      %v6749 = vld [vmem:[%s6747 + $0x8] sm:$0xff]
      %v6750 = vld [vmem:[%s6747 + $0x10] sm:$0x1]
      %v6751 = vld [vmem:[%s6747 + $0x18] sm:$0x1]
      %s6752 = scalar_lea.vmem %s4, 24
      %v6753 = vld [vmem:[%s6752] sm:$0x3]
      %s6754 = scalar_lea.vmem %s5, 3072
      %v6755 = vld [vmem:[%s6754] sm:$0xff]
      %v6756 = vld [vmem:[%s6754 + $0x8] sm:$0xff]
      %v6757 = vld [vmem:[%s6754 + $0x10] sm:$0xff]
      %v6758 = vld [vmem:[%s6754 + $0x18] sm:$0xff]
      %v6759 = vld [vmem:[%s6754 + $0x20] sm:$0xff]
      %v6760 = vld [vmem:[%s6754 + $0x28] sm:$0xff]
      %v6761 = vld [vmem:[%s6754 + $0x30] sm:$0xff]
      %v6762 = vld [vmem:[%s6754 + $0x38] sm:$0xff]
      %v6763 = vld [vmem:[%s6754 + $0x40] sm:$0xff]
      %v6764 = vld [vmem:[%s6754 + $0x48] sm:$0xff]
      %v6765 = vld [vmem:[%s6754 + $0x50] sm:$0xff]
      %v6766 = vld [vmem:[%s6754 + $0x58] sm:$0xff]
      %v6767 = vld [vmem:[%s6754 + $0x60] sm:$0xff]
      %v6768 = vld [vmem:[%s6754 + $0x68] sm:$0xff]
      %v6769 = vld [vmem:[%s6754 + $0x70] sm:$0xff]
      %v6770 = vld [vmem:[%s6754 + $0x78] sm:$0xff]
      %v6771 = vld [vmem:[%s6754 + $0x80] sm:$0xff]
      %v6772 = vld [vmem:[%s6754 + $0x88] sm:$0xff]
      %v6773 = vld [vmem:[%s6754 + $0x90] sm:$0xff]
      %v6774 = vld [vmem:[%s6754 + $0x98] sm:$0xff]
      %v6775 = vld [vmem:[%s6754 + $0xa0] sm:$0xff]
      %v6776 = vld [vmem:[%s6754 + $0xa8] sm:$0xff]
      %v6777 = vld [vmem:[%s6754 + $0xb0] sm:$0xff]
      %v6778 = vld [vmem:[%s6754 + $0xb8] sm:$0xff]
      %v6779 = vld [vmem:[%s6754 + $0xc0] sm:$0xff]
      %v6780 = vld [vmem:[%s6754 + $0xc8] sm:$0xff]
      %v6781 = vld [vmem:[%s6754 + $0xd0] sm:$0xff]
      %v6782 = vld [vmem:[%s6754 + $0xd8] sm:$0xff]
      %v6783 = vld [vmem:[%s6754 + $0xe0] sm:$0xff]
      %v6784 = vld [vmem:[%s6754 + $0xe8] sm:$0xff]
      %v6785 = vld [vmem:[%s6754 + $0xf0] sm:$0xff]
      %v6786 = vld [vmem:[%s6754 + $0xf8] sm:$0xff]
      %s6787 = scalar_lea.vmem %s6, 24
      %v6788 = vld [vmem:[%s6787] sm:$0x3]
      %v6789 = vld [vmem:[#allocation14] ss:$8 sm:$0x3]
      %v6792 = vcombine.low %v6748, %v6749
      %v6794 = vunpack.c.l.s4 1966171168
      %v6795 = vunpack.c.0.s8 %v6794
      %v6796 = vlaneseq
      %v6797 = vshrl.u32 %v6796, 7
      %v6798 = vsub.s32 %v6795, %v6797
      %v6799 = vrot.slane %v6792, %v6798
      %v6801 = vunpack.c.l.s4 1966171168
      %v6802 = vunpack.c.0.s8 %v6801
      %v6803 = vlaneseq
      %v6804 = vshrl.u32 %v6803, 7
      %v6805 = vsub.s32 %v6802, %v6804
      %v6806 = vrot.slane %v6799, %v6805
      %v6808 = vmul.f32 %v6789, %v6806
      %s6809 = scalar_lea.vmem [#allocation14], 1
      %v6810 = vld [vmem:[%s6809] ss:$8 sm:$0x3]
      %v6811 = vcombine.high %v6799, %v6799
      %v6813 = vunpack.c.l.s4 1966171168
      %v6814 = vunpack.c.0.s8 %v6813
      %v6815 = vlaneseq
      %v6816 = vshrl.u32 %v6815, 7
      %v6817 = vsub.s32 %v6814, %v6816
      %v6818 = vrot.slane %v6811, %v6817
      %v6820 = vmul.f32 %v6810, %v6818
      %v6821 = vadd.f32 %v6808, %v6820
      %s6822 = scalar_lea.vmem [#allocation14], 2
      %v6823 = vld [vmem:[%s6822] ss:$8 sm:$0x3]
      %v6824 = vcombine.high %v6806, %v6806
      %v6826 = vmul.f32 %v6823, %v6824
      %v6827 = vadd.f32 %v6821, %v6826
      %s6828 = scalar_lea.vmem [#allocation14], 3
      %v6829 = vld [vmem:[%s6828] ss:$8 sm:$0x3]
      %v6830 = vcombine.high %v6818, %v6818
      %v6832 = vmul.f32 %v6829, %v6830
      %v6833 = vadd.f32 %v6827, %v6832
      %v6834 = vld [vmem:[%s6744] ss:$8 sm:$0x3]
      %v6835 = vcombine.high %v6748, %v6749
      %v6837 = vunpack.c.l.s4 1966171168
      %v6838 = vunpack.c.0.s8 %v6837
      %v6839 = vlaneseq
      %v6840 = vshrl.u32 %v6839, 7
      %v6841 = vsub.s32 %v6838, %v6840
      %v6842 = vrot.slane %v6835, %v6841
      %v6844 = vunpack.c.l.s4 1966171168
      %v6845 = vunpack.c.0.s8 %v6844
      %v6846 = vlaneseq
      %v6847 = vshrl.u32 %v6846, 7
      %v6848 = vsub.s32 %v6845, %v6847
      %v6849 = vrot.slane %v6842, %v6848
      %v6851 = vmul.f32 %v6834, %v6849
      %v6852 = vadd.f32 %v6833, %v6851
      %s6853 = scalar_lea.vmem [#allocation14], 5
      %v6854 = vld [vmem:[%s6853] ss:$8 sm:$0x3]
      %v6855 = vcombine.high %v6842, %v6842
      %v6857 = vunpack.c.l.s4 1966171168
      %v6858 = vunpack.c.0.s8 %v6857
      %v6859 = vlaneseq
      %v6860 = vshrl.u32 %v6859, 7
      %v6861 = vsub.s32 %v6858, %v6860
      %v6862 = vrot.slane %v6855, %v6861
      %v6864 = vmul.f32 %v6854, %v6862
      %v6865 = vadd.f32 %v6852, %v6864
      %s6866 = scalar_lea.vmem [#allocation14], 6
      %v6867 = vld [vmem:[%s6866] ss:$8 sm:$0x3]
      %v6868 = vcombine.high %v6849, %v6849
      %v6870 = vmul.f32 %v6867, %v6868
      %v6871 = vadd.f32 %v6865, %v6870
      %s6872 = scalar_lea.vmem [#allocation14], 7
      %v6873 = vld [vmem:[%s6872] ss:$8 sm:$0x3]
      %v6874 = vcombine.high %v6862, %v6862
      %v6876 = vmul.f32 %v6873, %v6874
      %v6877 = vadd.f32 %v6871, %v6876
      %s6878 = scalar_lea.vmem [#allocation14], 16
      %v6879 = vld [vmem:[%s6878] ss:$8 sm:$0x3]
      %v6882 = vcombine.low %v6750, %v6751
      %v6884 = vunpack.c.l.s4 1966171168
      %v6885 = vunpack.c.0.s8 %v6884
      %v6886 = vlaneseq
      %v6887 = vshrl.u32 %v6886, 7
      %v6888 = vsub.s32 %v6885, %v6887
      %v6889 = vrot.slane %v6882, %v6888
      %v6891 = vunpack.c.l.s4 1966171168
      %v6892 = vunpack.c.0.s8 %v6891
      %v6893 = vlaneseq
      %v6894 = vshrl.u32 %v6893, 7
      %v6895 = vsub.s32 %v6892, %v6894
      %v6896 = vrot.slane %v6889, %v6895
      %v6898 = vmul.f32 %v6879, %v6896
      %v6899 = vadd.f32 %v6877, %v6898
      %v6900 = vadd.f32 %v6899, %v6753
      %vm6901 = vcmp.ge.f32.partialorder %v6900, 0.0
      %v6902 = vmul.f32 %v6900, 0.1
      %v6903 = vsel %vm6901, %v6900, %v6902
      %v6905 = vlaneseq
      %v6906 = vshrl.u32 %v6905, 7
      %v6907 = vsub.s32 0, %v6906
      %v6908 = vrot.slane %v6903, %v6907
      %v6909 = vlaneseq
      %v6910 = vshrl.u32 %v6909, 7
      %v6911 = vsub.s32 1, %v6910
      %v6912 = vrot.slane %v6903, %v6911
      %v6915 = vpack.c.bf16 %v6908, %v6908
      %v6916 = vpack.c.bf16 %v6912, %v6912
      %v6949 = vunpack.c.l.b16 %v6755
      %v6950 = vunpack.c.h.b16 %v6755
      %v6951 = vunpack.c.l.b16 %v6756
      %v6952 = vunpack.c.h.b16 %v6756
      %v6953 = vunpack.c.l.b16 %v6757
      %v6954 = vunpack.c.h.b16 %v6757
      %v6955 = vunpack.c.l.b16 %v6758
      %v6956 = vunpack.c.h.b16 %v6758
      %v6957 = vunpack.c.l.b16 %v6759
      %v6958 = vunpack.c.h.b16 %v6759
      %v6959 = vunpack.c.l.b16 %v6760
      %v6960 = vunpack.c.h.b16 %v6760
      %v6961 = vunpack.c.l.b16 %v6761
      %v6962 = vunpack.c.h.b16 %v6761
      %v6963 = vunpack.c.l.b16 %v6762
      %v6964 = vunpack.c.h.b16 %v6762
      %v6965 = vunpack.c.l.b16 %v6763
      %v6966 = vunpack.c.h.b16 %v6763
      %v6967 = vunpack.c.l.b16 %v6764
      %v6968 = vunpack.c.h.b16 %v6764
      %v6969 = vunpack.c.l.b16 %v6765
      %v6970 = vunpack.c.h.b16 %v6765
      %v6971 = vunpack.c.l.b16 %v6766
      %v6972 = vunpack.c.h.b16 %v6766
      %v6973 = vunpack.c.l.b16 %v6767
      %v6974 = vunpack.c.h.b16 %v6767
      %v6975 = vunpack.c.l.b16 %v6768
      %v6976 = vunpack.c.h.b16 %v6768
      %v6977 = vunpack.c.l.b16 %v6769
      %v6978 = vunpack.c.h.b16 %v6769
      %v6979 = vunpack.c.l.b16 %v6770
      %v6980 = vunpack.c.h.b16 %v6770
      %v6981 = vunpack.c.l.b16 %v6771
      %v6982 = vunpack.c.h.b16 %v6771
      %v6983 = vunpack.c.l.b16 %v6772
      %v6984 = vunpack.c.h.b16 %v6772
      %v6985 = vunpack.c.l.b16 %v6773
      %v6986 = vunpack.c.h.b16 %v6773
      %v6987 = vunpack.c.l.b16 %v6774
      %v6988 = vunpack.c.h.b16 %v6774
      %v6989 = vunpack.c.l.b16 %v6775
      %v6990 = vunpack.c.h.b16 %v6775
      %v6991 = vunpack.c.l.b16 %v6776
      %v6992 = vunpack.c.h.b16 %v6776
      %v6993 = vunpack.c.l.b16 %v6777
      %v6994 = vunpack.c.h.b16 %v6777
      %v6995 = vunpack.c.l.b16 %v6778
      %v6996 = vunpack.c.h.b16 %v6778
      %v6997 = vunpack.c.l.b16 %v6779
      %v6998 = vunpack.c.h.b16 %v6779
      %v6999 = vunpack.c.l.b16 %v6780
      %v7000 = vunpack.c.h.b16 %v6780
      %v7001 = vunpack.c.l.b16 %v6781
      %v7002 = vunpack.c.h.b16 %v6781
      %v7003 = vunpack.c.l.b16 %v6782
      %v7004 = vunpack.c.h.b16 %v6782
      %v7005 = vunpack.c.l.b16 %v6783
      %v7006 = vunpack.c.h.b16 %v6783
      %v7007 = vunpack.c.l.b16 %v6784
      %v7008 = vunpack.c.h.b16 %v6784
      %v7009 = vunpack.c.l.b16 %v6785
      %v7010 = vunpack.c.h.b16 %v6785
      %v7011 = vunpack.c.l.b16 %v6786
      %v7012 = vunpack.c.h.b16 %v6786
      %v7013 = vpack.c.b16 %v6951, %v6949
      %v7014 = vpack.c.b16 %v6952, %v6950
      %v7015 = vpack.c.b16 %v6955, %v6953
      %v7016 = vpack.c.b16 %v6956, %v6954
      %v7017 = vpack.c.b16 %v6959, %v6957
      %v7018 = vpack.c.b16 %v6960, %v6958
      %v7019 = vpack.c.b16 %v6963, %v6961
      %v7020 = vpack.c.b16 %v6964, %v6962
      %v7021 = vpack.c.b16 %v6967, %v6965
      %v7022 = vpack.c.b16 %v6968, %v6966
      %v7023 = vpack.c.b16 %v6971, %v6969
      %v7024 = vpack.c.b16 %v6972, %v6970
      %v7025 = vpack.c.b16 %v6975, %v6973
      %v7026 = vpack.c.b16 %v6976, %v6974
      %v7027 = vpack.c.b16 %v6979, %v6977
      %v7028 = vpack.c.b16 %v6980, %v6978
      %v7029 = vpack.c.b16 %v6983, %v6981
      %v7030 = vpack.c.b16 %v6984, %v6982
      %v7031 = vpack.c.b16 %v6987, %v6985
      %v7032 = vpack.c.b16 %v6988, %v6986
      %v7033 = vpack.c.b16 %v6991, %v6989
      %v7034 = vpack.c.b16 %v6992, %v6990
      %v7035 = vpack.c.b16 %v6995, %v6993
      %v7036 = vpack.c.b16 %v6996, %v6994
      %v7037 = vpack.c.b16 %v6999, %v6997
      %v7038 = vpack.c.b16 %v7000, %v6998
      %v7039 = vpack.c.b16 %v7003, %v7001
      %v7040 = vpack.c.b16 %v7004, %v7002
      %v7041 = vpack.c.b16 %v7007, %v7005
      %v7042 = vpack.c.b16 %v7008, %v7006
      %v7043 = vpack.c.b16 %v7011, %v7009
      %v7044 = vpack.c.b16 %v7012, %v7010
      %v7078 = vlaneseq
      %v7079 = vshrl.u32 %v7078, 7
      %v7080 = vsub.s32 0, %v7079
      %v7081 = vrot.slane %v6788, %v7080
      %v7082 = vlaneseq
      %v7083 = vshrl.u32 %v7082, 7
      %v7084 = vsub.s32 1, %v7083
      %v7085 = vrot.slane %v6788, %v7084
      %7088 = vmatprep.subr.bf16.mxu0 %v7014
      %7089 = vmatpush1.bf16.msra.mxu0 %v7013
      %7090 = vmatprep.subr.bf16.mxu0 %v7016
      %7091 = vmatpush1.bf16.msra.mxu0 %v7015
      %7092 = vmatprep.subr.bf16.mxu0 %v7018
      %7093 = vmatpush1.bf16.msra.mxu0 %v7017
      %7094 = vmatprep.subr.bf16.mxu0 %v7020
      %7095 = vmatpush1.bf16.msra.mxu0 %v7019
      %7096 = vmatprep.subr.bf16.mxu0 %v7022
      %7097 = vmatpush1.bf16.msra.mxu0 %v7021
      %7098 = vmatprep.subr.bf16.mxu0 %v7024
      %7099 = vmatpush1.bf16.msra.mxu0 %v7023
      %7100 = vmatprep.subr.bf16.mxu0 %v7026
      %7101 = vmatpush1.bf16.msra.mxu0 %v7025
      %7102 = vmatprep.subr.bf16.mxu0 %v7028
      %7103 = vmatpush1.bf16.msra.mxu0 %v7027
      %7104 = vmatprep.subr.bf16.mxu0 %v7030
      %7105 = vmatpush1.bf16.msra.mxu0 %v7029
      %7106 = vmatprep.subr.bf16.mxu0 %v7032
      %7107 = vmatpush1.bf16.msra.mxu0 %v7031
      %7108 = vmatprep.subr.bf16.mxu0 %v7034
      %7109 = vmatpush1.bf16.msra.mxu0 %v7033
      %7110 = vmatprep.subr.bf16.mxu0 %v7036
      %7111 = vmatpush1.bf16.msra.mxu0 %v7035
      %7112 = vmatprep.subr.bf16.mxu0 %v7038
      %7113 = vmatpush1.bf16.msra.mxu0 %v7037
      %7114 = vmatprep.subr.bf16.mxu0 %v7040
      %7115 = vmatpush1.bf16.msra.mxu0 %v7039
      %7116 = vmatprep.subr.bf16.mxu0 %v7042
      %7117 = vmatpush1.bf16.msra.mxu0 %v7041
      %7118 = vmatprep.subr.bf16.mxu0 %v7044
      %7119 = vmatpush1.bf16.msra.mxu0 %v7043
      %7120 = vmatprep.mubr.bf16.mxu0 %v6916
      %7121 = vmatmul.mubr.bf16.gmra.mrb[0].mxu0 %v6915
      %v7122 = vpop.f32.mrb[0].mxu0
      %v7123 = vadd.f32 %v7081, %v7122
      %v7124 = vpop.f32.mrb[0].mxu0
      %v7125 = vadd.f32 %v7085, %v7124
      %v7126 = vpop.f32.mrb[0].mxu0
      %v7127 = vpop.f32.mrb[0].mxu0
      %7128 = vdwg.mxu0
      %vm7129 = vcmp.ge.f32.partialorder %v7123, 0.0
      %vm7130 = vcmp.ge.f32.partialorder %v7125, 0.0
      %v7131 = vmul.f32 %v7123, 0.1
      %v7132 = vmul.f32 %v7125, 0.1
      %v7133 = vsel %vm7129, %v7123, %v7131
      %v7134 = vsel %vm7130, %v7125, %v7132
      %v7135 = vadd.f32 %v7133, 0.0
      %v7136 = vadd.f32 %v7134, 0.0
      %v7137 = vpack.c.bf16 %v7135, %v7135
      %v7138 = vpack.c.bf16 %v7136, %v7136
      %v7139 = vld [vmem:[%s11] sm:$0xff]
      %v7140 = vld [vmem:[%s11 + $0x8] sm:$0xff]
      %v7141 = vld [vmem:[%s11 + $0x10] sm:$0xff]
      %v7142 = vld [vmem:[%s11 + $0x18] sm:$0xff]
      %v7143 = vld [vmem:[%s11 + $0x20] sm:$0xff]
      %v7144 = vld [vmem:[%s11 + $0x28] sm:$0xff]
      %v7145 = vld [vmem:[%s11 + $0x30] sm:$0xff]
      %v7146 = vld [vmem:[%s11 + $0x38] sm:$0xff]
      %v7147 = vld [vmem:[%s11 + $0x40] sm:$0xff]
      %v7148 = vld [vmem:[%s11 + $0x48] sm:$0xff]
      %v7149 = vld [vmem:[%s11 + $0x50] sm:$0xff]
      %v7150 = vld [vmem:[%s11 + $0x58] sm:$0xff]
      %v7151 = vld [vmem:[%s11 + $0x60] sm:$0xff]
      %v7152 = vld [vmem:[%s11 + $0x68] sm:$0xff]
      %v7153 = vld [vmem:[%s11 + $0x70] sm:$0xff]
      %v7154 = vld [vmem:[%s11 + $0x78] sm:$0xff]
      %v7155 = vld [vmem:[%s11 + $0x80] sm:$0xff]
      %v7156 = vld [vmem:[%s11 + $0x88] sm:$0xff]
      %v7157 = vld [vmem:[%s11 + $0x90] sm:$0xff]
      %v7158 = vld [vmem:[%s11 + $0x98] sm:$0xff]
      %v7159 = vld [vmem:[%s11 + $0xa0] sm:$0xff]
      %v7160 = vld [vmem:[%s11 + $0xa8] sm:$0xff]
      %v7161 = vld [vmem:[%s11 + $0xb0] sm:$0xff]
      %v7162 = vld [vmem:[%s11 + $0xb8] sm:$0xff]
      %v7163 = vld [vmem:[%s11 + $0xc0] sm:$0xff]
      %v7164 = vld [vmem:[%s11 + $0xc8] sm:$0xff]
      %v7165 = vld [vmem:[%s11 + $0xd0] sm:$0xff]
      %v7166 = vld [vmem:[%s11 + $0xd8] sm:$0xff]
      %v7167 = vld [vmem:[%s11 + $0xe0] sm:$0xff]
      %v7168 = vld [vmem:[%s11 + $0xe8] sm:$0xff]
      %v7169 = vld [vmem:[%s11 + $0xf0] sm:$0xff]
      %v7170 = vld [vmem:[%s11 + $0xf8] sm:$0xff]
      %v7171 = vld [vmem:[%s11 + $0x100] sm:$0xff]
      %v7172 = vld [vmem:[%s11 + $0x108] sm:$0xff]
      %v7173 = vld [vmem:[%s11 + $0x110] sm:$0xff]
      %v7174 = vld [vmem:[%s11 + $0x118] sm:$0xff]
      %v7175 = vld [vmem:[%s11 + $0x120] sm:$0xff]
      %v7176 = vld [vmem:[%s11 + $0x128] sm:$0xff]
      %v7177 = vld [vmem:[%s11 + $0x130] sm:$0xff]
      %v7178 = vld [vmem:[%s11 + $0x138] sm:$0xff]
      %v7179 = vld [vmem:[%s11 + $0x140] sm:$0xff]
      %v7180 = vld [vmem:[%s11 + $0x148] sm:$0xff]
      %v7181 = vld [vmem:[%s11 + $0x150] sm:$0xff]
      %v7182 = vld [vmem:[%s11 + $0x158] sm:$0xff]
      %v7183 = vld [vmem:[%s11 + $0x160] sm:$0xff]
      %v7184 = vld [vmem:[%s11 + $0x168] sm:$0xff]
      %v7185 = vld [vmem:[%s11 + $0x170] sm:$0xff]
      %v7186 = vld [vmem:[%s11 + $0x178] sm:$0xff]
      %v7187 = vld [vmem:[%s11 + $0x180] sm:$0xff]
      %v7188 = vld [vmem:[%s11 + $0x188] sm:$0xff]
      %v7189 = vld [vmem:[%s11 + $0x190] sm:$0xff]
      %v7190 = vld [vmem:[%s11 + $0x198] sm:$0xff]
      %v7191 = vld [vmem:[%s11 + $0x1a0] sm:$0xff]
      %v7192 = vld [vmem:[%s11 + $0x1a8] sm:$0xff]
      %v7193 = vld [vmem:[%s11 + $0x1b0] sm:$0xff]
      %v7194 = vld [vmem:[%s11 + $0x1b8] sm:$0xff]
      %v7195 = vld [vmem:[%s11 + $0x1c0] sm:$0xff]
      %v7196 = vld [vmem:[%s11 + $0x1c8] sm:$0xff]
      %v7197 = vld [vmem:[%s11 + $0x1d0] sm:$0xff]
      %v7198 = vld [vmem:[%s11 + $0x1d8] sm:$0xff]
      %v7199 = vld [vmem:[%s11 + $0x1e0] sm:$0xff]
      %v7200 = vld [vmem:[%s11 + $0x1e8] sm:$0xff]
      %v7201 = vld [vmem:[%s11 + $0x1f0] sm:$0xff]
      %v7202 = vld [vmem:[%s11 + $0x1f8] sm:$0xff]
      %v7203 = vld [vmem:[%s11 + $0x200] sm:$0xff]
      %v7204 = vld [vmem:[%s11 + $0x208] sm:$0xff]
      %v7205 = vld [vmem:[%s11 + $0x210] sm:$0xff]
      %v7206 = vld [vmem:[%s11 + $0x218] sm:$0xff]
      %v7207 = vld [vmem:[%s11 + $0x220] sm:$0xff]
      %v7208 = vld [vmem:[%s11 + $0x228] sm:$0xff]
      %v7209 = vld [vmem:[%s11 + $0x230] sm:$0xff]
      %v7210 = vld [vmem:[%s11 + $0x238] sm:$0xff]
      %v7211 = vld [vmem:[%s11 + $0x240] sm:$0xff]
      %v7212 = vld [vmem:[%s11 + $0x248] sm:$0xff]
      %v7213 = vld [vmem:[%s11 + $0x250] sm:$0xff]
      %v7214 = vld [vmem:[%s11 + $0x258] sm:$0xff]
      %v7215 = vld [vmem:[%s11 + $0x260] sm:$0xff]
      %v7216 = vld [vmem:[%s11 + $0x268] sm:$0xff]
      %v7217 = vld [vmem:[%s11 + $0x270] sm:$0xff]
      %v7218 = vld [vmem:[%s11 + $0x278] sm:$0xff]
      %v7219 = vld [vmem:[%s11 + $0x280] sm:$0xff]
      %v7220 = vld [vmem:[%s11 + $0x288] sm:$0xff]
      %v7221 = vld [vmem:[%s11 + $0x290] sm:$0xff]
      %v7222 = vld [vmem:[%s11 + $0x298] sm:$0xff]
      %v7223 = vld [vmem:[%s11 + $0x2a0] sm:$0xff]
      %v7224 = vld [vmem:[%s11 + $0x2a8] sm:$0xff]
      %v7225 = vld [vmem:[%s11 + $0x2b0] sm:$0xff]
      %v7226 = vld [vmem:[%s11 + $0x2b8] sm:$0xff]
      %v7227 = vld [vmem:[%s11 + $0x2c0] sm:$0xff]
      %v7228 = vld [vmem:[%s11 + $0x2c8] sm:$0xff]
      %v7229 = vld [vmem:[%s11 + $0x2d0] sm:$0xff]
      %v7230 = vld [vmem:[%s11 + $0x2d8] sm:$0xff]
      %v7231 = vld [vmem:[%s11 + $0x2e0] sm:$0xff]
      %v7232 = vld [vmem:[%s11 + $0x2e8] sm:$0xff]
      %v7233 = vld [vmem:[%s11 + $0x2f0] sm:$0xff]
      %v7234 = vld [vmem:[%s11 + $0x2f8] sm:$0xff]
      %v7235 = vld [vmem:[%s11 + $0x300] sm:$0xff]
      %v7236 = vld [vmem:[%s11 + $0x308] sm:$0xff]
      %v7237 = vld [vmem:[%s11 + $0x310] sm:$0xff]
      %v7238 = vld [vmem:[%s11 + $0x318] sm:$0xff]
      %v7239 = vld [vmem:[%s11 + $0x320] sm:$0xff]
      %v7240 = vld [vmem:[%s11 + $0x328] sm:$0xff]
      %v7241 = vld [vmem:[%s11 + $0x330] sm:$0xff]
      %v7242 = vld [vmem:[%s11 + $0x338] sm:$0xff]
      %v7243 = vld [vmem:[%s11 + $0x340] sm:$0xff]
      %v7244 = vld [vmem:[%s11 + $0x348] sm:$0xff]
      %v7245 = vld [vmem:[%s11 + $0x350] sm:$0xff]
      %v7246 = vld [vmem:[%s11 + $0x358] sm:$0xff]
      %v7247 = vld [vmem:[%s11 + $0x360] sm:$0xff]
      %v7248 = vld [vmem:[%s11 + $0x368] sm:$0xff]
      %v7249 = vld [vmem:[%s11 + $0x370] sm:$0xff]
      %v7250 = vld [vmem:[%s11 + $0x378] sm:$0xff]
      %v7251 = vld [vmem:[%s11 + $0x380] sm:$0xff]
      %v7252 = vld [vmem:[%s11 + $0x388] sm:$0xff]
      %v7253 = vld [vmem:[%s11 + $0x390] sm:$0xff]
      %v7254 = vld [vmem:[%s11 + $0x398] sm:$0xff]
      %v7255 = vld [vmem:[%s11 + $0x3a0] sm:$0xff]
      %v7256 = vld [vmem:[%s11 + $0x3a8] sm:$0xff]
      %v7257 = vld [vmem:[%s11 + $0x3b0] sm:$0xff]
      %v7258 = vld [vmem:[%s11 + $0x3b8] sm:$0xff]
      %v7259 = vld [vmem:[%s11 + $0x3c0] sm:$0xff]
      %v7260 = vld [vmem:[%s11 + $0x3c8] sm:$0xff]
      %v7261 = vld [vmem:[%s11 + $0x3d0] sm:$0xff]
      %v7262 = vld [vmem:[%s11 + $0x3d8] sm:$0xff]
      %v7263 = vld [vmem:[%s11 + $0x3e0] sm:$0xff]
      %v7264 = vld [vmem:[%s11 + $0x3e8] sm:$0xff]
      %v7265 = vld [vmem:[%s11 + $0x3f0] sm:$0xff]
      %v7266 = vld [vmem:[%s11 + $0x3f8] sm:$0xff]
      %v7267 = vld [vmem:[%s12] sm:$0xff]
      %v7396 = vunpack.c.l.b16 %v7139
      %v7397 = vunpack.c.h.b16 %v7139
      %v7398 = vunpack.c.l.b16 %v7140
      %v7399 = vunpack.c.h.b16 %v7140
      %v7400 = vunpack.c.l.b16 %v7141
      %v7401 = vunpack.c.h.b16 %v7141
      %v7402 = vunpack.c.l.b16 %v7142
      %v7403 = vunpack.c.h.b16 %v7142
      %v7404 = vunpack.c.l.b16 %v7143
      %v7405 = vunpack.c.h.b16 %v7143
      %v7406 = vunpack.c.l.b16 %v7144
      %v7407 = vunpack.c.h.b16 %v7144
      %v7408 = vunpack.c.l.b16 %v7145
      %v7409 = vunpack.c.h.b16 %v7145
      %v7410 = vunpack.c.l.b16 %v7146
      %v7411 = vunpack.c.h.b16 %v7146
      %v7412 = vunpack.c.l.b16 %v7147
      %v7413 = vunpack.c.h.b16 %v7147
      %v7414 = vunpack.c.l.b16 %v7148
      %v7415 = vunpack.c.h.b16 %v7148
      %v7416 = vunpack.c.l.b16 %v7149
      %v7417 = vunpack.c.h.b16 %v7149
      %v7418 = vunpack.c.l.b16 %v7150
      %v7419 = vunpack.c.h.b16 %v7150
      %v7420 = vunpack.c.l.b16 %v7151
      %v7421 = vunpack.c.h.b16 %v7151
      %v7422 = vunpack.c.l.b16 %v7152
      %v7423 = vunpack.c.h.b16 %v7152
      %v7424 = vunpack.c.l.b16 %v7153
      %v7425 = vunpack.c.h.b16 %v7153
      %v7426 = vunpack.c.l.b16 %v7154
      %v7427 = vunpack.c.h.b16 %v7154
      %v7428 = vunpack.c.l.b16 %v7155
      %v7429 = vunpack.c.h.b16 %v7155
      %v7430 = vunpack.c.l.b16 %v7156
      %v7431 = vunpack.c.h.b16 %v7156
      %v7432 = vunpack.c.l.b16 %v7157
      %v7433 = vunpack.c.h.b16 %v7157
      %v7434 = vunpack.c.l.b16 %v7158
      %v7435 = vunpack.c.h.b16 %v7158
      %v7436 = vunpack.c.l.b16 %v7159
      %v7437 = vunpack.c.h.b16 %v7159
      %v7438 = vunpack.c.l.b16 %v7160
      %v7439 = vunpack.c.h.b16 %v7160
      %v7440 = vunpack.c.l.b16 %v7161
      %v7441 = vunpack.c.h.b16 %v7161
      %v7442 = vunpack.c.l.b16 %v7162
      %v7443 = vunpack.c.h.b16 %v7162
      %v7444 = vunpack.c.l.b16 %v7163
      %v7445 = vunpack.c.h.b16 %v7163
      %v7446 = vunpack.c.l.b16 %v7164
      %v7447 = vunpack.c.h.b16 %v7164
      %v7448 = vunpack.c.l.b16 %v7165
      %v7449 = vunpack.c.h.b16 %v7165
      %v7450 = vunpack.c.l.b16 %v7166
      %v7451 = vunpack.c.h.b16 %v7166
      %v7452 = vunpack.c.l.b16 %v7167
      %v7453 = vunpack.c.h.b16 %v7167
      %v7454 = vunpack.c.l.b16 %v7168
      %v7455 = vunpack.c.h.b16 %v7168
      %v7456 = vunpack.c.l.b16 %v7169
      %v7457 = vunpack.c.h.b16 %v7169
      %v7458 = vunpack.c.l.b16 %v7170
      %v7459 = vunpack.c.h.b16 %v7170
      %v7460 = vunpack.c.l.b16 %v7171
      %v7461 = vunpack.c.h.b16 %v7171
      %v7462 = vunpack.c.l.b16 %v7172
      %v7463 = vunpack.c.h.b16 %v7172
      %v7464 = vunpack.c.l.b16 %v7173
      %v7465 = vunpack.c.h.b16 %v7173
      %v7466 = vunpack.c.l.b16 %v7174
      %v7467 = vunpack.c.h.b16 %v7174
      %v7468 = vunpack.c.l.b16 %v7175
      %v7469 = vunpack.c.h.b16 %v7175
      %v7470 = vunpack.c.l.b16 %v7176
      %v7471 = vunpack.c.h.b16 %v7176
      %v7472 = vunpack.c.l.b16 %v7177
      %v7473 = vunpack.c.h.b16 %v7177
      %v7474 = vunpack.c.l.b16 %v7178
      %v7475 = vunpack.c.h.b16 %v7178
      %v7476 = vunpack.c.l.b16 %v7179
      %v7477 = vunpack.c.h.b16 %v7179
      %v7478 = vunpack.c.l.b16 %v7180
      %v7479 = vunpack.c.h.b16 %v7180
      %v7480 = vunpack.c.l.b16 %v7181
      %v7481 = vunpack.c.h.b16 %v7181
      %v7482 = vunpack.c.l.b16 %v7182
      %v7483 = vunpack.c.h.b16 %v7182
      %v7484 = vunpack.c.l.b16 %v7183
      %v7485 = vunpack.c.h.b16 %v7183
      %v7486 = vunpack.c.l.b16 %v7184
      %v7487 = vunpack.c.h.b16 %v7184
      %v7488 = vunpack.c.l.b16 %v7185
      %v7489 = vunpack.c.h.b16 %v7185
      %v7490 = vunpack.c.l.b16 %v7186
      %v7491 = vunpack.c.h.b16 %v7186
      %v7492 = vunpack.c.l.b16 %v7187
      %v7493 = vunpack.c.h.b16 %v7187
      %v7494 = vunpack.c.l.b16 %v7188
      %v7495 = vunpack.c.h.b16 %v7188
      %v7496 = vunpack.c.l.b16 %v7189
      %v7497 = vunpack.c.h.b16 %v7189
      %v7498 = vunpack.c.l.b16 %v7190
      %v7499 = vunpack.c.h.b16 %v7190
      %v7500 = vunpack.c.l.b16 %v7191
      %v7501 = vunpack.c.h.b16 %v7191
      %v7502 = vunpack.c.l.b16 %v7192
      %v7503 = vunpack.c.h.b16 %v7192
      %v7504 = vunpack.c.l.b16 %v7193
      %v7505 = vunpack.c.h.b16 %v7193
      %v7506 = vunpack.c.l.b16 %v7194
      %v7507 = vunpack.c.h.b16 %v7194
      %v7508 = vunpack.c.l.b16 %v7195
      %v7509 = vunpack.c.h.b16 %v7195
      %v7510 = vunpack.c.l.b16 %v7196
      %v7511 = vunpack.c.h.b16 %v7196
      %v7512 = vunpack.c.l.b16 %v7197
      %v7513 = vunpack.c.h.b16 %v7197
      %v7514 = vunpack.c.l.b16 %v7198
      %v7515 = vunpack.c.h.b16 %v7198
      %v7516 = vunpack.c.l.b16 %v7199
      %v7517 = vunpack.c.h.b16 %v7199
      %v7518 = vunpack.c.l.b16 %v7200
      %v7519 = vunpack.c.h.b16 %v7200
      %v7520 = vunpack.c.l.b16 %v7201
      %v7521 = vunpack.c.h.b16 %v7201
      %v7522 = vunpack.c.l.b16 %v7202
      %v7523 = vunpack.c.h.b16 %v7202
      %v7524 = vunpack.c.l.b16 %v7203
      %v7525 = vunpack.c.h.b16 %v7203
      %v7526 = vunpack.c.l.b16 %v7204
      %v7527 = vunpack.c.h.b16 %v7204
      %v7528 = vunpack.c.l.b16 %v7205
      %v7529 = vunpack.c.h.b16 %v7205
      %v7530 = vunpack.c.l.b16 %v7206
      %v7531 = vunpack.c.h.b16 %v7206
      %v7532 = vunpack.c.l.b16 %v7207
      %v7533 = vunpack.c.h.b16 %v7207
      %v7534 = vunpack.c.l.b16 %v7208
      %v7535 = vunpack.c.h.b16 %v7208
      %v7536 = vunpack.c.l.b16 %v7209
      %v7537 = vunpack.c.h.b16 %v7209
      %v7538 = vunpack.c.l.b16 %v7210
      %v7539 = vunpack.c.h.b16 %v7210
      %v7540 = vunpack.c.l.b16 %v7211
      %v7541 = vunpack.c.h.b16 %v7211
      %v7542 = vunpack.c.l.b16 %v7212
      %v7543 = vunpack.c.h.b16 %v7212
      %v7544 = vunpack.c.l.b16 %v7213
      %v7545 = vunpack.c.h.b16 %v7213
      %v7546 = vunpack.c.l.b16 %v7214
      %v7547 = vunpack.c.h.b16 %v7214
      %v7548 = vunpack.c.l.b16 %v7215
      %v7549 = vunpack.c.h.b16 %v7215
      %v7550 = vunpack.c.l.b16 %v7216
      %v7551 = vunpack.c.h.b16 %v7216
      %v7552 = vunpack.c.l.b16 %v7217
      %v7553 = vunpack.c.h.b16 %v7217
      %v7554 = vunpack.c.l.b16 %v7218
      %v7555 = vunpack.c.h.b16 %v7218
      %v7556 = vunpack.c.l.b16 %v7219
      %v7557 = vunpack.c.h.b16 %v7219
      %v7558 = vunpack.c.l.b16 %v7220
      %v7559 = vunpack.c.h.b16 %v7220
      %v7560 = vunpack.c.l.b16 %v7221
      %v7561 = vunpack.c.h.b16 %v7221
      %v7562 = vunpack.c.l.b16 %v7222
      %v7563 = vunpack.c.h.b16 %v7222
      %v7564 = vunpack.c.l.b16 %v7223
      %v7565 = vunpack.c.h.b16 %v7223
      %v7566 = vunpack.c.l.b16 %v7224
      %v7567 = vunpack.c.h.b16 %v7224
      %v7568 = vunpack.c.l.b16 %v7225
      %v7569 = vunpack.c.h.b16 %v7225
      %v7570 = vunpack.c.l.b16 %v7226
      %v7571 = vunpack.c.h.b16 %v7226
      %v7572 = vunpack.c.l.b16 %v7227
      %v7573 = vunpack.c.h.b16 %v7227
      %v7574 = vunpack.c.l.b16 %v7228
      %v7575 = vunpack.c.h.b16 %v7228
      %v7576 = vunpack.c.l.b16 %v7229
      %v7577 = vunpack.c.h.b16 %v7229
      %v7578 = vunpack.c.l.b16 %v7230
      %v7579 = vunpack.c.h.b16 %v7230
      %v7580 = vunpack.c.l.b16 %v7231
      %v7581 = vunpack.c.h.b16 %v7231
      %v7582 = vunpack.c.l.b16 %v7232
      %v7583 = vunpack.c.h.b16 %v7232
      %v7584 = vunpack.c.l.b16 %v7233
      %v7585 = vunpack.c.h.b16 %v7233
      %v7586 = vunpack.c.l.b16 %v7234
      %v7587 = vunpack.c.h.b16 %v7234
      %v7588 = vunpack.c.l.b16 %v7235
      %v7589 = vunpack.c.h.b16 %v7235
      %v7590 = vunpack.c.l.b16 %v7236
      %v7591 = vunpack.c.h.b16 %v7236
      %v7592 = vunpack.c.l.b16 %v7237
      %v7593 = vunpack.c.h.b16 %v7237
      %v7594 = vunpack.c.l.b16 %v7238
      %v7595 = vunpack.c.h.b16 %v7238
      %v7596 = vunpack.c.l.b16 %v7239
      %v7597 = vunpack.c.h.b16 %v7239
      %v7598 = vunpack.c.l.b16 %v7240
      %v7599 = vunpack.c.h.b16 %v7240
      %v7600 = vunpack.c.l.b16 %v7241
      %v7601 = vunpack.c.h.b16 %v7241
      %v7602 = vunpack.c.l.b16 %v7242
      %v7603 = vunpack.c.h.b16 %v7242
      %v7604 = vunpack.c.l.b16 %v7243
      %v7605 = vunpack.c.h.b16 %v7243
      %v7606 = vunpack.c.l.b16 %v7244
      %v7607 = vunpack.c.h.b16 %v7244
      %v7608 = vunpack.c.l.b16 %v7245
      %v7609 = vunpack.c.h.b16 %v7245
      %v7610 = vunpack.c.l.b16 %v7246
      %v7611 = vunpack.c.h.b16 %v7246
      %v7612 = vunpack.c.l.b16 %v7247
      %v7613 = vunpack.c.h.b16 %v7247
      %v7614 = vunpack.c.l.b16 %v7248
      %v7615 = vunpack.c.h.b16 %v7248
      %v7616 = vunpack.c.l.b16 %v7249
      %v7617 = vunpack.c.h.b16 %v7249
      %v7618 = vunpack.c.l.b16 %v7250
      %v7619 = vunpack.c.h.b16 %v7250
      %v7620 = vunpack.c.l.b16 %v7251
      %v7621 = vunpack.c.h.b16 %v7251
      %v7622 = vunpack.c.l.b16 %v7252
      %v7623 = vunpack.c.h.b16 %v7252
      %v7624 = vunpack.c.l.b16 %v7253
      %v7625 = vunpack.c.h.b16 %v7253
      %v7626 = vunpack.c.l.b16 %v7254
      %v7627 = vunpack.c.h.b16 %v7254
      %v7628 = vunpack.c.l.b16 %v7255
      %v7629 = vunpack.c.h.b16 %v7255
      %v7630 = vunpack.c.l.b16 %v7256
      %v7631 = vunpack.c.h.b16 %v7256
      %v7632 = vunpack.c.l.b16 %v7257
      %v7633 = vunpack.c.h.b16 %v7257
      %v7634 = vunpack.c.l.b16 %v7258
      %v7635 = vunpack.c.h.b16 %v7258
      %v7636 = vunpack.c.l.b16 %v7259
      %v7637 = vunpack.c.h.b16 %v7259
      %v7638 = vunpack.c.l.b16 %v7260
      %v7639 = vunpack.c.h.b16 %v7260
      %v7640 = vunpack.c.l.b16 %v7261
      %v7641 = vunpack.c.h.b16 %v7261
      %v7642 = vunpack.c.l.b16 %v7262
      %v7643 = vunpack.c.h.b16 %v7262
      %v7644 = vunpack.c.l.b16 %v7263
      %v7645 = vunpack.c.h.b16 %v7263
      %v7646 = vunpack.c.l.b16 %v7264
      %v7647 = vunpack.c.h.b16 %v7264
      %v7648 = vunpack.c.l.b16 %v7265
      %v7649 = vunpack.c.h.b16 %v7265
      %v7650 = vunpack.c.l.b16 %v7266
      %v7651 = vunpack.c.h.b16 %v7266
      %v7652 = vpack.c.b16 %v7404, %v7396
      %v7653 = vpack.c.b16 %v7405, %v7397
      %v7654 = vpack.c.b16 %v7406, %v7398
      %v7655 = vpack.c.b16 %v7407, %v7399
      %v7656 = vpack.c.b16 %v7408, %v7400
      %v7657 = vpack.c.b16 %v7409, %v7401
      %v7658 = vpack.c.b16 %v7410, %v7402
      %v7659 = vpack.c.b16 %v7411, %v7403
      %v7660 = vpack.c.b16 %v7420, %v7412
      %v7661 = vpack.c.b16 %v7421, %v7413
      %v7662 = vpack.c.b16 %v7422, %v7414
      %v7663 = vpack.c.b16 %v7423, %v7415
      %v7664 = vpack.c.b16 %v7424, %v7416
      %v7665 = vpack.c.b16 %v7425, %v7417
      %v7666 = vpack.c.b16 %v7426, %v7418
      %v7667 = vpack.c.b16 %v7427, %v7419
      %v7668 = vpack.c.b16 %v7436, %v7428
      %v7669 = vpack.c.b16 %v7437, %v7429
      %v7670 = vpack.c.b16 %v7438, %v7430
      %v7671 = vpack.c.b16 %v7439, %v7431
      %v7672 = vpack.c.b16 %v7440, %v7432
      %v7673 = vpack.c.b16 %v7441, %v7433
      %v7674 = vpack.c.b16 %v7442, %v7434
      %v7675 = vpack.c.b16 %v7443, %v7435
      %v7676 = vpack.c.b16 %v7452, %v7444
      %v7677 = vpack.c.b16 %v7453, %v7445
      %v7678 = vpack.c.b16 %v7454, %v7446
      %v7679 = vpack.c.b16 %v7455, %v7447
      %v7680 = vpack.c.b16 %v7456, %v7448
      %v7681 = vpack.c.b16 %v7457, %v7449
      %v7682 = vpack.c.b16 %v7458, %v7450
      %v7683 = vpack.c.b16 %v7459, %v7451
      %v7684 = vpack.c.b16 %v7468, %v7460
      %v7685 = vpack.c.b16 %v7469, %v7461
      %v7686 = vpack.c.b16 %v7470, %v7462
      %v7687 = vpack.c.b16 %v7471, %v7463
      %v7688 = vpack.c.b16 %v7472, %v7464
      %v7689 = vpack.c.b16 %v7473, %v7465
      %v7690 = vpack.c.b16 %v7474, %v7466
      %v7691 = vpack.c.b16 %v7475, %v7467
      %v7692 = vpack.c.b16 %v7484, %v7476
      %v7693 = vpack.c.b16 %v7485, %v7477
      %v7694 = vpack.c.b16 %v7486, %v7478
      %v7695 = vpack.c.b16 %v7487, %v7479
      %v7696 = vpack.c.b16 %v7488, %v7480
      %v7697 = vpack.c.b16 %v7489, %v7481
      %v7698 = vpack.c.b16 %v7490, %v7482
      %v7699 = vpack.c.b16 %v7491, %v7483
      %v7700 = vpack.c.b16 %v7500, %v7492
      %v7701 = vpack.c.b16 %v7501, %v7493
      %v7702 = vpack.c.b16 %v7502, %v7494
      %v7703 = vpack.c.b16 %v7503, %v7495
      %v7704 = vpack.c.b16 %v7504, %v7496
      %v7705 = vpack.c.b16 %v7505, %v7497
      %v7706 = vpack.c.b16 %v7506, %v7498
      %v7707 = vpack.c.b16 %v7507, %v7499
      %v7708 = vpack.c.b16 %v7516, %v7508
      %v7709 = vpack.c.b16 %v7517, %v7509
      %v7710 = vpack.c.b16 %v7518, %v7510
      %v7711 = vpack.c.b16 %v7519, %v7511
      %v7712 = vpack.c.b16 %v7520, %v7512
      %v7713 = vpack.c.b16 %v7521, %v7513
      %v7714 = vpack.c.b16 %v7522, %v7514
      %v7715 = vpack.c.b16 %v7523, %v7515
      %v7716 = vpack.c.b16 %v7532, %v7524
      %v7717 = vpack.c.b16 %v7533, %v7525
      %v7718 = vpack.c.b16 %v7534, %v7526
      %v7719 = vpack.c.b16 %v7535, %v7527
      %v7720 = vpack.c.b16 %v7536, %v7528
      %v7721 = vpack.c.b16 %v7537, %v7529
      %v7722 = vpack.c.b16 %v7538, %v7530
      %v7723 = vpack.c.b16 %v7539, %v7531
      %v7724 = vpack.c.b16 %v7548, %v7540
      %v7725 = vpack.c.b16 %v7549, %v7541
      %v7726 = vpack.c.b16 %v7550, %v7542
      %v7727 = vpack.c.b16 %v7551, %v7543
      %v7728 = vpack.c.b16 %v7552, %v7544
      %v7729 = vpack.c.b16 %v7553, %v7545
      %v7730 = vpack.c.b16 %v7554, %v7546
      %v7731 = vpack.c.b16 %v7555, %v7547
      %v7732 = vpack.c.b16 %v7564, %v7556
      %v7733 = vpack.c.b16 %v7565, %v7557
      %v7734 = vpack.c.b16 %v7566, %v7558
      %v7735 = vpack.c.b16 %v7567, %v7559
      %v7736 = vpack.c.b16 %v7568, %v7560
      %v7737 = vpack.c.b16 %v7569, %v7561
      %v7738 = vpack.c.b16 %v7570, %v7562
      %v7739 = vpack.c.b16 %v7571, %v7563
      %v7740 = vpack.c.b16 %v7580, %v7572
      %v7741 = vpack.c.b16 %v7581, %v7573
      %v7742 = vpack.c.b16 %v7582, %v7574
      %v7743 = vpack.c.b16 %v7583, %v7575
      %v7744 = vpack.c.b16 %v7584, %v7576
      %v7745 = vpack.c.b16 %v7585, %v7577
      %v7746 = vpack.c.b16 %v7586, %v7578
      %v7747 = vpack.c.b16 %v7587, %v7579
      %v7748 = vpack.c.b16 %v7596, %v7588
      %v7749 = vpack.c.b16 %v7597, %v7589
      %v7750 = vpack.c.b16 %v7598, %v7590
      %v7751 = vpack.c.b16 %v7599, %v7591
      %v7752 = vpack.c.b16 %v7600, %v7592
      %v7753 = vpack.c.b16 %v7601, %v7593
      %v7754 = vpack.c.b16 %v7602, %v7594
      %v7755 = vpack.c.b16 %v7603, %v7595
      %v7756 = vpack.c.b16 %v7612, %v7604
      %v7757 = vpack.c.b16 %v7613, %v7605
      %v7758 = vpack.c.b16 %v7614, %v7606
      %v7759 = vpack.c.b16 %v7615, %v7607
      %v7760 = vpack.c.b16 %v7616, %v7608
      %v7761 = vpack.c.b16 %v7617, %v7609
      %v7762 = vpack.c.b16 %v7618, %v7610
      %v7763 = vpack.c.b16 %v7619, %v7611
      %v7764 = vpack.c.b16 %v7628, %v7620
      %v7765 = vpack.c.b16 %v7629, %v7621
      %v7766 = vpack.c.b16 %v7630, %v7622
      %v7767 = vpack.c.b16 %v7631, %v7623
      %v7768 = vpack.c.b16 %v7632, %v7624
      %v7769 = vpack.c.b16 %v7633, %v7625
      %v7770 = vpack.c.b16 %v7634, %v7626
      %v7771 = vpack.c.b16 %v7635, %v7627
      %v7772 = vpack.c.b16 %v7644, %v7636
      %v7773 = vpack.c.b16 %v7645, %v7637
      %v7774 = vpack.c.b16 %v7646, %v7638
      %v7775 = vpack.c.b16 %v7647, %v7639
      %v7776 = vpack.c.b16 %v7648, %v7640
      %v7777 = vpack.c.b16 %v7649, %v7641
      %v7778 = vpack.c.b16 %v7650, %v7642
      %v7779 = vpack.c.b16 %v7651, %v7643
      %v7909 = vlaneseq
      %v7910 = vshrl.u32 %v7909, 7
      %v7911 = vsub.s32 0, %v7910
      %v7912 = vrot.slane %v7267, %v7911
      %v7913 = vlaneseq
      %v7914 = vshrl.u32 %v7913, 7
      %v7915 = vsub.s32 1, %v7914
      %v7916 = vrot.slane %v7267, %v7915
      %v7917 = vlaneseq
      %v7918 = vshrl.u32 %v7917, 7
      %v7919 = vsub.s32 2, %v7918
      %v7920 = vrot.slane %v7267, %v7919
      %v7921 = vlaneseq
      %v7922 = vshrl.u32 %v7921, 7
      %v7923 = vsub.s32 3, %v7922
      %v7924 = vrot.slane %v7267, %v7923
      %v7925 = vlaneseq
      %v7926 = vshrl.u32 %v7925, 7
      %v7927 = vsub.s32 4, %v7926
      %v7928 = vrot.slane %v7267, %v7927
      %v7929 = vlaneseq
      %v7930 = vshrl.u32 %v7929, 7
      %v7931 = vsub.s32 5, %v7930
      %v7932 = vrot.slane %v7267, %v7931
      %v7933 = vlaneseq
      %v7934 = vshrl.u32 %v7933, 7
      %v7935 = vsub.s32 6, %v7934
      %v7936 = vrot.slane %v7267, %v7935
      %v7937 = vlaneseq
      %v7938 = vshrl.u32 %v7937, 7
      %v7939 = vsub.s32 7, %v7938
      %v7940 = vrot.slane %v7267, %v7939
      %7949 = vmatprep.subr.bf16.mxu0 %v7653
      %7950 = vmatpush1.bf16.msra.mxu0 %v7652
      %7951 = vmatprep.subr.bf16.mxu0 %v7661
      %7952 = vmatpush1.bf16.msra.mxu0 %v7660
      %7953 = vmatprep.subr.bf16.mxu0 %v7669
      %7954 = vmatpush1.bf16.msra.mxu0 %v7668
      %7955 = vmatprep.subr.bf16.mxu0 %v7677
      %7956 = vmatpush1.bf16.msra.mxu0 %v7676
      %7957 = vmatprep.subr.bf16.mxu0 %v7685
      %7958 = vmatpush1.bf16.msra.mxu0 %v7684
      %7959 = vmatprep.subr.bf16.mxu0 %v7693
      %7960 = vmatpush1.bf16.msra.mxu0 %v7692
      %7961 = vmatprep.subr.bf16.mxu0 %v7701
      %7962 = vmatpush1.bf16.msra.mxu0 %v7700
      %7963 = vmatprep.subr.bf16.mxu0 %v7709
      %7964 = vmatpush1.bf16.msra.mxu0 %v7708
      %7965 = vmatprep.subr.bf16.mxu0 %v7717
      %7966 = vmatpush1.bf16.msra.mxu0 %v7716
      %7967 = vmatprep.subr.bf16.mxu0 %v7725
      %7968 = vmatpush1.bf16.msra.mxu0 %v7724
      %7969 = vmatprep.subr.bf16.mxu0 %v7733
      %7970 = vmatpush1.bf16.msra.mxu0 %v7732
      %7971 = vmatprep.subr.bf16.mxu0 %v7741
      %7972 = vmatpush1.bf16.msra.mxu0 %v7740
      %7973 = vmatprep.subr.bf16.mxu0 %v7749
      %7974 = vmatpush1.bf16.msra.mxu0 %v7748
      %7975 = vmatprep.subr.bf16.mxu0 %v7757
      %7976 = vmatpush1.bf16.msra.mxu0 %v7756
      %7977 = vmatprep.subr.bf16.mxu0 %v7765
      %7978 = vmatpush1.bf16.msra.mxu0 %v7764
      %7979 = vmatprep.subr.bf16.mxu0 %v7773
      %7980 = vmatpush1.bf16.msra.mxu0 %v7772
      %7981 = vmatprep.mubr.bf16.mxu0 %v7138
      %7982 = vmatmul.mubr.bf16.gmra.mrb[0].mxu0 %v7137
      %v7983 = vpop.f32.mrb[0].mxu0
      %v7984 = vadd.f32 %v7912, %v7983
      %v7985 = vpop.f32.mrb[0].mxu0
      %v7986 = vadd.f32 %v7916, %v7985
      %v7987 = vpop.f32.mrb[0].mxu0
      %v7988 = vpop.f32.mrb[0].mxu0
      %7989 = vdwg.mxu0
      %7990 = vmatprep.subr.bf16.mxu0 %v7655
      %7991 = vmatpush1.bf16.msra.mxu0 %v7654
      %7992 = vmatprep.subr.bf16.mxu0 %v7663
      %7993 = vmatpush1.bf16.msra.mxu0 %v7662
      %7994 = vmatprep.subr.bf16.mxu0 %v7671
      %7995 = vmatpush1.bf16.msra.mxu0 %v7670
      %7996 = vmatprep.subr.bf16.mxu0 %v7679
      %7997 = vmatpush1.bf16.msra.mxu0 %v7678
      %7998 = vmatprep.subr.bf16.mxu0 %v7687
      %7999 = vmatpush1.bf16.msra.mxu0 %v7686
      %8000 = vmatprep.subr.bf16.mxu0 %v7695
      %8001 = vmatpush1.bf16.msra.mxu0 %v7694
      %8002 = vmatprep.subr.bf16.mxu0 %v7703
      %8003 = vmatpush1.bf16.msra.mxu0 %v7702
      %8004 = vmatprep.subr.bf16.mxu0 %v7711
      %8005 = vmatpush1.bf16.msra.mxu0 %v7710
      %8006 = vmatprep.subr.bf16.mxu0 %v7719
      %8007 = vmatpush1.bf16.msra.mxu0 %v7718
      %8008 = vmatprep.subr.bf16.mxu0 %v7727
      %8009 = vmatpush1.bf16.msra.mxu0 %v7726
      %8010 = vmatprep.subr.bf16.mxu0 %v7735
      %8011 = vmatpush1.bf16.msra.mxu0 %v7734
      %8012 = vmatprep.subr.bf16.mxu0 %v7743
      %8013 = vmatpush1.bf16.msra.mxu0 %v7742
      %8014 = vmatprep.subr.bf16.mxu0 %v7751
      %8015 = vmatpush1.bf16.msra.mxu0 %v7750
      %8016 = vmatprep.subr.bf16.mxu0 %v7759
      %8017 = vmatpush1.bf16.msra.mxu0 %v7758
      %8018 = vmatprep.subr.bf16.mxu0 %v7767
      %8019 = vmatpush1.bf16.msra.mxu0 %v7766
      %8020 = vmatprep.subr.bf16.mxu0 %v7775
      %8021 = vmatpush1.bf16.msra.mxu0 %v7774
      %8022 = vmatprep.mubr.bf16.mxu0 %v7138
      %8023 = vmatmul.mubr.bf16.gmra.mrb[0].mxu0 %v7137
      %v8024 = vpop.f32.mrb[0].mxu0
      %v8025 = vadd.f32 %v7920, %v8024
      %v8026 = vpop.f32.mrb[0].mxu0
      %v8027 = vadd.f32 %v7924, %v8026
      %v8028 = vpop.f32.mrb[0].mxu0
      %v8029 = vpop.f32.mrb[0].mxu0
      %8030 = vdwg.mxu0
      %8031 = vmatprep.subr.bf16.mxu0 %v7657
      %8032 = vmatpush1.bf16.msra.mxu0 %v7656
      %8033 = vmatprep.subr.bf16.mxu0 %v7665
      %8034 = vmatpush1.bf16.msra.mxu0 %v7664
      %8035 = vmatprep.subr.bf16.mxu0 %v7673
      %8036 = vmatpush1.bf16.msra.mxu0 %v7672
      %8037 = vmatprep.subr.bf16.mxu0 %v7681
      %8038 = vmatpush1.bf16.msra.mxu0 %v7680
      %8039 = vmatprep.subr.bf16.mxu0 %v7689
      %8040 = vmatpush1.bf16.msra.mxu0 %v7688
      %8041 = vmatprep.subr.bf16.mxu0 %v7697
      %8042 = vmatpush1.bf16.msra.mxu0 %v7696
      %8043 = vmatprep.subr.bf16.mxu0 %v7705
      %8044 = vmatpush1.bf16.msra.mxu0 %v7704
      %8045 = vmatprep.subr.bf16.mxu0 %v7713
      %8046 = vmatpush1.bf16.msra.mxu0 %v7712
      %8047 = vmatprep.subr.bf16.mxu0 %v7721
      %8048 = vmatpush1.bf16.msra.mxu0 %v7720
      %8049 = vmatprep.subr.bf16.mxu0 %v7729
      %8050 = vmatpush1.bf16.msra.mxu0 %v7728
      %8051 = vmatprep.subr.bf16.mxu0 %v7737
      %8052 = vmatpush1.bf16.msra.mxu0 %v7736
      %8053 = vmatprep.subr.bf16.mxu0 %v7745
      %8054 = vmatpush1.bf16.msra.mxu0 %v7744
      %8055 = vmatprep.subr.bf16.mxu0 %v7753
      %8056 = vmatpush1.bf16.msra.mxu0 %v7752
      %8057 = vmatprep.subr.bf16.mxu0 %v7761
      %8058 = vmatpush1.bf16.msra.mxu0 %v7760
      %8059 = vmatprep.subr.bf16.mxu0 %v7769
      %8060 = vmatpush1.bf16.msra.mxu0 %v7768
      %8061 = vmatprep.subr.bf16.mxu0 %v7777
      %8062 = vmatpush1.bf16.msra.mxu0 %v7776
      %8063 = vmatprep.mubr.bf16.mxu0 %v7138
      %8064 = vmatmul.mubr.bf16.gmra.mrb[0].mxu0 %v7137
      %v8065 = vpop.f32.mrb[0].mxu0
      %v8066 = vadd.f32 %v7928, %v8065
      %v8067 = vpop.f32.mrb[0].mxu0
      %v8068 = vadd.f32 %v7932, %v8067
      %v8069 = vpop.f32.mrb[0].mxu0
      %v8070 = vpop.f32.mrb[0].mxu0
      %8071 = vdwg.mxu0
      %8072 = vmatprep.subr.bf16.mxu0 %v7659
      %8073 = vmatpush1.bf16.msra.mxu0 %v7658
      %8074 = vmatprep.subr.bf16.mxu0 %v7667
      %8075 = vmatpush1.bf16.msra.mxu0 %v7666
      %8076 = vmatprep.subr.bf16.mxu0 %v7675
      %8077 = vmatpush1.bf16.msra.mxu0 %v7674
      %8078 = vmatprep.subr.bf16.mxu0 %v7683
      %8079 = vmatpush1.bf16.msra.mxu0 %v7682
      %8080 = vmatprep.subr.bf16.mxu0 %v7691
      %8081 = vmatpush1.bf16.msra.mxu0 %v7690
      %8082 = vmatprep.subr.bf16.mxu0 %v7699
      %8083 = vmatpush1.bf16.msra.mxu0 %v7698
      %8084 = vmatprep.subr.bf16.mxu0 %v7707
      %8085 = vmatpush1.bf16.msra.mxu0 %v7706
      %8086 = vmatprep.subr.bf16.mxu0 %v7715
      %8087 = vmatpush1.bf16.msra.mxu0 %v7714
      %8088 = vmatprep.subr.bf16.mxu0 %v7723
      %8089 = vmatpush1.bf16.msra.mxu0 %v7722
      %8090 = vmatprep.subr.bf16.mxu0 %v7731
      %8091 = vmatpush1.bf16.msra.mxu0 %v7730
      %8092 = vmatprep.subr.bf16.mxu0 %v7739
      %8093 = vmatpush1.bf16.msra.mxu0 %v7738
      %8094 = vmatprep.subr.bf16.mxu0 %v7747
      %8095 = vmatpush1.bf16.msra.mxu0 %v7746
      %8096 = vmatprep.subr.bf16.mxu0 %v7755
      %8097 = vmatpush1.bf16.msra.mxu0 %v7754
      %8098 = vmatprep.subr.bf16.mxu0 %v7763
      %8099 = vmatpush1.bf16.msra.mxu0 %v7762
      %8100 = vmatprep.subr.bf16.mxu0 %v7771
      %8101 = vmatpush1.bf16.msra.mxu0 %v7770
      %8102 = vmatprep.subr.bf16.mxu0 %v7779
      %8103 = vmatpush1.bf16.msra.mxu0 %v7778
      %8104 = vmatprep.mubr.bf16.mxu0 %v7138
      %8105 = vmatmul.mubr.bf16.gmra.mrb[0].mxu0 %v7137
      %v8106 = vpop.f32.mrb[0].mxu0
      %v8107 = vadd.f32 %v7936, %v8106
      %v8108 = vpop.f32.mrb[0].mxu0
      %v8109 = vadd.f32 %v7940, %v8108
      %v8110 = vpop.f32.mrb[0].mxu0
      %v8111 = vpop.f32.mrb[0].mxu0
      %8112 = vdwg.mxu0
      %v8121 = vcombine.low %v7984, %v7986
      %v8122 = vcombine.low %v8025, %v8027
      %v8123 = vcombine.low %v8066, %v8068
      %v8124 = vcombine.low %v8107, %v8109
      %v8126 = vunpack.c.l.s4 1966171168
      %v8127 = vunpack.c.0.s8 %v8126
      %v8128 = vlaneseq
      %v8129 = vshrl.u32 %v8128, 7
      %v8130 = vsub.s32 %v8127, %v8129
      %v8131 = vrot.slane %v8121, %v8130
      %v8133 = vunpack.c.l.s4 1966171168
      %v8134 = vunpack.c.0.s8 %v8133
      %v8135 = vlaneseq
      %v8136 = vshrl.u32 %v8135, 7
      %v8137 = vsub.s32 %v8134, %v8136
      %v8138 = vrot.slane %v8122, %v8137
      %v8140 = vunpack.c.l.s4 1966171168
      %v8141 = vunpack.c.0.s8 %v8140
      %v8142 = vlaneseq
      %v8143 = vshrl.u32 %v8142, 7
      %v8144 = vsub.s32 %v8141, %v8143
      %v8145 = vrot.slane %v8123, %v8144
      %v8147 = vunpack.c.l.s4 1966171168
      %v8148 = vunpack.c.0.s8 %v8147
      %v8149 = vlaneseq
      %v8150 = vshrl.u32 %v8149, 7
      %v8151 = vsub.s32 %v8148, %v8150
      %v8152 = vrot.slane %v8124, %v8151
      %v8153 = vcombine.low %v8131, %v8138
      %v8154 = vcombine.low %v8145, %v8152
      %v8156 = vunpack.c.l.s4 1966171168
      %v8157 = vunpack.c.0.s8 %v8156
      %v8158 = vlaneseq
      %v8159 = vshrl.u32 %v8158, 7
      %v8160 = vsub.s32 %v8157, %v8159
      %v8161 = vrot.slane %v8153, %v8160
      %v8163 = vunpack.c.l.s4 1966171168
      %v8164 = vunpack.c.0.s8 %v8163
      %v8165 = vlaneseq
      %v8166 = vshrl.u32 %v8165, 7
      %v8167 = vsub.s32 %v8164, %v8166
      %v8168 = vrot.slane %v8154, %v8167
      %v8169 = vcombine.low %v8161, %v8168
      %8171 = vst [vmem:[%s438] sm:$0xff] %v8169
      %p8172 = scmp.lt.s32.totalorder %s24, 1
      %s8173 = scalar_select %p8172, %s24, 1
      %s8174 = smul.addr %s8173, 8
      %s8175 = scalar_lea.vmem %s13, %s8174
      // Predicated region
      $region73: #{mobilenet_v1_forward.1} parent=71 // pred_check
        %p8176 = pneg %p320
      $region74: #{mobilenet_v1_forward.1} parent=71 // pred_check_branch
        %8178 = sbr.rel (%p8176) target = $region76
      $region75: #{mobilenet_v1_forward.1} parent=71 // pred_region
        _
      $region76: #{mobilenet_v1_forward.1} parent=71 // pred_fallthru
        _
    $region72: #{mobilenet_v1_forward.1} parent=5 // pred_fallthru
      _
    %p8179 = scmp.le.s32.totalorder 2, %s19
    // Predicated region
    $region77: #{mobilenet_v1_forward.1} parent=5 // pred_check
      %p8180 = pneg %p8179
    $region78: #{mobilenet_v1_forward.1} parent=5 // pred_check_branch
      %8182 = sbr.rel (%p8180) target = $region80
    $region79: #{mobilenet_v1_forward.1} parent=5 // pred_region
      %s8183 = ssub.s32 %s19, 2
      // Predicated region
      $region81: #{mobilenet_v1_forward.1} parent=79 // pred_check
        %p8184 = pneg %p326
      $region82: #{mobilenet_v1_forward.1} parent=79 // pred_check_branch
        %8186 = sbr.rel (%p8184) target = $region84
      $region83: #{mobilenet_v1_forward.1} parent=79 // pred_region
        %p8187 = scmp.lt.s32.totalorder %s25, 1
        %s8188 = scalar_select %p8187, %s25, 1
        %s8189 = smul.addr %s8188, 8
        %s8190 = scalar_lea.vmem %s13, %s8189
      $region84: #{mobilenet_v1_forward.1} parent=79 // pred_fallthru
        _
    $region80: #{mobilenet_v1_forward.1} parent=5 // pred_fallthru
      _
  $region6: #{mobilenet_v1_forward.1} parent=0 // loop_footer
    %s23 = sadd.s32 1, %s19
  $region7: #{mobilenet_v1_forward.1} parent=0 // loop_footer_branch
    %18 = sbr.rel target = $region3
  $region8: #{mobilenet_v1_forward.1} parent=0 // loop_exit
    _

</llo_original>
